<compile_context>
chip_gen: v7x
topology: tpu7x:2x2x1
jax: 0.10.0
libtpu: 0.0.40
codegen_flags: <defaults>
</compile_context>

<pallas_src>
import functools

import numpy as np
import jax
import jax.numpy as jnp
from jax import lax
from jax.experimental import pallas as pl
from jax.experimental.pallas import tpu as pltpu

EPS = 1e-5          # GroupNorm eps (PyTorch default)
NEG_INF = -1e30     # additive softmax mask
GROUPS = 16         # nn.GroupNorm(num_groups=16, ...)


# ---------------------------------------------------------------------------
# host-side constants
# ---------------------------------------------------------------------------
def bicubic_matrix(in_size, out_size):
    """1-D bicubic (align_corners=True, A=-0.75) interpolation matrix (out_size, in_size)."""
    A = -0.75

    def w1(t):   # 0 <= t <= 1
        return ((A + 2.0) * t - (A + 3.0)) * t * t + 1.0

    def w2(t):   # 1 <= t <= 2
        return (((t - 5.0) * t + 8.0) * t - 4.0) * A

    M = np.zeros((out_size, in_size), dtype=np.float64)
    if out_size == 1:
        M[0, 0] = 1.0
        return M.astype(np.float32)
    scale = (in_size - 1) / (out_size - 1)
    for i in range(out_size):
        real = i * scale
        idx = int(np.floor(real))
        t = real - idx
        ws = [w2(t + 1.0), w1(t), w1(1.0 - t), w2(2.0 - t)]
        for k, wgt in enumerate(ws):
            src = min(max(idx - 1 + k, 0), in_size - 1)
            M[i, src] += wgt
    return M.astype(np.float32)


def group_sum_matrix(nc, cg):
    """(nc, nc) 0/1 matrix: gg[c, c'] = 1 iff channels c, c' are in the same GroupNorm group."""
    idx = np.arange(nc)
    return (idx[:, None] // cg == idx[None, :] // cg).astype(np.float32)


# ---------------------------------------------------------------------------
# the single fused kernel
# ---------------------------------------------------------------------------
def _scm_kernel(inv_nf, inv_np,
                base_ref, bp_ref, rp_ref,
                wi2_ref, pi2_ref, wrf_ref, prf_ref, wf2_ref, pf2_ref,
                wfu_ref, pfu_ref, ggC_ref, gg2C_ref, up_ref,
                w1_ref, b1_ref, w2_ref, b2_ref, ws_ref, bs_ref,
                o_ref, pad1_ref, pad2_ref):
    bf16 = jnp.bfloat16
    f32 = jnp.float32
    _, H, W, C = base_ref.shape
    _, h, w, _ = bp_ref.shape
    HW, hw = H * W, h * w
    Hp2, WP2, _ = pad1_ref.shape                      # (H + 2, round_up(W + 2, 8), 2C)

    def conv_gn(x, w_r, p_r, gg_r, inv_n):
        # 1x1 conv (bf16 MXU, f32 acc) + GroupNorm.  Single-pass stats (E[y], E[y^2]); one tiny
        # (2, Cx)x(Cx, Cx) f32 matmul broadcasts the per-group stats back to channels.
        p = p_r[...]                                                 # (3, Cx): bias, gamma, beta
        y = jnp.dot(x.astype(bf16), w_r[...],
                    preferred_element_type=f32) + p[0:1]             # (N, Cx) f32
        st = jnp.concatenate([jnp.sum(y, axis=0, keepdims=True),
                              jnp.sum(y * y, axis=0, keepdims=True)], axis=0) * inv_n
        m = jnp.dot(st, gg_r[...], preferred_element_type=f32)       # (2, Cx) f32
        mean = m[0:1]
        var = m[1:2] - mean * mean
        return (y - mean) * lax.rsqrt(var + EPS) * p[1:2] + p[2:3]

    # ---- full-res branch: base_info = GN(conv_info2(base)) ----
    base_info = conv_gn(base_ref[0].reshape(HW, C), wi2_ref, pi2_ref, ggC_ref, inv_nf)

    # ---- pooled branch: conv_info1 | conv_fea1 fused into one (C, 2C) matmul on pooled ref ----
    ro = conv_gn(rp_ref[0].reshape(hw, C), wrf_ref, prf_ref, gg2C_ref, inv_np)     # (hw, 2C)
    ref_info, ref_fea = ro[:, :C], ro[:, C:]
    base_fea = conv_gn(bp_ref[0].reshape(hw, C), wf2_ref, pf2_ref, ggC_ref, inv_np)

    # ---- per-pooled-row warp attention: dense (hw, hw) scores, block mask built in-kernel ----
    s = lax.dot_general(base_fea.astype(bf16), ref_fea.astype(bf16),
                        (((1,), (1,)), ((), ())), preferred_element_type=f32)      # (hw, hw)
    inv_w = 1.0 / w
    rq = jnp.floor((lax.broadcasted_iota(jnp.int32, (hw, hw), 0).astype(f32) + 0.5) * inv_w)
    rk = jnp.floor((lax.broadcasted_iota(jnp.int32, (hw, hw), 1).astype(f32) + 0.5) * inv_w)
    s = jnp.where(rq == rk, s, NEG_INF)              # only attend within the same pooled row
    s = s - jnp.max(s, axis=-1, keepdims=True)
    e = jnp.exp(s)
    pr = e * pl.reciprocal(jnp.sum(e, axis=-1, keepdims=True), approx=True)
    warp = jnp.dot(pr.astype(bf16), ref_info.astype(bf16),
                   preferred_element_type=f32)                                      # (hw, C)

    # ---- bicubic x2 upsample (align_corners=True) as one (HW, hw) matmul, fus conv + GN ----
    warp_up = jnp.dot(up_ref[...], warp.astype(bf16), preferred_element_type=f32)   # (HW, C)
    warp_fus = conv_gn(warp_up, wfu_ref, pfu_ref, ggC_ref, inv_nf)

    # ---- ResBlock(2C -> C -> C), fused: concat input -> zero-padded VMEM scratch ----
    pad1_ref[...] = jnp.zeros_like(pad1_ref)
    pad1_ref[1:H + 1, 1:W + 1, 0:C] = warp_fus.reshape(H, W, C)
    pad1_ref[1:H + 1, 1:W + 1, C:2 * C] = base_info.reshape(H, W, C)

    def conv3x3(pad_r, ww_r, b_r):
        # output-side im2col: one wide-N (Np, Cin)x(Cin, 9C) matmul, then sum of the 9
        # statically shifted (H, W, C) slices of the result.
        xp = pad_r[...]
        cin = xp.shape[-1]
        Y = jnp.dot(xp.reshape(Hp2 * WP2, cin).astype(bf16), ww_r[...],
                    preferred_element_type=f32).reshape(Hp2, WP2, 9 * C)
        out = b_r[...].reshape(1, 1, C)
        for k in range(9):
            a, b = divmod(k, 3)
            out = out + Y[a:a + H, b:b + W, k * C:(k + 1) * C]
        return out                                                                  # (H, W, C)

    h1 = jnp.maximum(conv3x3(pad1_ref, w1_ref, b1_ref), 0.0)

    pad2_ref[...] = jnp.zeros_like(pad2_ref)
    pad2_ref[1:H + 1, 1:W + 1, :] = h1
    y2 = conv3x3(pad2_ref, w2_ref, b2_ref)

    # 1x1 skip conv on the (unpadded) concat input, without materialising the concat
    skip = (jnp.dot(warp_fus.astype(bf16), ws_ref[0:C, :], preferred_element_type=f32)
            + jnp.dot(base_info.astype(bf16), ws_ref[C:2 * C, :], preferred_element_type=f32)
            + bs_ref[...])
    o_ref[0] = (y2 + skip.reshape(H, W, C)).astype(o_ref.dtype)


def _whole_spec(a):
    return pl.BlockSpec(a.shape, lambda b, nd=a.ndim: (0,) * nd)


# ---------------------------------------------------------------------------
# forward
# ---------------------------------------------------------------------------
def scm_block_forward(base, ref, P):
    """base, ref: (B, H, W, C) channels-last (PyTorch NCHW permuted to NHWC)."""
    B, H, W, C = base.shape
    h, w = H // 2, W // 2
    cg = C // GROUPS
    WP2 = ((W + 2 + 7) // 8) * 8          # padded-grid width, 8-aligned -> layout-free reshapes

    # MaxPool2d(4, 2, 1) on the stacked [base; ref] -> one small fused XLA prologue, (2B,h,w,C).
    x = jnp.concatenate([base, ref], axis=0)
    xp = jnp.pad(x, ((0, 0), (1, 1), (1, 1), (0, 0)), constant_values=-jnp.inf)
    a = jnp.maximum(jnp.maximum(xp[:, 0::2, 0::2], xp[:, 0::2, 1::2]),
                    jnp.maximum(xp[:, 1::2, 0::2], xp[:, 1::2, 1::2]))
    pooled = jnp.maximum(
        jnp.maximum(a[:, 0:h, 0:w], a[:, 0:h, 1:w + 1]),
        jnp.maximum(a[:, 1:h + 1, 0:w], a[:, 1:h + 1, 1:w + 1]))

    kern = functools.partial(_scm_kernel, 1.0 / (H * W * cg), 1.0 / (h * w * cg))
    operands = (base, pooled, pooled,
                P["w_info2"], P["p_info2"], P["w_rf"], P["p_rf"],
                P["w_fea2"], P["p_fea2"], P["w_fus"], P["p_fus"],
                P["ggC"], P["gg2C"], P["upmat"],
                P["res_w1"], P["res_b1"], P["res_w2"], P["res_b2"],
                P["res_ws"], P["res_bs"])
    in_specs = ([pl.BlockSpec((1, H, W, C), lambda b: (b, 0, 0, 0)),
                 pl.BlockSpec((1, h, w, C), lambda b: (b, 0, 0, 0)),         # pooled base
                 pl.BlockSpec((1, h, w, C), lambda b: (b + B, 0, 0, 0))]     # pooled ref
                + [_whole_spec(op) for op in operands[3:]])

    return pl.pallas_call(
        kern,
        out_shape=jax.ShapeDtypeStruct((B, H, W, C), jnp.float32),
        grid=(B,),
        in_specs=in_specs,
        out_specs=pl.BlockSpec((1, H, W, C), lambda b: (b, 0, 0, 0)),
        scratch_shapes=[pltpu.VMEM((H + 2, WP2, 2 * C), jnp.float32),
                        pltpu.VMEM((H + 2, WP2, C), jnp.float32)],
        compiler_params=pltpu.CompilerParams(
            dimension_semantics=("parallel",),
            vmem_limit_bytes=32 * 1024 * 1024),
    )(*operands)


# ---------------------------------------------------------------------------
# parameters (all layouts precomputed once, outside the jitted forward)
# ---------------------------------------------------------------------------
def init_params(key, H, W, C, G=GROUPS):
    assert C % G == 0, "GroupNorm requires channels divisible by num_groups"
    keys = jax.random.split(key, 12)
    cg = C // G

    def cw(k, cin, cout):
        return jax.random.normal(k, (cin, cout), jnp.float32) / np.sqrt(cin)

    def vec(k, cout, scale=0.05):
        return scale * jax.random.normal(k, (1, cout), jnp.float32)

    def conv_gn_params(k):
        k1, k2, k3, k4 = jax.random.split(k, 4)
        wgt = cw(k1, C, C)
        packed = jnp.concatenate([vec(k2, C),                    # conv bias
                                  1.0 + vec(k3, C),              # GN gamma
                                  vec(k4, C)], axis=0)           # GN beta
        return wgt, packed

    w_info2, p_info2 = conv_gn_params(keys[0])
    w_info1, p_info1 = conv_gn_params(keys[1])
    w_fea1, p_fea1 = conv_gn_params(keys[2])
    w_fea2, p_fea2 = conv_gn_params(keys[3])
    w_fus, p_fus = conv_gn_params(keys[4])

    # conv_info1 and conv_fea1 both consume the pooled ref -> fuse into one (C, 2C) matmul
    w_rf = jnp.concatenate([w_info1, w_fea1], axis=1)
    p_rf = jnp.concatenate([p_info1, p_fea1], axis=1)

    # ResBlock(2C -> C -> C): conv3x3 -> ReLU -> conv3x3 with a 1x1 skip conv (assumed)
    w1 = jax.random.normal(keys[5], (3, 3, 2 * C, C), jnp.float32) / np.sqrt(9 * 2 * C)
    w2 = jax.random.normal(keys[6], (3, 3, C, C), jnp.float32) / np.sqrt(9 * C)
    ws = jax.random.normal(keys[7], (2 * C, C), jnp.float32) / np.sqrt(2 * C)
    b1, b2, bs = vec(keys[8], C), vec(keys[9], C), vec(keys[10], C)

    # output-side im2col weight layout: Wwide[cin, (3a+b)*C + cout] = w[a, b, cin, cout]
    w1wide = jnp.transpose(w1, (2, 0, 1, 3)).reshape(2 * C, 9 * C)
    w2wide = jnp.transpose(w2, (2, 0, 1, 3)).reshape(C, 9 * C)

    # bicubic x2 (align_corners=True) as a single dense (HW, hw) interpolation matrix
    kh = bicubic_matrix(H // 2, H)
    kw = bicubic_matrix(W // 2, W)
    upmat = np.kron(kh, kw).astype(np.float32)

    bf = jnp.bfloat16
    return dict(
        w_info2=w_info2.astype(bf), p_info2=p_info2,
        w_rf=w_rf.astype(bf), p_rf=p_rf,
        w_fea2=w_fea2.astype(bf), p_fea2=p_fea2,
        w_fus=w_fus.astype(bf), p_fus=p_fus,
        ggC=jnp.asarray(group_sum_matrix(C, cg)),
        gg2C=jnp.asarray(group_sum_matrix(2 * C, cg)),
        upmat=jnp.asarray(upmat).astype(bf),
        res_w1=w1wide.astype(bf), res_b1=b1,
        res_w2=w2wide.astype(bf), res_b2=b2,
        res_ws=ws.astype(bf), res_bs=bs,
    )


if __name__ == "__main__":
    key = jax.random.PRNGKey(0)
    k_base, k_ref, k_param = jax.random.split(key, 3)

    B, C, H, W = 2, 32, 16, 16      # channels must be divisible by 16 (GroupNorm groups)
    # NHWC inputs; equivalent PyTorch NCHW shapes are (2, 32, 16, 16)
    base = jax.random.normal(k_base, (B, H, W, C), jnp.float32)
    ref = jax.random.normal(k_ref, (B, H, W, C), jnp.float32)
    P = init_params(k_param, H, W, C)

    out = jax.jit(scm_block_forward)(base, ref, P)
    out = jax.block_until_ready(out)

    assert out.shape == (B, H, W, C), out.shape
    assert bool(jnp.all(jnp.isfinite(out)))
    print("KERNEL_OK")
</pallas_src>

<mosaic_0001>
module attributes {stable_mosaic.version = 11 : i64} {
  func.func @_scm_kernel(%arg0: i32, %arg1: memref<1x16x16x32xf32, #tpu.memory_space<vmem>>, %arg2: memref<1x8x8x32xf32, #tpu.memory_space<vmem>>, %arg3: memref<1x8x8x32xf32, #tpu.memory_space<vmem>>, %arg4: memref<32x32xbf16, #tpu.memory_space<vmem>>, %arg5: memref<3x32xf32, #tpu.memory_space<vmem>>, %arg6: memref<32x64xbf16, #tpu.memory_space<vmem>>, %arg7: memref<3x64xf32, #tpu.memory_space<vmem>>, %arg8: memref<32x32xbf16, #tpu.memory_space<vmem>>, %arg9: memref<3x32xf32, #tpu.memory_space<vmem>>, %arg10: memref<32x32xbf16, #tpu.memory_space<vmem>>, %arg11: memref<3x32xf32, #tpu.memory_space<vmem>>, %arg12: memref<32x32xf32, #tpu.memory_space<vmem>>, %arg13: memref<64x64xf32, #tpu.memory_space<vmem>>, %arg14: memref<256x64xbf16, #tpu.memory_space<vmem>>, %arg15: memref<64x288xbf16, #tpu.memory_space<vmem>>, %arg16: memref<1x32xf32, #tpu.memory_space<vmem>>, %arg17: memref<32x288xbf16, #tpu.memory_space<vmem>>, %arg18: memref<1x32xf32, #tpu.memory_space<vmem>>, %arg19: memref<64x32xbf16, #tpu.memory_space<vmem>>, %arg20: memref<1x32xf32, #tpu.memory_space<vmem>>, %arg21: memref<1x16x16x32xf32, #tpu.memory_space<vmem>>, %arg22: memref<18x24x64xf32, #tpu.memory_space<vmem>>, %arg23: memref<18x24x32xf32, #tpu.memory_space<vmem>>) attributes {dimension_semantics = [#tpu.dimension_semantics<parallel>], iteration_bounds = array<i64: 2>, scalar_prefetch = 0 : i64, scratch_operands = 2 : i64, tpu.core_type = #tpu.core_type<tc>, window_params = [{transform_indices = @transform_0, window_bounds = array<i64: 1, 16, 16, 32>}, {transform_indices = @transform_1, window_bounds = array<i64: 1, 8, 8, 32>}, {transform_indices = @transform_2, window_bounds = array<i64: 1, 8, 8, 32>}, {pipeline_mode = #tpu.pipeline_mode<synchronous>, transform_indices = @transform_3, window_bounds = array<i64: 32, 32>}, {pipeline_mode = #tpu.pipeline_mode<synchronous>, transform_indices = @transform_4, window_bounds = array<i64: 3, 32>}, {pipeline_mode = #tpu.pipeline_mode<synchronous>, transform_indices = @transform_5, window_bounds = array<i64: 32, 64>}, {pipeline_mode = #tpu.pipeline_mode<synchronous>, transform_indices = @transform_6, window_bounds = array<i64: 3, 64>}, {pipeline_mode = #tpu.pipeline_mode<synchronous>, transform_indices = @transform_7, window_bounds = array<i64: 32, 32>}, {pipeline_mode = #tpu.pipeline_mode<synchronous>, transform_indices = @transform_8, window_bounds = array<i64: 3, 32>}, {pipeline_mode = #tpu.pipeline_mode<synchronous>, transform_indices = @transform_9, window_bounds = array<i64: 32, 32>}, {pipeline_mode = #tpu.pipeline_mode<synchronous>, transform_indices = @transform_10, window_bounds = array<i64: 3, 32>}, {pipeline_mode = #tpu.pipeline_mode<synchronous>, transform_indices = @transform_11, window_bounds = array<i64: 32, 32>}, {pipeline_mode = #tpu.pipeline_mode<synchronous>, transform_indices = @transform_12, window_bounds = array<i64: 64, 64>}, {pipeline_mode = #tpu.pipeline_mode<synchronous>, transform_indices = @transform_13, window_bounds = array<i64: 256, 64>}, {pipeline_mode = #tpu.pipeline_mode<synchronous>, transform_indices = @transform_14, window_bounds = array<i64: 64, 288>}, {pipeline_mode = #tpu.pipeline_mode<synchronous>, transform_indices = @transform_15, window_bounds = array<i64: 1, 32>}, {pipeline_mode = #tpu.pipeline_mode<synchronous>, transform_indices = @transform_16, window_bounds = array<i64: 32, 288>}, {pipeline_mode = #tpu.pipeline_mode<synchronous>, transform_indices = @transform_17, window_bounds = array<i64: 1, 32>}, {pipeline_mode = #tpu.pipeline_mode<synchronous>, transform_indices = @transform_18, window_bounds = array<i64: 64, 32>}, {pipeline_mode = #tpu.pipeline_mode<synchronous>, transform_indices = @transform_19, window_bounds = array<i64: 1, 32>}, {transform_indices = @transform_20, window_bounds = array<i64: 1, 16, 16, 32>}]} {
    %c0 = arith.constant 0 : index
    %c0_0 = arith.constant 0 : index
    %c0_1 = arith.constant 0 : index
    %c0_2 = arith.constant 0 : index
    %0 = vector.load %arg1[%c0, %c0_0, %c0_1, %c0_2] : memref<1x16x16x32xf32, #tpu.memory_space<vmem>>, vector<1x16x16x32xf32>
    %1 = vector.shape_cast %0 : vector<1x16x16x32xf32> to vector<16x16x32xf32>
    %2 = vector.shape_cast %1 : vector<16x16x32xf32> to vector<256x32xf32>
    %c0_3 = arith.constant 0 : index
    %c0_4 = arith.constant 0 : index
    %3 = vector.load %arg5[%c0_3, %c0_4] : memref<3x32xf32, #tpu.memory_space<vmem>>, vector<3x32xf32>
    %4 = arith.truncf %2 : vector<256x32xf32> to vector<256x32xbf16>
    %c0_5 = arith.constant 0 : index
    %c0_6 = arith.constant 0 : index
    %5 = vector.load %arg4[%c0_5, %c0_6] : memref<32x32xbf16, #tpu.memory_space<vmem>>, vector<32x32xbf16>
    %cst = arith.constant dense<0.000000e+00> : vector<256x32xf32>
    %6 = tpu.matmul %4, %5, %cst {dimension_numbers = #tpu.dot_dimension_numbers<[1], [0], [0], [1], [0, 0, 1, 1], [], []>} : vector<256x32xbf16>, vector<32x32xbf16>, vector<256x32xf32> -> vector<256x32xf32>
    %7 = vector.extract_strided_slice %3 {offsets = [0, 0], sizes = [1, 32], strides = [1, 1]} : vector<3x32xf32> to vector<1x32xf32>
    %8 = vector.broadcast %7 : vector<1x32xf32> to vector<256x32xf32>
    %9 = arith.addf %6, %8 : vector<256x32xf32>
    %cst_7 = arith.constant dense<0.000000e+00> : vector<32xf32>
    %10 = vector.multi_reduction <add>, %9, %cst_7 [0] : vector<256x32xf32> to vector<32xf32>
    %11 = vector.shape_cast %10 : vector<32xf32> to vector<1x32xf32>
    %12 = arith.mulf %9, %9 : vector<256x32xf32>
    %cst_8 = arith.constant dense<0.000000e+00> : vector<32xf32>
    %13 = vector.multi_reduction <add>, %12, %cst_8 [0] : vector<256x32xf32> to vector<32xf32>
    %14 = vector.shape_cast %13 : vector<32xf32> to vector<1x32xf32>
    %15 = tpu.concatenate %11, %14 in 0 : vector<1x32xf32>, vector<1x32xf32> -> vector<2x32xf32>
    %cst_9 = arith.constant 0.001953125 : f32
    %16 = vector.broadcast %cst_9 : f32 to vector<2x32xf32>
    %17 = arith.mulf %15, %16 : vector<2x32xf32>
    %c0_10 = arith.constant 0 : index
    %c0_11 = arith.constant 0 : index
    %18 = vector.load %arg12[%c0_10, %c0_11] : memref<32x32xf32, #tpu.memory_space<vmem>>, vector<32x32xf32>
    %cst_12 = arith.constant dense<0.000000e+00> : vector<2x32xf32>
    %19 = tpu.matmul %17, %18, %cst_12 {dimension_numbers = #tpu.dot_dimension_numbers<[1], [0], [0], [1], [0, 0, 1, 1], [], []>} : vector<2x32xf32>, vector<32x32xf32>, vector<2x32xf32> -> vector<2x32xf32>
    %20 = vector.extract_strided_slice %19 {offsets = [0, 0], sizes = [1, 32], strides = [1, 1]} : vector<2x32xf32> to vector<1x32xf32>
    %21 = vector.extract_strided_slice %19 {offsets = [1, 0], sizes = [1, 32], strides = [1, 1]} : vector<2x32xf32> to vector<1x32xf32>
    %22 = arith.mulf %20, %20 : vector<1x32xf32>
    %23 = arith.subf %21, %22 : vector<1x32xf32>
    %24 = vector.broadcast %20 : vector<1x32xf32> to vector<256x32xf32>
    %25 = arith.subf %9, %24 : vector<256x32xf32>
    %cst_13 = arith.constant 9.99999974E-6 : f32
    %26 = vector.broadcast %cst_13 : f32 to vector<1x32xf32>
    %27 = arith.addf %23, %26 : vector<1x32xf32>
    %28 = math.rsqrt %27 : vector<1x32xf32>
    %29 = vector.broadcast %28 : vector<1x32xf32> to vector<256x32xf32>
    %30 = arith.mulf %25, %29 : vector<256x32xf32>
    %31 = vector.extract_strided_slice %3 {offsets = [1, 0], sizes = [1, 32], strides = [1, 1]} : vector<3x32xf32> to vector<1x32xf32>
    %32 = vector.broadcast %31 : vector<1x32xf32> to vector<256x32xf32>
    %33 = arith.mulf %30, %32 : vector<256x32xf32>
    %34 = vector.extract_strided_slice %3 {offsets = [2, 0], sizes = [1, 32], strides = [1, 1]} : vector<3x32xf32> to vector<1x32xf32>
    %35 = vector.broadcast %34 : vector<1x32xf32> to vector<256x32xf32>
    %36 = arith.addf %33, %35 : vector<256x32xf32>
    %c0_14 = arith.constant 0 : index
    %c0_15 = arith.constant 0 : index
    %c0_16 = arith.constant 0 : index
    %c0_17 = arith.constant 0 : index
    %37 = vector.load %arg3[%c0_14, %c0_15, %c0_16, %c0_17] : memref<1x8x8x32xf32, #tpu.memory_space<vmem>>, vector<1x8x8x32xf32>
    %38 = vector.shape_cast %37 : vector<1x8x8x32xf32> to vector<8x8x32xf32>
    %39 = vector.shape_cast %38 : vector<8x8x32xf32> to vector<64x32xf32>
    %c0_18 = arith.constant 0 : index
    %c0_19 = arith.constant 0 : index
    %40 = vector.load %arg7[%c0_18, %c0_19] : memref<3x64xf32, #tpu.memory_space<vmem>>, vector<3x64xf32>
    %41 = arith.truncf %39 : vector<64x32xf32> to vector<64x32xbf16>
    %c0_20 = arith.constant 0 : index
    %c0_21 = arith.constant 0 : index
    %42 = vector.load %arg6[%c0_20, %c0_21] : memref<32x64xbf16, #tpu.memory_space<vmem>>, vector<32x64xbf16>
    %cst_22 = arith.constant dense<0.000000e+00> : vector<64x64xf32>
    %43 = tpu.matmul %41, %42, %cst_22 {dimension_numbers = #tpu.dot_dimension_numbers<[1], [0], [0], [1], [0, 0, 1, 1], [], []>} : vector<64x32xbf16>, vector<32x64xbf16>, vector<64x64xf32> -> vector<64x64xf32>
    %44 = vector.extract_strided_slice %40 {offsets = [0, 0], sizes = [1, 64], strides = [1, 1]} : vector<3x64xf32> to vector<1x64xf32>
    %45 = vector.broadcast %44 : vector<1x64xf32> to vector<64x64xf32>
    %46 = arith.addf %43, %45 : vector<64x64xf32>
    %cst_23 = arith.constant dense<0.000000e+00> : vector<64xf32>
    %47 = vector.multi_reduction <add>, %46, %cst_23 [0] : vector<64x64xf32> to vector<64xf32>
    %48 = vector.shape_cast %47 : vector<64xf32> to vector<1x64xf32>
    %49 = arith.mulf %46, %46 : vector<64x64xf32>
    %cst_24 = arith.constant dense<0.000000e+00> : vector<64xf32>
    %50 = vector.multi_reduction <add>, %49, %cst_24 [0] : vector<64x64xf32> to vector<64xf32>
    %51 = vector.shape_cast %50 : vector<64xf32> to vector<1x64xf32>
    %52 = tpu.concatenate %48, %51 in 0 : vector<1x64xf32>, vector<1x64xf32> -> vector<2x64xf32>
    %cst_25 = arith.constant 7.812500e-03 : f32
    %53 = vector.broadcast %cst_25 : f32 to vector<2x64xf32>
    %54 = arith.mulf %52, %53 : vector<2x64xf32>
    %c0_26 = arith.constant 0 : index
    %c0_27 = arith.constant 0 : index
    %55 = vector.load %arg13[%c0_26, %c0_27] : memref<64x64xf32, #tpu.memory_space<vmem>>, vector<64x64xf32>
    %cst_28 = arith.constant dense<0.000000e+00> : vector<2x64xf32>
    %56 = tpu.matmul %54, %55, %cst_28 {dimension_numbers = #tpu.dot_dimension_numbers<[1], [0], [0], [1], [0, 0, 1, 1], [], []>} : vector<2x64xf32>, vector<64x64xf32>, vector<2x64xf32> -> vector<2x64xf32>
    %57 = vector.extract_strided_slice %56 {offsets = [0, 0], sizes = [1, 64], strides = [1, 1]} : vector<2x64xf32> to vector<1x64xf32>
    %58 = vector.extract_strided_slice %56 {offsets = [1, 0], sizes = [1, 64], strides = [1, 1]} : vector<2x64xf32> to vector<1x64xf32>
    %59 = arith.mulf %57, %57 : vector<1x64xf32>
    %60 = arith.subf %58, %59 : vector<1x64xf32>
    %61 = vector.broadcast %57 : vector<1x64xf32> to vector<64x64xf32>
    %62 = arith.subf %46, %61 : vector<64x64xf32>
    %cst_29 = arith.constant 9.99999974E-6 : f32
    %63 = vector.broadcast %cst_29 : f32 to vector<1x64xf32>
    %64 = arith.addf %60, %63 : vector<1x64xf32>
    %65 = math.rsqrt %64 : vector<1x64xf32>
    %66 = vector.broadcast %65 : vector<1x64xf32> to vector<64x64xf32>
    %67 = arith.mulf %62, %66 : vector<64x64xf32>
    %68 = vector.extract_strided_slice %40 {offsets = [1, 0], sizes = [1, 64], strides = [1, 1]} : vector<3x64xf32> to vector<1x64xf32>
    %69 = vector.broadcast %68 : vector<1x64xf32> to vector<64x64xf32>
    %70 = arith.mulf %67, %69 : vector<64x64xf32>
    %71 = vector.extract_strided_slice %40 {offsets = [2, 0], sizes = [1, 64], strides = [1, 1]} : vector<3x64xf32> to vector<1x64xf32>
    %72 = vector.broadcast %71 : vector<1x64xf32> to vector<64x64xf32>
    %73 = arith.addf %70, %72 : vector<64x64xf32>
    %74 = vector.extract_strided_slice %73 {offsets = [0, 0], sizes = [64, 32], strides = [1, 1]} : vector<64x64xf32> to vector<64x32xf32>
    %75 = vector.extract_strided_slice %73 {offsets = [0, 32], sizes = [64, 32], strides = [1, 1]} : vector<64x64xf32> to vector<64x32xf32>
    %c0_30 = arith.constant 0 : index
    %c0_31 = arith.constant 0 : index
    %c0_32 = arith.constant 0 : index
    %c0_33 = arith.constant 0 : index
    %76 = vector.load %arg2[%c0_30, %c0_31, %c0_32, %c0_33] : memref<1x8x8x32xf32, #tpu.memory_space<vmem>>, vector<1x8x8x32xf32>
    %77 = vector.shape_cast %76 : vector<1x8x8x32xf32> to vector<8x8x32xf32>
    %78 = vector.shape_cast %77 : vector<8x8x32xf32> to vector<64x32xf32>
    %c0_34 = arith.constant 0 : index
    %c0_35 = arith.constant 0 : index
    %79 = vector.load %arg9[%c0_34, %c0_35] : memref<3x32xf32, #tpu.memory_space<vmem>>, vector<3x32xf32>
    %80 = arith.truncf %78 : vector<64x32xf32> to vector<64x32xbf16>
    %c0_36 = arith.constant 0 : index
    %c0_37 = arith.constant 0 : index
    %81 = vector.load %arg8[%c0_36, %c0_37] : memref<32x32xbf16, #tpu.memory_space<vmem>>, vector<32x32xbf16>
    %cst_38 = arith.constant dense<0.000000e+00> : vector<64x32xf32>
    %82 = tpu.matmul %80, %81, %cst_38 {dimension_numbers = #tpu.dot_dimension_numbers<[1], [0], [0], [1], [0, 0, 1, 1], [], []>} : vector<64x32xbf16>, vector<32x32xbf16>, vector<64x32xf32> -> vector<64x32xf32>
    %83 = vector.extract_strided_slice %79 {offsets = [0, 0], sizes = [1, 32], strides = [1, 1]} : vector<3x32xf32> to vector<1x32xf32>
    %84 = vector.broadcast %83 : vector<1x32xf32> to vector<64x32xf32>
    %85 = arith.addf %82, %84 : vector<64x32xf32>
    %cst_39 = arith.constant dense<0.000000e+00> : vector<32xf32>
    %86 = vector.multi_reduction <add>, %85, %cst_39 [0] : vector<64x32xf32> to vector<32xf32>
    %87 = vector.shape_cast %86 : vector<32xf32> to vector<1x32xf32>
    %88 = arith.mulf %85, %85 : vector<64x32xf32>
    %cst_40 = arith.constant dense<0.000000e+00> : vector<32xf32>
    %89 = vector.multi_reduction <add>, %88, %cst_40 [0] : vector<64x32xf32> to vector<32xf32>
    %90 = vector.shape_cast %89 : vector<32xf32> to vector<1x32xf32>
    %91 = tpu.concatenate %87, %90 in 0 : vector<1x32xf32>, vector<1x32xf32> -> vector<2x32xf32>
    %cst_41 = arith.constant 7.812500e-03 : f32
    %92 = vector.broadcast %cst_41 : f32 to vector<2x32xf32>
    %93 = arith.mulf %91, %92 : vector<2x32xf32>
    %c0_42 = arith.constant 0 : index
    %c0_43 = arith.constant 0 : index
    %94 = vector.load %arg12[%c0_42, %c0_43] : memref<32x32xf32, #tpu.memory_space<vmem>>, vector<32x32xf32>
    %cst_44 = arith.constant dense<0.000000e+00> : vector<2x32xf32>
    %95 = tpu.matmul %93, %94, %cst_44 {dimension_numbers = #tpu.dot_dimension_numbers<[1], [0], [0], [1], [0, 0, 1, 1], [], []>} : vector<2x32xf32>, vector<32x32xf32>, vector<2x32xf32> -> vector<2x32xf32>
    %96 = vector.extract_strided_slice %95 {offsets = [0, 0], sizes = [1, 32], strides = [1, 1]} : vector<2x32xf32> to vector<1x32xf32>
    %97 = vector.extract_strided_slice %95 {offsets = [1, 0], sizes = [1, 32], strides = [1, 1]} : vector<2x32xf32> to vector<1x32xf32>
    %98 = arith.mulf %96, %96 : vector<1x32xf32>
    %99 = arith.subf %97, %98 : vector<1x32xf32>
    %100 = vector.broadcast %96 : vector<1x32xf32> to vector<64x32xf32>
    %101 = arith.subf %85, %100 : vector<64x32xf32>
    %cst_45 = arith.constant 9.99999974E-6 : f32
    %102 = vector.broadcast %cst_45 : f32 to vector<1x32xf32>
    %103 = arith.addf %99, %102 : vector<1x32xf32>
    %104 = math.rsqrt %103 : vector<1x32xf32>
    %105 = vector.broadcast %104 : vector<1x32xf32> to vector<64x32xf32>
    %106 = arith.mulf %101, %105 : vector<64x32xf32>
    %107 = vector.extract_strided_slice %79 {offsets = [1, 0], sizes = [1, 32], strides = [1, 1]} : vector<3x32xf32> to vector<1x32xf32>
    %108 = vector.broadcast %107 : vector<1x32xf32> to vector<64x32xf32>
    %109 = arith.mulf %106, %108 : vector<64x32xf32>
    %110 = vector.extract_strided_slice %79 {offsets = [2, 0], sizes = [1, 32], strides = [1, 1]} : vector<3x32xf32> to vector<1x32xf32>
    %111 = vector.broadcast %110 : vector<1x32xf32> to vector<64x32xf32>
    %112 = arith.addf %109, %111 : vector<64x32xf32>
    %113 = arith.truncf %112 : vector<64x32xf32> to vector<64x32xbf16>
    %114 = arith.truncf %75 : vector<64x32xf32> to vector<64x32xbf16>
    %cst_46 = arith.constant dense<0.000000e+00> : vector<64x64xf32>
    %115 = tpu.matmul %113, %114, %cst_46 {dimension_numbers = #tpu.dot_dimension_numbers<[1], [1], [0], [0], [0, 0, 1, 0], [], []>} : vector<64x32xbf16>, vector<64x32xbf16>, vector<64x64xf32> -> vector<64x64xf32>
    %116 = tpu.iota {dimensions = array<i32: 0>} : vector<64x64xi32>
    %117 = arith.sitofp %116 : vector<64x64xi32> to vector<64x64xf32>
    %cst_47 = arith.constant 5.000000e-01 : f32
    %118 = vector.broadcast %cst_47 : f32 to vector<64x64xf32>
    %119 = arith.addf %117, %118 : vector<64x64xf32>
    %cst_48 = arith.constant 1.250000e-01 : f32
    %120 = vector.broadcast %cst_48 : f32 to vector<64x64xf32>
    %121 = arith.mulf %119, %120 : vector<64x64xf32>
    %122 = math.floor %121 : vector<64x64xf32>
    %123 = tpu.iota {dimensions = array<i32: 1>} : vector<64x64xi32>
    %124 = arith.sitofp %123 : vector<64x64xi32> to vector<64x64xf32>
    %cst_49 = arith.constant 5.000000e-01 : f32
    %125 = vector.broadcast %cst_49 : f32 to vector<64x64xf32>
    %126 = arith.addf %124, %125 : vector<64x64xf32>
    %cst_50 = arith.constant 1.250000e-01 : f32
    %127 = vector.broadcast %cst_50 : f32 to vector<64x64xf32>
    %128 = arith.mulf %126, %127 : vector<64x64xf32>
    %129 = math.floor %128 : vector<64x64xf32>
    %130 = arith.cmpf oeq, %122, %129 : vector<64x64xf32>
    %cst_51 = arith.constant -1.000000e+30 : f32
    %131 = vector.broadcast %cst_51 : f32 to vector<64x64xf32>
    %132 = arith.select %130, %115, %131 : vector<64x64xi1>, vector<64x64xf32>
    %cst_52 = arith.constant dense<0xFF800000> : vector<64xf32>
    %133 = vector.multi_reduction <maximumf>, %132, %cst_52 [1] : vector<64x64xf32> to vector<64xf32>
    %134 = vector.shape_cast %133 : vector<64xf32> to vector<64x1xf32>
    %135 = vector.broadcast %134 : vector<64x1xf32> to vector<64x64xf32>
    %136 = arith.subf %132, %135 : vector<64x64xf32>
    %137 = math.exp %136 : vector<64x64xf32>
    %cst_53 = arith.constant dense<0.000000e+00> : vector<64xf32>
    %138 = vector.multi_reduction <add>, %137, %cst_53 [1] : vector<64x64xf32> to vector<64xf32>
    %139 = vector.shape_cast %138 : vector<64xf32> to vector<64x1xf32>
    %140 = tpu.reciprocal %139 {approx = true} : vector<64x1xf32> -> vector<64x1xf32>
    %141 = vector.broadcast %140 : vector<64x1xf32> to vector<64x64xf32>
    %142 = arith.mulf %137, %141 : vector<64x64xf32>
    %143 = arith.truncf %142 : vector<64x64xf32> to vector<64x64xbf16>
    %144 = arith.truncf %74 : vector<64x32xf32> to vector<64x32xbf16>
    %cst_54 = arith.constant dense<0.000000e+00> : vector<64x32xf32>
    %145 = tpu.matmul %143, %144, %cst_54 {dimension_numbers = #tpu.dot_dimension_numbers<[1], [0], [0], [1], [0, 0, 1, 1], [], []>} : vector<64x64xbf16>, vector<64x32xbf16>, vector<64x32xf32> -> vector<64x32xf32>
    %c0_55 = arith.constant 0 : index
    %c0_56 = arith.constant 0 : index
    %146 = vector.load %arg14[%c0_55, %c0_56] : memref<256x64xbf16, #tpu.memory_space<vmem>>, vector<256x64xbf16>
    %147 = arith.truncf %145 : vector<64x32xf32> to vector<64x32xbf16>
    %cst_57 = arith.constant dense<0.000000e+00> : vector<256x32xf32>
    %148 = tpu.matmul %146, %147, %cst_57 {dimension_numbers = #tpu.dot_dimension_numbers<[1], [0], [0], [1], [0, 0, 1, 1], [], []>} : vector<256x64xbf16>, vector<64x32xbf16>, vector<256x32xf32> -> vector<256x32xf32>
    %c0_58 = arith.constant 0 : index
    %c0_59 = arith.constant 0 : index
    %149 = vector.load %arg11[%c0_58, %c0_59] : memref<3x32xf32, #tpu.memory_space<vmem>>, vector<3x32xf32>
    %150 = arith.truncf %148 : vector<256x32xf32> to vector<256x32xbf16>
    %c0_60 = arith.constant 0 : index
    %c0_61 = arith.constant 0 : index
    %151 = vector.load %arg10[%c0_60, %c0_61] : memref<32x32xbf16, #tpu.memory_space<vmem>>, vector<32x32xbf16>
    %cst_62 = arith.constant dense<0.000000e+00> : vector<256x32xf32>
    %152 = tpu.matmul %150, %151, %cst_62 {dimension_numbers = #tpu.dot_dimension_numbers<[1], [0], [0], [1], [0, 0, 1, 1], [], []>} : vector<256x32xbf16>, vector<32x32xbf16>, vector<256x32xf32> -> vector<256x32xf32>
    %153 = vector.extract_strided_slice %149 {offsets = [0, 0], sizes = [1, 32], strides = [1, 1]} : vector<3x32xf32> to vector<1x32xf32>
    %154 = vector.broadcast %153 : vector<1x32xf32> to vector<256x32xf32>
    %155 = arith.addf %152, %154 : vector<256x32xf32>
    %cst_63 = arith.constant dense<0.000000e+00> : vector<32xf32>
    %156 = vector.multi_reduction <add>, %155, %cst_63 [0] : vector<256x32xf32> to vector<32xf32>
    %157 = vector.shape_cast %156 : vector<32xf32> to vector<1x32xf32>
    %158 = arith.mulf %155, %155 : vector<256x32xf32>
    %cst_64 = arith.constant dense<0.000000e+00> : vector<32xf32>
    %159 = vector.multi_reduction <add>, %158, %cst_64 [0] : vector<256x32xf32> to vector<32xf32>
    %160 = vector.shape_cast %159 : vector<32xf32> to vector<1x32xf32>
    %161 = tpu.concatenate %157, %160 in 0 : vector<1x32xf32>, vector<1x32xf32> -> vector<2x32xf32>
    %cst_65 = arith.constant 0.001953125 : f32
    %162 = vector.broadcast %cst_65 : f32 to vector<2x32xf32>
    %163 = arith.mulf %161, %162 : vector<2x32xf32>
    %c0_66 = arith.constant 0 : index
    %c0_67 = arith.constant 0 : index
    %164 = vector.load %arg12[%c0_66, %c0_67] : memref<32x32xf32, #tpu.memory_space<vmem>>, vector<32x32xf32>
    %cst_68 = arith.constant dense<0.000000e+00> : vector<2x32xf32>
    %165 = tpu.matmul %163, %164, %cst_68 {dimension_numbers = #tpu.dot_dimension_numbers<[1], [0], [0], [1], [0, 0, 1, 1], [], []>} : vector<2x32xf32>, vector<32x32xf32>, vector<2x32xf32> -> vector<2x32xf32>
    %166 = vector.extract_strided_slice %165 {offsets = [0, 0], sizes = [1, 32], strides = [1, 1]} : vector<2x32xf32> to vector<1x32xf32>
    %167 = vector.extract_strided_slice %165 {offsets = [1, 0], sizes = [1, 32], strides = [1, 1]} : vector<2x32xf32> to vector<1x32xf32>
    %168 = arith.mulf %166, %166 : vector<1x32xf32>
    %169 = arith.subf %167, %168 : vector<1x32xf32>
    %170 = vector.broadcast %166 : vector<1x32xf32> to vector<256x32xf32>
    %171 = arith.subf %155, %170 : vector<256x32xf32>
    %cst_69 = arith.constant 9.99999974E-6 : f32
    %172 = vector.broadcast %cst_69 : f32 to vector<1x32xf32>
    %173 = arith.addf %169, %172 : vector<1x32xf32>
    %174 = math.rsqrt %173 : vector<1x32xf32>
    %175 = vector.broadcast %174 : vector<1x32xf32> to vector<256x32xf32>
    %176 = arith.mulf %171, %175 : vector<256x32xf32>
    %177 = vector.extract_strided_slice %149 {offsets = [1, 0], sizes = [1, 32], strides = [1, 1]} : vector<3x32xf32> to vector<1x32xf32>
    %178 = vector.broadcast %177 : vector<1x32xf32> to vector<256x32xf32>
    %179 = arith.mulf %176, %178 : vector<256x32xf32>
    %180 = vector.extract_strided_slice %149 {offsets = [2, 0], sizes = [1, 32], strides = [1, 1]} : vector<3x32xf32> to vector<1x32xf32>
    %181 = vector.broadcast %180 : vector<1x32xf32> to vector<256x32xf32>
    %182 = arith.addf %179, %181 : vector<256x32xf32>
    %cst_70 = arith.constant 0.000000e+00 : f32
    %183 = vector.broadcast %cst_70 : f32 to vector<18x24x64xf32>
    %c0_71 = arith.constant 0 : index
    %c0_72 = arith.constant 0 : index
    %c0_73 = arith.constant 0 : index
    %184 = vector.load %arg22[%c0_71, %c0_72, %c0_73] : memref<18x24x64xf32, #tpu.memory_space<vmem>>, vector<18x24x64xf32>
    tpu.vector_store %arg22[%c0_71, %c0_72, %c0_73], %183 {strides = array<i32>} : memref<18x24x64xf32, #tpu.memory_space<vmem>>, vector<18x24x64xf32>,
    %185 = vector.shape_cast %182 : vector<256x32xf32> to vector<16x16x32xf32>
    %c1 = arith.constant 1 : index
    %c1_74 = arith.constant 1 : index
    %c0_75 = arith.constant 0 : index
    %186 = vector.load %arg22[%c1, %c1_74, %c0_75] : memref<18x24x64xf32, #tpu.memory_space<vmem>>, vector<16x16x32xf32>
    tpu.vector_store %arg22[%c1, %c1_74, %c0_75], %185 {strides = array<i32>} : memref<18x24x64xf32, #tpu.memory_space<vmem>>, vector<16x16x32xf32>,
    %187 = vector.shape_cast %36 : vector<256x32xf32> to vector<16x16x32xf32>
    %c1_76 = arith.constant 1 : index
    %c1_77 = arith.constant 1 : index
    %c32 = arith.constant 32 : index
    %188 = vector.load %arg22[%c1_76, %c1_77, %c32] : memref<18x24x64xf32, #tpu.memory_space<vmem>>, vector<16x16x32xf32>
    tpu.vector_store %arg22[%c1_76, %c1_77, %c32], %187 {strides = array<i32>} : memref<18x24x64xf32, #tpu.memory_space<vmem>>, vector<16x16x32xf32>,
    %c0_78 = arith.constant 0 : index
    %c0_79 = arith.constant 0 : index
    %c0_80 = arith.constant 0 : index
    %189 = vector.load %arg22[%c0_78, %c0_79, %c0_80] : memref<18x24x64xf32, #tpu.memory_space<vmem>>, vector<18x24x64xf32>
    %190 = vector.shape_cast %189 : vector<18x24x64xf32> to vector<432x64xf32>
    %191 = arith.truncf %190 : vector<432x64xf32> to vector<432x64xbf16>
    %c0_81 = arith.constant 0 : index
    %c0_82 = arith.constant 0 : index
    %192 = vector.load %arg15[%c0_81, %c0_82] : memref<64x288xbf16, #tpu.memory_space<vmem>>, vector<64x288xbf16>
    %cst_83 = arith.constant dense<0.000000e+00> : vector<432x288xf32>
    %193 = tpu.matmul %191, %192, %cst_83 {dimension_numbers = #tpu.dot_dimension_numbers<[1], [0], [0], [1], [0, 0, 1, 1], [], []>} : vector<432x64xbf16>, vector<64x288xbf16>, vector<432x288xf32> -> vector<432x288xf32>
    %194 = vector.shape_cast %193 : vector<432x288xf32> to vector<18x24x288xf32>
    %c0_84 = arith.constant 0 : index
    %c0_85 = arith.constant 0 : index
    %195 = vector.load %arg16[%c0_84, %c0_85] : memref<1x32xf32, #tpu.memory_space<vmem>>, vector<1x32xf32>
    %196 = vector.shape_cast %195 : vector<1x32xf32> to vector<1x1x32xf32>
    %197 = vector.extract_strided_slice %194 {offsets = [0, 0, 0], sizes = [16, 16, 32], strides = [1, 1, 1]} : vector<18x24x288xf32> to vector<16x16x32xf32>
    %198 = vector.broadcast %196 : vector<1x1x32xf32> to vector<16x16x32xf32>
    %199 = arith.addf %198, %197 : vector<16x16x32xf32>
    %200 = vector.extract_strided_slice %194 {offsets = [0, 1, 32], sizes = [16, 16, 32], strides = [1, 1, 1]} : vector<18x24x288xf32> to vector<16x16x32xf32>
    %201 = arith.addf %199, %200 : vector<16x16x32xf32>
    %202 = vector.extract_strided_slice %194 {offsets = [0, 2, 64], sizes = [16, 16, 32], strides = [1, 1, 1]} : vector<18x24x288xf32> to vector<16x16x32xf32>
    %203 = arith.addf %201, %202 : vector<16x16x32xf32>
    %204 = vector.extract_strided_slice %194 {offsets = [1, 0, 96], sizes = [16, 16, 32], strides = [1, 1, 1]} : vector<18x24x288xf32> to vector<16x16x32xf32>
    %205 = arith.addf %203, %204 : vector<16x16x32xf32>
    %206 = vector.extract_strided_slice %194 {offsets = [1, 1, 128], sizes = [16, 16, 32], strides = [1, 1, 1]} : vector<18x24x288xf32> to vector<16x16x32xf32>
    %207 = arith.addf %205, %206 : vector<16x16x32xf32>
    %208 = vector.extract_strided_slice %194 {offsets = [1, 2, 160], sizes = [16, 16, 32], strides = [1, 1, 1]} : vector<18x24x288xf32> to vector<16x16x32xf32>
    %209 = arith.addf %207, %208 : vector<16x16x32xf32>
    %210 = vector.extract_strided_slice %194 {offsets = [2, 0, 192], sizes = [16, 16, 32], strides = [1, 1, 1]} : vector<18x24x288xf32> to vector<16x16x32xf32>
    %211 = arith.addf %209, %210 : vector<16x16x32xf32>
    %212 = vector.extract_strided_slice %194 {offsets = [2, 1, 224], sizes = [16, 16, 32], strides = [1, 1, 1]} : vector<18x24x288xf32> to vector<16x16x32xf32>
    %213 = arith.addf %211, %212 : vector<16x16x32xf32>
    %214 = vector.extract_strided_slice %194 {offsets = [2, 2, 256], sizes = [16, 16, 32], strides = [1, 1, 1]} : vector<18x24x288xf32> to vector<16x16x32xf32>
    %215 = arith.addf %213, %214 : vector<16x16x32xf32>
    %cst_86 = arith.constant 0.000000e+00 : f32
    %216 = vector.broadcast %cst_86 : f32 to vector<16x16x32xf32>
    %217 = arith.maximumf %215, %216 : vector<16x16x32xf32>
    %cst_87 = arith.constant 0.000000e+00 : f32
    %218 = vector.broadcast %cst_87 : f32 to vector<18x24x32xf32>
    %c0_88 = arith.constant 0 : index
    %c0_89 = arith.constant 0 : index
    %c0_90 = arith.constant 0 : index
    %219 = vector.load %arg23[%c0_88, %c0_89, %c0_90] : memref<18x24x32xf32, #tpu.memory_space<vmem>>, vector<18x24x32xf32>
    tpu.vector_store %arg23[%c0_88, %c0_89, %c0_90], %218 {strides = array<i32>} : memref<18x24x32xf32, #tpu.memory_space<vmem>>, vector<18x24x32xf32>,
    %c1_91 = arith.constant 1 : index
    %c1_92 = arith.constant 1 : index
    %c0_93 = arith.constant 0 : index
    %220 = vector.load %arg23[%c1_91, %c1_92, %c0_93] : memref<18x24x32xf32, #tpu.memory_space<vmem>>, vector<16x16x32xf32>
    tpu.vector_store %arg23[%c1_91, %c1_92, %c0_93], %217 {strides = array<i32>} : memref<18x24x32xf32, #tpu.memory_space<vmem>>, vector<16x16x32xf32>,
    %c0_94 = arith.constant 0 : index
    %c0_95 = arith.constant 0 : index
    %c0_96 = arith.constant 0 : index
    %221 = vector.load %arg23[%c0_94, %c0_95, %c0_96] : memref<18x24x32xf32, #tpu.memory_space<vmem>>, vector<18x24x32xf32>
    %222 = vector.shape_cast %221 : vector<18x24x32xf32> to vector<432x32xf32>
    %223 = arith.truncf %222 : vector<432x32xf32> to vector<432x32xbf16>
    %c0_97 = arith.constant 0 : index
    %c0_98 = arith.constant 0 : index
    %224 = vector.load %arg17[%c0_97, %c0_98] : memref<32x288xbf16, #tpu.memory_space<vmem>>, vector<32x288xbf16>
    %cst_99 = arith.constant dense<0.000000e+00> : vector<432x288xf32>
    %225 = tpu.matmul %223, %224, %cst_99 {dimension_numbers = #tpu.dot_dimension_numbers<[1], [0], [0], [1], [0, 0, 1, 1], [], []>} : vector<432x32xbf16>, vector<32x288xbf16>, vector<432x288xf32> -> vector<432x288xf32>
    %226 = vector.shape_cast %225 : vector<432x288xf32> to vector<18x24x288xf32>
    %c0_100 = arith.constant 0 : index
    %c0_101 = arith.constant 0 : index
    %227 = vector.load %arg18[%c0_100, %c0_101] : memref<1x32xf32, #tpu.memory_space<vmem>>, vector<1x32xf32>
    %228 = vector.shape_cast %227 : vector<1x32xf32> to vector<1x1x32xf32>
    %229 = vector.extract_strided_slice %226 {offsets = [0, 0, 0], sizes = [16, 16, 32], strides = [1, 1, 1]} : vector<18x24x288xf32> to vector<16x16x32xf32>
    %230 = vector.broadcast %228 : vector<1x1x32xf32> to vector<16x16x32xf32>
    %231 = arith.addf %230, %229 : vector<16x16x32xf32>
    %232 = vector.extract_strided_slice %226 {offsets = [0, 1, 32], sizes = [16, 16, 32], strides = [1, 1, 1]} : vector<18x24x288xf32> to vector<16x16x32xf32>
    %233 = arith.addf %231, %232 : vector<16x16x32xf32>
    %234 = vector.extract_strided_slice %226 {offsets = [0, 2, 64], sizes = [16, 16, 32], strides = [1, 1, 1]} : vector<18x24x288xf32> to vector<16x16x32xf32>
    %235 = arith.addf %233, %234 : vector<16x16x32xf32>
    %236 = vector.extract_strided_slice %226 {offsets = [1, 0, 96], sizes = [16, 16, 32], strides = [1, 1, 1]} : vector<18x24x288xf32> to vector<16x16x32xf32>
    %237 = arith.addf %235, %236 : vector<16x16x32xf32>
    %238 = vector.extract_strided_slice %226 {offsets = [1, 1, 128], sizes = [16, 16, 32], strides = [1, 1, 1]} : vector<18x24x288xf32> to vector<16x16x32xf32>
    %239 = arith.addf %237, %238 : vector<16x16x32xf32>
    %240 = vector.extract_strided_slice %226 {offsets = [1, 2, 160], sizes = [16, 16, 32], strides = [1, 1, 1]} : vector<18x24x288xf32> to vector<16x16x32xf32>
    %241 = arith.addf %239, %240 : vector<16x16x32xf32>
    %242 = vector.extract_strided_slice %226 {offsets = [2, 0, 192], sizes = [16, 16, 32], strides = [1, 1, 1]} : vector<18x24x288xf32> to vector<16x16x32xf32>
    %243 = arith.addf %241, %242 : vector<16x16x32xf32>
    %244 = vector.extract_strided_slice %226 {offsets = [2, 1, 224], sizes = [16, 16, 32], strides = [1, 1, 1]} : vector<18x24x288xf32> to vector<16x16x32xf32>
    %245 = arith.addf %243, %244 : vector<16x16x32xf32>
    %246 = vector.extract_strided_slice %226 {offsets = [2, 2, 256], sizes = [16, 16, 32], strides = [1, 1, 1]} : vector<18x24x288xf32> to vector<16x16x32xf32>
    %247 = arith.addf %245, %246 : vector<16x16x32xf32>
    %248 = arith.truncf %182 : vector<256x32xf32> to vector<256x32xbf16>
    %c0_102 = arith.constant 0 : index
    %c0_103 = arith.constant 0 : index
    %249 = vector.load %arg19[%c0_102, %c0_103] : memref<64x32xbf16, #tpu.memory_space<vmem>>, vector<32x32xbf16>
    %cst_104 = arith.constant dense<0.000000e+00> : vector<256x32xf32>
    %250 = tpu.matmul %248, %249, %cst_104 {dimension_numbers = #tpu.dot_dimension_numbers<[1], [0], [0], [1], [0, 0, 1, 1], [], []>} : vector<256x32xbf16>, vector<32x32xbf16>, vector<256x32xf32> -> vector<256x32xf32>
    %251 = arith.truncf %36 : vector<256x32xf32> to vector<256x32xbf16>
    %c32_105 = arith.constant 32 : index
    %c0_106 = arith.constant 0 : index
    %252 = vector.load %arg19[%c32_105, %c0_106] : memref<64x32xbf16, #tpu.memory_space<vmem>>, vector<32x32xbf16>
    %cst_107 = arith.constant dense<0.000000e+00> : vector<256x32xf32>
    %253 = tpu.matmul %251, %252, %cst_107 {dimension_numbers = #tpu.dot_dimension_numbers<[1], [0], [0], [1], [0, 0, 1, 1], [], []>} : vector<256x32xbf16>, vector<32x32xbf16>, vector<256x32xf32> -> vector<256x32xf32>
    %254 = arith.addf %250, %253 : vector<256x32xf32>
    %c0_108 = arith.constant 0 : index
    %c0_109 = arith.constant 0 : index
    %255 = vector.load %arg20[%c0_108, %c0_109] : memref<1x32xf32, #tpu.memory_space<vmem>>, vector<1x32xf32>
    %256 = vector.broadcast %255 : vector<1x32xf32> to vector<256x32xf32>
    %257 = arith.addf %254, %256 : vector<256x32xf32>
    %258 = vector.shape_cast %257 : vector<256x32xf32> to vector<16x16x32xf32>
    %259 = arith.addf %247, %258 : vector<16x16x32xf32>
    %c0_110 = arith.constant 0 : index
    %c0_111 = arith.constant 0 : index
    %c0_112 = arith.constant 0 : index
    %c0_113 = arith.constant 0 : index
    %260 = vector.load %arg21[%c0_110, %c0_111, %c0_112, %c0_113] : memref<1x16x16x32xf32, #tpu.memory_space<vmem>>, vector<1x16x16x32xf32>
    %261 = vector.shape_cast %260 : vector<1x16x16x32xf32> to vector<16x16x32xf32>
    %262 = vector.shape_cast %259 : vector<16x16x32xf32> to vector<1x16x16x32xf32>
    tpu.vector_store %arg21[%c0_110, %c0_111, %c0_112, %c0_113], %262 {strides = array<i32>} : memref<1x16x16x32xf32, #tpu.memory_space<vmem>>, vector<1x16x16x32xf32>,
    return
  }
  func.func @transform_0(%arg0: i32) -> (i32, i32, i32, i32) {
    %c0_i32 = arith.constant 0 : i32
    %c0_i32_0 = arith.constant 0 : i32
    %c0_i32_1 = arith.constant 0 : i32
    %c0_i32_2 = arith.constant 0 : i32
    return %arg0, %c0_i32, %c0_i32_0, %c0_i32_1 : i32, i32, i32, i32
  }
  func.func @transform_1(%arg0: i32) -> (i32, i32, i32, i32) {
    %c0_i32 = arith.constant 0 : i32
    %c0_i32_0 = arith.constant 0 : i32
    %c0_i32_1 = arith.constant 0 : i32
    %c0_i32_2 = arith.constant 0 : i32
    return %arg0, %c0_i32, %c0_i32_0, %c0_i32_1 : i32, i32, i32, i32
  }
  func.func @transform_2(%arg0: i32) -> (i32, i32, i32, i32) {
    %c2_i32 = arith.constant 2 : i32
    %0 = arith.addi %arg0, %c2_i32 : i32
    %c0_i32 = arith.constant 0 : i32
    %c0_i32_0 = arith.constant 0 : i32
    %c0_i32_1 = arith.constant 0 : i32
    %c0_i32_2 = arith.constant 0 : i32
    return %0, %c0_i32, %c0_i32_0, %c0_i32_1 : i32, i32, i32, i32
  }
  func.func @transform_3(%arg0: i32) -> (i32, i32) {
    %c0_i32 = arith.constant 0 : i32
    %c0_i32_0 = arith.constant 0 : i32
    %c0_i32_1 = arith.constant 0 : i32
    return %c0_i32, %c0_i32_0 : i32, i32
  }
  func.func @transform_4(%arg0: i32) -> (i32, i32) {
    %c0_i32 = arith.constant 0 : i32
    %c0_i32_0 = arith.constant 0 : i32
    %c0_i32_1 = arith.constant 0 : i32
    return %c0_i32, %c0_i32_0 : i32, i32
  }
  func.func @transform_5(%arg0: i32) -> (i32, i32) {
    %c0_i32 = arith.constant 0 : i32
    %c0_i32_0 = arith.constant 0 : i32
    %c0_i32_1 = arith.constant 0 : i32
    return %c0_i32, %c0_i32_0 : i32, i32
  }
  func.func @transform_6(%arg0: i32) -> (i32, i32) {
    %c0_i32 = arith.constant 0 : i32
    %c0_i32_0 = arith.constant 0 : i32
    %c0_i32_1 = arith.constant 0 : i32
    return %c0_i32, %c0_i32_0 : i32, i32
  }
  func.func @transform_7(%arg0: i32) -> (i32, i32) {
    %c0_i32 = arith.constant 0 : i32
    %c0_i32_0 = arith.constant 0 : i32
    %c0_i32_1 = arith.constant 0 : i32
    return %c0_i32, %c0_i32_0 : i32, i32
  }
  func.func @transform_8(%arg0: i32) -> (i32, i32) {
    %c0_i32 = arith.constant 0 : i32
    %c0_i32_0 = arith.constant 0 : i32
    %c0_i32_1 = arith.constant 0 : i32
    return %c0_i32, %c0_i32_0 : i32, i32
  }
  func.func @transform_9(%arg0: i32) -> (i32, i32) {
    %c0_i32 = arith.constant 0 : i32
    %c0_i32_0 = arith.constant 0 : i32
    %c0_i32_1 = arith.constant 0 : i32
    return %c0_i32, %c0_i32_0 : i32, i32
  }
  func.func @transform_10(%arg0: i32) -> (i32, i32) {
    %c0_i32 = arith.constant 0 : i32
    %c0_i32_0 = arith.constant 0 : i32
    %c0_i32_1 = arith.constant 0 : i32
    return %c0_i32, %c0_i32_0 : i32, i32
  }
  func.func @transform_11(%arg0: i32) -> (i32, i32) {
    %c0_i32 = arith.constant 0 : i32
    %c0_i32_0 = arith.constant 0 : i32
    %c0_i32_1 = arith.constant 0 : i32
    return %c0_i32, %c0_i32_0 : i32, i32
  }
  func.func @transform_12(%arg0: i32) -> (i32, i32) {
    %c0_i32 = arith.constant 0 : i32
    %c0_i32_0 = arith.constant 0 : i32
    %c0_i32_1 = arith.constant 0 : i32
    return %c0_i32, %c0_i32_0 : i32, i32
  }
  func.func @transform_13(%arg0: i32) -> (i32, i32) {
    %c0_i32 = arith.constant 0 : i32
    %c0_i32_0 = arith.constant 0 : i32
    %c0_i32_1 = arith.constant 0 : i32
    return %c0_i32, %c0_i32_0 : i32, i32
  }
  func.func @transform_14(%arg0: i32) -> (i32, i32) {
    %c0_i32 = arith.constant 0 : i32
    %c0_i32_0 = arith.constant 0 : i32
    %c0_i32_1 = arith.constant 0 : i32
    return %c0_i32, %c0_i32_0 : i32, i32
  }
  func.func @transform_15(%arg0: i32) -> (i32, i32) {
    %c0_i32 = arith.constant 0 : i32
    %c0_i32_0 = arith.constant 0 : i32
    %c0_i32_1 = arith.constant 0 : i32
    return %c0_i32, %c0_i32_0 : i32, i32
  }
  func.func @transform_16(%arg0: i32) -> (i32, i32) {
    %c0_i32 = arith.constant 0 : i32
    %c0_i32_0 = arith.constant 0 : i32
    %c0_i32_1 = arith.constant 0 : i32
    return %c0_i32, %c0_i32_0 : i32, i32
  }
  func.func @transform_17(%arg0: i32) -> (i32, i32) {
    %c0_i32 = arith.constant 0 : i32
    %c0_i32_0 = arith.constant 0 : i32
    %c0_i32_1 = arith.constant 0 : i32
    return %c0_i32, %c0_i32_0 : i32, i32
  }
  func.func @transform_18(%arg0: i32) -> (i32, i32) {
    %c0_i32 = arith.constant 0 : i32
    %c0_i32_0 = arith.constant 0 : i32
    %c0_i32_1 = arith.constant 0 : i32
    return %c0_i32, %c0_i32_0 : i32, i32
  }
  func.func @transform_19(%arg0: i32) -> (i32, i32) {
    %c0_i32 = arith.constant 0 : i32
    %c0_i32_0 = arith.constant 0 : i32
    %c0_i32_1 = arith.constant 0 : i32
    return %c0_i32, %c0_i32_0 : i32, i32
  }
  func.func @transform_20(%arg0: i32) -> (i32, i32, i32, i32) {
    %c0_i32 = arith.constant 0 : i32
    %c0_i32_0 = arith.constant 0 : i32
    %c0_i32_1 = arith.constant 0 : i32
    %c0_i32_2 = arith.constant 0 : i32
    return %arg0, %c0_i32, %c0_i32_0, %c0_i32_1 : i32, i32, i32, i32
  }
}

</mosaic_0001>

<llo_original>
// kernel: scm_block_forward.1
$region0: #{scm_block_forward.1}
  #allocation0 [shape = 'u32[]', space=smem, size = 0x4, offset = 0x4, fixed_abs, tag = 'smem constant byte address 0x4 - core index']
  #allocation1 [shape = 'u32[144,128]{1,0:T(1,128)}', space=vmem, size = 0x12000, scoped, tag = 'internal scratch']
  #allocation2 [shape = 'f32[18,24,64]{2,1,0:T(8,128)}', space=vmem, size = 0x36000, scoped, tag = 'scratch operand']
  #allocation3 [shape = 'f32[18,24,32]{2,1,0:T(8,128)}', space=vmem, size = 0x36000, scoped, tag = 'scratch operand']
  %s0 = inlined_call_operand.vmem [shape: f32[2,16,16,32], index: 0, kind: input, shape index: {}]
  %s1 = inlined_call_operand.vmem [shape: f32[4,8,8,32], index: 1, kind: input, shape index: {}, may-alias: {1,2}]
  %s2 = inlined_call_operand.vmem [shape: f32[4,8,8,32], index: 2, kind: input, shape index: {}, may-alias: {1,2}]
  %s3 = inlined_call_operand.vmem [shape: bf16[32,32], index: 3, kind: input, shape index: {}]
  %s4 = inlined_call_operand.vmem [shape: f32[3,32], index: 4, kind: input, shape index: {}]
  %s5 = inlined_call_operand.vmem [shape: bf16[32,64], index: 5, kind: input, shape index: {}]
  %s6 = inlined_call_operand.vmem [shape: f32[3,64], index: 6, kind: input, shape index: {}]
  %s7 = inlined_call_operand.vmem [shape: bf16[32,32], index: 7, kind: input, shape index: {}]
  %s8 = inlined_call_operand.vmem [shape: f32[3,32], index: 8, kind: input, shape index: {}]
  %s9 = inlined_call_operand.vmem [shape: bf16[32,32], index: 9, kind: input, shape index: {}]
  %s10 = inlined_call_operand.vmem [shape: f32[3,32], index: 10, kind: input, shape index: {}]
  %s11 = inlined_call_operand.vmem [shape: f32[32,32], index: 11, kind: input, shape index: {}]
  %s12 = inlined_call_operand.vmem [shape: f32[64,64], index: 12, kind: input, shape index: {}]
  %s13 = inlined_call_operand.vmem [shape: bf16[256,64], index: 13, kind: input, shape index: {}]
  %s14 = inlined_call_operand.vmem [shape: bf16[64,288], index: 14, kind: input, shape index: {}]
  %s15 = inlined_call_operand.vmem [shape: f32[1,32], index: 15, kind: input, shape index: {}]
  %s16 = inlined_call_operand.vmem [shape: bf16[32,288], index: 16, kind: input, shape index: {}]
  %s17 = inlined_call_operand.vmem [shape: f32[1,32], index: 17, kind: input, shape index: {}]
  %s18 = inlined_call_operand.vmem [shape: bf16[64,32], index: 18, kind: input, shape index: {}]
  %s19 = inlined_call_operand.vmem [shape: f32[1,32], index: 19, kind: input, shape index: {}]
  %s20 = inlined_call_operand.hbm [shape: f32[2,16,16,32], index: 20, kind: output, shape index: {}]
  %s21 = sld [smem:[#allocation0]]
  $region113: #{scm_block_forward.1} parent=0
    _
  %s23 = ssub.s32 1, %s21
  %s24 = scalar_select 0, %s23, %s21
  $region1: #{scm_block_forward.1} parent=0
    #allocation4 [shape = 'u8[262144]{0}', space=vmem, size = 0x40000, scoped, tag = 'output window, operand 0']
    #allocation5 [shape = 's32[2]{0}', space=sflag, size = 0x8, scoped, tag = 'scoped memory for scm_block_forward.1']
    %25 = vsyncpa [#allocation5], 0
    %s26 = scalar_lea.sflag [#allocation5], 1
    %27 = vsyncpa %s26, 0
    loop: start=0, step=1, limit=4
    $region2: #{scm_block_forward.1} parent=1 // loop_pre_header
      _
    $region3: #{scm_block_forward.1} parent=1 // loop_header
      %s29 = sphi 0, %s33
      %p30 = scmp.ge.s32.totalorder %s29, 4
      %s39 = sphi 0, %s41
      %s42 = sphi 0, %s39
      %s43 = sphi 0, %s42
      %s59 = sphi 0, %s43
      %s65 = sphi 0, %s67
      %s68 = sphi 0, %s65
      %s69 = sphi 0, %s68
      %s85 = sphi 0, %s69
      %s93 = sphi 0, %s95
      %s96 = sphi 0, %s93
      %s97 = sphi 0, %s96
      %s113 = sphi 0, %s97
      %s117 = sphi 0, %s117
      %s119 = sphi 0, %s117
      %s120 = sphi 0, %s119
      %s134 = sphi 0, %s120
      %s138 = sphi 0, %s138
      %s140 = sphi 0, %s138
      %s141 = sphi 0, %s140
      %s155 = sphi 0, %s141
      %s159 = sphi 0, %s159
      %s161 = sphi 0, %s159
      %s162 = sphi 0, %s161
      %s176 = sphi 0, %s162
      %s180 = sphi 0, %s180
      %s182 = sphi 0, %s180
      %s183 = sphi 0, %s182
      %s197 = sphi 0, %s183
      %s201 = sphi 0, %s201
      %s203 = sphi 0, %s201
      %s204 = sphi 0, %s203
      %s218 = sphi 0, %s204
      %s222 = sphi 0, %s222
      %s224 = sphi 0, %s222
      %s225 = sphi 0, %s224
      %s239 = sphi 0, %s225
      %s243 = sphi 0, %s243
      %s245 = sphi 0, %s243
      %s246 = sphi 0, %s245
      %s260 = sphi 0, %s246
      %s264 = sphi 0, %s264
      %s266 = sphi 0, %s264
      %s267 = sphi 0, %s266
      %s281 = sphi 0, %s267
      %s285 = sphi 0, %s285
      %s287 = sphi 0, %s285
      %s288 = sphi 0, %s287
      %s302 = sphi 0, %s288
      %s306 = sphi 0, %s306
      %s308 = sphi 0, %s306
      %s309 = sphi 0, %s308
      %s323 = sphi 0, %s309
      %s327 = sphi 0, %s327
      %s329 = sphi 0, %s327
      %s330 = sphi 0, %s329
      %s344 = sphi 0, %s330
      %s348 = sphi 0, %s348
      %s350 = sphi 0, %s348
      %s351 = sphi 0, %s350
      %s365 = sphi 0, %s351
      %s369 = sphi 0, %s369
      %s371 = sphi 0, %s369
      %s372 = sphi 0, %s371
      %s386 = sphi 0, %s372
      %s390 = sphi 0, %s390
      %s392 = sphi 0, %s390
      %s393 = sphi 0, %s392
      %s407 = sphi 0, %s393
      %s411 = sphi 0, %s411
      %s413 = sphi 0, %s411
      %s414 = sphi 0, %s413
      %s428 = sphi 0, %s414
      %s432 = sphi 0, %s432
      %s434 = sphi 0, %s432
      %s435 = sphi 0, %s434
      %s449 = sphi 0, %s435
      %s453 = sphi 0, %s453
      %s455 = sphi 0, %s453
      %s456 = sphi 0, %s455
      %s470 = sphi 0, %s456
      %s476 = sphi 0, %s478
      %s479 = sphi 0, %s476
      %s480 = sphi 0, %s479
      %s496 = sphi 0, %s480
    $region4: #{scm_block_forward.1} parent=1 // loop_header_branch
      %32 = sbr.rel (%p30) target = $region8
    $region5: #{scm_block_forward.1} parent=1 // loop_body
      %s34 = ssub.s32 %s29, 1
      %s35 = ssub.s32 %s29, 2
      %s36 = sadd.s32 %s29, 1
      %s37 = ssub.s32 %s29, %s36
      %p38 = scmp.eq.s32.totalorder %s37, 0
      %s40 = sadd.s32 %s39, 1
      %s41 = scalar_select %p38, %s39, %s40
      %p44 = pneg %p38
      %p45 = scmp.eq.s32.totalorder %s29, 1
      %p46 = por %p44, %p45
      %p47 = scmp.ne.s32.totalorder %s39, %s42
      %p48 = scmp.eq.s32.totalorder %s29, 0
      %p49 = por %p47, %p48
      %p50 = scmp.ne.s32.totalorder %s39, %s42
      %p51 = scmp.eq.s32.totalorder %s34, 1
      %p52 = por %p50, %p51
      %p53 = scmp.ne.s32.totalorder %s42, %s43
      %p54 = scmp.eq.s32.totalorder %s34, 0
      %p55 = por %p53, %p54
      %p56 = scmp.ne.s32.totalorder %s42, %s43
      %p57 = scmp.eq.s32.totalorder %s35, 1
      %p58 = por %p56, %p57
      %p60 = scmp.ne.s32.totalorder %s43, %s59
      %p61 = scmp.eq.s32.totalorder %s35, 0
      %p62 = por %p60, %p61
      %s63 = ssub.s32 %s29, %s36
      %p64 = scmp.eq.s32.totalorder %s63, 0
      %s66 = sadd.s32 %s65, 1
      %s67 = scalar_select %p64, %s65, %s66
      %p70 = pneg %p64
      %p71 = scmp.eq.s32.totalorder %s29, 1
      %p72 = por %p70, %p71
      %p73 = scmp.ne.s32.totalorder %s65, %s68
      %p74 = scmp.eq.s32.totalorder %s29, 0
      %p75 = por %p73, %p74
      %p76 = scmp.ne.s32.totalorder %s65, %s68
      %p77 = scmp.eq.s32.totalorder %s34, 1
      %p78 = por %p76, %p77
      %p79 = scmp.ne.s32.totalorder %s68, %s69
      %p80 = scmp.eq.s32.totalorder %s34, 0
      %p81 = por %p79, %p80
      %p82 = scmp.ne.s32.totalorder %s68, %s69
      %p83 = scmp.eq.s32.totalorder %s35, 1
      %p84 = por %p82, %p83
      %p86 = scmp.ne.s32.totalorder %s69, %s85
      %p87 = scmp.eq.s32.totalorder %s35, 0
      %p88 = por %p86, %p87
      %s89 = sadd.s32 %s29, 2
      %s90 = sadd.s32 %s36, 2
      %s91 = ssub.s32 %s89, %s90
      %p92 = scmp.eq.s32.totalorder %s91, 0
      %s94 = sadd.s32 %s93, 1
      %s95 = scalar_select %p92, %s93, %s94
      %p98 = pneg %p92
      %p99 = scmp.eq.s32.totalorder %s29, 1
      %p100 = por %p98, %p99
      %p101 = scmp.ne.s32.totalorder %s93, %s96
      %p102 = scmp.eq.s32.totalorder %s29, 0
      %p103 = por %p101, %p102
      %p104 = scmp.ne.s32.totalorder %s93, %s96
      %p105 = scmp.eq.s32.totalorder %s34, 1
      %p106 = por %p104, %p105
      %p107 = scmp.ne.s32.totalorder %s96, %s97
      %p108 = scmp.eq.s32.totalorder %s34, 0
      %p109 = por %p107, %p108
      %p110 = scmp.ne.s32.totalorder %s96, %s97
      %p111 = scmp.eq.s32.totalorder %s35, 1
      %p112 = por %p110, %p111
      %p114 = scmp.ne.s32.totalorder %s97, %s113
      %p115 = scmp.eq.s32.totalorder %s35, 0
      %p116 = por %p114, %p115
      %s118 = sadd.s32 %s117, 1
      %p121 = scmp.eq.s32.totalorder %s29, 1
      %p122 = scmp.ne.s32.totalorder %s117, %s119
      %p123 = scmp.eq.s32.totalorder %s29, 0
      %p124 = por %p122, %p123
      %p125 = scmp.ne.s32.totalorder %s117, %s119
      %p126 = scmp.eq.s32.totalorder %s34, 1
      %p127 = por %p125, %p126
      %p128 = scmp.ne.s32.totalorder %s119, %s120
      %p129 = scmp.eq.s32.totalorder %s34, 0
      %p130 = por %p128, %p129
      %p131 = scmp.ne.s32.totalorder %s119, %s120
      %p132 = scmp.eq.s32.totalorder %s35, 1
      %p133 = por %p131, %p132
      %p135 = scmp.ne.s32.totalorder %s120, %s134
      %p136 = scmp.eq.s32.totalorder %s35, 0
      %p137 = por %p135, %p136
      %s139 = sadd.s32 %s138, 1
      %p142 = scmp.eq.s32.totalorder %s29, 1
      %p143 = scmp.ne.s32.totalorder %s138, %s140
      %p144 = scmp.eq.s32.totalorder %s29, 0
      %p145 = por %p143, %p144
      %p146 = scmp.ne.s32.totalorder %s138, %s140
      %p147 = scmp.eq.s32.totalorder %s34, 1
      %p148 = por %p146, %p147
      %p149 = scmp.ne.s32.totalorder %s140, %s141
      %p150 = scmp.eq.s32.totalorder %s34, 0
      %p151 = por %p149, %p150
      %p152 = scmp.ne.s32.totalorder %s140, %s141
      %p153 = scmp.eq.s32.totalorder %s35, 1
      %p154 = por %p152, %p153
      %p156 = scmp.ne.s32.totalorder %s141, %s155
      %p157 = scmp.eq.s32.totalorder %s35, 0
      %p158 = por %p156, %p157
      %s160 = sadd.s32 %s159, 1
      %p163 = scmp.eq.s32.totalorder %s29, 1
      %p164 = scmp.ne.s32.totalorder %s159, %s161
      %p165 = scmp.eq.s32.totalorder %s29, 0
      %p166 = por %p164, %p165
      %p167 = scmp.ne.s32.totalorder %s159, %s161
      %p168 = scmp.eq.s32.totalorder %s34, 1
      %p169 = por %p167, %p168
      %p170 = scmp.ne.s32.totalorder %s161, %s162
      %p171 = scmp.eq.s32.totalorder %s34, 0
      %p172 = por %p170, %p171
      %p173 = scmp.ne.s32.totalorder %s161, %s162
      %p174 = scmp.eq.s32.totalorder %s35, 1
      %p175 = por %p173, %p174
      %p177 = scmp.ne.s32.totalorder %s162, %s176
      %p178 = scmp.eq.s32.totalorder %s35, 0
      %p179 = por %p177, %p178
      %s181 = sadd.s32 %s180, 1
      %p184 = scmp.eq.s32.totalorder %s29, 1
      %p185 = scmp.ne.s32.totalorder %s180, %s182
      %p186 = scmp.eq.s32.totalorder %s29, 0
      %p187 = por %p185, %p186
      %p188 = scmp.ne.s32.totalorder %s180, %s182
      %p189 = scmp.eq.s32.totalorder %s34, 1
      %p190 = por %p188, %p189
      %p191 = scmp.ne.s32.totalorder %s182, %s183
      %p192 = scmp.eq.s32.totalorder %s34, 0
      %p193 = por %p191, %p192
      %p194 = scmp.ne.s32.totalorder %s182, %s183
      %p195 = scmp.eq.s32.totalorder %s35, 1
      %p196 = por %p194, %p195
      %p198 = scmp.ne.s32.totalorder %s183, %s197
      %p199 = scmp.eq.s32.totalorder %s35, 0
      %p200 = por %p198, %p199
      %s202 = sadd.s32 %s201, 1
      %p205 = scmp.eq.s32.totalorder %s29, 1
      %p206 = scmp.ne.s32.totalorder %s201, %s203
      %p207 = scmp.eq.s32.totalorder %s29, 0
      %p208 = por %p206, %p207
      %p209 = scmp.ne.s32.totalorder %s201, %s203
      %p210 = scmp.eq.s32.totalorder %s34, 1
      %p211 = por %p209, %p210
      %p212 = scmp.ne.s32.totalorder %s203, %s204
      %p213 = scmp.eq.s32.totalorder %s34, 0
      %p214 = por %p212, %p213
      %p215 = scmp.ne.s32.totalorder %s203, %s204
      %p216 = scmp.eq.s32.totalorder %s35, 1
      %p217 = por %p215, %p216
      %p219 = scmp.ne.s32.totalorder %s204, %s218
      %p220 = scmp.eq.s32.totalorder %s35, 0
      %p221 = por %p219, %p220
      %s223 = sadd.s32 %s222, 1
      %p226 = scmp.eq.s32.totalorder %s29, 1
      %p227 = scmp.ne.s32.totalorder %s222, %s224
      %p228 = scmp.eq.s32.totalorder %s29, 0
      %p229 = por %p227, %p228
      %p230 = scmp.ne.s32.totalorder %s222, %s224
      %p231 = scmp.eq.s32.totalorder %s34, 1
      %p232 = por %p230, %p231
      %p233 = scmp.ne.s32.totalorder %s224, %s225
      %p234 = scmp.eq.s32.totalorder %s34, 0
      %p235 = por %p233, %p234
      %p236 = scmp.ne.s32.totalorder %s224, %s225
      %p237 = scmp.eq.s32.totalorder %s35, 1
      %p238 = por %p236, %p237
      %p240 = scmp.ne.s32.totalorder %s225, %s239
      %p241 = scmp.eq.s32.totalorder %s35, 0
      %p242 = por %p240, %p241
      %s244 = sadd.s32 %s243, 1
      %p247 = scmp.eq.s32.totalorder %s29, 1
      %p248 = scmp.ne.s32.totalorder %s243, %s245
      %p249 = scmp.eq.s32.totalorder %s29, 0
      %p250 = por %p248, %p249
      %p251 = scmp.ne.s32.totalorder %s243, %s245
      %p252 = scmp.eq.s32.totalorder %s34, 1
      %p253 = por %p251, %p252
      %p254 = scmp.ne.s32.totalorder %s245, %s246
      %p255 = scmp.eq.s32.totalorder %s34, 0
      %p256 = por %p254, %p255
      %p257 = scmp.ne.s32.totalorder %s245, %s246
      %p258 = scmp.eq.s32.totalorder %s35, 1
      %p259 = por %p257, %p258
      %p261 = scmp.ne.s32.totalorder %s246, %s260
      %p262 = scmp.eq.s32.totalorder %s35, 0
      %p263 = por %p261, %p262
      %s265 = sadd.s32 %s264, 1
      %p268 = scmp.eq.s32.totalorder %s29, 1
      %p269 = scmp.ne.s32.totalorder %s264, %s266
      %p270 = scmp.eq.s32.totalorder %s29, 0
      %p271 = por %p269, %p270
      %p272 = scmp.ne.s32.totalorder %s264, %s266
      %p273 = scmp.eq.s32.totalorder %s34, 1
      %p274 = por %p272, %p273
      %p275 = scmp.ne.s32.totalorder %s266, %s267
      %p276 = scmp.eq.s32.totalorder %s34, 0
      %p277 = por %p275, %p276
      %p278 = scmp.ne.s32.totalorder %s266, %s267
      %p279 = scmp.eq.s32.totalorder %s35, 1
      %p280 = por %p278, %p279
      %p282 = scmp.ne.s32.totalorder %s267, %s281
      %p283 = scmp.eq.s32.totalorder %s35, 0
      %p284 = por %p282, %p283
      %s286 = sadd.s32 %s285, 1
      %p289 = scmp.eq.s32.totalorder %s29, 1
      %p290 = scmp.ne.s32.totalorder %s285, %s287
      %p291 = scmp.eq.s32.totalorder %s29, 0
      %p292 = por %p290, %p291
      %p293 = scmp.ne.s32.totalorder %s285, %s287
      %p294 = scmp.eq.s32.totalorder %s34, 1
      %p295 = por %p293, %p294
      %p296 = scmp.ne.s32.totalorder %s287, %s288
      %p297 = scmp.eq.s32.totalorder %s34, 0
      %p298 = por %p296, %p297
      %p299 = scmp.ne.s32.totalorder %s287, %s288
      %p300 = scmp.eq.s32.totalorder %s35, 1
      %p301 = por %p299, %p300
      %p303 = scmp.ne.s32.totalorder %s288, %s302
      %p304 = scmp.eq.s32.totalorder %s35, 0
      %p305 = por %p303, %p304
      %s307 = sadd.s32 %s306, 1
      %p310 = scmp.eq.s32.totalorder %s29, 1
      %p311 = scmp.ne.s32.totalorder %s306, %s308
      %p312 = scmp.eq.s32.totalorder %s29, 0
      %p313 = por %p311, %p312
      %p314 = scmp.ne.s32.totalorder %s306, %s308
      %p315 = scmp.eq.s32.totalorder %s34, 1
      %p316 = por %p314, %p315
      %p317 = scmp.ne.s32.totalorder %s308, %s309
      %p318 = scmp.eq.s32.totalorder %s34, 0
      %p319 = por %p317, %p318
      %p320 = scmp.ne.s32.totalorder %s308, %s309
      %p321 = scmp.eq.s32.totalorder %s35, 1
      %p322 = por %p320, %p321
      %p324 = scmp.ne.s32.totalorder %s309, %s323
      %p325 = scmp.eq.s32.totalorder %s35, 0
      %p326 = por %p324, %p325
      %s328 = sadd.s32 %s327, 1
      %p331 = scmp.eq.s32.totalorder %s29, 1
      %p332 = scmp.ne.s32.totalorder %s327, %s329
      %p333 = scmp.eq.s32.totalorder %s29, 0
      %p334 = por %p332, %p333
      %p335 = scmp.ne.s32.totalorder %s327, %s329
      %p336 = scmp.eq.s32.totalorder %s34, 1
      %p337 = por %p335, %p336
      %p338 = scmp.ne.s32.totalorder %s329, %s330
      %p339 = scmp.eq.s32.totalorder %s34, 0
      %p340 = por %p338, %p339
      %p341 = scmp.ne.s32.totalorder %s329, %s330
      %p342 = scmp.eq.s32.totalorder %s35, 1
      %p343 = por %p341, %p342
      %p345 = scmp.ne.s32.totalorder %s330, %s344
      %p346 = scmp.eq.s32.totalorder %s35, 0
      %p347 = por %p345, %p346
      %s349 = sadd.s32 %s348, 1
      %p352 = scmp.eq.s32.totalorder %s29, 1
      %p353 = scmp.ne.s32.totalorder %s348, %s350
      %p354 = scmp.eq.s32.totalorder %s29, 0
      %p355 = por %p353, %p354
      %p356 = scmp.ne.s32.totalorder %s348, %s350
      %p357 = scmp.eq.s32.totalorder %s34, 1
      %p358 = por %p356, %p357
      %p359 = scmp.ne.s32.totalorder %s350, %s351
      %p360 = scmp.eq.s32.totalorder %s34, 0
      %p361 = por %p359, %p360
      %p362 = scmp.ne.s32.totalorder %s350, %s351
      %p363 = scmp.eq.s32.totalorder %s35, 1
      %p364 = por %p362, %p363
      %p366 = scmp.ne.s32.totalorder %s351, %s365
      %p367 = scmp.eq.s32.totalorder %s35, 0
      %p368 = por %p366, %p367
      %s370 = sadd.s32 %s369, 1
      %p373 = scmp.eq.s32.totalorder %s29, 1
      %p374 = scmp.ne.s32.totalorder %s369, %s371
      %p375 = scmp.eq.s32.totalorder %s29, 0
      %p376 = por %p374, %p375
      %p377 = scmp.ne.s32.totalorder %s369, %s371
      %p378 = scmp.eq.s32.totalorder %s34, 1
      %p379 = por %p377, %p378
      %p380 = scmp.ne.s32.totalorder %s371, %s372
      %p381 = scmp.eq.s32.totalorder %s34, 0
      %p382 = por %p380, %p381
      %p383 = scmp.ne.s32.totalorder %s371, %s372
      %p384 = scmp.eq.s32.totalorder %s35, 1
      %p385 = por %p383, %p384
      %p387 = scmp.ne.s32.totalorder %s372, %s386
      %p388 = scmp.eq.s32.totalorder %s35, 0
      %p389 = por %p387, %p388
      %s391 = sadd.s32 %s390, 1
      %p394 = scmp.eq.s32.totalorder %s29, 1
      %p395 = scmp.ne.s32.totalorder %s390, %s392
      %p396 = scmp.eq.s32.totalorder %s29, 0
      %p397 = por %p395, %p396
      %p398 = scmp.ne.s32.totalorder %s390, %s392
      %p399 = scmp.eq.s32.totalorder %s34, 1
      %p400 = por %p398, %p399
      %p401 = scmp.ne.s32.totalorder %s392, %s393
      %p402 = scmp.eq.s32.totalorder %s34, 0
      %p403 = por %p401, %p402
      %p404 = scmp.ne.s32.totalorder %s392, %s393
      %p405 = scmp.eq.s32.totalorder %s35, 1
      %p406 = por %p404, %p405
      %p408 = scmp.ne.s32.totalorder %s393, %s407
      %p409 = scmp.eq.s32.totalorder %s35, 0
      %p410 = por %p408, %p409
      %s412 = sadd.s32 %s411, 1
      %p415 = scmp.eq.s32.totalorder %s29, 1
      %p416 = scmp.ne.s32.totalorder %s411, %s413
      %p417 = scmp.eq.s32.totalorder %s29, 0
      %p418 = por %p416, %p417
      %p419 = scmp.ne.s32.totalorder %s411, %s413
      %p420 = scmp.eq.s32.totalorder %s34, 1
      %p421 = por %p419, %p420
      %p422 = scmp.ne.s32.totalorder %s413, %s414
      %p423 = scmp.eq.s32.totalorder %s34, 0
      %p424 = por %p422, %p423
      %p425 = scmp.ne.s32.totalorder %s413, %s414
      %p426 = scmp.eq.s32.totalorder %s35, 1
      %p427 = por %p425, %p426
      %p429 = scmp.ne.s32.totalorder %s414, %s428
      %p430 = scmp.eq.s32.totalorder %s35, 0
      %p431 = por %p429, %p430
      %s433 = sadd.s32 %s432, 1
      %p436 = scmp.eq.s32.totalorder %s29, 1
      %p437 = scmp.ne.s32.totalorder %s432, %s434
      %p438 = scmp.eq.s32.totalorder %s29, 0
      %p439 = por %p437, %p438
      %p440 = scmp.ne.s32.totalorder %s432, %s434
      %p441 = scmp.eq.s32.totalorder %s34, 1
      %p442 = por %p440, %p441
      %p443 = scmp.ne.s32.totalorder %s434, %s435
      %p444 = scmp.eq.s32.totalorder %s34, 0
      %p445 = por %p443, %p444
      %p446 = scmp.ne.s32.totalorder %s434, %s435
      %p447 = scmp.eq.s32.totalorder %s35, 1
      %p448 = por %p446, %p447
      %p450 = scmp.ne.s32.totalorder %s435, %s449
      %p451 = scmp.eq.s32.totalorder %s35, 0
      %p452 = por %p450, %p451
      %s454 = sadd.s32 %s453, 1
      %p457 = scmp.eq.s32.totalorder %s29, 1
      %p458 = scmp.ne.s32.totalorder %s453, %s455
      %p459 = scmp.eq.s32.totalorder %s29, 0
      %p460 = por %p458, %p459
      %p461 = scmp.ne.s32.totalorder %s453, %s455
      %p462 = scmp.eq.s32.totalorder %s34, 1
      %p463 = por %p461, %p462
      %p464 = scmp.ne.s32.totalorder %s455, %s456
      %p465 = scmp.eq.s32.totalorder %s34, 0
      %p466 = por %p464, %p465
      %p467 = scmp.ne.s32.totalorder %s455, %s456
      %p468 = scmp.eq.s32.totalorder %s35, 1
      %p469 = por %p467, %p468
      %p471 = scmp.ne.s32.totalorder %s456, %s470
      %p472 = scmp.eq.s32.totalorder %s35, 0
      %p473 = por %p471, %p472
      %s474 = ssub.s32 %s29, %s36
      %p475 = scmp.eq.s32.totalorder %s474, 0
      %s477 = sadd.s32 %s476, 1
      %s478 = scalar_select %p475, %s476, %s477
      %p481 = pneg %p475
      %p482 = scmp.eq.s32.totalorder %s29, 1
      %p483 = por %p481, %p482
      %p484 = scmp.ne.s32.totalorder %s476, %s479
      %p485 = scmp.eq.s32.totalorder %s29, 0
      %p486 = por %p484, %p485
      %p487 = scmp.ne.s32.totalorder %s476, %s479
      %p488 = scmp.eq.s32.totalorder %s34, 1
      %p489 = por %p487, %p488
      %p490 = scmp.ne.s32.totalorder %s479, %s480
      %p491 = scmp.eq.s32.totalorder %s34, 0
      %p492 = por %p490, %p491
      %p493 = scmp.ne.s32.totalorder %s479, %s480
      %p494 = scmp.eq.s32.totalorder %s35, 1
      %p495 = por %p493, %p494
      %p497 = scmp.ne.s32.totalorder %s480, %s496
      %p498 = scmp.eq.s32.totalorder %s35, 0
      %p499 = por %p497, %p498
      %p500 = scmp.le.s32.totalorder 1, %s29
      %p501 = scmp.lt.s32.totalorder %s29, 3
      %p502 = pnand %p500, %p501
      %p503 = pneg %p502
      // Predicated region
      $region9: #{scm_block_forward.1} parent=5 // pred_check
        _
      $region10: #{scm_block_forward.1} parent=5 // pred_check_branch
        %505 = sbr.rel (%p502) target = $region12
      $region11: #{scm_block_forward.1} parent=5 // pred_region
        %s506 = ssub.s32 %s29, 1
        // Predicated region
        $region13: #{scm_block_forward.1} parent=11 // pred_check
          %p507 = pneg %p130
        $region14: #{scm_block_forward.1} parent=11 // pred_check_branch
          %509 = sbr.rel (%p507) target = $region16
        $region15: #{scm_block_forward.1} parent=11 // pred_region
          _
        $region16: #{scm_block_forward.1} parent=11 // pred_fallthru
          _
        // Predicated region
        $region17: #{scm_block_forward.1} parent=11 // pred_check
          %p510 = pneg %p151
        $region18: #{scm_block_forward.1} parent=11 // pred_check_branch
          %512 = sbr.rel (%p510) target = $region20
        $region19: #{scm_block_forward.1} parent=11 // pred_region
          _
        $region20: #{scm_block_forward.1} parent=11 // pred_fallthru
          _
        // Predicated region
        $region21: #{scm_block_forward.1} parent=11 // pred_check
          %p513 = pneg %p172
        $region22: #{scm_block_forward.1} parent=11 // pred_check_branch
          %515 = sbr.rel (%p513) target = $region24
        $region23: #{scm_block_forward.1} parent=11 // pred_region
          _
        $region24: #{scm_block_forward.1} parent=11 // pred_fallthru
          _
        // Predicated region
        $region25: #{scm_block_forward.1} parent=11 // pred_check
          %p516 = pneg %p193
        $region26: #{scm_block_forward.1} parent=11 // pred_check_branch
          %518 = sbr.rel (%p516) target = $region28
        $region27: #{scm_block_forward.1} parent=11 // pred_region
          _
        $region28: #{scm_block_forward.1} parent=11 // pred_fallthru
          _
        // Predicated region
        $region29: #{scm_block_forward.1} parent=11 // pred_check
          %p519 = pneg %p214
        $region30: #{scm_block_forward.1} parent=11 // pred_check_branch
          %521 = sbr.rel (%p519) target = $region32
        $region31: #{scm_block_forward.1} parent=11 // pred_region
          _
        $region32: #{scm_block_forward.1} parent=11 // pred_fallthru
          _
        // Predicated region
        $region33: #{scm_block_forward.1} parent=11 // pred_check
          %p522 = pneg %p235
        $region34: #{scm_block_forward.1} parent=11 // pred_check_branch
          %524 = sbr.rel (%p522) target = $region36
        $region35: #{scm_block_forward.1} parent=11 // pred_region
          _
        $region36: #{scm_block_forward.1} parent=11 // pred_fallthru
          _
        // Predicated region
        $region37: #{scm_block_forward.1} parent=11 // pred_check
          %p525 = pneg %p256
        $region38: #{scm_block_forward.1} parent=11 // pred_check_branch
          %527 = sbr.rel (%p525) target = $region40
        $region39: #{scm_block_forward.1} parent=11 // pred_region
          _
        $region40: #{scm_block_forward.1} parent=11 // pred_fallthru
          _
        // Predicated region
        $region41: #{scm_block_forward.1} parent=11 // pred_check
          %p528 = pneg %p277
        $region42: #{scm_block_forward.1} parent=11 // pred_check_branch
          %530 = sbr.rel (%p528) target = $region44
        $region43: #{scm_block_forward.1} parent=11 // pred_region
          _
        $region44: #{scm_block_forward.1} parent=11 // pred_fallthru
          _
        // Predicated region
        $region45: #{scm_block_forward.1} parent=11 // pred_check
          %p531 = pneg %p298
        $region46: #{scm_block_forward.1} parent=11 // pred_check_branch
          %533 = sbr.rel (%p531) target = $region48
        $region47: #{scm_block_forward.1} parent=11 // pred_region
          _
        $region48: #{scm_block_forward.1} parent=11 // pred_fallthru
          _
        // Predicated region
        $region49: #{scm_block_forward.1} parent=11 // pred_check
          %p534 = pneg %p319
        $region50: #{scm_block_forward.1} parent=11 // pred_check_branch
          %536 = sbr.rel (%p534) target = $region52
        $region51: #{scm_block_forward.1} parent=11 // pred_region
          _
        $region52: #{scm_block_forward.1} parent=11 // pred_fallthru
          _
        // Predicated region
        $region53: #{scm_block_forward.1} parent=11 // pred_check
          %p537 = pneg %p340
        $region54: #{scm_block_forward.1} parent=11 // pred_check_branch
          %539 = sbr.rel (%p537) target = $region56
        $region55: #{scm_block_forward.1} parent=11 // pred_region
          _
        $region56: #{scm_block_forward.1} parent=11 // pred_fallthru
          _
        // Predicated region
        $region57: #{scm_block_forward.1} parent=11 // pred_check
          %p540 = pneg %p361
        $region58: #{scm_block_forward.1} parent=11 // pred_check_branch
          %542 = sbr.rel (%p540) target = $region60
        $region59: #{scm_block_forward.1} parent=11 // pred_region
          _
        $region60: #{scm_block_forward.1} parent=11 // pred_fallthru
          _
        // Predicated region
        $region61: #{scm_block_forward.1} parent=11 // pred_check
          %p543 = pneg %p382
        $region62: #{scm_block_forward.1} parent=11 // pred_check_branch
          %545 = sbr.rel (%p543) target = $region64
        $region63: #{scm_block_forward.1} parent=11 // pred_region
          _
        $region64: #{scm_block_forward.1} parent=11 // pred_fallthru
          _
        // Predicated region
        $region65: #{scm_block_forward.1} parent=11 // pred_check
          %p546 = pneg %p403
        $region66: #{scm_block_forward.1} parent=11 // pred_check_branch
          %548 = sbr.rel (%p546) target = $region68
        $region67: #{scm_block_forward.1} parent=11 // pred_region
          _
        $region68: #{scm_block_forward.1} parent=11 // pred_fallthru
          _
        // Predicated region
        $region69: #{scm_block_forward.1} parent=11 // pred_check
          %p549 = pneg %p424
        $region70: #{scm_block_forward.1} parent=11 // pred_check_branch
          %551 = sbr.rel (%p549) target = $region72
        $region71: #{scm_block_forward.1} parent=11 // pred_region
          _
        $region72: #{scm_block_forward.1} parent=11 // pred_fallthru
          _
        // Predicated region
        $region73: #{scm_block_forward.1} parent=11 // pred_check
          %p552 = pneg %p445
        $region74: #{scm_block_forward.1} parent=11 // pred_check_branch
          %554 = sbr.rel (%p552) target = $region76
        $region75: #{scm_block_forward.1} parent=11 // pred_region
          _
        $region76: #{scm_block_forward.1} parent=11 // pred_fallthru
          _
        // Predicated region
        $region77: #{scm_block_forward.1} parent=11 // pred_check
          %p555 = pneg %p466
        $region78: #{scm_block_forward.1} parent=11 // pred_check_branch
          %557 = sbr.rel (%p555) target = $region80
        $region79: #{scm_block_forward.1} parent=11 // pred_region
          _
        $region80: #{scm_block_forward.1} parent=11 // pred_fallthru
          _
      $region12: #{scm_block_forward.1} parent=5 // pred_fallthru
        _
      %p558 = scmp.lt.s32.totalorder %s29, 2
      // Predicated region
      $region81: #{scm_block_forward.1} parent=5 // pred_check
        %p559 = pneg %p558
      $region82: #{scm_block_forward.1} parent=5 // pred_check_branch
        %561 = sbr.rel (%p559) target = $region84
      $region83: #{scm_block_forward.1} parent=5 // pred_region
        // Predicated region
        $region85: #{scm_block_forward.1} parent=83 // pred_check
          %p562 = pneg %p49
        $region86: #{scm_block_forward.1} parent=83 // pred_check_branch
          %564 = sbr.rel (%p562) target = $region88
        $region87: #{scm_block_forward.1} parent=83 // pred_region
          %p565 = scmp.lt.s32.totalorder %s29, 1
          %s566 = scalar_select %p565, %s29, 1
          %s567 = smul.addr %s566, 32
          %s568 = smul.addr %s567, 8
          %s569 = scalar_lea.vmem %s0, %s568
        $region88: #{scm_block_forward.1} parent=83 // pred_fallthru
          _
        // Predicated region
        $region89: #{scm_block_forward.1} parent=83 // pred_check
          %p570 = pneg %p75
        $region90: #{scm_block_forward.1} parent=83 // pred_check_branch
          %572 = sbr.rel (%p570) target = $region92
        $region91: #{scm_block_forward.1} parent=83 // pred_region
          %p573 = scmp.lt.s32.totalorder %s29, 3
          %s574 = scalar_select %p573, %s29, 3
          %s575 = smul.addr %s574, 8
          %s576 = smul.addr %s575, 8
          %s577 = scalar_lea.vmem %s1, %s576
        $region92: #{scm_block_forward.1} parent=83 // pred_fallthru
          _
        // Predicated region
        $region93: #{scm_block_forward.1} parent=83 // pred_check
          %p578 = pneg %p103
        $region94: #{scm_block_forward.1} parent=83 // pred_check_branch
          %580 = sbr.rel (%p578) target = $region96
        $region95: #{scm_block_forward.1} parent=83 // pred_region
          %s581 = sadd.s32 %s29, 2
          %p582 = scmp.lt.s32.totalorder %s581, 3
          %s583 = scalar_select %p582, %s581, 3
          %s584 = smul.addr %s583, 8
          %s585 = smul.addr %s584, 8
          %s586 = scalar_lea.vmem %s2, %s585
          %s587 = sadd.s32 %s29, 2
        $region96: #{scm_block_forward.1} parent=83 // pred_fallthru
          _
      $region84: #{scm_block_forward.1} parent=5 // pred_fallthru
        _
      %p588 = scmp.le.s32.totalorder 1, %s29
      %p589 = scmp.lt.s32.totalorder %s29, 3
      %p590 = pnand %p588, %p589
      %p591 = pneg %p590
      // Predicated region
      $region97: #{scm_block_forward.1} parent=5 // pred_check
        _
      $region98: #{scm_block_forward.1} parent=5 // pred_check_branch
        %593 = sbr.rel (%p590) target = $region100
      $region99: #{scm_block_forward.1} parent=5 // pred_region
        %s594 = ssub.s32 %s29, 1
        %p595 = scmp.lt.s32.totalorder %s34, 1
        %s596 = scalar_select %p595, %s34, 1
        %s597 = smul.addr %s596, 32
        %s598 = smul.addr %s597, 8
        %s599 = scalar_lea.vmem %s0, %s598
        %p600 = pneg %p55
        %p601 = pneg %p52
        %p602 = scmp.lt.s32.totalorder %s34, 3
        %s603 = scalar_select %p602, %s34, 3
        %s604 = smul.addr %s603, 8
        %s605 = smul.addr %s604, 8
        %s606 = scalar_lea.vmem %s1, %s605
        %p607 = pneg %p81
        %p608 = pneg %p78
        %s609 = sadd.s32 %s34, 2
        %p610 = scmp.lt.s32.totalorder %s609, 3
        %s611 = scalar_select %p610, %s609, 3
        %s612 = smul.addr %s611, 8
        %s613 = smul.addr %s612, 8
        %s614 = scalar_lea.vmem %s2, %s613
        %p615 = pneg %p109
        %p616 = pneg %p106
        %p617 = pneg %p130
        %p618 = pneg %p127
        %p619 = pneg %p151
        %p620 = pneg %p148
        %p621 = pneg %p172
        %p622 = pneg %p169
        %p623 = pneg %p193
        %p624 = pneg %p190
        %p625 = pneg %p214
        %p626 = pneg %p211
        %p627 = pneg %p235
        %p628 = pneg %p232
        %p629 = pneg %p256
        %p630 = pneg %p253
        %p631 = pneg %p277
        %p632 = pneg %p274
        %p633 = pneg %p298
        %p634 = pneg %p295
        %p635 = pneg %p319
        %p636 = pneg %p316
        %p637 = pneg %p340
        %p638 = pneg %p337
        %p639 = pneg %p361
        %p640 = pneg %p358
        %p641 = pneg %p382
        %p642 = pneg %p379
        %p643 = pneg %p403
        %p644 = pneg %p400
        %p645 = pneg %p424
        %p646 = pneg %p421
        %p647 = pneg %p445
        %p648 = pneg %p442
        %p649 = pneg %p466
        %p650 = pneg %p463
        %p651 = pneg %p492
        %p652 = pneg %p489
        %s653 = sand.u32 %s479, 1
        %s654 = scalar_lea.sflag [#allocation5], %s653
        %s655 = sand.u32 %s479, 1
        %s656 = smul.addr %s655, 256
        %s657 = scalar_lea.vmem [#allocation4], %s656
        %p658 = scmp.lt.s32.totalorder %s34, 1
        %s659 = scalar_select %p658, %s34, 1
        %s660 = smul.addr %s659, 32
        %s661 = smul.addr %s660, 8
        %s662 = scalar_lea.vmem %s0, %s661
        %p663 = scmp.lt.s32.totalorder %s34, 3
        %s664 = scalar_select %p663, %s34, 3
        %s665 = smul.addr %s664, 8
        %s666 = smul.addr %s665, 8
        %s667 = scalar_lea.vmem %s1, %s666
        %s668 = sadd.s32 %s34, 2
        %p669 = scmp.lt.s32.totalorder %s668, 3
        %s670 = scalar_select %p669, %s668, 3
        %s671 = smul.addr %s670, 8
        %s672 = smul.addr %s671, 8
        %s673 = scalar_lea.vmem %s2, %s672
        %s674 = sadd.s32 %s34, 2
        %v676 = vld [vmem:[%s662] sm:$0xff]
        %v677 = vld [vmem:[%s662 + $0x8] sm:$0xff]
        %v678 = vld [vmem:[%s662 + $0x10] sm:$0xff]
        %v679 = vld [vmem:[%s662 + $0x18] sm:$0xff]
        %v680 = vld [vmem:[%s662 + $0x20] sm:$0xff]
        %v681 = vld [vmem:[%s662 + $0x28] sm:$0xff]
        %v682 = vld [vmem:[%s662 + $0x30] sm:$0xff]
        %v683 = vld [vmem:[%s662 + $0x38] sm:$0xff]
        %v684 = vld [vmem:[%s662 + $0x40] sm:$0xff]
        %v685 = vld [vmem:[%s662 + $0x48] sm:$0xff]
        %v686 = vld [vmem:[%s662 + $0x50] sm:$0xff]
        %v687 = vld [vmem:[%s662 + $0x58] sm:$0xff]
        %v688 = vld [vmem:[%s662 + $0x60] sm:$0xff]
        %v689 = vld [vmem:[%s662 + $0x68] sm:$0xff]
        %v690 = vld [vmem:[%s662 + $0x70] sm:$0xff]
        %v691 = vld [vmem:[%s662 + $0x78] sm:$0xff]
        %v692 = vld [vmem:[%s662 + $0x80] sm:$0xff]
        %v693 = vld [vmem:[%s662 + $0x88] sm:$0xff]
        %v694 = vld [vmem:[%s662 + $0x90] sm:$0xff]
        %v695 = vld [vmem:[%s662 + $0x98] sm:$0xff]
        %v696 = vld [vmem:[%s662 + $0xa0] sm:$0xff]
        %v697 = vld [vmem:[%s662 + $0xa8] sm:$0xff]
        %v698 = vld [vmem:[%s662 + $0xb0] sm:$0xff]
        %v699 = vld [vmem:[%s662 + $0xb8] sm:$0xff]
        %v700 = vld [vmem:[%s662 + $0xc0] sm:$0xff]
        %v701 = vld [vmem:[%s662 + $0xc8] sm:$0xff]
        %v702 = vld [vmem:[%s662 + $0xd0] sm:$0xff]
        %v703 = vld [vmem:[%s662 + $0xd8] sm:$0xff]
        %v704 = vld [vmem:[%s662 + $0xe0] sm:$0xff]
        %v705 = vld [vmem:[%s662 + $0xe8] sm:$0xff]
        %v706 = vld [vmem:[%s662 + $0xf0] sm:$0xff]
        %v707 = vld [vmem:[%s662 + $0xf8] sm:$0xff]
        %v708 = vld [vmem:[%s4] sm:$0x7]
        %v709 = vpack.c.bf16 %v677, %v676
        %v710 = vpack.c.bf16 %v679, %v678
        %v711 = vpack.c.bf16 %v681, %v680
        %v712 = vpack.c.bf16 %v683, %v682
        %v713 = vpack.c.bf16 %v685, %v684
        %v714 = vpack.c.bf16 %v687, %v686
        %v715 = vpack.c.bf16 %v689, %v688
        %v716 = vpack.c.bf16 %v691, %v690
        %v717 = vpack.c.bf16 %v693, %v692
        %v718 = vpack.c.bf16 %v695, %v694
        %v719 = vpack.c.bf16 %v697, %v696
        %v720 = vpack.c.bf16 %v699, %v698
        %v721 = vpack.c.bf16 %v701, %v700
        %v722 = vpack.c.bf16 %v703, %v702
        %v723 = vpack.c.bf16 %v705, %v704
        %v724 = vpack.c.bf16 %v707, %v706
        %v725 = vld [vmem:[%s3] sm:$0xf]
        %v726 = vld [vmem:[%s3 + $0x4] sm:$0xf]
        %v727 = vld [vmem:[%s3 + $0x8] sm:$0xf]
        %v728 = vld [vmem:[%s3 + $0xc] sm:$0xf]
        %v729 = vlaneseq
        %v730 = vshrl.u32 %v729, 7
        %v731 = vsub.s32 0, %v730
        %v732 = vrot.slane %v708, %v731
        %v737 = vunpack.c.l.b16 %v725
        %v738 = vunpack.c.l.b16 %v726
        %v739 = vunpack.c.l.b16 %v727
        %v740 = vunpack.c.l.b16 %v728
        %v741 = vpack.c.b16 %v738, %v737
        %v742 = vpack.c.b16 %v740, %v739
        %vm745 = vcmask 261120
        %v747 = vsel %vm745, %v709, 0
        %v750 = vsel %vm745, %v710, 0
        %v753 = vsel %vm745, %v711, 0
        %v756 = vsel %vm745, %v712, 0
        %v759 = vsel %vm745, %v713, 0
        %v762 = vsel %vm745, %v714, 0
        %v765 = vsel %vm745, %v715, 0
        %v768 = vsel %vm745, %v716, 0
        %v771 = vsel %vm745, %v717, 0
        %v774 = vsel %vm745, %v718, 0
        %v777 = vsel %vm745, %v719, 0
        %v780 = vsel %vm745, %v720, 0
        %v783 = vsel %vm745, %v721, 0
        %v786 = vsel %vm745, %v722, 0
        %v789 = vsel %vm745, %v723, 0
        %v792 = vsel %vm745, %v724, 0
        %794 = vmatprep.subr.bf16.mxu0 0
        %795 = vmatpush1.bf16.msra.mxu0 %v741
        %796 = vmatprep.subr.bf16.mxu0 0
        %797 = vmatpush1.bf16.msra.mxu0 %v742
        %798 = vmatprep.subr.bf16.mxu0 0
        %799 = vmatpush1.bf16.msra.mxu0 0
        %800 = vmatprep.subr.bf16.mxu0 0
        %801 = vmatpush1.bf16.msra.mxu0 0
        %802 = vmatprep.subr.bf16.mxu0 0
        %803 = vmatpush1.bf16.msra.mxu0 0
        %804 = vmatprep.subr.bf16.mxu0 0
        %805 = vmatpush1.bf16.msra.mxu0 0
        %806 = vmatprep.subr.bf16.mxu0 0
        %807 = vmatpush1.bf16.msra.mxu0 0
        %808 = vmatprep.subr.bf16.mxu0 0
        %809 = vmatpush1.bf16.msra.mxu0 0
        %810 = vmatprep.subr.bf16.mxu0 0
        %811 = vmatpush1.bf16.msra.mxu0 0
        %812 = vmatprep.subr.bf16.mxu0 0
        %813 = vmatpush1.bf16.msra.mxu0 0
        %814 = vmatprep.subr.bf16.mxu0 0
        %815 = vmatpush1.bf16.msra.mxu0 0
        %816 = vmatprep.subr.bf16.mxu0 0
        %817 = vmatpush1.bf16.msra.mxu0 0
        %818 = vmatprep.subr.bf16.mxu0 0
        %819 = vmatpush1.bf16.msra.mxu0 0
        %820 = vmatprep.subr.bf16.mxu0 0
        %821 = vmatpush1.bf16.msra.mxu0 0
        %822 = vmatprep.subr.bf16.mxu0 0
        %823 = vmatpush1.bf16.msra.mxu0 0
        %824 = vmatprep.subr.bf16.mxu0 0
        %825 = vmatpush1.bf16.msra.mxu0 0
        %826 = vmatprep.mubr.bf16.mxu0 0
        %827 = vmatmul.mubr.bf16.gmra.mrb[0].mxu0 %v747
        %v828 = vpop.f32.mrb[0].mxu0
        %v829 = vadd.f32 %v732, %v828
        %v830 = vpop.f32.mrb[0].mxu0
        %v831 = vpop.f32.mrb[0].mxu0
        %v832 = vadd.f32 %v732, %v831
        %v833 = vpop.f32.mrb[0].mxu0
        %834 = vmatprep.mubr.bf16.mxu0 0
        %835 = vmatmul.mubr.bf16.gmra.mrb[0].mxu0 %v750
        %v836 = vpop.f32.mrb[0].mxu0
        %v837 = vadd.f32 %v732, %v836
        %v838 = vpop.f32.mrb[0].mxu0
        %v839 = vpop.f32.mrb[0].mxu0
        %v840 = vadd.f32 %v732, %v839
        %v841 = vpop.f32.mrb[0].mxu0
        %842 = vmatprep.mubr.bf16.mxu0 0
        %843 = vmatmul.mubr.bf16.gmra.mrb[0].mxu0 %v753
        %v844 = vpop.f32.mrb[0].mxu0
        %v845 = vadd.f32 %v732, %v844
        %v846 = vpop.f32.mrb[0].mxu0
        %v847 = vpop.f32.mrb[0].mxu0
        %v848 = vadd.f32 %v732, %v847
        %v849 = vpop.f32.mrb[0].mxu0
        %850 = vmatprep.mubr.bf16.mxu0 0
        %851 = vmatmul.mubr.bf16.gmra.mrb[0].mxu0 %v756
        %v852 = vpop.f32.mrb[0].mxu0
        %v853 = vadd.f32 %v732, %v852
        %v854 = vpop.f32.mrb[0].mxu0
        %v855 = vpop.f32.mrb[0].mxu0
        %v856 = vadd.f32 %v732, %v855
        %v857 = vpop.f32.mrb[0].mxu0
        %858 = vmatprep.mubr.bf16.mxu0 0
        %859 = vmatmul.mubr.bf16.gmra.mrb[0].mxu0 %v759
        %v860 = vpop.f32.mrb[0].mxu0
        %v861 = vadd.f32 %v732, %v860
        %v862 = vpop.f32.mrb[0].mxu0
        %v863 = vpop.f32.mrb[0].mxu0
        %v864 = vadd.f32 %v732, %v863
        %v865 = vpop.f32.mrb[0].mxu0
        %866 = vmatprep.mubr.bf16.mxu0 0
        %867 = vmatmul.mubr.bf16.gmra.mrb[0].mxu0 %v762
        %v868 = vpop.f32.mrb[0].mxu0
        %v869 = vadd.f32 %v732, %v868
        %v870 = vpop.f32.mrb[0].mxu0
        %v871 = vpop.f32.mrb[0].mxu0
        %v872 = vadd.f32 %v732, %v871
        %v873 = vpop.f32.mrb[0].mxu0
        %874 = vmatprep.mubr.bf16.mxu0 0
        %875 = vmatmul.mubr.bf16.gmra.mrb[0].mxu0 %v765
        %v876 = vpop.f32.mrb[0].mxu0
        %v877 = vadd.f32 %v732, %v876
        %v878 = vpop.f32.mrb[0].mxu0
        %v879 = vpop.f32.mrb[0].mxu0
        %v880 = vadd.f32 %v732, %v879
        %v881 = vpop.f32.mrb[0].mxu0
        %882 = vmatprep.mubr.bf16.mxu0 0
        %883 = vmatmul.mubr.bf16.gmra.mrb[0].mxu0 %v768
        %v884 = vpop.f32.mrb[0].mxu0
        %v885 = vadd.f32 %v732, %v884
        %v886 = vpop.f32.mrb[0].mxu0
        %v887 = vpop.f32.mrb[0].mxu0
        %v888 = vadd.f32 %v732, %v887
        %v889 = vpop.f32.mrb[0].mxu0
        %890 = vmatprep.mubr.bf16.mxu0 0
        %891 = vmatmul.mubr.bf16.gmra.mrb[0].mxu0 %v771
        %v892 = vpop.f32.mrb[0].mxu0
        %v893 = vadd.f32 %v732, %v892
        %v894 = vpop.f32.mrb[0].mxu0
        %v895 = vpop.f32.mrb[0].mxu0
        %v896 = vadd.f32 %v732, %v895
        %v897 = vpop.f32.mrb[0].mxu0
        %898 = vmatprep.mubr.bf16.mxu0 0
        %899 = vmatmul.mubr.bf16.gmra.mrb[0].mxu0 %v774
        %v900 = vpop.f32.mrb[0].mxu0
        %v901 = vadd.f32 %v732, %v900
        %v902 = vpop.f32.mrb[0].mxu0
        %v903 = vpop.f32.mrb[0].mxu0
        %v904 = vadd.f32 %v732, %v903
        %v905 = vpop.f32.mrb[0].mxu0
        %906 = vmatprep.mubr.bf16.mxu0 0
        %907 = vmatmul.mubr.bf16.gmra.mrb[0].mxu0 %v777
        %v908 = vpop.f32.mrb[0].mxu0
        %v909 = vadd.f32 %v732, %v908
        %v910 = vpop.f32.mrb[0].mxu0
        %v911 = vpop.f32.mrb[0].mxu0
        %v912 = vadd.f32 %v732, %v911
        %v913 = vpop.f32.mrb[0].mxu0
        %914 = vmatprep.mubr.bf16.mxu0 0
        %915 = vmatmul.mubr.bf16.gmra.mrb[0].mxu0 %v780
        %v916 = vpop.f32.mrb[0].mxu0
        %v917 = vadd.f32 %v732, %v916
        %v918 = vpop.f32.mrb[0].mxu0
        %v919 = vpop.f32.mrb[0].mxu0
        %v920 = vadd.f32 %v732, %v919
        %v921 = vpop.f32.mrb[0].mxu0
        %922 = vmatprep.mubr.bf16.mxu0 0
        %923 = vmatmul.mubr.bf16.gmra.mrb[0].mxu0 %v783
        %v924 = vpop.f32.mrb[0].mxu0
        %v925 = vadd.f32 %v732, %v924
        %v926 = vpop.f32.mrb[0].mxu0
        %v927 = vpop.f32.mrb[0].mxu0
        %v928 = vadd.f32 %v732, %v927
        %v929 = vpop.f32.mrb[0].mxu0
        %930 = vmatprep.mubr.bf16.mxu0 0
        %931 = vmatmul.mubr.bf16.gmra.mrb[0].mxu0 %v786
        %v932 = vpop.f32.mrb[0].mxu0
        %v933 = vadd.f32 %v732, %v932
        %v934 = vpop.f32.mrb[0].mxu0
        %v935 = vpop.f32.mrb[0].mxu0
        %v936 = vadd.f32 %v732, %v935
        %v937 = vpop.f32.mrb[0].mxu0
        %938 = vmatprep.mubr.bf16.mxu0 0
        %939 = vmatmul.mubr.bf16.gmra.mrb[0].mxu0 %v789
        %v940 = vpop.f32.mrb[0].mxu0
        %v941 = vadd.f32 %v732, %v940
        %v942 = vpop.f32.mrb[0].mxu0
        %v943 = vpop.f32.mrb[0].mxu0
        %v944 = vadd.f32 %v732, %v943
        %v945 = vpop.f32.mrb[0].mxu0
        %946 = vmatprep.mubr.bf16.mxu0 0
        %947 = vmatmul.mubr.bf16.gmra.mrb[0].mxu0 %v792
        %v948 = vpop.f32.mrb[0].mxu0
        %v949 = vadd.f32 %v732, %v948
        %v950 = vpop.f32.mrb[0].mxu0
        %v951 = vpop.f32.mrb[0].mxu0
        %v952 = vadd.f32 %v732, %v951
        %v953 = vpop.f32.mrb[0].mxu0
        %954 = vdwg.mxu0
        %v955 = vsel %vm745, %v829, 0.0
        %v956 = vsel %vm745, %v832, 0.0
        %v957 = vadd.f32 %v955, %v956
        %v958 = vsel %vm745, %v837, 0.0
        %v959 = vadd.f32 %v957, %v958
        %v960 = vsel %vm745, %v840, 0.0
        %v961 = vadd.f32 %v959, %v960
        %v962 = vsel %vm745, %v845, 0.0
        %v963 = vadd.f32 %v961, %v962
        %v964 = vsel %vm745, %v848, 0.0
        %v965 = vadd.f32 %v963, %v964
        %v966 = vsel %vm745, %v853, 0.0
        %v967 = vadd.f32 %v965, %v966
        %v968 = vsel %vm745, %v856, 0.0
        %v969 = vadd.f32 %v967, %v968
        %v970 = vsel %vm745, %v861, 0.0
        %v971 = vadd.f32 %v969, %v970
        %v972 = vsel %vm745, %v864, 0.0
        %v973 = vadd.f32 %v971, %v972
        %v974 = vsel %vm745, %v869, 0.0
        %v975 = vadd.f32 %v973, %v974
        %v976 = vsel %vm745, %v872, 0.0
        %v977 = vadd.f32 %v975, %v976
        %v978 = vsel %vm745, %v877, 0.0
        %v979 = vadd.f32 %v977, %v978
        %v980 = vsel %vm745, %v880, 0.0
        %v981 = vadd.f32 %v979, %v980
        %v982 = vsel %vm745, %v885, 0.0
        %v983 = vadd.f32 %v981, %v982
        %v984 = vsel %vm745, %v888, 0.0
        %v985 = vadd.f32 %v983, %v984
        %v986 = vsel %vm745, %v893, 0.0
        %v987 = vadd.f32 %v985, %v986
        %v988 = vsel %vm745, %v896, 0.0
        %v989 = vadd.f32 %v987, %v988
        %v990 = vsel %vm745, %v901, 0.0
        %v991 = vadd.f32 %v989, %v990
        %v992 = vsel %vm745, %v904, 0.0
        %v993 = vadd.f32 %v991, %v992
        %v994 = vsel %vm745, %v909, 0.0
        %v995 = vadd.f32 %v993, %v994
        %v996 = vsel %vm745, %v912, 0.0
        %v997 = vadd.f32 %v995, %v996
        %v998 = vsel %vm745, %v917, 0.0
        %v999 = vadd.f32 %v997, %v998
        %v1000 = vsel %vm745, %v920, 0.0
        %v1001 = vadd.f32 %v999, %v1000
        %v1002 = vsel %vm745, %v925, 0.0
        %v1003 = vadd.f32 %v1001, %v1002
        %v1004 = vsel %vm745, %v928, 0.0
        %v1005 = vadd.f32 %v1003, %v1004
        %v1006 = vsel %vm745, %v933, 0.0
        %v1007 = vadd.f32 %v1005, %v1006
        %v1008 = vsel %vm745, %v936, 0.0
        %v1009 = vadd.f32 %v1007, %v1008
        %v1010 = vsel %vm745, %v941, 0.0
        %v1011 = vadd.f32 %v1009, %v1010
        %v1012 = vsel %vm745, %v944, 0.0
        %v1013 = vadd.f32 %v1011, %v1012
        %v1014 = vsel %vm745, %v949, 0.0
        %v1015 = vadd.f32 %v1013, %v1014
        %v1016 = vsel %vm745, %v952, 0.0
        %v1017 = vadd.f32 %v1015, %v1016
        %v1018 = vrot.slane %v1017, 4
        %v1019 = vadd.f32 %v1017, %v1018
        %v1020 = vrot.slane %v1019, 2
        %v1021 = vadd.f32 %v1019, %v1020
        %v1022 = vrot.slane %v1021, 1
        %v1023 = vadd.f32 %v1021, %v1022
        %v1024 = vmul.f32 %v829, %v829
        %v1025 = vmul.f32 %v832, %v832
        %v1026 = vmul.f32 %v837, %v837
        %v1027 = vmul.f32 %v840, %v840
        %v1028 = vmul.f32 %v845, %v845
        %v1029 = vmul.f32 %v848, %v848
        %v1030 = vmul.f32 %v853, %v853
        %v1031 = vmul.f32 %v856, %v856
        %v1032 = vmul.f32 %v861, %v861
        %v1033 = vmul.f32 %v864, %v864
        %v1034 = vmul.f32 %v869, %v869
        %v1035 = vmul.f32 %v872, %v872
        %v1036 = vmul.f32 %v877, %v877
        %v1037 = vmul.f32 %v880, %v880
        %v1038 = vmul.f32 %v885, %v885
        %v1039 = vmul.f32 %v888, %v888
        %v1040 = vmul.f32 %v893, %v893
        %v1041 = vmul.f32 %v896, %v896
        %v1042 = vmul.f32 %v901, %v901
        %v1043 = vmul.f32 %v904, %v904
        %v1044 = vmul.f32 %v909, %v909
        %v1045 = vmul.f32 %v912, %v912
        %v1046 = vmul.f32 %v917, %v917
        %v1047 = vmul.f32 %v920, %v920
        %v1048 = vmul.f32 %v925, %v925
        %v1049 = vmul.f32 %v928, %v928
        %v1050 = vmul.f32 %v933, %v933
        %v1051 = vmul.f32 %v936, %v936
        %v1052 = vmul.f32 %v941, %v941
        %v1053 = vmul.f32 %v944, %v944
        %v1054 = vmul.f32 %v949, %v949
        %v1055 = vmul.f32 %v952, %v952
        %v1056 = vsel %vm745, %v1024, 0.0
        %v1057 = vsel %vm745, %v1025, 0.0
        %v1058 = vadd.f32 %v1056, %v1057
        %v1059 = vsel %vm745, %v1026, 0.0
        %v1060 = vadd.f32 %v1058, %v1059
        %v1061 = vsel %vm745, %v1027, 0.0
        %v1062 = vadd.f32 %v1060, %v1061
        %v1063 = vsel %vm745, %v1028, 0.0
        %v1064 = vadd.f32 %v1062, %v1063
        %v1065 = vsel %vm745, %v1029, 0.0
        %v1066 = vadd.f32 %v1064, %v1065
        %v1067 = vsel %vm745, %v1030, 0.0
        %v1068 = vadd.f32 %v1066, %v1067
        %v1069 = vsel %vm745, %v1031, 0.0
        %v1070 = vadd.f32 %v1068, %v1069
        %v1071 = vsel %vm745, %v1032, 0.0
        %v1072 = vadd.f32 %v1070, %v1071
        %v1073 = vsel %vm745, %v1033, 0.0
        %v1074 = vadd.f32 %v1072, %v1073
        %v1075 = vsel %vm745, %v1034, 0.0
        %v1076 = vadd.f32 %v1074, %v1075
        %v1077 = vsel %vm745, %v1035, 0.0
        %v1078 = vadd.f32 %v1076, %v1077
        %v1079 = vsel %vm745, %v1036, 0.0
        %v1080 = vadd.f32 %v1078, %v1079
        %v1081 = vsel %vm745, %v1037, 0.0
        %v1082 = vadd.f32 %v1080, %v1081
        %v1083 = vsel %vm745, %v1038, 0.0
        %v1084 = vadd.f32 %v1082, %v1083
        %v1085 = vsel %vm745, %v1039, 0.0
        %v1086 = vadd.f32 %v1084, %v1085
        %v1087 = vsel %vm745, %v1040, 0.0
        %v1088 = vadd.f32 %v1086, %v1087
        %v1089 = vsel %vm745, %v1041, 0.0
        %v1090 = vadd.f32 %v1088, %v1089
        %v1091 = vsel %vm745, %v1042, 0.0
        %v1092 = vadd.f32 %v1090, %v1091
        %v1093 = vsel %vm745, %v1043, 0.0
        %v1094 = vadd.f32 %v1092, %v1093
        %v1095 = vsel %vm745, %v1044, 0.0
        %v1096 = vadd.f32 %v1094, %v1095
        %v1097 = vsel %vm745, %v1045, 0.0
        %v1098 = vadd.f32 %v1096, %v1097
        %v1099 = vsel %vm745, %v1046, 0.0
        %v1100 = vadd.f32 %v1098, %v1099
        %v1101 = vsel %vm745, %v1047, 0.0
        %v1102 = vadd.f32 %v1100, %v1101
        %v1103 = vsel %vm745, %v1048, 0.0
        %v1104 = vadd.f32 %v1102, %v1103
        %v1105 = vsel %vm745, %v1049, 0.0
        %v1106 = vadd.f32 %v1104, %v1105
        %v1107 = vsel %vm745, %v1050, 0.0
        %v1108 = vadd.f32 %v1106, %v1107
        %v1109 = vsel %vm745, %v1051, 0.0
        %v1110 = vadd.f32 %v1108, %v1109
        %v1111 = vsel %vm745, %v1052, 0.0
        %v1112 = vadd.f32 %v1110, %v1111
        %v1113 = vsel %vm745, %v1053, 0.0
        %v1114 = vadd.f32 %v1112, %v1113
        %v1115 = vsel %vm745, %v1054, 0.0
        %v1116 = vadd.f32 %v1114, %v1115
        %v1117 = vsel %vm745, %v1055, 0.0
        %v1118 = vadd.f32 %v1116, %v1117
        %v1119 = vrot.slane %v1118, 4
        %v1120 = vadd.f32 %v1118, %v1119
        %v1121 = vrot.slane %v1120, 2
        %v1122 = vadd.f32 %v1120, %v1121
        %v1123 = vrot.slane %v1122, 1
        %v1124 = vadd.f32 %v1122, %v1123
        %vm1125 = vcmask 1040384
        %v1126 = vsel %vm1125, %v1023, %v1124
        %v1127 = vmul.f32 %v1126, 0.001953125
        %v1128 = vld [vmem:[%s11] sm:$0xff]
        %v1129 = vld [vmem:[%s11 + $0x8] sm:$0xff]
        %v1130 = vld [vmem:[%s11 + $0x10] sm:$0xff]
        %v1131 = vld [vmem:[%s11 + $0x18] sm:$0xff]
        %v1133 = vsel %vm745, %v1127, 0
        %1135 = vmatprep.subr.mxu0 0.0
        %1136 = vmatpush1.msra.mxu0 %v1128
        %1137 = vmatprep.subr.mxu0 0.0
        %1138 = vmatpush1.msra.mxu0 %v1129
        %1139 = vmatprep.subr.mxu0 0.0
        %1140 = vmatpush1.msra.mxu0 %v1130
        %1141 = vmatprep.subr.mxu0 0.0
        %1142 = vmatpush1.msra.mxu0 %v1131
        %1143 = vmatprep.subr.mxu0 0.0
        %1144 = vmatpush1.msra.mxu0 0.0
        %1145 = vmatprep.subr.mxu0 0.0
        %1146 = vmatpush1.msra.mxu0 0.0
        %1147 = vmatprep.subr.mxu0 0.0
        %1148 = vmatpush1.msra.mxu0 0.0
        %1149 = vmatprep.subr.mxu0 0.0
        %1150 = vmatpush1.msra.mxu0 0.0
        %1151 = vmatprep.subr.mxu0 0.0
        %1152 = vmatpush1.msra.mxu0 0.0
        %1153 = vmatprep.subr.mxu0 0.0
        %1154 = vmatpush1.msra.mxu0 0.0
        %1155 = vmatprep.subr.mxu0 0.0
        %1156 = vmatpush1.msra.mxu0 0.0
        %1157 = vmatprep.subr.mxu0 0.0
        %1158 = vmatpush1.msra.mxu0 0.0
        %1159 = vmatprep.subr.mxu0 0.0
        %1160 = vmatpush1.msra.mxu0 0.0
        %1161 = vmatprep.subr.mxu0 0.0
        %1162 = vmatpush1.msra.mxu0 0.0
        %1163 = vmatprep.subr.mxu0 0.0
        %1164 = vmatpush1.msra.mxu0 0.0
        %1165 = vmatprep.subr.mxu0 0.0
        %1166 = vmatpush1.msra.mxu0 0.0
        %1167 = vmatprep.subr.mxu0 0.0
        %1168 = vmatpush1.msra.mxu0 0.0
        %1169 = vmatprep.subr.mxu0 0.0
        %1170 = vmatpush1.msra.mxu0 0.0
        %1171 = vmatprep.subr.mxu0 0.0
        %1172 = vmatpush1.msra.mxu0 0.0
        %1173 = vmatprep.subr.mxu0 0.0
        %1174 = vmatpush1.msra.mxu0 0.0
        %1175 = vmatprep.subr.mxu0 0.0
        %1176 = vmatpush1.msra.mxu0 0.0
        %1177 = vmatprep.subr.mxu0 0.0
        %1178 = vmatpush1.msra.mxu0 0.0
        %1179 = vmatprep.subr.mxu0 0.0
        %1180 = vmatpush1.msra.mxu0 0.0
        %1181 = vmatprep.subr.mxu0 0.0
        %1182 = vmatpush1.msra.mxu0 0.0
        %1183 = vmatprep.subr.mxu0 0.0
        %1184 = vmatpush1.msra.mxu0 0.0
        %1185 = vmatprep.subr.mxu0 0.0
        %1186 = vmatpush1.msra.mxu0 0.0
        %1187 = vmatprep.subr.mxu0 0.0
        %1188 = vmatpush1.msra.mxu0 0.0
        %1189 = vmatprep.subr.mxu0 0.0
        %1190 = vmatpush1.msra.mxu0 0.0
        %1191 = vmatprep.subr.mxu0 0.0
        %1192 = vmatpush1.msra.mxu0 0.0
        %1193 = vmatprep.subr.mxu0 0.0
        %1194 = vmatpush1.msra.mxu0 0.0
        %1195 = vmatprep.subr.mxu0 0.0
        %1196 = vmatpush1.msra.mxu0 0.0
        %1197 = vmatprep.subr.mxu0 0.0
        %1198 = vmatpush1.msra.mxu0 0.0
        %1199 = vmatprep.mubr.f32.mxu0 0.0
        %1200 = vmatmul.mubr.f32.gmra.mrb[0].mxu0 %v1133
        %v1201 = vpop.f32.mrb[0].mxu0
        %v1202 = vadd.f32 0.0, %v1201
        %v1203 = vpop.f32.mrb[0].mxu0
        %1204 = vdwg.mxu0
        %v1205 = vmul.f32 %v1202, %v1202
        %v1207 = vrot.slane %v1205, 7
        %v1209 = vsub.f32 %v1202, %v1207
        %v1210 = vlaneseq
        %v1211 = vshrl.u32 %v1210, 7
        %v1212 = vsub.s32 0, %v1211
        %v1213 = vrot.slane %v1202, %v1212
        %v1214 = vsub.f32 %v829, %v1213
        %v1215 = vsub.f32 %v832, %v1213
        %v1216 = vsub.f32 %v837, %v1213
        %v1217 = vsub.f32 %v840, %v1213
        %v1218 = vsub.f32 %v845, %v1213
        %v1219 = vsub.f32 %v848, %v1213
        %v1220 = vsub.f32 %v853, %v1213
        %v1221 = vsub.f32 %v856, %v1213
        %v1222 = vsub.f32 %v861, %v1213
        %v1223 = vsub.f32 %v864, %v1213
        %v1224 = vsub.f32 %v869, %v1213
        %v1225 = vsub.f32 %v872, %v1213
        %v1226 = vsub.f32 %v877, %v1213
        %v1227 = vsub.f32 %v880, %v1213
        %v1228 = vsub.f32 %v885, %v1213
        %v1229 = vsub.f32 %v888, %v1213
        %v1230 = vsub.f32 %v893, %v1213
        %v1231 = vsub.f32 %v896, %v1213
        %v1232 = vsub.f32 %v901, %v1213
        %v1233 = vsub.f32 %v904, %v1213
        %v1234 = vsub.f32 %v909, %v1213
        %v1235 = vsub.f32 %v912, %v1213
        %v1236 = vsub.f32 %v917, %v1213
        %v1237 = vsub.f32 %v920, %v1213
        %v1238 = vsub.f32 %v925, %v1213
        %v1239 = vsub.f32 %v928, %v1213
        %v1240 = vsub.f32 %v933, %v1213
        %v1241 = vsub.f32 %v936, %v1213
        %v1242 = vsub.f32 %v941, %v1213
        %v1243 = vsub.f32 %v944, %v1213
        %v1244 = vsub.f32 %v949, %v1213
        %v1245 = vsub.f32 %v952, %v1213
        %v1246 = vadd.f32 %v1209, 1e-05
        %v1247 = vrsqrt.pop %v1246
        %v1248 = vlaneseq
        %v1249 = vshrl.u32 %v1248, 7
        %v1250 = vsub.s32 1, %v1249
        %v1251 = vrot.slane %v1247, %v1250
        %v1252 = vmul.f32 %v1214, %v1251
        %v1253 = vmul.f32 %v1215, %v1251
        %v1254 = vmul.f32 %v1216, %v1251
        %v1255 = vmul.f32 %v1217, %v1251
        %v1256 = vmul.f32 %v1218, %v1251
        %v1257 = vmul.f32 %v1219, %v1251
        %v1258 = vmul.f32 %v1220, %v1251
        %v1259 = vmul.f32 %v1221, %v1251
        %v1260 = vmul.f32 %v1222, %v1251
        %v1261 = vmul.f32 %v1223, %v1251
        %v1262 = vmul.f32 %v1224, %v1251
        %v1263 = vmul.f32 %v1225, %v1251
        %v1264 = vmul.f32 %v1226, %v1251
        %v1265 = vmul.f32 %v1227, %v1251
        %v1266 = vmul.f32 %v1228, %v1251
        %v1267 = vmul.f32 %v1229, %v1251
        %v1268 = vmul.f32 %v1230, %v1251
        %v1269 = vmul.f32 %v1231, %v1251
        %v1270 = vmul.f32 %v1232, %v1251
        %v1271 = vmul.f32 %v1233, %v1251
        %v1272 = vmul.f32 %v1234, %v1251
        %v1273 = vmul.f32 %v1235, %v1251
        %v1274 = vmul.f32 %v1236, %v1251
        %v1275 = vmul.f32 %v1237, %v1251
        %v1276 = vmul.f32 %v1238, %v1251
        %v1277 = vmul.f32 %v1239, %v1251
        %v1278 = vmul.f32 %v1240, %v1251
        %v1279 = vmul.f32 %v1241, %v1251
        %v1280 = vmul.f32 %v1242, %v1251
        %v1281 = vmul.f32 %v1243, %v1251
        %v1282 = vmul.f32 %v1244, %v1251
        %v1283 = vmul.f32 %v1245, %v1251
        %v1284 = vlaneseq
        %v1285 = vshrl.u32 %v1284, 7
        %v1286 = vsub.s32 1, %v1285
        %v1287 = vrot.slane %v708, %v1286
        %v1288 = vmul.f32 %v1252, %v1287
        %v1289 = vmul.f32 %v1253, %v1287
        %v1290 = vmul.f32 %v1254, %v1287
        %v1291 = vmul.f32 %v1255, %v1287
        %v1292 = vmul.f32 %v1256, %v1287
        %v1293 = vmul.f32 %v1257, %v1287
        %v1294 = vmul.f32 %v1258, %v1287
        %v1295 = vmul.f32 %v1259, %v1287
        %v1296 = vmul.f32 %v1260, %v1287
        %v1297 = vmul.f32 %v1261, %v1287
        %v1298 = vmul.f32 %v1262, %v1287
        %v1299 = vmul.f32 %v1263, %v1287
        %v1300 = vmul.f32 %v1264, %v1287
        %v1301 = vmul.f32 %v1265, %v1287
        %v1302 = vmul.f32 %v1266, %v1287
        %v1303 = vmul.f32 %v1267, %v1287
        %v1304 = vmul.f32 %v1268, %v1287
        %v1305 = vmul.f32 %v1269, %v1287
        %v1306 = vmul.f32 %v1270, %v1287
        %v1307 = vmul.f32 %v1271, %v1287
        %v1308 = vmul.f32 %v1272, %v1287
        %v1309 = vmul.f32 %v1273, %v1287
        %v1310 = vmul.f32 %v1274, %v1287
        %v1311 = vmul.f32 %v1275, %v1287
        %v1312 = vmul.f32 %v1276, %v1287
        %v1313 = vmul.f32 %v1277, %v1287
        %v1314 = vmul.f32 %v1278, %v1287
        %v1315 = vmul.f32 %v1279, %v1287
        %v1316 = vmul.f32 %v1280, %v1287
        %v1317 = vmul.f32 %v1281, %v1287
        %v1318 = vmul.f32 %v1282, %v1287
        %v1319 = vmul.f32 %v1283, %v1287
        %v1320 = vlaneseq
        %v1321 = vshrl.u32 %v1320, 7
        %v1322 = vsub.s32 2, %v1321
        %v1323 = vrot.slane %v708, %v1322
        %v1324 = vadd.f32 %v1288, %v1323
        %v1325 = vadd.f32 %v1289, %v1323
        %v1326 = vadd.f32 %v1290, %v1323
        %v1327 = vadd.f32 %v1291, %v1323
        %v1328 = vadd.f32 %v1292, %v1323
        %v1329 = vadd.f32 %v1293, %v1323
        %v1330 = vadd.f32 %v1294, %v1323
        %v1331 = vadd.f32 %v1295, %v1323
        %v1332 = vadd.f32 %v1296, %v1323
        %v1333 = vadd.f32 %v1297, %v1323
        %v1334 = vadd.f32 %v1298, %v1323
        %v1335 = vadd.f32 %v1299, %v1323
        %v1336 = vadd.f32 %v1300, %v1323
        %v1337 = vadd.f32 %v1301, %v1323
        %v1338 = vadd.f32 %v1302, %v1323
        %v1339 = vadd.f32 %v1303, %v1323
        %v1340 = vadd.f32 %v1304, %v1323
        %v1341 = vadd.f32 %v1305, %v1323
        %v1342 = vadd.f32 %v1306, %v1323
        %v1343 = vadd.f32 %v1307, %v1323
        %v1344 = vadd.f32 %v1308, %v1323
        %v1345 = vadd.f32 %v1309, %v1323
        %v1346 = vadd.f32 %v1310, %v1323
        %v1347 = vadd.f32 %v1311, %v1323
        %v1348 = vadd.f32 %v1312, %v1323
        %v1349 = vadd.f32 %v1313, %v1323
        %v1350 = vadd.f32 %v1314, %v1323
        %v1351 = vadd.f32 %v1315, %v1323
        %v1352 = vadd.f32 %v1316, %v1323
        %v1353 = vadd.f32 %v1317, %v1323
        %v1354 = vadd.f32 %v1318, %v1323
        %v1355 = vadd.f32 %v1319, %v1323
        %v1356 = vld [vmem:[%s673] sm:$0xff]
        %v1357 = vld [vmem:[%s673 + $0x8] sm:$0xff]
        %v1358 = vld [vmem:[%s673 + $0x10] sm:$0xff]
        %v1359 = vld [vmem:[%s673 + $0x18] sm:$0xff]
        %v1360 = vld [vmem:[%s673 + $0x20] sm:$0xff]
        %v1361 = vld [vmem:[%s673 + $0x28] sm:$0xff]
        %v1362 = vld [vmem:[%s673 + $0x30] sm:$0xff]
        %v1363 = vld [vmem:[%s673 + $0x38] sm:$0xff]
        %v1364 = vld [vmem:[%s6] sm:$0x7]
        %v1365 = vpack.c.bf16 %v1357, %v1356
        %v1366 = vpack.c.bf16 %v1359, %v1358
        %v1367 = vpack.c.bf16 %v1361, %v1360
        %v1368 = vpack.c.bf16 %v1363, %v1362
        %v1369 = vld [vmem:[%s5] sm:$0xf]
        %v1370 = vld [vmem:[%s5 + $0x4] sm:$0xf]
        %v1371 = vld [vmem:[%s5 + $0x8] sm:$0xf]
        %v1372 = vld [vmem:[%s5 + $0xc] sm:$0xf]
        %v1373 = vlaneseq
        %v1374 = vshrl.u32 %v1373, 7
        %v1375 = vsub.s32 0, %v1374
        %v1376 = vrot.slane %v1364, %v1375
        %v1381 = vunpack.c.l.b16 %v1369
        %v1382 = vunpack.c.l.b16 %v1370
        %v1383 = vunpack.c.l.b16 %v1371
        %v1384 = vunpack.c.l.b16 %v1372
        %v1385 = vpack.c.b16 %v1382, %v1381
        %v1386 = vpack.c.b16 %v1384, %v1383
        %v1390 = vsel %vm745, %v1365, 0
        %v1393 = vsel %vm745, %v1366, 0
        %v1396 = vsel %vm745, %v1367, 0
        %v1399 = vsel %vm745, %v1368, 0
        %1401 = vmatprep.subr.bf16.mxu0 0
        %1402 = vmatpush1.bf16.msra.mxu0 %v1385
        %1403 = vmatprep.subr.bf16.mxu0 0
        %1404 = vmatpush1.bf16.msra.mxu0 %v1386
        %1405 = vmatprep.subr.bf16.mxu0 0
        %1406 = vmatpush1.bf16.msra.mxu0 0
        %1407 = vmatprep.subr.bf16.mxu0 0
        %1408 = vmatpush1.bf16.msra.mxu0 0
        %1409 = vmatprep.subr.bf16.mxu0 0
        %1410 = vmatpush1.bf16.msra.mxu0 0
        %1411 = vmatprep.subr.bf16.mxu0 0
        %1412 = vmatpush1.bf16.msra.mxu0 0
        %1413 = vmatprep.subr.bf16.mxu0 0
        %1414 = vmatpush1.bf16.msra.mxu0 0
        %1415 = vmatprep.subr.bf16.mxu0 0
        %1416 = vmatpush1.bf16.msra.mxu0 0
        %1417 = vmatprep.subr.bf16.mxu0 0
        %1418 = vmatpush1.bf16.msra.mxu0 0
        %1419 = vmatprep.subr.bf16.mxu0 0
        %1420 = vmatpush1.bf16.msra.mxu0 0
        %1421 = vmatprep.subr.bf16.mxu0 0
        %1422 = vmatpush1.bf16.msra.mxu0 0
        %1423 = vmatprep.subr.bf16.mxu0 0
        %1424 = vmatpush1.bf16.msra.mxu0 0
        %1425 = vmatprep.subr.bf16.mxu0 0
        %1426 = vmatpush1.bf16.msra.mxu0 0
        %1427 = vmatprep.subr.bf16.mxu0 0
        %1428 = vmatpush1.bf16.msra.mxu0 0
        %1429 = vmatprep.subr.bf16.mxu0 0
        %1430 = vmatpush1.bf16.msra.mxu0 0
        %1431 = vmatprep.subr.bf16.mxu0 0
        %1432 = vmatpush1.bf16.msra.mxu0 0
        %1433 = vmatprep.mubr.bf16.mxu0 0
        %1434 = vmatmul.mubr.bf16.gmra.mrb[0].mxu0 %v1390
        %v1435 = vpop.f32.mrb[0].mxu0
        %v1436 = vadd.f32 %v1376, %v1435
        %v1437 = vpop.f32.mrb[0].mxu0
        %v1438 = vpop.f32.mrb[0].mxu0
        %v1439 = vadd.f32 %v1376, %v1438
        %v1440 = vpop.f32.mrb[0].mxu0
        %1441 = vmatprep.mubr.bf16.mxu0 0
        %1442 = vmatmul.mubr.bf16.gmra.mrb[0].mxu0 %v1393
        %v1443 = vpop.f32.mrb[0].mxu0
        %v1444 = vadd.f32 %v1376, %v1443
        %v1445 = vpop.f32.mrb[0].mxu0
        %v1446 = vpop.f32.mrb[0].mxu0
        %v1447 = vadd.f32 %v1376, %v1446
        %v1448 = vpop.f32.mrb[0].mxu0
        %1449 = vmatprep.mubr.bf16.mxu0 0
        %1450 = vmatmul.mubr.bf16.gmra.mrb[0].mxu0 %v1396
        %v1451 = vpop.f32.mrb[0].mxu0
        %v1452 = vadd.f32 %v1376, %v1451
        %v1453 = vpop.f32.mrb[0].mxu0
        %v1454 = vpop.f32.mrb[0].mxu0
        %v1455 = vadd.f32 %v1376, %v1454
        %v1456 = vpop.f32.mrb[0].mxu0
        %1457 = vmatprep.mubr.bf16.mxu0 0
        %1458 = vmatmul.mubr.bf16.gmra.mrb[0].mxu0 %v1399
        %v1459 = vpop.f32.mrb[0].mxu0
        %v1460 = vadd.f32 %v1376, %v1459
        %v1461 = vpop.f32.mrb[0].mxu0
        %v1462 = vpop.f32.mrb[0].mxu0
        %v1463 = vadd.f32 %v1376, %v1462
        %v1464 = vpop.f32.mrb[0].mxu0
        %1465 = vdwg.mxu0
        %vm1466 = vcmask 523264
        %v1467 = vsel %vm1466, %v1436, 0.0
        %v1468 = vsel %vm1466, %v1439, 0.0
        %v1469 = vadd.f32 %v1467, %v1468
        %v1470 = vsel %vm1466, %v1444, 0.0
        %v1471 = vadd.f32 %v1469, %v1470
        %v1472 = vsel %vm1466, %v1447, 0.0
        %v1473 = vadd.f32 %v1471, %v1472
        %v1474 = vsel %vm1466, %v1452, 0.0
        %v1475 = vadd.f32 %v1473, %v1474
        %v1476 = vsel %vm1466, %v1455, 0.0
        %v1477 = vadd.f32 %v1475, %v1476
        %v1478 = vsel %vm1466, %v1460, 0.0
        %v1479 = vadd.f32 %v1477, %v1478
        %v1480 = vsel %vm1466, %v1463, 0.0
        %v1481 = vadd.f32 %v1479, %v1480
        %v1482 = vrot.slane %v1481, 4
        %v1483 = vadd.f32 %v1481, %v1482
        %v1484 = vrot.slane %v1483, 2
        %v1485 = vadd.f32 %v1483, %v1484
        %v1486 = vrot.slane %v1485, 1
        %v1487 = vadd.f32 %v1485, %v1486
        %v1488 = vmul.f32 %v1436, %v1436
        %v1489 = vmul.f32 %v1439, %v1439
        %v1490 = vmul.f32 %v1444, %v1444
        %v1491 = vmul.f32 %v1447, %v1447
        %v1492 = vmul.f32 %v1452, %v1452
        %v1493 = vmul.f32 %v1455, %v1455
        %v1494 = vmul.f32 %v1460, %v1460
        %v1495 = vmul.f32 %v1463, %v1463
        %v1496 = vsel %vm1466, %v1488, 0.0
        %v1497 = vsel %vm1466, %v1489, 0.0
        %v1498 = vadd.f32 %v1496, %v1497
        %v1499 = vsel %vm1466, %v1490, 0.0
        %v1500 = vadd.f32 %v1498, %v1499
        %v1501 = vsel %vm1466, %v1491, 0.0
        %v1502 = vadd.f32 %v1500, %v1501
        %v1503 = vsel %vm1466, %v1492, 0.0
        %v1504 = vadd.f32 %v1502, %v1503
        %v1505 = vsel %vm1466, %v1493, 0.0
        %v1506 = vadd.f32 %v1504, %v1505
        %v1507 = vsel %vm1466, %v1494, 0.0
        %v1508 = vadd.f32 %v1506, %v1507
        %v1509 = vsel %vm1466, %v1495, 0.0
        %v1510 = vadd.f32 %v1508, %v1509
        %v1511 = vrot.slane %v1510, 4
        %v1512 = vadd.f32 %v1510, %v1511
        %v1513 = vrot.slane %v1512, 2
        %v1514 = vadd.f32 %v1512, %v1513
        %v1515 = vrot.slane %v1514, 1
        %v1516 = vadd.f32 %v1514, %v1515
        %v1517 = vsel %vm1125, %v1487, %v1516
        %v1518 = vmul.f32 %v1517, 0.0078125
        %v1519 = vld [vmem:[%s12] sm:$0xff]
        %v1520 = vld [vmem:[%s12 + $0x8] sm:$0xff]
        %v1521 = vld [vmem:[%s12 + $0x10] sm:$0xff]
        %v1522 = vld [vmem:[%s12 + $0x18] sm:$0xff]
        %v1523 = vld [vmem:[%s12 + $0x20] sm:$0xff]
        %v1524 = vld [vmem:[%s12 + $0x28] sm:$0xff]
        %v1525 = vld [vmem:[%s12 + $0x30] sm:$0xff]
        %v1526 = vld [vmem:[%s12 + $0x38] sm:$0xff]
        %v1528 = vsel %vm1466, %v1518, 0
        %1530 = vmatprep.subr.mxu0 0.0
        %1531 = vmatpush1.msra.mxu0 %v1519
        %1532 = vmatprep.subr.mxu0 0.0
        %1533 = vmatpush1.msra.mxu0 %v1520
        %1534 = vmatprep.subr.mxu0 0.0
        %1535 = vmatpush1.msra.mxu0 %v1521
        %1536 = vmatprep.subr.mxu0 0.0
        %1537 = vmatpush1.msra.mxu0 %v1522
        %1538 = vmatprep.subr.mxu0 0.0
        %1539 = vmatpush1.msra.mxu0 %v1523
        %1540 = vmatprep.subr.mxu0 0.0
        %1541 = vmatpush1.msra.mxu0 %v1524
        %1542 = vmatprep.subr.mxu0 0.0
        %1543 = vmatpush1.msra.mxu0 %v1525
        %1544 = vmatprep.subr.mxu0 0.0
        %1545 = vmatpush1.msra.mxu0 %v1526
        %1546 = vmatprep.subr.mxu0 0.0
        %1547 = vmatpush1.msra.mxu0 0.0
        %1548 = vmatprep.subr.mxu0 0.0
        %1549 = vmatpush1.msra.mxu0 0.0
        %1550 = vmatprep.subr.mxu0 0.0
        %1551 = vmatpush1.msra.mxu0 0.0
        %1552 = vmatprep.subr.mxu0 0.0
        %1553 = vmatpush1.msra.mxu0 0.0
        %1554 = vmatprep.subr.mxu0 0.0
        %1555 = vmatpush1.msra.mxu0 0.0
        %1556 = vmatprep.subr.mxu0 0.0
        %1557 = vmatpush1.msra.mxu0 0.0
        %1558 = vmatprep.subr.mxu0 0.0
        %1559 = vmatpush1.msra.mxu0 0.0
        %1560 = vmatprep.subr.mxu0 0.0
        %1561 = vmatpush1.msra.mxu0 0.0
        %1562 = vmatprep.subr.mxu0 0.0
        %1563 = vmatpush1.msra.mxu0 0.0
        %1564 = vmatprep.subr.mxu0 0.0
        %1565 = vmatpush1.msra.mxu0 0.0
        %1566 = vmatprep.subr.mxu0 0.0
        %1567 = vmatpush1.msra.mxu0 0.0
        %1568 = vmatprep.subr.mxu0 0.0
        %1569 = vmatpush1.msra.mxu0 0.0
        %1570 = vmatprep.subr.mxu0 0.0
        %1571 = vmatpush1.msra.mxu0 0.0
        %1572 = vmatprep.subr.mxu0 0.0
        %1573 = vmatpush1.msra.mxu0 0.0
        %1574 = vmatprep.subr.mxu0 0.0
        %1575 = vmatpush1.msra.mxu0 0.0
        %1576 = vmatprep.subr.mxu0 0.0
        %1577 = vmatpush1.msra.mxu0 0.0
        %1578 = vmatprep.subr.mxu0 0.0
        %1579 = vmatpush1.msra.mxu0 0.0
        %1580 = vmatprep.subr.mxu0 0.0
        %1581 = vmatpush1.msra.mxu0 0.0
        %1582 = vmatprep.subr.mxu0 0.0
        %1583 = vmatpush1.msra.mxu0 0.0
        %1584 = vmatprep.subr.mxu0 0.0
        %1585 = vmatpush1.msra.mxu0 0.0
        %1586 = vmatprep.subr.mxu0 0.0
        %1587 = vmatpush1.msra.mxu0 0.0
        %1588 = vmatprep.subr.mxu0 0.0
        %1589 = vmatpush1.msra.mxu0 0.0
        %1590 = vmatprep.subr.mxu0 0.0
        %1591 = vmatpush1.msra.mxu0 0.0
        %1592 = vmatprep.subr.mxu0 0.0
        %1593 = vmatpush1.msra.mxu0 0.0
        %1594 = vmatprep.mubr.f32.mxu0 0.0
        %1595 = vmatmul.mubr.f32.gmra.mrb[0].mxu0 %v1528
        %v1596 = vpop.f32.mrb[0].mxu0
        %v1597 = vadd.f32 0.0, %v1596
        %v1598 = vpop.f32.mrb[0].mxu0
        %1599 = vdwg.mxu0
        %v1600 = vmul.f32 %v1597, %v1597
        %v1602 = vrot.slane %v1600, 7
        %v1604 = vsub.f32 %v1597, %v1602
        %v1605 = vlaneseq
        %v1606 = vshrl.u32 %v1605, 7
        %v1607 = vsub.s32 0, %v1606
        %v1608 = vrot.slane %v1597, %v1607
        %v1609 = vsub.f32 %v1436, %v1608
        %v1610 = vsub.f32 %v1439, %v1608
        %v1611 = vsub.f32 %v1444, %v1608
        %v1612 = vsub.f32 %v1447, %v1608
        %v1613 = vsub.f32 %v1452, %v1608
        %v1614 = vsub.f32 %v1455, %v1608
        %v1615 = vsub.f32 %v1460, %v1608
        %v1616 = vsub.f32 %v1463, %v1608
        %v1617 = vadd.f32 %v1604, 1e-05
        %v1618 = vrsqrt.pop %v1617
        %v1619 = vlaneseq
        %v1620 = vshrl.u32 %v1619, 7
        %v1621 = vsub.s32 1, %v1620
        %v1622 = vrot.slane %v1618, %v1621
        %v1623 = vmul.f32 %v1609, %v1622
        %v1624 = vmul.f32 %v1610, %v1622
        %v1625 = vmul.f32 %v1611, %v1622
        %v1626 = vmul.f32 %v1612, %v1622
        %v1627 = vmul.f32 %v1613, %v1622
        %v1628 = vmul.f32 %v1614, %v1622
        %v1629 = vmul.f32 %v1615, %v1622
        %v1630 = vmul.f32 %v1616, %v1622
        %v1631 = vlaneseq
        %v1632 = vshrl.u32 %v1631, 7
        %v1633 = vsub.s32 1, %v1632
        %v1634 = vrot.slane %v1364, %v1633
        %v1635 = vmul.f32 %v1623, %v1634
        %v1636 = vmul.f32 %v1624, %v1634
        %v1637 = vmul.f32 %v1625, %v1634
        %v1638 = vmul.f32 %v1626, %v1634
        %v1639 = vmul.f32 %v1627, %v1634
        %v1640 = vmul.f32 %v1628, %v1634
        %v1641 = vmul.f32 %v1629, %v1634
        %v1642 = vmul.f32 %v1630, %v1634
        %v1643 = vlaneseq
        %v1644 = vshrl.u32 %v1643, 7
        %v1645 = vsub.s32 2, %v1644
        %v1646 = vrot.slane %v1364, %v1645
        %v1647 = vadd.f32 %v1635, %v1646
        %v1648 = vadd.f32 %v1636, %v1646
        %v1649 = vadd.f32 %v1637, %v1646
        %v1650 = vadd.f32 %v1638, %v1646
        %v1651 = vadd.f32 %v1639, %v1646
        %v1652 = vadd.f32 %v1640, %v1646
        %v1653 = vadd.f32 %v1641, %v1646
        %v1654 = vadd.f32 %v1642, %v1646
        %v1655 = vld [vmem:[%s667] sm:$0xff]
        %v1656 = vld [vmem:[%s667 + $0x8] sm:$0xff]
        %v1657 = vld [vmem:[%s667 + $0x10] sm:$0xff]
        %v1658 = vld [vmem:[%s667 + $0x18] sm:$0xff]
        %v1659 = vld [vmem:[%s667 + $0x20] sm:$0xff]
        %v1660 = vld [vmem:[%s667 + $0x28] sm:$0xff]
        %v1661 = vld [vmem:[%s667 + $0x30] sm:$0xff]
        %v1662 = vld [vmem:[%s667 + $0x38] sm:$0xff]
        %v1663 = vld [vmem:[%s8] sm:$0x7]
        %v1664 = vpack.c.bf16 %v1656, %v1655
        %v1665 = vpack.c.bf16 %v1658, %v1657
        %v1666 = vpack.c.bf16 %v1660, %v1659
        %v1667 = vpack.c.bf16 %v1662, %v1661
        %v1668 = vld [vmem:[%s7] sm:$0xf]
        %v1669 = vld [vmem:[%s7 + $0x4] sm:$0xf]
        %v1670 = vld [vmem:[%s7 + $0x8] sm:$0xf]
        %v1671 = vld [vmem:[%s7 + $0xc] sm:$0xf]
        %v1672 = vlaneseq
        %v1673 = vshrl.u32 %v1672, 7
        %v1674 = vsub.s32 0, %v1673
        %v1675 = vrot.slane %v1663, %v1674
        %v1680 = vunpack.c.l.b16 %v1668
        %v1681 = vunpack.c.l.b16 %v1669
        %v1682 = vunpack.c.l.b16 %v1670
        %v1683 = vunpack.c.l.b16 %v1671
        %v1684 = vpack.c.b16 %v1681, %v1680
        %v1685 = vpack.c.b16 %v1683, %v1682
        %v1689 = vsel %vm745, %v1664, 0
        %v1692 = vsel %vm745, %v1665, 0
        %v1695 = vsel %vm745, %v1666, 0
        %v1698 = vsel %vm745, %v1667, 0
        %1700 = vmatprep.subr.bf16.mxu0 0
        %1701 = vmatpush1.bf16.msra.mxu0 %v1684
        %1702 = vmatprep.subr.bf16.mxu0 0
        %1703 = vmatpush1.bf16.msra.mxu0 %v1685
        %1704 = vmatprep.subr.bf16.mxu0 0
        %1705 = vmatpush1.bf16.msra.mxu0 0
        %1706 = vmatprep.subr.bf16.mxu0 0
        %1707 = vmatpush1.bf16.msra.mxu0 0
        %1708 = vmatprep.subr.bf16.mxu0 0
        %1709 = vmatpush1.bf16.msra.mxu0 0
        %1710 = vmatprep.subr.bf16.mxu0 0
        %1711 = vmatpush1.bf16.msra.mxu0 0
        %1712 = vmatprep.subr.bf16.mxu0 0
        %1713 = vmatpush1.bf16.msra.mxu0 0
        %1714 = vmatprep.subr.bf16.mxu0 0
        %1715 = vmatpush1.bf16.msra.mxu0 0
        %1716 = vmatprep.subr.bf16.mxu0 0
        %1717 = vmatpush1.bf16.msra.mxu0 0
        %1718 = vmatprep.subr.bf16.mxu0 0
        %1719 = vmatpush1.bf16.msra.mxu0 0
        %1720 = vmatprep.subr.bf16.mxu0 0
        %1721 = vmatpush1.bf16.msra.mxu0 0
        %1722 = vmatprep.subr.bf16.mxu0 0
        %1723 = vmatpush1.bf16.msra.mxu0 0
        %1724 = vmatprep.subr.bf16.mxu0 0
        %1725 = vmatpush1.bf16.msra.mxu0 0
        %1726 = vmatprep.subr.bf16.mxu0 0
        %1727 = vmatpush1.bf16.msra.mxu0 0
        %1728 = vmatprep.subr.bf16.mxu0 0
        %1729 = vmatpush1.bf16.msra.mxu0 0
        %1730 = vmatprep.subr.bf16.mxu0 0
        %1731 = vmatpush1.bf16.msra.mxu0 0
        %1732 = vmatprep.mubr.bf16.mxu0 0
        %1733 = vmatmul.mubr.bf16.gmra.mrb[0].mxu0 %v1689
        %v1734 = vpop.f32.mrb[0].mxu0
        %v1735 = vadd.f32 %v1675, %v1734
        %v1736 = vpop.f32.mrb[0].mxu0
        %v1737 = vpop.f32.mrb[0].mxu0
        %v1738 = vadd.f32 %v1675, %v1737
        %v1739 = vpop.f32.mrb[0].mxu0
        %1740 = vmatprep.mubr.bf16.mxu0 0
        %1741 = vmatmul.mubr.bf16.gmra.mrb[0].mxu0 %v1692
        %v1742 = vpop.f32.mrb[0].mxu0
        %v1743 = vadd.f32 %v1675, %v1742
        %v1744 = vpop.f32.mrb[0].mxu0
        %v1745 = vpop.f32.mrb[0].mxu0
        %v1746 = vadd.f32 %v1675, %v1745
        %v1747 = vpop.f32.mrb[0].mxu0
        %1748 = vmatprep.mubr.bf16.mxu0 0
        %1749 = vmatmul.mubr.bf16.gmra.mrb[0].mxu0 %v1695
        %v1750 = vpop.f32.mrb[0].mxu0
        %v1751 = vadd.f32 %v1675, %v1750
        %v1752 = vpop.f32.mrb[0].mxu0
        %v1753 = vpop.f32.mrb[0].mxu0
        %v1754 = vadd.f32 %v1675, %v1753
        %v1755 = vpop.f32.mrb[0].mxu0
        %1756 = vmatprep.mubr.bf16.mxu0 0
        %1757 = vmatmul.mubr.bf16.gmra.mrb[0].mxu0 %v1698
        %v1758 = vpop.f32.mrb[0].mxu0
        %v1759 = vadd.f32 %v1675, %v1758
        %v1760 = vpop.f32.mrb[0].mxu0
        %v1761 = vpop.f32.mrb[0].mxu0
        %v1762 = vadd.f32 %v1675, %v1761
        %v1763 = vpop.f32.mrb[0].mxu0
        %1764 = vdwg.mxu0
        %v1765 = vsel %vm745, %v1735, 0.0
        %v1766 = vsel %vm745, %v1738, 0.0
        %v1767 = vadd.f32 %v1765, %v1766
        %v1768 = vsel %vm745, %v1743, 0.0
        %v1769 = vadd.f32 %v1767, %v1768
        %v1770 = vsel %vm745, %v1746, 0.0
        %v1771 = vadd.f32 %v1769, %v1770
        %v1772 = vsel %vm745, %v1751, 0.0
        %v1773 = vadd.f32 %v1771, %v1772
        %v1774 = vsel %vm745, %v1754, 0.0
        %v1775 = vadd.f32 %v1773, %v1774
        %v1776 = vsel %vm745, %v1759, 0.0
        %v1777 = vadd.f32 %v1775, %v1776
        %v1778 = vsel %vm745, %v1762, 0.0
        %v1779 = vadd.f32 %v1777, %v1778
        %v1780 = vrot.slane %v1779, 4
        %v1781 = vadd.f32 %v1779, %v1780
        %v1782 = vrot.slane %v1781, 2
        %v1783 = vadd.f32 %v1781, %v1782
        %v1784 = vrot.slane %v1783, 1
        %v1785 = vadd.f32 %v1783, %v1784
        %v1786 = vmul.f32 %v1735, %v1735
        %v1787 = vmul.f32 %v1738, %v1738
        %v1788 = vmul.f32 %v1743, %v1743
        %v1789 = vmul.f32 %v1746, %v1746
        %v1790 = vmul.f32 %v1751, %v1751
        %v1791 = vmul.f32 %v1754, %v1754
        %v1792 = vmul.f32 %v1759, %v1759
        %v1793 = vmul.f32 %v1762, %v1762
        %v1794 = vsel %vm745, %v1786, 0.0
        %v1795 = vsel %vm745, %v1787, 0.0
        %v1796 = vadd.f32 %v1794, %v1795
        %v1797 = vsel %vm745, %v1788, 0.0
        %v1798 = vadd.f32 %v1796, %v1797
        %v1799 = vsel %vm745, %v1789, 0.0
        %v1800 = vadd.f32 %v1798, %v1799
        %v1801 = vsel %vm745, %v1790, 0.0
        %v1802 = vadd.f32 %v1800, %v1801
        %v1803 = vsel %vm745, %v1791, 0.0
        %v1804 = vadd.f32 %v1802, %v1803
        %v1805 = vsel %vm745, %v1792, 0.0
        %v1806 = vadd.f32 %v1804, %v1805
        %v1807 = vsel %vm745, %v1793, 0.0
        %v1808 = vadd.f32 %v1806, %v1807
        %v1809 = vrot.slane %v1808, 4
        %v1810 = vadd.f32 %v1808, %v1809
        %v1811 = vrot.slane %v1810, 2
        %v1812 = vadd.f32 %v1810, %v1811
        %v1813 = vrot.slane %v1812, 1
        %v1814 = vadd.f32 %v1812, %v1813
        %v1815 = vsel %vm1125, %v1785, %v1814
        %v1816 = vmul.f32 %v1815, 0.0078125
        %v1818 = vsel %vm745, %v1816, 0
        %1820 = vmatprep.subr.mxu0 0.0
        %1821 = vmatpush1.msra.mxu0 %v1128
        %1822 = vmatprep.subr.mxu0 0.0
        %1823 = vmatpush1.msra.mxu0 %v1129
        %1824 = vmatprep.subr.mxu0 0.0
        %1825 = vmatpush1.msra.mxu0 %v1130
        %1826 = vmatprep.subr.mxu0 0.0
        %1827 = vmatpush1.msra.mxu0 %v1131
        %1828 = vmatprep.subr.mxu0 0.0
        %1829 = vmatpush1.msra.mxu0 0.0
        %1830 = vmatprep.subr.mxu0 0.0
        %1831 = vmatpush1.msra.mxu0 0.0
        %1832 = vmatprep.subr.mxu0 0.0
        %1833 = vmatpush1.msra.mxu0 0.0
        %1834 = vmatprep.subr.mxu0 0.0
        %1835 = vmatpush1.msra.mxu0 0.0
        %1836 = vmatprep.subr.mxu0 0.0
        %1837 = vmatpush1.msra.mxu0 0.0
        %1838 = vmatprep.subr.mxu0 0.0
        %1839 = vmatpush1.msra.mxu0 0.0
        %1840 = vmatprep.subr.mxu0 0.0
        %1841 = vmatpush1.msra.mxu0 0.0
        %1842 = vmatprep.subr.mxu0 0.0
        %1843 = vmatpush1.msra.mxu0 0.0
        %1844 = vmatprep.subr.mxu0 0.0
        %1845 = vmatpush1.msra.mxu0 0.0
        %1846 = vmatprep.subr.mxu0 0.0
        %1847 = vmatpush1.msra.mxu0 0.0
        %1848 = vmatprep.subr.mxu0 0.0
        %1849 = vmatpush1.msra.mxu0 0.0
        %1850 = vmatprep.subr.mxu0 0.0
        %1851 = vmatpush1.msra.mxu0 0.0
        %1852 = vmatprep.subr.mxu0 0.0
        %1853 = vmatpush1.msra.mxu0 0.0
        %1854 = vmatprep.subr.mxu0 0.0
        %1855 = vmatpush1.msra.mxu0 0.0
        %1856 = vmatprep.subr.mxu0 0.0
        %1857 = vmatpush1.msra.mxu0 0.0
        %1858 = vmatprep.subr.mxu0 0.0
        %1859 = vmatpush1.msra.mxu0 0.0
        %1860 = vmatprep.subr.mxu0 0.0
        %1861 = vmatpush1.msra.mxu0 0.0
        %1862 = vmatprep.subr.mxu0 0.0
        %1863 = vmatpush1.msra.mxu0 0.0
        %1864 = vmatprep.subr.mxu0 0.0
        %1865 = vmatpush1.msra.mxu0 0.0
        %1866 = vmatprep.subr.mxu0 0.0
        %1867 = vmatpush1.msra.mxu0 0.0
        %1868 = vmatprep.subr.mxu0 0.0
        %1869 = vmatpush1.msra.mxu0 0.0
        %1870 = vmatprep.subr.mxu0 0.0
        %1871 = vmatpush1.msra.mxu0 0.0
        %1872 = vmatprep.subr.mxu0 0.0
        %1873 = vmatpush1.msra.mxu0 0.0
        %1874 = vmatprep.subr.mxu0 0.0
        %1875 = vmatpush1.msra.mxu0 0.0
        %1876 = vmatprep.subr.mxu0 0.0
        %1877 = vmatpush1.msra.mxu0 0.0
        %1878 = vmatprep.subr.mxu0 0.0
        %1879 = vmatpush1.msra.mxu0 0.0
        %1880 = vmatprep.subr.mxu0 0.0
        %1881 = vmatpush1.msra.mxu0 0.0
        %1882 = vmatprep.subr.mxu0 0.0
        %1883 = vmatpush1.msra.mxu0 0.0
        %1884 = vmatprep.mubr.f32.mxu0 0.0
        %1885 = vmatmul.mubr.f32.gmra.mrb[0].mxu0 %v1818
        %v1886 = vpop.f32.mrb[0].mxu0
        %v1887 = vadd.f32 0.0, %v1886
        %v1888 = vpop.f32.mrb[0].mxu0
        %1889 = vdwg.mxu0
        %v1890 = vmul.f32 %v1887, %v1887
        %v1892 = vrot.slane %v1890, 7
        %v1894 = vsub.f32 %v1887, %v1892
        %v1895 = vlaneseq
        %v1896 = vshrl.u32 %v1895, 7
        %v1897 = vsub.s32 0, %v1896
        %v1898 = vrot.slane %v1887, %v1897
        %v1899 = vsub.f32 %v1735, %v1898
        %v1900 = vsub.f32 %v1738, %v1898
        %v1901 = vsub.f32 %v1743, %v1898
        %v1902 = vsub.f32 %v1746, %v1898
        %v1903 = vsub.f32 %v1751, %v1898
        %v1904 = vsub.f32 %v1754, %v1898
        %v1905 = vsub.f32 %v1759, %v1898
        %v1906 = vsub.f32 %v1762, %v1898
        %v1907 = vadd.f32 %v1894, 1e-05
        %v1908 = vrsqrt.pop %v1907
        %v1909 = vlaneseq
        %v1910 = vshrl.u32 %v1909, 7
        %v1911 = vsub.s32 1, %v1910
        %v1912 = vrot.slane %v1908, %v1911
        %v1913 = vmul.f32 %v1899, %v1912
        %v1914 = vmul.f32 %v1900, %v1912
        %v1915 = vmul.f32 %v1901, %v1912
        %v1916 = vmul.f32 %v1902, %v1912
        %v1917 = vmul.f32 %v1903, %v1912
        %v1918 = vmul.f32 %v1904, %v1912
        %v1919 = vmul.f32 %v1905, %v1912
        %v1920 = vmul.f32 %v1906, %v1912
        %v1921 = vlaneseq
        %v1922 = vshrl.u32 %v1921, 7
        %v1923 = vsub.s32 1, %v1922
        %v1924 = vrot.slane %v1663, %v1923
        %v1925 = vmul.f32 %v1913, %v1924
        %v1926 = vmul.f32 %v1914, %v1924
        %v1927 = vmul.f32 %v1915, %v1924
        %v1928 = vmul.f32 %v1916, %v1924
        %v1929 = vmul.f32 %v1917, %v1924
        %v1930 = vmul.f32 %v1918, %v1924
        %v1931 = vmul.f32 %v1919, %v1924
        %v1932 = vmul.f32 %v1920, %v1924
        %v1933 = vlaneseq
        %v1934 = vshrl.u32 %v1933, 7
        %v1935 = vsub.s32 2, %v1934
        %v1936 = vrot.slane %v1663, %v1935
        %v1937 = vadd.f32 %v1925, %v1936
        %v1938 = vadd.f32 %v1926, %v1936
        %v1939 = vadd.f32 %v1927, %v1936
        %v1940 = vadd.f32 %v1928, %v1936
        %v1941 = vadd.f32 %v1929, %v1936
        %v1942 = vadd.f32 %v1930, %v1936
        %v1943 = vadd.f32 %v1931, %v1936
        %v1944 = vadd.f32 %v1932, %v1936
        %v1945 = vpack.c.bf16 %v1938, %v1937
        %v1946 = vpack.c.bf16 %v1940, %v1939
        %v1947 = vpack.c.bf16 %v1942, %v1941
        %v1948 = vpack.c.bf16 %v1944, %v1943
        %v1949 = vpack.c.bf16 %v1648, %v1647
        %v1950 = vpack.c.bf16 %v1650, %v1649
        %v1951 = vpack.c.bf16 %v1652, %v1651
        %v1952 = vpack.c.bf16 %v1654, %v1653
        %1957 = vrot.lane.b32.xlu0 %v1949, 96
        %v1958 = vpop.permute.xlu0 %1957
        %1959 = vrot.lane.b32.xlu0 %v1950, 96
        %v1960 = vpop.permute.xlu0 %1959
        %1961 = vrot.lane.b32.xlu0 %v1951, 96
        %v1962 = vpop.permute.xlu0 %1961
        %1963 = vrot.lane.b32.xlu0 %v1952, 96
        %v1964 = vpop.permute.xlu0 %1963
        %v1966 = vsel %vm745, %v1945, 0
        %v1969 = vsel %vm745, %v1946, 0
        %v1972 = vsel %vm745, %v1947, 0
        %v1975 = vsel %vm745, %v1948, 0
        %v1978 = vsel %vm745, %v1958, 0
        %v1981 = vsel %vm745, %v1960, 0
        %v1984 = vsel %vm745, %v1962, 0
        %v1987 = vsel %vm745, %v1964, 0
        %1989 = vmatprep.subr.bf16.mxu0 0
        %1990 = vmatpush1.bf16.xpose.msra.mxu0 %v1978
        %1991 = vmatprep.subr.bf16.mxu0 0
        %1992 = vmatpush1.bf16.xpose.msra.mxu0 %v1981
        %1993 = vmatprep.subr.bf16.mxu0 0
        %1994 = vmatpush1.bf16.xpose.msra.mxu0 %v1984
        %1995 = vmatprep.subr.bf16.mxu0 0
        %1996 = vmatpush1.bf16.xpose.msra.mxu0 %v1987
        %1997 = vmatprep.subr.bf16.mxu0 0
        %1998 = vmatpush1.bf16.xpose.msra.mxu0 0
        %1999 = vmatprep.subr.bf16.mxu0 0
        %2000 = vmatpush1.bf16.xpose.msra.mxu0 0
        %2001 = vmatprep.subr.bf16.mxu0 0
        %2002 = vmatpush1.bf16.xpose.msra.mxu0 0
        %2003 = vmatprep.subr.bf16.mxu0 0
        %2004 = vmatpush1.bf16.xpose.msra.mxu0 0
        %2005 = vmatprep.subr.bf16.mxu0 0
        %2006 = vmatpush1.bf16.xpose.msra.mxu0 0
        %2007 = vmatprep.subr.bf16.mxu0 0
        %2008 = vmatpush1.bf16.xpose.msra.mxu0 0
        %2009 = vmatprep.subr.bf16.mxu0 0
        %2010 = vmatpush1.bf16.xpose.msra.mxu0 0
        %2011 = vmatprep.subr.bf16.mxu0 0
        %2012 = vmatpush1.bf16.xpose.msra.mxu0 0
        %2013 = vmatprep.subr.bf16.mxu0 0
        %2014 = vmatpush1.bf16.xpose.msra.mxu0 0
        %2015 = vmatprep.subr.bf16.mxu0 0
        %2016 = vmatpush1.bf16.xpose.msra.mxu0 0
        %2017 = vmatprep.subr.bf16.mxu0 0
        %2018 = vmatpush1.bf16.xpose.msra.mxu0 0
        %2019 = vmatprep.subr.bf16.mxu0 0
        %2020 = vmatpush1.bf16.xpose.msra.mxu0 0
        %2021 = vmatprep.mubr.bf16.mxu0 0
        %2022 = vmatmul.mubr.bf16.gmra.mrb[0].mxu0 %v1966
        %v2023 = vpop.f32.mrb[0].mxu0
        %v2024 = vadd.f32 0.0, %v2023
        %v2025 = vpop.f32.mrb[0].mxu0
        %v2026 = vpop.f32.mrb[0].mxu0
        %v2027 = vadd.f32 0.0, %v2026
        %v2028 = vpop.f32.mrb[0].mxu0
        %2029 = vmatprep.mubr.bf16.mxu0 0
        %2030 = vmatmul.mubr.bf16.gmra.mrb[0].mxu0 %v1969
        %v2031 = vpop.f32.mrb[0].mxu0
        %v2032 = vadd.f32 0.0, %v2031
        %v2033 = vpop.f32.mrb[0].mxu0
        %v2034 = vpop.f32.mrb[0].mxu0
        %v2035 = vadd.f32 0.0, %v2034
        %v2036 = vpop.f32.mrb[0].mxu0
        %2037 = vmatprep.mubr.bf16.mxu0 0
        %2038 = vmatmul.mubr.bf16.gmra.mrb[0].mxu0 %v1972
        %v2039 = vpop.f32.mrb[0].mxu0
        %v2040 = vadd.f32 0.0, %v2039
        %v2041 = vpop.f32.mrb[0].mxu0
        %v2042 = vpop.f32.mrb[0].mxu0
        %v2043 = vadd.f32 0.0, %v2042
        %v2044 = vpop.f32.mrb[0].mxu0
        %2045 = vmatprep.mubr.bf16.mxu0 0
        %2046 = vmatmul.mubr.bf16.gmra.mrb[0].mxu0 %v1975
        %v2047 = vpop.f32.mrb[0].mxu0
        %v2048 = vadd.f32 0.0, %v2047
        %v2049 = vpop.f32.mrb[0].mxu0
        %v2050 = vpop.f32.mrb[0].mxu0
        %v2051 = vadd.f32 0.0, %v2050
        %v2052 = vpop.f32.mrb[0].mxu0
        %2053 = vdwg.mxu0
        %v2054 = vlaneseq
        %v2055 = vshrl.u32 %v2054, 7
        %v2056 = vadd.s32 %v2055, 8
        %v2057 = vadd.s32 %v2055, 16
        %v2058 = vadd.s32 %v2055, 24
        %v2059 = vadd.s32 %v2055, 32
        %v2060 = vadd.s32 %v2055, 40
        %v2061 = vadd.s32 %v2055, 48
        %v2062 = vadd.s32 %v2055, 56
        %v2063 = vcvt.s32.f32 %v2055
        %v2064 = vcvt.s32.f32 %v2056
        %v2065 = vcvt.s32.f32 %v2057
        %v2066 = vcvt.s32.f32 %v2058
        %v2067 = vcvt.s32.f32 %v2059
        %v2068 = vcvt.s32.f32 %v2060
        %v2069 = vcvt.s32.f32 %v2061
        %v2070 = vcvt.s32.f32 %v2062
        %v2071 = vadd.f32 %v2063, 0.5
        %v2072 = vadd.f32 %v2064, 0.5
        %v2073 = vadd.f32 %v2065, 0.5
        %v2074 = vadd.f32 %v2066, 0.5
        %v2075 = vadd.f32 %v2067, 0.5
        %v2076 = vadd.f32 %v2068, 0.5
        %v2077 = vadd.f32 %v2069, 0.5
        %v2078 = vadd.f32 %v2070, 0.5
        %v2079 = vmul.f32 %v2071, 0.125
        %v2080 = vmul.f32 %v2072, 0.125
        %v2081 = vmul.f32 %v2073, 0.125
        %v2082 = vmul.f32 %v2074, 0.125
        %v2083 = vmul.f32 %v2075, 0.125
        %v2084 = vmul.f32 %v2076, 0.125
        %v2085 = vmul.f32 %v2077, 0.125
        %v2086 = vmul.f32 %v2078, 0.125
        %v2087 = vfloor.f32 %v2079
        %v2088 = vfloor.f32 %v2080
        %v2089 = vfloor.f32 %v2081
        %v2090 = vfloor.f32 %v2082
        %v2091 = vfloor.f32 %v2083
        %v2092 = vfloor.f32 %v2084
        %v2093 = vfloor.f32 %v2085
        %v2094 = vfloor.f32 %v2086
        %v2095 = vlaneseq
        %v2096 = vand.u32 %v2095, 127
        %v2097 = vcvt.s32.f32 %v2096
        %v2098 = vadd.f32 %v2097, 0.5
        %v2099 = vmul.f32 %v2098, 0.125
        %v2100 = vfloor.f32 %v2099
        %vm2101 = vcmp.eq.f32.partialorder %v2087, %v2100
        %vm2102 = vcmp.eq.f32.partialorder %v2088, %v2100
        %vm2103 = vcmp.eq.f32.partialorder %v2089, %v2100
        %vm2104 = vcmp.eq.f32.partialorder %v2090, %v2100
        %vm2105 = vcmp.eq.f32.partialorder %v2091, %v2100
        %vm2106 = vcmp.eq.f32.partialorder %v2092, %v2100
        %vm2107 = vcmp.eq.f32.partialorder %v2093, %v2100
        %vm2108 = vcmp.eq.f32.partialorder %v2094, %v2100
        %v2109 = vsel %vm2101, %v2024, -1e+30
        %v2110 = vsel %vm2102, %v2027, -1e+30
        %v2111 = vsel %vm2103, %v2032, -1e+30
        %v2112 = vsel %vm2104, %v2035, -1e+30
        %v2113 = vsel %vm2105, %v2040, -1e+30
        %v2114 = vsel %vm2106, %v2043, -1e+30
        %v2115 = vsel %vm2107, %v2048, -1e+30
        %v2116 = vsel %vm2108, %v2051, -1e+30
        %v2117 = vsel %vm1466, %v2109, -inf
        %2118 = vmax.xlane.f32.xlu0 %v2117
        %v2119 = vpop.xlane.xlu0 %2118
        %v2120 = vsel %vm1466, %v2110, -inf
        %2121 = vmax.xlane.f32.xlu0 %v2120
        %v2122 = vpop.xlane.xlu0 %2121
        %v2123 = vsel %vm1466, %v2111, -inf
        %2124 = vmax.xlane.f32.xlu0 %v2123
        %v2125 = vpop.xlane.xlu0 %2124
        %v2126 = vsel %vm1466, %v2112, -inf
        %2127 = vmax.xlane.f32.xlu0 %v2126
        %v2128 = vpop.xlane.xlu0 %2127
        %v2129 = vsel %vm1466, %v2113, -inf
        %2130 = vmax.xlane.f32.xlu0 %v2129
        %v2131 = vpop.xlane.xlu0 %2130
        %v2132 = vsel %vm1466, %v2114, -inf
        %2133 = vmax.xlane.f32.xlu0 %v2132
        %v2134 = vpop.xlane.xlu0 %2133
        %v2135 = vsel %vm1466, %v2115, -inf
        %2136 = vmax.xlane.f32.xlu0 %v2135
        %v2137 = vpop.xlane.xlu0 %2136
        %v2138 = vsel %vm1466, %v2116, -inf
        %2139 = vmax.xlane.f32.xlu0 %v2138
        %v2140 = vpop.xlane.xlu0 %2139
        %v2141 = vsub.f32 %v2109, %v2119
        %v2142 = vsub.f32 %v2110, %v2122
        %v2143 = vsub.f32 %v2111, %v2125
        %v2144 = vsub.f32 %v2112, %v2128
        %v2145 = vsub.f32 %v2113, %v2131
        %v2146 = vsub.f32 %v2114, %v2134
        %v2147 = vsub.f32 %v2115, %v2137
        %v2148 = vsub.f32 %v2116, %v2140
        %v2149 = vmul.f32 %v2141, 1.442695
        %v2150 = vpow.pop %v2149
        %v2151 = vmul.f32 %v2142, 1.442695
        %v2152 = vpow.pop %v2151
        %v2153 = vmul.f32 %v2143, 1.442695
        %v2154 = vpow.pop %v2153
        %v2155 = vmul.f32 %v2144, 1.442695
        %v2156 = vpow.pop %v2155
        %v2157 = vmul.f32 %v2145, 1.442695
        %v2158 = vpow.pop %v2157
        %v2159 = vmul.f32 %v2146, 1.442695
        %v2160 = vpow.pop %v2159
        %v2161 = vmul.f32 %v2147, 1.442695
        %v2162 = vpow.pop %v2161
        %v2163 = vmul.f32 %v2148, 1.442695
        %v2164 = vpow.pop %v2163
        %v2165 = vsel %vm1466, %v2150, 0.0
        %2166 = vadd.xlane.f32.xlu0 %v2165
        %v2167 = vpop.xlane.xlu0 %2166
        %v2168 = vsel %vm1466, %v2152, 0.0
        %2169 = vadd.xlane.f32.xlu0 %v2168
        %v2170 = vpop.xlane.xlu0 %2169
        %v2171 = vsel %vm1466, %v2154, 0.0
        %2172 = vadd.xlane.f32.xlu0 %v2171
        %v2173 = vpop.xlane.xlu0 %2172
        %v2174 = vsel %vm1466, %v2156, 0.0
        %2175 = vadd.xlane.f32.xlu0 %v2174
        %v2176 = vpop.xlane.xlu0 %2175
        %v2177 = vsel %vm1466, %v2158, 0.0
        %2178 = vadd.xlane.f32.xlu0 %v2177
        %v2179 = vpop.xlane.xlu0 %2178
        %v2180 = vsel %vm1466, %v2160, 0.0
        %2181 = vadd.xlane.f32.xlu0 %v2180
        %v2182 = vpop.xlane.xlu0 %2181
        %v2183 = vsel %vm1466, %v2162, 0.0
        %2184 = vadd.xlane.f32.xlu0 %v2183
        %v2185 = vpop.xlane.xlu0 %2184
        %v2186 = vsel %vm1466, %v2164, 0.0
        %2187 = vadd.xlane.f32.xlu0 %v2186
        %v2188 = vpop.xlane.xlu0 %2187
        %v2189 = vrcp.pop %v2167
        %v2190 = vrcp.pop %v2170
        %v2191 = vrcp.pop %v2173
        %v2192 = vrcp.pop %v2176
        %v2193 = vrcp.pop %v2179
        %v2194 = vrcp.pop %v2182
        %v2195 = vrcp.pop %v2185
        %v2196 = vrcp.pop %v2188
        %v2197 = vmul.f32 %v2150, %v2189
        %v2198 = vmul.f32 %v2152, %v2190
        %v2199 = vmul.f32 %v2154, %v2191
        %v2200 = vmul.f32 %v2156, %v2192
        %v2201 = vmul.f32 %v2158, %v2193
        %v2202 = vmul.f32 %v2160, %v2194
        %v2203 = vmul.f32 %v2162, %v2195
        %v2204 = vmul.f32 %v2164, %v2196
        %v2205 = vpack.c.bf16 %v2198, %v2197
        %v2206 = vpack.c.bf16 %v2200, %v2199
        %v2207 = vpack.c.bf16 %v2202, %v2201
        %v2208 = vpack.c.bf16 %v2204, %v2203
        %v2210 = vsel %vm1466, %v2205, 0
        %v2213 = vsel %vm1466, %v2206, 0
        %v2216 = vsel %vm1466, %v2207, 0
        %v2219 = vsel %vm1466, %v2208, 0
        %2221 = vmatprep.subr.bf16.mxu0 0
        %2222 = vmatpush1.bf16.msra.mxu0 %v1949
        %2223 = vmatprep.subr.bf16.mxu0 0
        %2224 = vmatpush1.bf16.msra.mxu0 %v1950
        %2225 = vmatprep.subr.bf16.mxu0 0
        %2226 = vmatpush1.bf16.msra.mxu0 %v1951
        %2227 = vmatprep.subr.bf16.mxu0 0
        %2228 = vmatpush1.bf16.msra.mxu0 %v1952
        %2229 = vmatprep.subr.bf16.mxu0 0
        %2230 = vmatpush1.bf16.msra.mxu0 0
        %2231 = vmatprep.subr.bf16.mxu0 0
        %2232 = vmatpush1.bf16.msra.mxu0 0
        %2233 = vmatprep.subr.bf16.mxu0 0
        %2234 = vmatpush1.bf16.msra.mxu0 0
        %2235 = vmatprep.subr.bf16.mxu0 0
        %2236 = vmatpush1.bf16.msra.mxu0 0
        %2237 = vmatprep.subr.bf16.mxu0 0
        %2238 = vmatpush1.bf16.msra.mxu0 0
        %2239 = vmatprep.subr.bf16.mxu0 0
        %2240 = vmatpush1.bf16.msra.mxu0 0
        %2241 = vmatprep.subr.bf16.mxu0 0
        %2242 = vmatpush1.bf16.msra.mxu0 0
        %2243 = vmatprep.subr.bf16.mxu0 0
        %2244 = vmatpush1.bf16.msra.mxu0 0
        %2245 = vmatprep.subr.bf16.mxu0 0
        %2246 = vmatpush1.bf16.msra.mxu0 0
        %2247 = vmatprep.subr.bf16.mxu0 0
        %2248 = vmatpush1.bf16.msra.mxu0 0
        %2249 = vmatprep.subr.bf16.mxu0 0
        %2250 = vmatpush1.bf16.msra.mxu0 0
        %2251 = vmatprep.subr.bf16.mxu0 0
        %2252 = vmatpush1.bf16.msra.mxu0 0
        %2253 = vmatprep.mubr.bf16.mxu0 0
        %2254 = vmatmul.mubr.bf16.gmra.mrb[0].mxu0 %v2210
        %v2255 = vpop.f32.mrb[0].mxu0
        %v2256 = vadd.f32 0.0, %v2255
        %v2257 = vpop.f32.mrb[0].mxu0
        %v2258 = vpop.f32.mrb[0].mxu0
        %v2259 = vadd.f32 0.0, %v2258
        %v2260 = vpop.f32.mrb[0].mxu0
        %2261 = vmatprep.mubr.bf16.mxu0 0
        %2262 = vmatmul.mubr.bf16.gmra.mrb[0].mxu0 %v2213
        %v2263 = vpop.f32.mrb[0].mxu0
        %v2264 = vadd.f32 0.0, %v2263
        %v2265 = vpop.f32.mrb[0].mxu0
        %v2266 = vpop.f32.mrb[0].mxu0
        %v2267 = vadd.f32 0.0, %v2266
        %v2268 = vpop.f32.mrb[0].mxu0
        %2269 = vmatprep.mubr.bf16.mxu0 0
        %2270 = vmatmul.mubr.bf16.gmra.mrb[0].mxu0 %v2216
        %v2271 = vpop.f32.mrb[0].mxu0
        %v2272 = vadd.f32 0.0, %v2271
        %v2273 = vpop.f32.mrb[0].mxu0
        %v2274 = vpop.f32.mrb[0].mxu0
        %v2275 = vadd.f32 0.0, %v2274
        %v2276 = vpop.f32.mrb[0].mxu0
        %2277 = vmatprep.mubr.bf16.mxu0 0
        %2278 = vmatmul.mubr.bf16.gmra.mrb[0].mxu0 %v2219
        %v2279 = vpop.f32.mrb[0].mxu0
        %v2280 = vadd.f32 0.0, %v2279
        %v2281 = vpop.f32.mrb[0].mxu0
        %v2282 = vpop.f32.mrb[0].mxu0
        %v2283 = vadd.f32 0.0, %v2282
        %v2284 = vpop.f32.mrb[0].mxu0
        %2285 = vdwg.mxu0
        %v2286 = vld [vmem:[%s13] sm:$0xf]
        %v2287 = vld [vmem:[%s13 + $0x4] sm:$0xf]
        %v2288 = vld [vmem:[%s13 + $0x8] sm:$0xf]
        %v2289 = vld [vmem:[%s13 + $0xc] sm:$0xf]
        %v2290 = vld [vmem:[%s13 + $0x10] sm:$0xf]
        %v2291 = vld [vmem:[%s13 + $0x14] sm:$0xf]
        %v2292 = vld [vmem:[%s13 + $0x18] sm:$0xf]
        %v2293 = vld [vmem:[%s13 + $0x1c] sm:$0xf]
        %v2294 = vld [vmem:[%s13 + $0x20] sm:$0xf]
        %v2295 = vld [vmem:[%s13 + $0x24] sm:$0xf]
        %v2296 = vld [vmem:[%s13 + $0x28] sm:$0xf]
        %v2297 = vld [vmem:[%s13 + $0x2c] sm:$0xf]
        %v2298 = vld [vmem:[%s13 + $0x30] sm:$0xf]
        %v2299 = vld [vmem:[%s13 + $0x34] sm:$0xf]
        %v2300 = vld [vmem:[%s13 + $0x38] sm:$0xf]
        %v2301 = vld [vmem:[%s13 + $0x3c] sm:$0xf]
        %v2302 = vld [vmem:[%s13 + $0x40] sm:$0xf]
        %v2303 = vld [vmem:[%s13 + $0x44] sm:$0xf]
        %v2304 = vld [vmem:[%s13 + $0x48] sm:$0xf]
        %v2305 = vld [vmem:[%s13 + $0x4c] sm:$0xf]
        %v2306 = vld [vmem:[%s13 + $0x50] sm:$0xf]
        %v2307 = vld [vmem:[%s13 + $0x54] sm:$0xf]
        %v2308 = vld [vmem:[%s13 + $0x58] sm:$0xf]
        %v2309 = vld [vmem:[%s13 + $0x5c] sm:$0xf]
        %v2310 = vld [vmem:[%s13 + $0x60] sm:$0xf]
        %v2311 = vld [vmem:[%s13 + $0x64] sm:$0xf]
        %v2312 = vld [vmem:[%s13 + $0x68] sm:$0xf]
        %v2313 = vld [vmem:[%s13 + $0x6c] sm:$0xf]
        %v2314 = vld [vmem:[%s13 + $0x70] sm:$0xf]
        %v2315 = vld [vmem:[%s13 + $0x74] sm:$0xf]
        %v2316 = vld [vmem:[%s13 + $0x78] sm:$0xf]
        %v2317 = vld [vmem:[%s13 + $0x7c] sm:$0xf]
        %v2318 = vpack.c.bf16 %v2259, %v2256
        %v2319 = vpack.c.bf16 %v2267, %v2264
        %v2320 = vpack.c.bf16 %v2275, %v2272
        %v2321 = vpack.c.bf16 %v2283, %v2280
        %v2354 = vunpack.c.l.b16 %v2286
        %v2355 = vunpack.c.l.b16 %v2287
        %v2356 = vunpack.c.l.b16 %v2288
        %v2357 = vunpack.c.l.b16 %v2289
        %v2358 = vunpack.c.l.b16 %v2290
        %v2359 = vunpack.c.l.b16 %v2291
        %v2360 = vunpack.c.l.b16 %v2292
        %v2361 = vunpack.c.l.b16 %v2293
        %v2362 = vunpack.c.l.b16 %v2294
        %v2363 = vunpack.c.l.b16 %v2295
        %v2364 = vunpack.c.l.b16 %v2296
        %v2365 = vunpack.c.l.b16 %v2297
        %v2366 = vunpack.c.l.b16 %v2298
        %v2367 = vunpack.c.l.b16 %v2299
        %v2368 = vunpack.c.l.b16 %v2300
        %v2369 = vunpack.c.l.b16 %v2301
        %v2370 = vunpack.c.l.b16 %v2302
        %v2371 = vunpack.c.l.b16 %v2303
        %v2372 = vunpack.c.l.b16 %v2304
        %v2373 = vunpack.c.l.b16 %v2305
        %v2374 = vunpack.c.l.b16 %v2306
        %v2375 = vunpack.c.l.b16 %v2307
        %v2376 = vunpack.c.l.b16 %v2308
        %v2377 = vunpack.c.l.b16 %v2309
        %v2378 = vunpack.c.l.b16 %v2310
        %v2379 = vunpack.c.l.b16 %v2311
        %v2380 = vunpack.c.l.b16 %v2312
        %v2381 = vunpack.c.l.b16 %v2313
        %v2382 = vunpack.c.l.b16 %v2314
        %v2383 = vunpack.c.l.b16 %v2315
        %v2384 = vunpack.c.l.b16 %v2316
        %v2385 = vunpack.c.l.b16 %v2317
        %v2386 = vpack.c.b16 %v2355, %v2354
        %v2387 = vpack.c.b16 %v2357, %v2356
        %v2388 = vpack.c.b16 %v2359, %v2358
        %v2389 = vpack.c.b16 %v2361, %v2360
        %v2390 = vpack.c.b16 %v2363, %v2362
        %v2391 = vpack.c.b16 %v2365, %v2364
        %v2392 = vpack.c.b16 %v2367, %v2366
        %v2393 = vpack.c.b16 %v2369, %v2368
        %v2394 = vpack.c.b16 %v2371, %v2370
        %v2395 = vpack.c.b16 %v2373, %v2372
        %v2396 = vpack.c.b16 %v2375, %v2374
        %v2397 = vpack.c.b16 %v2377, %v2376
        %v2398 = vpack.c.b16 %v2379, %v2378
        %v2399 = vpack.c.b16 %v2381, %v2380
        %v2400 = vpack.c.b16 %v2383, %v2382
        %v2401 = vpack.c.b16 %v2385, %v2384
        %v2403 = vsel %vm1466, %v2386, 0
        %v2406 = vsel %vm1466, %v2387, 0
        %v2409 = vsel %vm1466, %v2388, 0
        %v2412 = vsel %vm1466, %v2389, 0
        %v2415 = vsel %vm1466, %v2390, 0
        %v2418 = vsel %vm1466, %v2391, 0
        %v2421 = vsel %vm1466, %v2392, 0
        %v2424 = vsel %vm1466, %v2393, 0
        %v2427 = vsel %vm1466, %v2394, 0
        %v2430 = vsel %vm1466, %v2395, 0
        %v2433 = vsel %vm1466, %v2396, 0
        %v2436 = vsel %vm1466, %v2397, 0
        %v2439 = vsel %vm1466, %v2398, 0
        %v2442 = vsel %vm1466, %v2399, 0
        %v2445 = vsel %vm1466, %v2400, 0
        %v2448 = vsel %vm1466, %v2401, 0
        %2450 = vmatprep.subr.bf16.mxu0 0
        %2451 = vmatpush1.bf16.msra.mxu0 %v2318
        %2452 = vmatprep.subr.bf16.mxu0 0
        %2453 = vmatpush1.bf16.msra.mxu0 %v2319
        %2454 = vmatprep.subr.bf16.mxu0 0
        %2455 = vmatpush1.bf16.msra.mxu0 %v2320
        %2456 = vmatprep.subr.bf16.mxu0 0
        %2457 = vmatpush1.bf16.msra.mxu0 %v2321
        %2458 = vmatprep.subr.bf16.mxu0 0
        %2459 = vmatpush1.bf16.msra.mxu0 0
        %2460 = vmatprep.subr.bf16.mxu0 0
        %2461 = vmatpush1.bf16.msra.mxu0 0
        %2462 = vmatprep.subr.bf16.mxu0 0
        %2463 = vmatpush1.bf16.msra.mxu0 0
        %2464 = vmatprep.subr.bf16.mxu0 0
        %2465 = vmatpush1.bf16.msra.mxu0 0
        %2466 = vmatprep.subr.bf16.mxu0 0
        %2467 = vmatpush1.bf16.msra.mxu0 0
        %2468 = vmatprep.subr.bf16.mxu0 0
        %2469 = vmatpush1.bf16.msra.mxu0 0
        %2470 = vmatprep.subr.bf16.mxu0 0
        %2471 = vmatpush1.bf16.msra.mxu0 0
        %2472 = vmatprep.subr.bf16.mxu0 0
        %2473 = vmatpush1.bf16.msra.mxu0 0
        %2474 = vmatprep.subr.bf16.mxu0 0
        %2475 = vmatpush1.bf16.msra.mxu0 0
        %2476 = vmatprep.subr.bf16.mxu0 0
        %2477 = vmatpush1.bf16.msra.mxu0 0
        %2478 = vmatprep.subr.bf16.mxu0 0
        %2479 = vmatpush1.bf16.msra.mxu0 0
        %2480 = vmatprep.subr.bf16.mxu0 0
        %2481 = vmatpush1.bf16.msra.mxu0 0
        %2482 = vmatprep.mubr.bf16.mxu0 0
        %2483 = vmatmul.mubr.bf16.gmra.mrb[0].mxu0 %v2403
        %v2484 = vpop.f32.mrb[0].mxu0
        %v2485 = vadd.f32 0.0, %v2484
        %v2486 = vpop.f32.mrb[0].mxu0
        %v2487 = vpop.f32.mrb[0].mxu0
        %v2488 = vadd.f32 0.0, %v2487
        %v2489 = vpop.f32.mrb[0].mxu0
        %2490 = vmatprep.mubr.bf16.mxu0 0
        %2491 = vmatmul.mubr.bf16.gmra.mrb[0].mxu0 %v2406
        %v2492 = vpop.f32.mrb[0].mxu0
        %v2493 = vadd.f32 0.0, %v2492
        %v2494 = vpop.f32.mrb[0].mxu0
        %v2495 = vpop.f32.mrb[0].mxu0
        %v2496 = vadd.f32 0.0, %v2495
        %v2497 = vpop.f32.mrb[0].mxu0
        %2498 = vmatprep.mubr.bf16.mxu0 0
        %2499 = vmatmul.mubr.bf16.gmra.mrb[0].mxu0 %v2409
        %v2500 = vpop.f32.mrb[0].mxu0
        %v2501 = vadd.f32 0.0, %v2500
        %v2502 = vpop.f32.mrb[0].mxu0
        %v2503 = vpop.f32.mrb[0].mxu0
        %v2504 = vadd.f32 0.0, %v2503
        %v2505 = vpop.f32.mrb[0].mxu0
        %2506 = vmatprep.mubr.bf16.mxu0 0
        %2507 = vmatmul.mubr.bf16.gmra.mrb[0].mxu0 %v2412
        %v2508 = vpop.f32.mrb[0].mxu0
        %v2509 = vadd.f32 0.0, %v2508
        %v2510 = vpop.f32.mrb[0].mxu0
        %v2511 = vpop.f32.mrb[0].mxu0
        %v2512 = vadd.f32 0.0, %v2511
        %v2513 = vpop.f32.mrb[0].mxu0
        %2514 = vmatprep.mubr.bf16.mxu0 0
        %2515 = vmatmul.mubr.bf16.gmra.mrb[0].mxu0 %v2415
        %v2516 = vpop.f32.mrb[0].mxu0
        %v2517 = vadd.f32 0.0, %v2516
        %v2518 = vpop.f32.mrb[0].mxu0
        %v2519 = vpop.f32.mrb[0].mxu0
        %v2520 = vadd.f32 0.0, %v2519
        %v2521 = vpop.f32.mrb[0].mxu0
        %2522 = vmatprep.mubr.bf16.mxu0 0
        %2523 = vmatmul.mubr.bf16.gmra.mrb[0].mxu0 %v2418
        %v2524 = vpop.f32.mrb[0].mxu0
        %v2525 = vadd.f32 0.0, %v2524
        %v2526 = vpop.f32.mrb[0].mxu0
        %v2527 = vpop.f32.mrb[0].mxu0
        %v2528 = vadd.f32 0.0, %v2527
        %v2529 = vpop.f32.mrb[0].mxu0
        %2530 = vmatprep.mubr.bf16.mxu0 0
        %2531 = vmatmul.mubr.bf16.gmra.mrb[0].mxu0 %v2421
        %v2532 = vpop.f32.mrb[0].mxu0
        %v2533 = vadd.f32 0.0, %v2532
        %v2534 = vpop.f32.mrb[0].mxu0
        %v2535 = vpop.f32.mrb[0].mxu0
        %v2536 = vadd.f32 0.0, %v2535
        %v2537 = vpop.f32.mrb[0].mxu0
        %2538 = vmatprep.mubr.bf16.mxu0 0
        %2539 = vmatmul.mubr.bf16.gmra.mrb[0].mxu0 %v2424
        %v2540 = vpop.f32.mrb[0].mxu0
        %v2541 = vadd.f32 0.0, %v2540
        %v2542 = vpop.f32.mrb[0].mxu0
        %v2543 = vpop.f32.mrb[0].mxu0
        %v2544 = vadd.f32 0.0, %v2543
        %v2545 = vpop.f32.mrb[0].mxu0
        %2546 = vmatprep.mubr.bf16.mxu0 0
        %2547 = vmatmul.mubr.bf16.gmra.mrb[0].mxu0 %v2427
        %v2548 = vpop.f32.mrb[0].mxu0
        %v2549 = vadd.f32 0.0, %v2548
        %v2550 = vpop.f32.mrb[0].mxu0
        %v2551 = vpop.f32.mrb[0].mxu0
        %v2552 = vadd.f32 0.0, %v2551
        %v2553 = vpop.f32.mrb[0].mxu0
        %2554 = vmatprep.mubr.bf16.mxu0 0
        %2555 = vmatmul.mubr.bf16.gmra.mrb[0].mxu0 %v2430
        %v2556 = vpop.f32.mrb[0].mxu0
        %v2557 = vadd.f32 0.0, %v2556
        %v2558 = vpop.f32.mrb[0].mxu0
        %v2559 = vpop.f32.mrb[0].mxu0
        %v2560 = vadd.f32 0.0, %v2559
        %v2561 = vpop.f32.mrb[0].mxu0
        %2562 = vmatprep.mubr.bf16.mxu0 0
        %2563 = vmatmul.mubr.bf16.gmra.mrb[0].mxu0 %v2433
        %v2564 = vpop.f32.mrb[0].mxu0
        %v2565 = vadd.f32 0.0, %v2564
        %v2566 = vpop.f32.mrb[0].mxu0
        %v2567 = vpop.f32.mrb[0].mxu0
        %v2568 = vadd.f32 0.0, %v2567
        %v2569 = vpop.f32.mrb[0].mxu0
        %2570 = vmatprep.mubr.bf16.mxu0 0
        %2571 = vmatmul.mubr.bf16.gmra.mrb[0].mxu0 %v2436
        %v2572 = vpop.f32.mrb[0].mxu0
        %v2573 = vadd.f32 0.0, %v2572
        %v2574 = vpop.f32.mrb[0].mxu0
        %v2575 = vpop.f32.mrb[0].mxu0
        %v2576 = vadd.f32 0.0, %v2575
        %v2577 = vpop.f32.mrb[0].mxu0
        %2578 = vmatprep.mubr.bf16.mxu0 0
        %2579 = vmatmul.mubr.bf16.gmra.mrb[0].mxu0 %v2439
        %v2580 = vpop.f32.mrb[0].mxu0
        %v2581 = vadd.f32 0.0, %v2580
        %v2582 = vpop.f32.mrb[0].mxu0
        %v2583 = vpop.f32.mrb[0].mxu0
        %v2584 = vadd.f32 0.0, %v2583
        %v2585 = vpop.f32.mrb[0].mxu0
        %2586 = vmatprep.mubr.bf16.mxu0 0
        %2587 = vmatmul.mubr.bf16.gmra.mrb[0].mxu0 %v2442
        %v2588 = vpop.f32.mrb[0].mxu0
        %v2589 = vadd.f32 0.0, %v2588
        %v2590 = vpop.f32.mrb[0].mxu0
        %v2591 = vpop.f32.mrb[0].mxu0
        %v2592 = vadd.f32 0.0, %v2591
        %v2593 = vpop.f32.mrb[0].mxu0
        %2594 = vmatprep.mubr.bf16.mxu0 0
        %2595 = vmatmul.mubr.bf16.gmra.mrb[0].mxu0 %v2445
        %v2596 = vpop.f32.mrb[0].mxu0
        %v2597 = vadd.f32 0.0, %v2596
        %v2598 = vpop.f32.mrb[0].mxu0
        %v2599 = vpop.f32.mrb[0].mxu0
        %v2600 = vadd.f32 0.0, %v2599
        %v2601 = vpop.f32.mrb[0].mxu0
        %2602 = vmatprep.mubr.bf16.mxu0 0
        %2603 = vmatmul.mubr.bf16.gmra.mrb[0].mxu0 %v2448
        %v2604 = vpop.f32.mrb[0].mxu0
        %v2605 = vadd.f32 0.0, %v2604
        %v2606 = vpop.f32.mrb[0].mxu0
        %v2607 = vpop.f32.mrb[0].mxu0
        %v2608 = vadd.f32 0.0, %v2607
        %v2609 = vpop.f32.mrb[0].mxu0
        %2610 = vdwg.mxu0
        %v2611 = vld [vmem:[%s10] sm:$0x7]
        %v2612 = vpack.c.bf16 %v2488, %v2485
        %v2613 = vpack.c.bf16 %v2496, %v2493
        %v2614 = vpack.c.bf16 %v2504, %v2501
        %v2615 = vpack.c.bf16 %v2512, %v2509
        %v2616 = vpack.c.bf16 %v2520, %v2517
        %v2617 = vpack.c.bf16 %v2528, %v2525
        %v2618 = vpack.c.bf16 %v2536, %v2533
        %v2619 = vpack.c.bf16 %v2544, %v2541
        %v2620 = vpack.c.bf16 %v2552, %v2549
        %v2621 = vpack.c.bf16 %v2560, %v2557
        %v2622 = vpack.c.bf16 %v2568, %v2565
        %v2623 = vpack.c.bf16 %v2576, %v2573
        %v2624 = vpack.c.bf16 %v2584, %v2581
        %v2625 = vpack.c.bf16 %v2592, %v2589
        %v2626 = vpack.c.bf16 %v2600, %v2597
        %v2627 = vpack.c.bf16 %v2608, %v2605
        %v2628 = vld [vmem:[%s9] sm:$0xf]
        %v2629 = vld [vmem:[%s9 + $0x4] sm:$0xf]
        %v2630 = vld [vmem:[%s9 + $0x8] sm:$0xf]
        %v2631 = vld [vmem:[%s9 + $0xc] sm:$0xf]
        %v2632 = vlaneseq
        %v2633 = vshrl.u32 %v2632, 7
        %v2634 = vsub.s32 0, %v2633
        %v2635 = vrot.slane %v2611, %v2634
        %v2640 = vunpack.c.l.b16 %v2628
        %v2641 = vunpack.c.l.b16 %v2629
        %v2642 = vunpack.c.l.b16 %v2630
        %v2643 = vunpack.c.l.b16 %v2631
        %v2644 = vpack.c.b16 %v2641, %v2640
        %v2645 = vpack.c.b16 %v2643, %v2642
        %v2649 = vsel %vm745, %v2612, 0
        %v2652 = vsel %vm745, %v2613, 0
        %v2655 = vsel %vm745, %v2614, 0
        %v2658 = vsel %vm745, %v2615, 0
        %v2661 = vsel %vm745, %v2616, 0
        %v2664 = vsel %vm745, %v2617, 0
        %v2667 = vsel %vm745, %v2618, 0
        %v2670 = vsel %vm745, %v2619, 0
        %v2673 = vsel %vm745, %v2620, 0
        %v2676 = vsel %vm745, %v2621, 0
        %v2679 = vsel %vm745, %v2622, 0
        %v2682 = vsel %vm745, %v2623, 0
        %v2685 = vsel %vm745, %v2624, 0
        %v2688 = vsel %vm745, %v2625, 0
        %v2691 = vsel %vm745, %v2626, 0
        %v2694 = vsel %vm745, %v2627, 0
        %2696 = vmatprep.subr.bf16.mxu0 0
        %2697 = vmatpush1.bf16.msra.mxu0 %v2644
        %2698 = vmatprep.subr.bf16.mxu0 0
        %2699 = vmatpush1.bf16.msra.mxu0 %v2645
        %2700 = vmatprep.subr.bf16.mxu0 0
        %2701 = vmatpush1.bf16.msra.mxu0 0
        %2702 = vmatprep.subr.bf16.mxu0 0
        %2703 = vmatpush1.bf16.msra.mxu0 0
        %2704 = vmatprep.subr.bf16.mxu0 0
        %2705 = vmatpush1.bf16.msra.mxu0 0
        %2706 = vmatprep.subr.bf16.mxu0 0
        %2707 = vmatpush1.bf16.msra.mxu0 0
        %2708 = vmatprep.subr.bf16.mxu0 0
        %2709 = vmatpush1.bf16.msra.mxu0 0
        %2710 = vmatprep.subr.bf16.mxu0 0
        %2711 = vmatpush1.bf16.msra.mxu0 0
        %2712 = vmatprep.subr.bf16.mxu0 0
        %2713 = vmatpush1.bf16.msra.mxu0 0
        %2714 = vmatprep.subr.bf16.mxu0 0
        %2715 = vmatpush1.bf16.msra.mxu0 0
        %2716 = vmatprep.subr.bf16.mxu0 0
        %2717 = vmatpush1.bf16.msra.mxu0 0
        %2718 = vmatprep.subr.bf16.mxu0 0
        %2719 = vmatpush1.bf16.msra.mxu0 0
        %2720 = vmatprep.subr.bf16.mxu0 0
        %2721 = vmatpush1.bf16.msra.mxu0 0
        %2722 = vmatprep.subr.bf16.mxu0 0
        %2723 = vmatpush1.bf16.msra.mxu0 0
        %2724 = vmatprep.subr.bf16.mxu0 0
        %2725 = vmatpush1.bf16.msra.mxu0 0
        %2726 = vmatprep.subr.bf16.mxu0 0
        %2727 = vmatpush1.bf16.msra.mxu0 0
        %2728 = vmatprep.mubr.bf16.mxu0 0
        %2729 = vmatmul.mubr.bf16.gmra.mrb[0].mxu0 %v2649
        %v2730 = vpop.f32.mrb[0].mxu0
        %v2731 = vadd.f32 %v2635, %v2730
        %v2732 = vpop.f32.mrb[0].mxu0
        %v2733 = vpop.f32.mrb[0].mxu0
        %v2734 = vadd.f32 %v2635, %v2733
        %v2735 = vpop.f32.mrb[0].mxu0
        %2736 = vmatprep.mubr.bf16.mxu0 0
        %2737 = vmatmul.mubr.bf16.gmra.mrb[0].mxu0 %v2652
        %v2738 = vpop.f32.mrb[0].mxu0
        %v2739 = vadd.f32 %v2635, %v2738
        %v2740 = vpop.f32.mrb[0].mxu0
        %v2741 = vpop.f32.mrb[0].mxu0
        %v2742 = vadd.f32 %v2635, %v2741
        %v2743 = vpop.f32.mrb[0].mxu0
        %2744 = vmatprep.mubr.bf16.mxu0 0
        %2745 = vmatmul.mubr.bf16.gmra.mrb[0].mxu0 %v2655
        %v2746 = vpop.f32.mrb[0].mxu0
        %v2747 = vadd.f32 %v2635, %v2746
        %v2748 = vpop.f32.mrb[0].mxu0
        %v2749 = vpop.f32.mrb[0].mxu0
        %v2750 = vadd.f32 %v2635, %v2749
        %v2751 = vpop.f32.mrb[0].mxu0
        %2752 = vmatprep.mubr.bf16.mxu0 0
        %2753 = vmatmul.mubr.bf16.gmra.mrb[0].mxu0 %v2658
        %v2754 = vpop.f32.mrb[0].mxu0
        %v2755 = vadd.f32 %v2635, %v2754
        %v2756 = vpop.f32.mrb[0].mxu0
        %v2757 = vpop.f32.mrb[0].mxu0
        %v2758 = vadd.f32 %v2635, %v2757
        %v2759 = vpop.f32.mrb[0].mxu0
        %2760 = vmatprep.mubr.bf16.mxu0 0
        %2761 = vmatmul.mubr.bf16.gmra.mrb[0].mxu0 %v2661
        %v2762 = vpop.f32.mrb[0].mxu0
        %v2763 = vadd.f32 %v2635, %v2762
        %v2764 = vpop.f32.mrb[0].mxu0
        %v2765 = vpop.f32.mrb[0].mxu0
        %v2766 = vadd.f32 %v2635, %v2765
        %v2767 = vpop.f32.mrb[0].mxu0
        %2768 = vmatprep.mubr.bf16.mxu0 0
        %2769 = vmatmul.mubr.bf16.gmra.mrb[0].mxu0 %v2664
        %v2770 = vpop.f32.mrb[0].mxu0
        %v2771 = vadd.f32 %v2635, %v2770
        %v2772 = vpop.f32.mrb[0].mxu0
        %v2773 = vpop.f32.mrb[0].mxu0
        %v2774 = vadd.f32 %v2635, %v2773
        %v2775 = vpop.f32.mrb[0].mxu0
        %2776 = vmatprep.mubr.bf16.mxu0 0
        %2777 = vmatmul.mubr.bf16.gmra.mrb[0].mxu0 %v2667
        %v2778 = vpop.f32.mrb[0].mxu0
        %v2779 = vadd.f32 %v2635, %v2778
        %v2780 = vpop.f32.mrb[0].mxu0
        %v2781 = vpop.f32.mrb[0].mxu0
        %v2782 = vadd.f32 %v2635, %v2781
        %v2783 = vpop.f32.mrb[0].mxu0
        %2784 = vmatprep.mubr.bf16.mxu0 0
        %2785 = vmatmul.mubr.bf16.gmra.mrb[0].mxu0 %v2670
        %v2786 = vpop.f32.mrb[0].mxu0
        %v2787 = vadd.f32 %v2635, %v2786
        %v2788 = vpop.f32.mrb[0].mxu0
        %v2789 = vpop.f32.mrb[0].mxu0
        %v2790 = vadd.f32 %v2635, %v2789
        %v2791 = vpop.f32.mrb[0].mxu0
        %2792 = vmatprep.mubr.bf16.mxu0 0
        %2793 = vmatmul.mubr.bf16.gmra.mrb[0].mxu0 %v2673
        %v2794 = vpop.f32.mrb[0].mxu0
        %v2795 = vadd.f32 %v2635, %v2794
        %v2796 = vpop.f32.mrb[0].mxu0
        %v2797 = vpop.f32.mrb[0].mxu0
        %v2798 = vadd.f32 %v2635, %v2797
        %v2799 = vpop.f32.mrb[0].mxu0
        %2800 = vmatprep.mubr.bf16.mxu0 0
        %2801 = vmatmul.mubr.bf16.gmra.mrb[0].mxu0 %v2676
        %v2802 = vpop.f32.mrb[0].mxu0
        %v2803 = vadd.f32 %v2635, %v2802
        %v2804 = vpop.f32.mrb[0].mxu0
        %v2805 = vpop.f32.mrb[0].mxu0
        %v2806 = vadd.f32 %v2635, %v2805
        %v2807 = vpop.f32.mrb[0].mxu0
        %2808 = vmatprep.mubr.bf16.mxu0 0
        %2809 = vmatmul.mubr.bf16.gmra.mrb[0].mxu0 %v2679
        %v2810 = vpop.f32.mrb[0].mxu0
        %v2811 = vadd.f32 %v2635, %v2810
        %v2812 = vpop.f32.mrb[0].mxu0
        %v2813 = vpop.f32.mrb[0].mxu0
        %v2814 = vadd.f32 %v2635, %v2813
        %v2815 = vpop.f32.mrb[0].mxu0
        %2816 = vmatprep.mubr.bf16.mxu0 0
        %2817 = vmatmul.mubr.bf16.gmra.mrb[0].mxu0 %v2682
        %v2818 = vpop.f32.mrb[0].mxu0
        %v2819 = vadd.f32 %v2635, %v2818
        %v2820 = vpop.f32.mrb[0].mxu0
        %v2821 = vpop.f32.mrb[0].mxu0
        %v2822 = vadd.f32 %v2635, %v2821
        %v2823 = vpop.f32.mrb[0].mxu0
        %2824 = vmatprep.mubr.bf16.mxu0 0
        %2825 = vmatmul.mubr.bf16.gmra.mrb[0].mxu0 %v2685
        %v2826 = vpop.f32.mrb[0].mxu0
        %v2827 = vadd.f32 %v2635, %v2826
        %v2828 = vpop.f32.mrb[0].mxu0
        %v2829 = vpop.f32.mrb[0].mxu0
        %v2830 = vadd.f32 %v2635, %v2829
        %v2831 = vpop.f32.mrb[0].mxu0
        %2832 = vmatprep.mubr.bf16.mxu0 0
        %2833 = vmatmul.mubr.bf16.gmra.mrb[0].mxu0 %v2688
        %v2834 = vpop.f32.mrb[0].mxu0
        %v2835 = vadd.f32 %v2635, %v2834
        %v2836 = vpop.f32.mrb[0].mxu0
        %v2837 = vpop.f32.mrb[0].mxu0
        %v2838 = vadd.f32 %v2635, %v2837
        %v2839 = vpop.f32.mrb[0].mxu0
        %2840 = vmatprep.mubr.bf16.mxu0 0
        %2841 = vmatmul.mubr.bf16.gmra.mrb[0].mxu0 %v2691
        %v2842 = vpop.f32.mrb[0].mxu0
        %v2843 = vadd.f32 %v2635, %v2842
        %v2844 = vpop.f32.mrb[0].mxu0
        %v2845 = vpop.f32.mrb[0].mxu0
        %v2846 = vadd.f32 %v2635, %v2845
        %v2847 = vpop.f32.mrb[0].mxu0
        %2848 = vmatprep.mubr.bf16.mxu0 0
        %2849 = vmatmul.mubr.bf16.gmra.mrb[0].mxu0 %v2694
        %v2850 = vpop.f32.mrb[0].mxu0
        %v2851 = vadd.f32 %v2635, %v2850
        %v2852 = vpop.f32.mrb[0].mxu0
        %v2853 = vpop.f32.mrb[0].mxu0
        %v2854 = vadd.f32 %v2635, %v2853
        %v2855 = vpop.f32.mrb[0].mxu0
        %2856 = vdwg.mxu0
        %v2857 = vsel %vm745, %v2731, 0.0
        %v2858 = vsel %vm745, %v2734, 0.0
        %v2859 = vadd.f32 %v2857, %v2858
        %v2860 = vsel %vm745, %v2739, 0.0
        %v2861 = vadd.f32 %v2859, %v2860
        %v2862 = vsel %vm745, %v2742, 0.0
        %v2863 = vadd.f32 %v2861, %v2862
        %v2864 = vsel %vm745, %v2747, 0.0
        %v2865 = vadd.f32 %v2863, %v2864
        %v2866 = vsel %vm745, %v2750, 0.0
        %v2867 = vadd.f32 %v2865, %v2866
        %v2868 = vsel %vm745, %v2755, 0.0
        %v2869 = vadd.f32 %v2867, %v2868
        %v2870 = vsel %vm745, %v2758, 0.0
        %v2871 = vadd.f32 %v2869, %v2870
        %v2872 = vsel %vm745, %v2763, 0.0
        %v2873 = vadd.f32 %v2871, %v2872
        %v2874 = vsel %vm745, %v2766, 0.0
        %v2875 = vadd.f32 %v2873, %v2874
        %v2876 = vsel %vm745, %v2771, 0.0
        %v2877 = vadd.f32 %v2875, %v2876
        %v2878 = vsel %vm745, %v2774, 0.0
        %v2879 = vadd.f32 %v2877, %v2878
        %v2880 = vsel %vm745, %v2779, 0.0
        %v2881 = vadd.f32 %v2879, %v2880
        %v2882 = vsel %vm745, %v2782, 0.0
        %v2883 = vadd.f32 %v2881, %v2882
        %v2884 = vsel %vm745, %v2787, 0.0
        %v2885 = vadd.f32 %v2883, %v2884
        %v2886 = vsel %vm745, %v2790, 0.0
        %v2887 = vadd.f32 %v2885, %v2886
        %v2888 = vsel %vm745, %v2795, 0.0
        %v2889 = vadd.f32 %v2887, %v2888
        %v2890 = vsel %vm745, %v2798, 0.0
        %v2891 = vadd.f32 %v2889, %v2890
        %v2892 = vsel %vm745, %v2803, 0.0
        %v2893 = vadd.f32 %v2891, %v2892
        %v2894 = vsel %vm745, %v2806, 0.0
        %v2895 = vadd.f32 %v2893, %v2894
        %v2896 = vsel %vm745, %v2811, 0.0
        %v2897 = vadd.f32 %v2895, %v2896
        %v2898 = vsel %vm745, %v2814, 0.0
        %v2899 = vadd.f32 %v2897, %v2898
        %v2900 = vsel %vm745, %v2819, 0.0
        %v2901 = vadd.f32 %v2899, %v2900
        %v2902 = vsel %vm745, %v2822, 0.0
        %v2903 = vadd.f32 %v2901, %v2902
        %v2904 = vsel %vm745, %v2827, 0.0
        %v2905 = vadd.f32 %v2903, %v2904
        %v2906 = vsel %vm745, %v2830, 0.0
        %v2907 = vadd.f32 %v2905, %v2906
        %v2908 = vsel %vm745, %v2835, 0.0
        %v2909 = vadd.f32 %v2907, %v2908
        %v2910 = vsel %vm745, %v2838, 0.0
        %v2911 = vadd.f32 %v2909, %v2910
        %v2912 = vsel %vm745, %v2843, 0.0
        %v2913 = vadd.f32 %v2911, %v2912
        %v2914 = vsel %vm745, %v2846, 0.0
        %v2915 = vadd.f32 %v2913, %v2914
        %v2916 = vsel %vm745, %v2851, 0.0
        %v2917 = vadd.f32 %v2915, %v2916
        %v2918 = vsel %vm745, %v2854, 0.0
        %v2919 = vadd.f32 %v2917, %v2918
        %v2920 = vrot.slane %v2919, 4
        %v2921 = vadd.f32 %v2919, %v2920
        %v2922 = vrot.slane %v2921, 2
        %v2923 = vadd.f32 %v2921, %v2922
        %v2924 = vrot.slane %v2923, 1
        %v2925 = vadd.f32 %v2923, %v2924
        %v2926 = vmul.f32 %v2731, %v2731
        %v2927 = vmul.f32 %v2734, %v2734
        %v2928 = vmul.f32 %v2739, %v2739
        %v2929 = vmul.f32 %v2742, %v2742
        %v2930 = vmul.f32 %v2747, %v2747
        %v2931 = vmul.f32 %v2750, %v2750
        %v2932 = vmul.f32 %v2755, %v2755
        %v2933 = vmul.f32 %v2758, %v2758
        %v2934 = vmul.f32 %v2763, %v2763
        %v2935 = vmul.f32 %v2766, %v2766
        %v2936 = vmul.f32 %v2771, %v2771
        %v2937 = vmul.f32 %v2774, %v2774
        %v2938 = vmul.f32 %v2779, %v2779
        %v2939 = vmul.f32 %v2782, %v2782
        %v2940 = vmul.f32 %v2787, %v2787
        %v2941 = vmul.f32 %v2790, %v2790
        %v2942 = vmul.f32 %v2795, %v2795
        %v2943 = vmul.f32 %v2798, %v2798
        %v2944 = vmul.f32 %v2803, %v2803
        %v2945 = vmul.f32 %v2806, %v2806
        %v2946 = vmul.f32 %v2811, %v2811
        %v2947 = vmul.f32 %v2814, %v2814
        %v2948 = vmul.f32 %v2819, %v2819
        %v2949 = vmul.f32 %v2822, %v2822
        %v2950 = vmul.f32 %v2827, %v2827
        %v2951 = vmul.f32 %v2830, %v2830
        %v2952 = vmul.f32 %v2835, %v2835
        %v2953 = vmul.f32 %v2838, %v2838
        %v2954 = vmul.f32 %v2843, %v2843
        %v2955 = vmul.f32 %v2846, %v2846
        %v2956 = vmul.f32 %v2851, %v2851
        %v2957 = vmul.f32 %v2854, %v2854
        %v2958 = vsel %vm745, %v2926, 0.0
        %v2959 = vsel %vm745, %v2927, 0.0
        %v2960 = vadd.f32 %v2958, %v2959
        %v2961 = vsel %vm745, %v2928, 0.0
        %v2962 = vadd.f32 %v2960, %v2961
        %v2963 = vsel %vm745, %v2929, 0.0
        %v2964 = vadd.f32 %v2962, %v2963
        %v2965 = vsel %vm745, %v2930, 0.0
        %v2966 = vadd.f32 %v2964, %v2965
        %v2967 = vsel %vm745, %v2931, 0.0
        %v2968 = vadd.f32 %v2966, %v2967
        %v2969 = vsel %vm745, %v2932, 0.0
        %v2970 = vadd.f32 %v2968, %v2969
        %v2971 = vsel %vm745, %v2933, 0.0
        %v2972 = vadd.f32 %v2970, %v2971
        %v2973 = vsel %vm745, %v2934, 0.0
        %v2974 = vadd.f32 %v2972, %v2973
        %v2975 = vsel %vm745, %v2935, 0.0
        %v2976 = vadd.f32 %v2974, %v2975
        %v2977 = vsel %vm745, %v2936, 0.0
        %v2978 = vadd.f32 %v2976, %v2977
        %v2979 = vsel %vm745, %v2937, 0.0
        %v2980 = vadd.f32 %v2978, %v2979
        %v2981 = vsel %vm745, %v2938, 0.0
        %v2982 = vadd.f32 %v2980, %v2981
        %v2983 = vsel %vm745, %v2939, 0.0
        %v2984 = vadd.f32 %v2982, %v2983
        %v2985 = vsel %vm745, %v2940, 0.0
        %v2986 = vadd.f32 %v2984, %v2985
        %v2987 = vsel %vm745, %v2941, 0.0
        %v2988 = vadd.f32 %v2986, %v2987
        %v2989 = vsel %vm745, %v2942, 0.0
        %v2990 = vadd.f32 %v2988, %v2989
        %v2991 = vsel %vm745, %v2943, 0.0
        %v2992 = vadd.f32 %v2990, %v2991
        %v2993 = vsel %vm745, %v2944, 0.0
        %v2994 = vadd.f32 %v2992, %v2993
        %v2995 = vsel %vm745, %v2945, 0.0
        %v2996 = vadd.f32 %v2994, %v2995
        %v2997 = vsel %vm745, %v2946, 0.0
        %v2998 = vadd.f32 %v2996, %v2997
        %v2999 = vsel %vm745, %v2947, 0.0
        %v3000 = vadd.f32 %v2998, %v2999
        %v3001 = vsel %vm745, %v2948, 0.0
        %v3002 = vadd.f32 %v3000, %v3001
        %v3003 = vsel %vm745, %v2949, 0.0
        %v3004 = vadd.f32 %v3002, %v3003
        %v3005 = vsel %vm745, %v2950, 0.0
        %v3006 = vadd.f32 %v3004, %v3005
        %v3007 = vsel %vm745, %v2951, 0.0
        %v3008 = vadd.f32 %v3006, %v3007
        %v3009 = vsel %vm745, %v2952, 0.0
        %v3010 = vadd.f32 %v3008, %v3009
        %v3011 = vsel %vm745, %v2953, 0.0
        %v3012 = vadd.f32 %v3010, %v3011
        %v3013 = vsel %vm745, %v2954, 0.0
        %v3014 = vadd.f32 %v3012, %v3013
        %v3015 = vsel %vm745, %v2955, 0.0
        %v3016 = vadd.f32 %v3014, %v3015
        %v3017 = vsel %vm745, %v2956, 0.0
        %v3018 = vadd.f32 %v3016, %v3017
        %v3019 = vsel %vm745, %v2957, 0.0
        %v3020 = vadd.f32 %v3018, %v3019
        %v3021 = vrot.slane %v3020, 4
        %v3022 = vadd.f32 %v3020, %v3021
        %v3023 = vrot.slane %v3022, 2
        %v3024 = vadd.f32 %v3022, %v3023
        %v3025 = vrot.slane %v3024, 1
        %v3026 = vadd.f32 %v3024, %v3025
        %v3027 = vsel %vm1125, %v2925, %v3026
        %v3028 = vmul.f32 %v3027, 0.001953125
        %v3030 = vsel %vm745, %v3028, 0
        %3032 = vmatprep.subr.mxu0 0.0
        %3033 = vmatpush1.msra.mxu0 %v1128
        %3034 = vmatprep.subr.mxu0 0.0
        %3035 = vmatpush1.msra.mxu0 %v1129
        %3036 = vmatprep.subr.mxu0 0.0
        %3037 = vmatpush1.msra.mxu0 %v1130
        %3038 = vmatprep.subr.mxu0 0.0
        %3039 = vmatpush1.msra.mxu0 %v1131
        %3040 = vmatprep.subr.mxu0 0.0
        %3041 = vmatpush1.msra.mxu0 0.0
        %3042 = vmatprep.subr.mxu0 0.0
        %3043 = vmatpush1.msra.mxu0 0.0
        %3044 = vmatprep.subr.mxu0 0.0
        %3045 = vmatpush1.msra.mxu0 0.0
        %3046 = vmatprep.subr.mxu0 0.0
        %3047 = vmatpush1.msra.mxu0 0.0
        %3048 = vmatprep.subr.mxu0 0.0
        %3049 = vmatpush1.msra.mxu0 0.0
        %3050 = vmatprep.subr.mxu0 0.0
        %3051 = vmatpush1.msra.mxu0 0.0
        %3052 = vmatprep.subr.mxu0 0.0
        %3053 = vmatpush1.msra.mxu0 0.0
        %3054 = vmatprep.subr.mxu0 0.0
        %3055 = vmatpush1.msra.mxu0 0.0
        %3056 = vmatprep.subr.mxu0 0.0
        %3057 = vmatpush1.msra.mxu0 0.0
        %3058 = vmatprep.subr.mxu0 0.0
        %3059 = vmatpush1.msra.mxu0 0.0
        %3060 = vmatprep.subr.mxu0 0.0
        %3061 = vmatpush1.msra.mxu0 0.0
        %3062 = vmatprep.subr.mxu0 0.0
        %3063 = vmatpush1.msra.mxu0 0.0
        %3064 = vmatprep.subr.mxu0 0.0
        %3065 = vmatpush1.msra.mxu0 0.0
        %3066 = vmatprep.subr.mxu0 0.0
        %3067 = vmatpush1.msra.mxu0 0.0
        %3068 = vmatprep.subr.mxu0 0.0
        %3069 = vmatpush1.msra.mxu0 0.0
        %3070 = vmatprep.subr.mxu0 0.0
        %3071 = vmatpush1.msra.mxu0 0.0
        %3072 = vmatprep.subr.mxu0 0.0
        %3073 = vmatpush1.msra.mxu0 0.0
        %3074 = vmatprep.subr.mxu0 0.0
        %3075 = vmatpush1.msra.mxu0 0.0
        %3076 = vmatprep.subr.mxu0 0.0
        %3077 = vmatpush1.msra.mxu0 0.0
        %3078 = vmatprep.subr.mxu0 0.0
        %3079 = vmatpush1.msra.mxu0 0.0
        %3080 = vmatprep.subr.mxu0 0.0
        %3081 = vmatpush1.msra.mxu0 0.0
        %3082 = vmatprep.subr.mxu0 0.0
        %3083 = vmatpush1.msra.mxu0 0.0
        %3084 = vmatprep.subr.mxu0 0.0
        %3085 = vmatpush1.msra.mxu0 0.0
        %3086 = vmatprep.subr.mxu0 0.0
        %3087 = vmatpush1.msra.mxu0 0.0
        %3088 = vmatprep.subr.mxu0 0.0
        %3089 = vmatpush1.msra.mxu0 0.0
        %3090 = vmatprep.subr.mxu0 0.0
        %3091 = vmatpush1.msra.mxu0 0.0
        %3092 = vmatprep.subr.mxu0 0.0
        %3093 = vmatpush1.msra.mxu0 0.0
        %3094 = vmatprep.subr.mxu0 0.0
        %3095 = vmatpush1.msra.mxu0 0.0
        %3096 = vmatprep.mubr.f32.mxu0 0.0
        %3097 = vmatmul.mubr.f32.gmra.mrb[0].mxu0 %v3030
        %v3098 = vpop.f32.mrb[0].mxu0
        %v3099 = vadd.f32 0.0, %v3098
        %v3100 = vpop.f32.mrb[0].mxu0
        %3101 = vdwg.mxu0
        %v3102 = vmul.f32 %v3099, %v3099
        %v3104 = vrot.slane %v3102, 7
        %v3106 = vsub.f32 %v3099, %v3104
        %v3107 = vlaneseq
        %v3108 = vshrl.u32 %v3107, 7
        %v3109 = vsub.s32 0, %v3108
        %v3110 = vrot.slane %v3099, %v3109
        %v3111 = vsub.f32 %v2731, %v3110
        %v3112 = vsub.f32 %v2734, %v3110
        %v3113 = vsub.f32 %v2739, %v3110
        %v3114 = vsub.f32 %v2742, %v3110
        %v3115 = vsub.f32 %v2747, %v3110
        %v3116 = vsub.f32 %v2750, %v3110
        %v3117 = vsub.f32 %v2755, %v3110
        %v3118 = vsub.f32 %v2758, %v3110
        %v3119 = vsub.f32 %v2763, %v3110
        %v3120 = vsub.f32 %v2766, %v3110
        %v3121 = vsub.f32 %v2771, %v3110
        %v3122 = vsub.f32 %v2774, %v3110
        %v3123 = vsub.f32 %v2779, %v3110
        %v3124 = vsub.f32 %v2782, %v3110
        %v3125 = vsub.f32 %v2787, %v3110
        %v3126 = vsub.f32 %v2790, %v3110
        %v3127 = vsub.f32 %v2795, %v3110
        %v3128 = vsub.f32 %v2798, %v3110
        %v3129 = vsub.f32 %v2803, %v3110
        %v3130 = vsub.f32 %v2806, %v3110
        %v3131 = vsub.f32 %v2811, %v3110
        %v3132 = vsub.f32 %v2814, %v3110
        %v3133 = vsub.f32 %v2819, %v3110
        %v3134 = vsub.f32 %v2822, %v3110
        %v3135 = vsub.f32 %v2827, %v3110
        %v3136 = vsub.f32 %v2830, %v3110
        %v3137 = vsub.f32 %v2835, %v3110
        %v3138 = vsub.f32 %v2838, %v3110
        %v3139 = vsub.f32 %v2843, %v3110
        %v3140 = vsub.f32 %v2846, %v3110
        %v3141 = vsub.f32 %v2851, %v3110
        %v3142 = vsub.f32 %v2854, %v3110
        %v3143 = vadd.f32 %v3106, 1e-05
        %v3144 = vrsqrt.pop %v3143
        %v3145 = vlaneseq
        %v3146 = vshrl.u32 %v3145, 7
        %v3147 = vsub.s32 1, %v3146
        %v3148 = vrot.slane %v3144, %v3147
        %v3149 = vmul.f32 %v3111, %v3148
        %v3150 = vmul.f32 %v3112, %v3148
        %v3151 = vmul.f32 %v3113, %v3148
        %v3152 = vmul.f32 %v3114, %v3148
        %v3153 = vmul.f32 %v3115, %v3148
        %v3154 = vmul.f32 %v3116, %v3148
        %v3155 = vmul.f32 %v3117, %v3148
        %v3156 = vmul.f32 %v3118, %v3148
        %v3157 = vmul.f32 %v3119, %v3148
        %v3158 = vmul.f32 %v3120, %v3148
        %v3159 = vmul.f32 %v3121, %v3148
        %v3160 = vmul.f32 %v3122, %v3148
        %v3161 = vmul.f32 %v3123, %v3148
        %v3162 = vmul.f32 %v3124, %v3148
        %v3163 = vmul.f32 %v3125, %v3148
        %v3164 = vmul.f32 %v3126, %v3148
        %v3165 = vmul.f32 %v3127, %v3148
        %v3166 = vmul.f32 %v3128, %v3148
        %v3167 = vmul.f32 %v3129, %v3148
        %v3168 = vmul.f32 %v3130, %v3148
        %v3169 = vmul.f32 %v3131, %v3148
        %v3170 = vmul.f32 %v3132, %v3148
        %v3171 = vmul.f32 %v3133, %v3148
        %v3172 = vmul.f32 %v3134, %v3148
        %v3173 = vmul.f32 %v3135, %v3148
        %v3174 = vmul.f32 %v3136, %v3148
        %v3175 = vmul.f32 %v3137, %v3148
        %v3176 = vmul.f32 %v3138, %v3148
        %v3177 = vmul.f32 %v3139, %v3148
        %v3178 = vmul.f32 %v3140, %v3148
        %v3179 = vmul.f32 %v3141, %v3148
        %v3180 = vmul.f32 %v3142, %v3148
        %v3181 = vlaneseq
        %v3182 = vshrl.u32 %v3181, 7
        %v3183 = vsub.s32 1, %v3182
        %v3184 = vrot.slane %v2611, %v3183
        %v3185 = vmul.f32 %v3149, %v3184
        %v3186 = vmul.f32 %v3150, %v3184
        %v3187 = vmul.f32 %v3151, %v3184
        %v3188 = vmul.f32 %v3152, %v3184
        %v3189 = vmul.f32 %v3153, %v3184
        %v3190 = vmul.f32 %v3154, %v3184
        %v3191 = vmul.f32 %v3155, %v3184
        %v3192 = vmul.f32 %v3156, %v3184
        %v3193 = vmul.f32 %v3157, %v3184
        %v3194 = vmul.f32 %v3158, %v3184
        %v3195 = vmul.f32 %v3159, %v3184
        %v3196 = vmul.f32 %v3160, %v3184
        %v3197 = vmul.f32 %v3161, %v3184
        %v3198 = vmul.f32 %v3162, %v3184
        %v3199 = vmul.f32 %v3163, %v3184
        %v3200 = vmul.f32 %v3164, %v3184
        %v3201 = vmul.f32 %v3165, %v3184
        %v3202 = vmul.f32 %v3166, %v3184
        %v3203 = vmul.f32 %v3167, %v3184
        %v3204 = vmul.f32 %v3168, %v3184
        %v3205 = vmul.f32 %v3169, %v3184
        %v3206 = vmul.f32 %v3170, %v3184
        %v3207 = vmul.f32 %v3171, %v3184
        %v3208 = vmul.f32 %v3172, %v3184
        %v3209 = vmul.f32 %v3173, %v3184
        %v3210 = vmul.f32 %v3174, %v3184
        %v3211 = vmul.f32 %v3175, %v3184
        %v3212 = vmul.f32 %v3176, %v3184
        %v3213 = vmul.f32 %v3177, %v3184
        %v3214 = vmul.f32 %v3178, %v3184
        %v3215 = vmul.f32 %v3179, %v3184
        %v3216 = vmul.f32 %v3180, %v3184
        %v3217 = vlaneseq
        %v3218 = vshrl.u32 %v3217, 7
        %v3219 = vsub.s32 2, %v3218
        %v3220 = vrot.slane %v2611, %v3219
        %v3221 = vadd.f32 %v3185, %v3220
        %v3222 = vadd.f32 %v3186, %v3220
        %v3223 = vadd.f32 %v3187, %v3220
        %v3224 = vadd.f32 %v3188, %v3220
        %v3225 = vadd.f32 %v3189, %v3220
        %v3226 = vadd.f32 %v3190, %v3220
        %v3227 = vadd.f32 %v3191, %v3220
        %v3228 = vadd.f32 %v3192, %v3220
        %v3229 = vadd.f32 %v3193, %v3220
        %v3230 = vadd.f32 %v3194, %v3220
        %v3231 = vadd.f32 %v3195, %v3220
        %v3232 = vadd.f32 %v3196, %v3220
        %v3233 = vadd.f32 %v3197, %v3220
        %v3234 = vadd.f32 %v3198, %v3220
        %v3235 = vadd.f32 %v3199, %v3220
        %v3236 = vadd.f32 %v3200, %v3220
        %v3237 = vadd.f32 %v3201, %v3220
        %v3238 = vadd.f32 %v3202, %v3220
        %v3239 = vadd.f32 %v3203, %v3220
        %v3240 = vadd.f32 %v3204, %v3220
        %v3241 = vadd.f32 %v3205, %v3220
        %v3242 = vadd.f32 %v3206, %v3220
        %v3243 = vadd.f32 %v3207, %v3220
        %v3244 = vadd.f32 %v3208, %v3220
        %v3245 = vadd.f32 %v3209, %v3220
        %v3246 = vadd.f32 %v3210, %v3220
        %v3247 = vadd.f32 %v3211, %v3220
        %v3248 = vadd.f32 %v3212, %v3220
        %v3249 = vadd.f32 %v3213, %v3220
        %v3250 = vadd.f32 %v3214, %v3220
        %v3251 = vadd.f32 %v3215, %v3220
        %v3252 = vadd.f32 %v3216, %v3220
        %3253 = vst.msk [vmem:[#allocation2] sm:$0xff] %vm1466, 0.0
        %3254 = vst.msk [vmem:[#allocation2 + $0x8] sm:$0xff] %vm1466, 0.0
        %3255 = vst.msk [vmem:[#allocation2 + $0x10] sm:$0xff] %vm1466, 0.0
        %3256 = vst.msk [vmem:[#allocation2 + $0x18] sm:$0xff] %vm1466, 0.0
        %3257 = vst.msk [vmem:[#allocation2 + $0x20] sm:$0xff] %vm1466, 0.0
        %3258 = vst.msk [vmem:[#allocation2 + $0x28] sm:$0xff] %vm1466, 0.0
        %3259 = vst.msk [vmem:[#allocation2 + $0x30] sm:$0xff] %vm1466, 0.0
        %3260 = vst.msk [vmem:[#allocation2 + $0x38] sm:$0xff] %vm1466, 0.0
        %3261 = vst.msk [vmem:[#allocation2 + $0x40] sm:$0xff] %vm1466, 0.0
        %3262 = vst.msk [vmem:[#allocation2 + $0x48] sm:$0xff] %vm1466, 0.0
        %3263 = vst.msk [vmem:[#allocation2 + $0x50] sm:$0xff] %vm1466, 0.0
        %3264 = vst.msk [vmem:[#allocation2 + $0x58] sm:$0xff] %vm1466, 0.0
        %3265 = vst.msk [vmem:[#allocation2 + $0x60] sm:$0xff] %vm1466, 0.0
        %3266 = vst.msk [vmem:[#allocation2 + $0x68] sm:$0xff] %vm1466, 0.0
        %3267 = vst.msk [vmem:[#allocation2 + $0x70] sm:$0xff] %vm1466, 0.0
        %3268 = vst.msk [vmem:[#allocation2 + $0x78] sm:$0xff] %vm1466, 0.0
        %3269 = vst.msk [vmem:[#allocation2 + $0x80] sm:$0xff] %vm1466, 0.0
        %3270 = vst.msk [vmem:[#allocation2 + $0x88] sm:$0xff] %vm1466, 0.0
        %3271 = vst.msk [vmem:[#allocation2 + $0x90] sm:$0xff] %vm1466, 0.0
        %3272 = vst.msk [vmem:[#allocation2 + $0x98] sm:$0xff] %vm1466, 0.0
        %3273 = vst.msk [vmem:[#allocation2 + $0xa0] sm:$0xff] %vm1466, 0.0
        %3274 = vst.msk [vmem:[#allocation2 + $0xa8] sm:$0xff] %vm1466, 0.0
        %3275 = vst.msk [vmem:[#allocation2 + $0xb0] sm:$0xff] %vm1466, 0.0
        %3276 = vst.msk [vmem:[#allocation2 + $0xb8] sm:$0xff] %vm1466, 0.0
        %3277 = vst.msk [vmem:[#allocation2 + $0xc0] sm:$0xff] %vm1466, 0.0
        %3278 = vst.msk [vmem:[#allocation2 + $0xc8] sm:$0xff] %vm1466, 0.0
        %3279 = vst.msk [vmem:[#allocation2 + $0xd0] sm:$0xff] %vm1466, 0.0
        %3280 = vst.msk [vmem:[#allocation2 + $0xd8] sm:$0xff] %vm1466, 0.0
        %3281 = vst.msk [vmem:[#allocation2 + $0xe0] sm:$0xff] %vm1466, 0.0
        %3282 = vst.msk [vmem:[#allocation2 + $0xe8] sm:$0xff] %vm1466, 0.0
        %3283 = vst.msk [vmem:[#allocation2 + $0xf0] sm:$0xff] %vm1466, 0.0
        %3284 = vst.msk [vmem:[#allocation2 + $0xf8] sm:$0xff] %vm1466, 0.0
        %3285 = vst.msk [vmem:[#allocation2 + $0x100] sm:$0xff] %vm1466, 0.0
        %3286 = vst.msk [vmem:[#allocation2 + $0x108] sm:$0xff] %vm1466, 0.0
        %3287 = vst.msk [vmem:[#allocation2 + $0x110] sm:$0xff] %vm1466, 0.0
        %3288 = vst.msk [vmem:[#allocation2 + $0x118] sm:$0xff] %vm1466, 0.0
        %3289 = vst.msk [vmem:[#allocation2 + $0x120] sm:$0xff] %vm1466, 0.0
        %3290 = vst.msk [vmem:[#allocation2 + $0x128] sm:$0xff] %vm1466, 0.0
        %3291 = vst.msk [vmem:[#allocation2 + $0x130] sm:$0xff] %vm1466, 0.0
        %3292 = vst.msk [vmem:[#allocation2 + $0x138] sm:$0xff] %vm1466, 0.0
        %3293 = vst.msk [vmem:[#allocation2 + $0x140] sm:$0xff] %vm1466, 0.0
        %3294 = vst.msk [vmem:[#allocation2 + $0x148] sm:$0xff] %vm1466, 0.0
        %3295 = vst.msk [vmem:[#allocation2 + $0x150] sm:$0xff] %vm1466, 0.0
        %3296 = vst.msk [vmem:[#allocation2 + $0x158] sm:$0xff] %vm1466, 0.0
        %3297 = vst.msk [vmem:[#allocation2 + $0x160] sm:$0xff] %vm1466, 0.0
        %3298 = vst.msk [vmem:[#allocation2 + $0x168] sm:$0xff] %vm1466, 0.0
        %3299 = vst.msk [vmem:[#allocation2 + $0x170] sm:$0xff] %vm1466, 0.0
        %3300 = vst.msk [vmem:[#allocation2 + $0x178] sm:$0xff] %vm1466, 0.0
        %3301 = vst.msk [vmem:[#allocation2 + $0x180] sm:$0xff] %vm1466, 0.0
        %3302 = vst.msk [vmem:[#allocation2 + $0x188] sm:$0xff] %vm1466, 0.0
        %3303 = vst.msk [vmem:[#allocation2 + $0x190] sm:$0xff] %vm1466, 0.0
        %3304 = vst.msk [vmem:[#allocation2 + $0x198] sm:$0xff] %vm1466, 0.0
        %3305 = vst.msk [vmem:[#allocation2 + $0x1a0] sm:$0xff] %vm1466, 0.0
        %3306 = vst.msk [vmem:[#allocation2 + $0x1a8] sm:$0xff] %vm1466, 0.0
        %s3307 = scalar_lea.vmem [#allocation2], 24
        %3308 = vst.msk [vmem:[%s3307 + $0x1] sm:$0xff] %vm745, %v3221
        %3309 = vst.msk [vmem:[%s3307 + $0x9] sm:$0xff] %vm745, %v3222
        %3310 = vst.msk [vmem:[%s3307 + $0x19] sm:$0xff] %vm745, %v3223
        %3311 = vst.msk [vmem:[%s3307 + $0x21] sm:$0xff] %vm745, %v3224
        %3312 = vst.msk [vmem:[%s3307 + $0x31] sm:$0xff] %vm745, %v3225
        %3313 = vst.msk [vmem:[%s3307 + $0x39] sm:$0xff] %vm745, %v3226
        %3314 = vst.msk [vmem:[%s3307 + $0x49] sm:$0xff] %vm745, %v3227
        %3315 = vst.msk [vmem:[%s3307 + $0x51] sm:$0xff] %vm745, %v3228
        %3316 = vst.msk [vmem:[%s3307 + $0x61] sm:$0xff] %vm745, %v3229
        %3317 = vst.msk [vmem:[%s3307 + $0x69] sm:$0xff] %vm745, %v3230
        %3318 = vst.msk [vmem:[%s3307 + $0x79] sm:$0xff] %vm745, %v3231
        %3319 = vst.msk [vmem:[%s3307 + $0x81] sm:$0xff] %vm745, %v3232
        %3320 = vst.msk [vmem:[%s3307 + $0x91] sm:$0xff] %vm745, %v3233
        %3321 = vst.msk [vmem:[%s3307 + $0x99] sm:$0xff] %vm745, %v3234
        %3322 = vst.msk [vmem:[%s3307 + $0xa9] sm:$0xff] %vm745, %v3235
        %3323 = vst.msk [vmem:[%s3307 + $0xb1] sm:$0xff] %vm745, %v3236
        %3324 = vst.msk [vmem:[%s3307 + $0xc1] sm:$0xff] %vm745, %v3237
        %3325 = vst.msk [vmem:[%s3307 + $0xc9] sm:$0xff] %vm745, %v3238
        %3326 = vst.msk [vmem:[%s3307 + $0xd9] sm:$0xff] %vm745, %v3239
        %3327 = vst.msk [vmem:[%s3307 + $0xe1] sm:$0xff] %vm745, %v3240
        %3328 = vst.msk [vmem:[%s3307 + $0xf1] sm:$0xff] %vm745, %v3241
        %3329 = vst.msk [vmem:[%s3307 + $0xf9] sm:$0xff] %vm745, %v3242
        %3330 = vst.msk [vmem:[%s3307 + $0x109] sm:$0xff] %vm745, %v3243
        %3331 = vst.msk [vmem:[%s3307 + $0x111] sm:$0xff] %vm745, %v3244
        %3332 = vst.msk [vmem:[%s3307 + $0x121] sm:$0xff] %vm745, %v3245
        %3333 = vst.msk [vmem:[%s3307 + $0x129] sm:$0xff] %vm745, %v3246
        %3334 = vst.msk [vmem:[%s3307 + $0x139] sm:$0xff] %vm745, %v3247
        %3335 = vst.msk [vmem:[%s3307 + $0x141] sm:$0xff] %vm745, %v3248
        %3336 = vst.msk [vmem:[%s3307 + $0x151] sm:$0xff] %vm745, %v3249
        %3337 = vst.msk [vmem:[%s3307 + $0x159] sm:$0xff] %vm745, %v3250
        %3338 = vst.msk [vmem:[%s3307 + $0x169] sm:$0xff] %vm745, %v3251
        %3339 = vst.msk [vmem:[%s3307 + $0x171] sm:$0xff] %vm745, %v3252
        %3372 = vrot.lane.b32.xlu0 %v1324, 32
        %v3373 = vpop.permute.xlu0 %3372
        %3374 = vrot.lane.b32.xlu0 %v1325, 32
        %v3375 = vpop.permute.xlu0 %3374
        %3376 = vrot.lane.b32.xlu0 %v1326, 32
        %v3377 = vpop.permute.xlu0 %3376
        %3378 = vrot.lane.b32.xlu0 %v1327, 32
        %v3379 = vpop.permute.xlu0 %3378
        %3380 = vrot.lane.b32.xlu0 %v1328, 32
        %v3381 = vpop.permute.xlu0 %3380
        %3382 = vrot.lane.b32.xlu0 %v1329, 32
        %v3383 = vpop.permute.xlu0 %3382
        %3384 = vrot.lane.b32.xlu0 %v1330, 32
        %v3385 = vpop.permute.xlu0 %3384
        %3386 = vrot.lane.b32.xlu0 %v1331, 32
        %v3387 = vpop.permute.xlu0 %3386
        %3388 = vrot.lane.b32.xlu0 %v1332, 32
        %v3389 = vpop.permute.xlu0 %3388
        %3390 = vrot.lane.b32.xlu0 %v1333, 32
        %v3391 = vpop.permute.xlu0 %3390
        %3392 = vrot.lane.b32.xlu0 %v1334, 32
        %v3393 = vpop.permute.xlu0 %3392
        %3394 = vrot.lane.b32.xlu0 %v1335, 32
        %v3395 = vpop.permute.xlu0 %3394
        %3396 = vrot.lane.b32.xlu0 %v1336, 32
        %v3397 = vpop.permute.xlu0 %3396
        %3398 = vrot.lane.b32.xlu0 %v1337, 32
        %v3399 = vpop.permute.xlu0 %3398
        %3400 = vrot.lane.b32.xlu0 %v1338, 32
        %v3401 = vpop.permute.xlu0 %3400
        %3402 = vrot.lane.b32.xlu0 %v1339, 32
        %v3403 = vpop.permute.xlu0 %3402
        %3404 = vrot.lane.b32.xlu0 %v1340, 32
        %v3405 = vpop.permute.xlu0 %3404
        %3406 = vrot.lane.b32.xlu0 %v1341, 32
        %v3407 = vpop.permute.xlu0 %3406
        %3408 = vrot.lane.b32.xlu0 %v1342, 32
        %v3409 = vpop.permute.xlu0 %3408
        %3410 = vrot.lane.b32.xlu0 %v1343, 32
        %v3411 = vpop.permute.xlu0 %3410
        %3412 = vrot.lane.b32.xlu0 %v1344, 32
        %v3413 = vpop.permute.xlu0 %3412
        %3414 = vrot.lane.b32.xlu0 %v1345, 32
        %v3415 = vpop.permute.xlu0 %3414
        %3416 = vrot.lane.b32.xlu0 %v1346, 32
        %v3417 = vpop.permute.xlu0 %3416
        %3418 = vrot.lane.b32.xlu0 %v1347, 32
        %v3419 = vpop.permute.xlu0 %3418
        %3420 = vrot.lane.b32.xlu0 %v1348, 32
        %v3421 = vpop.permute.xlu0 %3420
        %3422 = vrot.lane.b32.xlu0 %v1349, 32
        %v3423 = vpop.permute.xlu0 %3422
        %3424 = vrot.lane.b32.xlu0 %v1350, 32
        %v3425 = vpop.permute.xlu0 %3424
        %3426 = vrot.lane.b32.xlu0 %v1351, 32
        %v3427 = vpop.permute.xlu0 %3426
        %3428 = vrot.lane.b32.xlu0 %v1352, 32
        %v3429 = vpop.permute.xlu0 %3428
        %3430 = vrot.lane.b32.xlu0 %v1353, 32
        %v3431 = vpop.permute.xlu0 %3430
        %3432 = vrot.lane.b32.xlu0 %v1354, 32
        %v3433 = vpop.permute.xlu0 %3432
        %3434 = vrot.lane.b32.xlu0 %v1355, 32
        %v3435 = vpop.permute.xlu0 %3434
        %vm3468 = vcmask 523520
        %3469 = vst.msk [vmem:[%s3307 + $0x1] sm:$0xff] %vm3468, %v3373
        %3470 = vst.msk [vmem:[%s3307 + $0x9] sm:$0xff] %vm3468, %v3375
        %3471 = vst.msk [vmem:[%s3307 + $0x19] sm:$0xff] %vm3468, %v3377
        %3472 = vst.msk [vmem:[%s3307 + $0x21] sm:$0xff] %vm3468, %v3379
        %3473 = vst.msk [vmem:[%s3307 + $0x31] sm:$0xff] %vm3468, %v3381
        %3474 = vst.msk [vmem:[%s3307 + $0x39] sm:$0xff] %vm3468, %v3383
        %3475 = vst.msk [vmem:[%s3307 + $0x49] sm:$0xff] %vm3468, %v3385
        %3476 = vst.msk [vmem:[%s3307 + $0x51] sm:$0xff] %vm3468, %v3387
        %3477 = vst.msk [vmem:[%s3307 + $0x61] sm:$0xff] %vm3468, %v3389
        %3478 = vst.msk [vmem:[%s3307 + $0x69] sm:$0xff] %vm3468, %v3391
        %3479 = vst.msk [vmem:[%s3307 + $0x79] sm:$0xff] %vm3468, %v3393
        %3480 = vst.msk [vmem:[%s3307 + $0x81] sm:$0xff] %vm3468, %v3395
        %3481 = vst.msk [vmem:[%s3307 + $0x91] sm:$0xff] %vm3468, %v3397
        %3482 = vst.msk [vmem:[%s3307 + $0x99] sm:$0xff] %vm3468, %v3399
        %3483 = vst.msk [vmem:[%s3307 + $0xa9] sm:$0xff] %vm3468, %v3401
        %3484 = vst.msk [vmem:[%s3307 + $0xb1] sm:$0xff] %vm3468, %v3403
        %3485 = vst.msk [vmem:[%s3307 + $0xc1] sm:$0xff] %vm3468, %v3405
        %3486 = vst.msk [vmem:[%s3307 + $0xc9] sm:$0xff] %vm3468, %v3407
        %3487 = vst.msk [vmem:[%s3307 + $0xd9] sm:$0xff] %vm3468, %v3409
        %3488 = vst.msk [vmem:[%s3307 + $0xe1] sm:$0xff] %vm3468, %v3411
        %3489 = vst.msk [vmem:[%s3307 + $0xf1] sm:$0xff] %vm3468, %v3413
        %3490 = vst.msk [vmem:[%s3307 + $0xf9] sm:$0xff] %vm3468, %v3415
        %3491 = vst.msk [vmem:[%s3307 + $0x109] sm:$0xff] %vm3468, %v3417
        %3492 = vst.msk [vmem:[%s3307 + $0x111] sm:$0xff] %vm3468, %v3419
        %3493 = vst.msk [vmem:[%s3307 + $0x121] sm:$0xff] %vm3468, %v3421
        %3494 = vst.msk [vmem:[%s3307 + $0x129] sm:$0xff] %vm3468, %v3423
        %3495 = vst.msk [vmem:[%s3307 + $0x139] sm:$0xff] %vm3468, %v3425
        %3496 = vst.msk [vmem:[%s3307 + $0x141] sm:$0xff] %vm3468, %v3427
        %3497 = vst.msk [vmem:[%s3307 + $0x151] sm:$0xff] %vm3468, %v3429
        %3498 = vst.msk [vmem:[%s3307 + $0x159] sm:$0xff] %vm3468, %v3431
        %3499 = vst.msk [vmem:[%s3307 + $0x169] sm:$0xff] %vm3468, %v3433
        %3500 = vst.msk [vmem:[%s3307 + $0x171] sm:$0xff] %vm3468, %v3435
        %v3501 = vld [vmem:[#allocation2] sm:$0xff]
        %v3502 = vld [vmem:[#allocation2 + $0x8] sm:$0xff]
        %v3503 = vld [vmem:[#allocation2 + $0x10] sm:$0xff]
        %v3504 = vld [vmem:[#allocation2 + $0x18] sm:$0xff]
        %v3505 = vld [vmem:[#allocation2 + $0x20] sm:$0xff]
        %v3506 = vld [vmem:[#allocation2 + $0x28] sm:$0xff]
        %v3507 = vld [vmem:[#allocation2 + $0x30] sm:$0xff]
        %v3508 = vld [vmem:[#allocation2 + $0x38] sm:$0xff]
        %v3509 = vld [vmem:[#allocation2 + $0x40] sm:$0xff]
        %v3510 = vld [vmem:[#allocation2 + $0x48] sm:$0xff]
        %v3511 = vld [vmem:[#allocation2 + $0x50] sm:$0xff]
        %v3512 = vld [vmem:[#allocation2 + $0x58] sm:$0xff]
        %v3513 = vld [vmem:[#allocation2 + $0x60] sm:$0xff]
        %v3514 = vld [vmem:[#allocation2 + $0x68] sm:$0xff]
        %v3515 = vld [vmem:[#allocation2 + $0x70] sm:$0xff]
        %v3516 = vld [vmem:[#allocation2 + $0x78] sm:$0xff]
        %v3517 = vld [vmem:[#allocation2 + $0x80] sm:$0xff]
        %v3518 = vld [vmem:[#allocation2 + $0x88] sm:$0xff]
        %v3519 = vld [vmem:[#allocation2 + $0x90] sm:$0xff]
        %v3520 = vld [vmem:[#allocation2 + $0x98] sm:$0xff]
        %v3521 = vld [vmem:[#allocation2 + $0xa0] sm:$0xff]
        %v3522 = vld [vmem:[#allocation2 + $0xa8] sm:$0xff]
        %v3523 = vld [vmem:[#allocation2 + $0xb0] sm:$0xff]
        %v3524 = vld [vmem:[#allocation2 + $0xb8] sm:$0xff]
        %v3525 = vld [vmem:[#allocation2 + $0xc0] sm:$0xff]
        %v3526 = vld [vmem:[#allocation2 + $0xc8] sm:$0xff]
        %v3527 = vld [vmem:[#allocation2 + $0xd0] sm:$0xff]
        %v3528 = vld [vmem:[#allocation2 + $0xd8] sm:$0xff]
        %v3529 = vld [vmem:[#allocation2 + $0xe0] sm:$0xff]
        %v3530 = vld [vmem:[#allocation2 + $0xe8] sm:$0xff]
        %v3531 = vld [vmem:[#allocation2 + $0xf0] sm:$0xff]
        %v3532 = vld [vmem:[#allocation2 + $0xf8] sm:$0xff]
        %v3533 = vld [vmem:[#allocation2 + $0x100] sm:$0xff]
        %v3534 = vld [vmem:[#allocation2 + $0x108] sm:$0xff]
        %v3535 = vld [vmem:[#allocation2 + $0x110] sm:$0xff]
        %v3536 = vld [vmem:[#allocation2 + $0x118] sm:$0xff]
        %v3537 = vld [vmem:[#allocation2 + $0x120] sm:$0xff]
        %v3538 = vld [vmem:[#allocation2 + $0x128] sm:$0xff]
        %v3539 = vld [vmem:[#allocation2 + $0x130] sm:$0xff]
        %v3540 = vld [vmem:[#allocation2 + $0x138] sm:$0xff]
        %v3541 = vld [vmem:[#allocation2 + $0x140] sm:$0xff]
        %v3542 = vld [vmem:[#allocation2 + $0x148] sm:$0xff]
        %v3543 = vld [vmem:[#allocation2 + $0x150] sm:$0xff]
        %v3544 = vld [vmem:[#allocation2 + $0x158] sm:$0xff]
        %v3545 = vld [vmem:[#allocation2 + $0x160] sm:$0xff]
        %v3546 = vld [vmem:[#allocation2 + $0x168] sm:$0xff]
        %v3547 = vld [vmem:[#allocation2 + $0x170] sm:$0xff]
        %v3548 = vld [vmem:[#allocation2 + $0x178] sm:$0xff]
        %v3549 = vld [vmem:[#allocation2 + $0x180] sm:$0xff]
        %v3550 = vld [vmem:[#allocation2 + $0x188] sm:$0xff]
        %v3551 = vld [vmem:[#allocation2 + $0x190] sm:$0xff]
        %v3552 = vld [vmem:[#allocation2 + $0x198] sm:$0xff]
        %v3553 = vld [vmem:[#allocation2 + $0x1a0] sm:$0xff]
        %v3554 = vld [vmem:[#allocation2 + $0x1a8] sm:$0xff]
        %v3555 = vpack.c.bf16 %v3502, %v3501
        %v3556 = vpack.c.bf16 %v3504, %v3503
        %v3557 = vpack.c.bf16 %v3506, %v3505
        %v3558 = vpack.c.bf16 %v3508, %v3507
        %v3559 = vpack.c.bf16 %v3510, %v3509
        %v3560 = vpack.c.bf16 %v3512, %v3511
        %v3561 = vpack.c.bf16 %v3514, %v3513
        %v3562 = vpack.c.bf16 %v3516, %v3515
        %v3563 = vpack.c.bf16 %v3518, %v3517
        %v3564 = vpack.c.bf16 %v3520, %v3519
        %v3565 = vpack.c.bf16 %v3522, %v3521
        %v3566 = vpack.c.bf16 %v3524, %v3523
        %v3567 = vpack.c.bf16 %v3526, %v3525
        %v3568 = vpack.c.bf16 %v3528, %v3527
        %v3569 = vpack.c.bf16 %v3530, %v3529
        %v3570 = vpack.c.bf16 %v3532, %v3531
        %v3571 = vpack.c.bf16 %v3534, %v3533
        %v3572 = vpack.c.bf16 %v3536, %v3535
        %v3573 = vpack.c.bf16 %v3538, %v3537
        %v3574 = vpack.c.bf16 %v3540, %v3539
        %v3575 = vpack.c.bf16 %v3542, %v3541
        %v3576 = vpack.c.bf16 %v3544, %v3543
        %v3577 = vpack.c.bf16 %v3546, %v3545
        %v3578 = vpack.c.bf16 %v3548, %v3547
        %v3579 = vpack.c.bf16 %v3550, %v3549
        %v3580 = vpack.c.bf16 %v3552, %v3551
        %v3581 = vpack.c.bf16 %v3554, %v3553
        %v3582 = vld [vmem:[%s14] sm:$0xff]
        %v3583 = vld [vmem:[%s14 + $0x8] sm:$0xf]
        %v3584 = vld [vmem:[%s14 + $0xc] sm:$0xff]
        %v3585 = vld [vmem:[%s14 + $0x14] sm:$0xf]
        %v3586 = vld [vmem:[%s14 + $0x18] sm:$0xff]
        %v3587 = vld [vmem:[%s14 + $0x20] sm:$0xf]
        %v3588 = vld [vmem:[%s14 + $0x24] sm:$0xff]
        %v3589 = vld [vmem:[%s14 + $0x2c] sm:$0xf]
        %v3590 = vld [vmem:[%s14 + $0x30] sm:$0xff]
        %v3591 = vld [vmem:[%s14 + $0x38] sm:$0xf]
        %v3592 = vld [vmem:[%s14 + $0x3c] sm:$0xff]
        %v3593 = vld [vmem:[%s14 + $0x44] sm:$0xf]
        %v3594 = vld [vmem:[%s14 + $0x48] sm:$0xff]
        %v3595 = vld [vmem:[%s14 + $0x50] sm:$0xf]
        %v3596 = vld [vmem:[%s14 + $0x54] sm:$0xff]
        %v3597 = vld [vmem:[%s14 + $0x5c] sm:$0xf]
        %v3614 = vunpack.c.l.b16 %v3582
        %v3615 = vunpack.c.h.b16 %v3582
        %v3616 = vunpack.c.l.b16 %v3583
        %v3617 = vunpack.c.l.b16 %v3584
        %v3618 = vunpack.c.h.b16 %v3584
        %v3619 = vunpack.c.l.b16 %v3585
        %v3620 = vunpack.c.l.b16 %v3586
        %v3621 = vunpack.c.h.b16 %v3586
        %v3622 = vunpack.c.l.b16 %v3587
        %v3623 = vunpack.c.l.b16 %v3588
        %v3624 = vunpack.c.h.b16 %v3588
        %v3625 = vunpack.c.l.b16 %v3589
        %v3626 = vunpack.c.l.b16 %v3590
        %v3627 = vunpack.c.h.b16 %v3590
        %v3628 = vunpack.c.l.b16 %v3591
        %v3629 = vunpack.c.l.b16 %v3592
        %v3630 = vunpack.c.h.b16 %v3592
        %v3631 = vunpack.c.l.b16 %v3593
        %v3632 = vunpack.c.l.b16 %v3594
        %v3633 = vunpack.c.h.b16 %v3594
        %v3634 = vunpack.c.l.b16 %v3595
        %v3635 = vunpack.c.l.b16 %v3596
        %v3636 = vunpack.c.h.b16 %v3596
        %v3637 = vunpack.c.l.b16 %v3597
        %v3638 = vpack.c.b16 %v3617, %v3614
        %v3639 = vpack.c.b16 %v3618, %v3615
        %v3640 = vpack.c.b16 %v3619, %v3616
        %v3641 = vpack.c.b16 %v3623, %v3620
        %v3642 = vpack.c.b16 %v3624, %v3621
        %v3643 = vpack.c.b16 %v3625, %v3622
        %v3644 = vpack.c.b16 %v3629, %v3626
        %v3645 = vpack.c.b16 %v3630, %v3627
        %v3646 = vpack.c.b16 %v3631, %v3628
        %v3647 = vpack.c.b16 %v3635, %v3632
        %v3648 = vpack.c.b16 %v3636, %v3633
        %v3649 = vpack.c.b16 %v3637, %v3634
        %v3663 = vsel %vm1466, %v3555, 0
        %v3666 = vsel %vm1466, %v3556, 0
        %v3669 = vsel %vm1466, %v3557, 0
        %v3672 = vsel %vm1466, %v3558, 0
        %v3675 = vsel %vm1466, %v3559, 0
        %v3678 = vsel %vm1466, %v3560, 0
        %v3681 = vsel %vm1466, %v3561, 0
        %v3684 = vsel %vm1466, %v3562, 0
        %v3687 = vsel %vm1466, %v3563, 0
        %v3690 = vsel %vm1466, %v3564, 0
        %v3693 = vsel %vm1466, %v3565, 0
        %v3696 = vsel %vm1466, %v3566, 0
        %v3699 = vsel %vm1466, %v3567, 0
        %v3702 = vsel %vm1466, %v3568, 0
        %v3705 = vsel %vm1466, %v3569, 0
        %v3708 = vsel %vm1466, %v3570, 0
        %v3711 = vsel %vm1466, %v3571, 0
        %v3714 = vsel %vm1466, %v3572, 0
        %v3717 = vsel %vm1466, %v3573, 0
        %v3720 = vsel %vm1466, %v3574, 0
        %v3723 = vsel %vm1466, %v3575, 0
        %v3726 = vsel %vm1466, %v3576, 0
        %v3729 = vsel %vm1466, %v3577, 0
        %v3732 = vsel %vm1466, %v3578, 0
        %v3735 = vsel %vm1466, %v3579, 0
        %v3738 = vsel %vm1466, %v3580, 0
        %v3741 = vsel %vm1466, %v3581, 0
        %3743 = vmatprep.subr.bf16.mxu0 %v3639
        %3744 = vmatpush1.bf16.msra.mxu0 %v3638
        %3745 = vmatprep.subr.bf16.mxu0 %v3642
        %3746 = vmatpush1.bf16.msra.mxu0 %v3641
        %3747 = vmatprep.subr.bf16.mxu0 %v3645
        %3748 = vmatpush1.bf16.msra.mxu0 %v3644
        %3749 = vmatprep.subr.bf16.mxu0 %v3648
        %3750 = vmatpush1.bf16.msra.mxu0 %v3647
        %3751 = vmatprep.subr.bf16.mxu0 0
        %3752 = vmatpush1.bf16.msra.mxu0 0
        %3753 = vmatprep.subr.bf16.mxu0 0
        %3754 = vmatpush1.bf16.msra.mxu0 0
        %3755 = vmatprep.subr.bf16.mxu0 0
        %3756 = vmatpush1.bf16.msra.mxu0 0
        %3757 = vmatprep.subr.bf16.mxu0 0
        %3758 = vmatpush1.bf16.msra.mxu0 0
        %3759 = vmatprep.subr.bf16.mxu0 0
        %3760 = vmatpush1.bf16.msra.mxu0 0
        %3761 = vmatprep.subr.bf16.mxu0 0
        %3762 = vmatpush1.bf16.msra.mxu0 0
        %3763 = vmatprep.subr.bf16.mxu0 0
        %3764 = vmatpush1.bf16.msra.mxu0 0
        %3765 = vmatprep.subr.bf16.mxu0 0
        %3766 = vmatpush1.bf16.msra.mxu0 0
        %3767 = vmatprep.subr.bf16.mxu0 0
        %3768 = vmatpush1.bf16.msra.mxu0 0
        %3769 = vmatprep.subr.bf16.mxu0 0
        %3770 = vmatpush1.bf16.msra.mxu0 0
        %3771 = vmatprep.subr.bf16.mxu0 0
        %3772 = vmatpush1.bf16.msra.mxu0 0
        %3773 = vmatprep.subr.bf16.mxu0 0
        %3774 = vmatpush1.bf16.msra.mxu0 0
        %3775 = vmatprep.mubr.bf16.mxu0 0
        %3776 = vmatmul.mubr.bf16.gmra.mrb[0].mxu0 %v3663
        %v3777 = vpop.f32.mrb[0].mxu0
        %v3778 = vadd.f32 0.0, %v3777
        %v3779 = vpop.f32.mrb[0].mxu0
        %v3780 = vpop.f32.mrb[0].mxu0
        %v3781 = vadd.f32 0.0, %v3780
        %v3782 = vpop.f32.mrb[0].mxu0
        %3783 = vmatprep.mubr.bf16.mxu0 0
        %3784 = vmatmul.mubr.bf16.gmra.mrb[0].mxu0 %v3666
        %v3785 = vpop.f32.mrb[0].mxu0
        %v3786 = vadd.f32 0.0, %v3785
        %v3787 = vpop.f32.mrb[0].mxu0
        %v3788 = vpop.f32.mrb[0].mxu0
        %v3789 = vadd.f32 0.0, %v3788
        %v3790 = vpop.f32.mrb[0].mxu0
        %v3791 = vadd.f32 0.0, %v3790
        %3792 = vmatprep.mubr.bf16.mxu0 0
        %3793 = vmatmul.mubr.bf16.gmra.mrb[0].mxu0 %v3669
        %v3794 = vpop.f32.mrb[0].mxu0
        %v3795 = vadd.f32 0.0, %v3794
        %v3796 = vpop.f32.mrb[0].mxu0
        %v3797 = vadd.f32 0.0, %v3796
        %v3798 = vpop.f32.mrb[0].mxu0
        %v3799 = vadd.f32 0.0, %v3798
        %v3800 = vpop.f32.mrb[0].mxu0
        %v3801 = vadd.f32 0.0, %v3800
        %3802 = vmatprep.mubr.bf16.mxu0 0
        %3803 = vmatmul.mubr.bf16.gmra.mrb[0].mxu0 %v3672
        %v3804 = vpop.f32.mrb[0].mxu0
        %v3805 = vadd.f32 0.0, %v3804
        %v3806 = vpop.f32.mrb[0].mxu0
        %v3807 = vadd.f32 0.0, %v3806
        %v3808 = vpop.f32.mrb[0].mxu0
        %v3809 = vadd.f32 0.0, %v3808
        %v3810 = vpop.f32.mrb[0].mxu0
        %v3811 = vadd.f32 0.0, %v3810
        %3812 = vmatprep.mubr.bf16.mxu0 0
        %3813 = vmatmul.mubr.bf16.gmra.mrb[0].mxu0 %v3675
        %v3814 = vpop.f32.mrb[0].mxu0
        %v3815 = vadd.f32 0.0, %v3814
        %v3816 = vpop.f32.mrb[0].mxu0
        %v3817 = vadd.f32 0.0, %v3816
        %v3818 = vpop.f32.mrb[0].mxu0
        %v3819 = vadd.f32 0.0, %v3818
        %v3820 = vpop.f32.mrb[0].mxu0
        %v3821 = vadd.f32 0.0, %v3820
        %3822 = vmatprep.mubr.bf16.mxu0 0
        %3823 = vmatmul.mubr.bf16.gmra.mrb[0].mxu0 %v3678
        %v3824 = vpop.f32.mrb[0].mxu0
        %v3825 = vadd.f32 0.0, %v3824
        %v3826 = vpop.f32.mrb[0].mxu0
        %v3827 = vadd.f32 0.0, %v3826
        %v3828 = vpop.f32.mrb[0].mxu0
        %v3829 = vadd.f32 0.0, %v3828
        %v3830 = vpop.f32.mrb[0].mxu0
        %v3831 = vadd.f32 0.0, %v3830
        %3832 = vmatprep.mubr.bf16.mxu0 0
        %3833 = vmatmul.mubr.bf16.gmra.mrb[0].mxu0 %v3681
        %v3834 = vpop.f32.mrb[0].mxu0
        %v3835 = vadd.f32 0.0, %v3834
        %v3836 = vpop.f32.mrb[0].mxu0
        %v3837 = vadd.f32 0.0, %v3836
        %v3838 = vpop.f32.mrb[0].mxu0
        %v3839 = vadd.f32 0.0, %v3838
        %v3840 = vpop.f32.mrb[0].mxu0
        %v3841 = vadd.f32 0.0, %v3840
        %3842 = vmatprep.mubr.bf16.mxu0 0
        %3843 = vmatmul.mubr.bf16.gmra.mrb[0].mxu0 %v3684
        %v3844 = vpop.f32.mrb[0].mxu0
        %v3845 = vadd.f32 0.0, %v3844
        %v3846 = vpop.f32.mrb[0].mxu0
        %v3847 = vadd.f32 0.0, %v3846
        %v3848 = vpop.f32.mrb[0].mxu0
        %v3849 = vadd.f32 0.0, %v3848
        %v3850 = vpop.f32.mrb[0].mxu0
        %v3851 = vadd.f32 0.0, %v3850
        %3852 = vmatprep.mubr.bf16.mxu0 0
        %3853 = vmatmul.mubr.bf16.gmra.mrb[0].mxu0 %v3687
        %v3854 = vpop.f32.mrb[0].mxu0
        %v3855 = vadd.f32 0.0, %v3854
        %v3856 = vpop.f32.mrb[0].mxu0
        %v3857 = vadd.f32 0.0, %v3856
        %v3858 = vpop.f32.mrb[0].mxu0
        %v3859 = vadd.f32 0.0, %v3858
        %v3860 = vpop.f32.mrb[0].mxu0
        %v3861 = vadd.f32 0.0, %v3860
        %3862 = vmatprep.mubr.bf16.mxu0 0
        %3863 = vmatmul.mubr.bf16.gmra.mrb[0].mxu0 %v3690
        %v3864 = vpop.f32.mrb[0].mxu0
        %v3865 = vadd.f32 0.0, %v3864
        %v3866 = vpop.f32.mrb[0].mxu0
        %v3867 = vadd.f32 0.0, %v3866
        %v3868 = vpop.f32.mrb[0].mxu0
        %v3869 = vadd.f32 0.0, %v3868
        %v3870 = vpop.f32.mrb[0].mxu0
        %v3871 = vadd.f32 0.0, %v3870
        %3872 = vmatprep.mubr.bf16.mxu0 0
        %3873 = vmatmul.mubr.bf16.gmra.mrb[0].mxu0 %v3693
        %v3874 = vpop.f32.mrb[0].mxu0
        %v3875 = vadd.f32 0.0, %v3874
        %v3876 = vpop.f32.mrb[0].mxu0
        %v3877 = vadd.f32 0.0, %v3876
        %v3878 = vpop.f32.mrb[0].mxu0
        %v3879 = vadd.f32 0.0, %v3878
        %v3880 = vpop.f32.mrb[0].mxu0
        %v3881 = vadd.f32 0.0, %v3880
        %3882 = vmatprep.mubr.bf16.mxu0 0
        %3883 = vmatmul.mubr.bf16.gmra.mrb[0].mxu0 %v3696
        %v3884 = vpop.f32.mrb[0].mxu0
        %v3885 = vadd.f32 0.0, %v3884
        %v3886 = vpop.f32.mrb[0].mxu0
        %v3887 = vadd.f32 0.0, %v3886
        %v3888 = vpop.f32.mrb[0].mxu0
        %v3889 = vadd.f32 0.0, %v3888
        %v3890 = vpop.f32.mrb[0].mxu0
        %v3891 = vadd.f32 0.0, %v3890
        %3892 = vmatprep.mubr.bf16.mxu0 0
        %3893 = vmatmul.mubr.bf16.gmra.mrb[0].mxu0 %v3699
        %v3894 = vpop.f32.mrb[0].mxu0
        %v3895 = vadd.f32 0.0, %v3894
        %v3896 = vpop.f32.mrb[0].mxu0
        %v3897 = vadd.f32 0.0, %v3896
        %v3898 = vpop.f32.mrb[0].mxu0
        %v3899 = vadd.f32 0.0, %v3898
        %v3900 = vpop.f32.mrb[0].mxu0
        %v3901 = vadd.f32 0.0, %v3900
        %3902 = vmatprep.mubr.bf16.mxu0 0
        %3903 = vmatmul.mubr.bf16.gmra.mrb[0].mxu0 %v3702
        %v3904 = vpop.f32.mrb[0].mxu0
        %v3905 = vadd.f32 0.0, %v3904
        %v3906 = vpop.f32.mrb[0].mxu0
        %v3907 = vadd.f32 0.0, %v3906
        %v3908 = vpop.f32.mrb[0].mxu0
        %v3909 = vadd.f32 0.0, %v3908
        %v3910 = vpop.f32.mrb[0].mxu0
        %v3911 = vadd.f32 0.0, %v3910
        %3912 = vmatprep.mubr.bf16.mxu0 0
        %3913 = vmatmul.mubr.bf16.gmra.mrb[0].mxu0 %v3705
        %v3914 = vpop.f32.mrb[0].mxu0
        %v3915 = vadd.f32 0.0, %v3914
        %v3916 = vpop.f32.mrb[0].mxu0
        %v3917 = vadd.f32 0.0, %v3916
        %v3918 = vpop.f32.mrb[0].mxu0
        %v3919 = vadd.f32 0.0, %v3918
        %v3920 = vpop.f32.mrb[0].mxu0
        %v3921 = vadd.f32 0.0, %v3920
        %3922 = vmatprep.mubr.bf16.mxu0 0
        %3923 = vmatmul.mubr.bf16.gmra.mrb[0].mxu0 %v3708
        %v3924 = vpop.f32.mrb[0].mxu0
        %v3925 = vadd.f32 0.0, %v3924
        %v3926 = vpop.f32.mrb[0].mxu0
        %v3927 = vadd.f32 0.0, %v3926
        %v3928 = vpop.f32.mrb[0].mxu0
        %v3929 = vadd.f32 0.0, %v3928
        %v3930 = vpop.f32.mrb[0].mxu0
        %v3931 = vadd.f32 0.0, %v3930
        %3932 = vmatprep.mubr.bf16.mxu0 0
        %3933 = vmatmul.mubr.bf16.gmra.mrb[0].mxu0 %v3711
        %v3934 = vpop.f32.mrb[0].mxu0
        %v3935 = vadd.f32 0.0, %v3934
        %v3936 = vpop.f32.mrb[0].mxu0
        %v3937 = vadd.f32 0.0, %v3936
        %v3938 = vpop.f32.mrb[0].mxu0
        %v3939 = vadd.f32 0.0, %v3938
        %v3940 = vpop.f32.mrb[0].mxu0
        %v3941 = vadd.f32 0.0, %v3940
        %3942 = vmatprep.mubr.bf16.mxu0 0
        %3943 = vmatmul.mubr.bf16.gmra.mrb[0].mxu0 %v3714
        %v3944 = vpop.f32.mrb[0].mxu0
        %v3945 = vadd.f32 0.0, %v3944
        %v3946 = vpop.f32.mrb[0].mxu0
        %v3947 = vadd.f32 0.0, %v3946
        %v3948 = vpop.f32.mrb[0].mxu0
        %v3949 = vadd.f32 0.0, %v3948
        %v3950 = vpop.f32.mrb[0].mxu0
        %v3951 = vadd.f32 0.0, %v3950
        %3952 = vmatprep.mubr.bf16.mxu0 0
        %3953 = vmatmul.mubr.bf16.gmra.mrb[0].mxu0 %v3717
        %v3954 = vpop.f32.mrb[0].mxu0
        %v3955 = vadd.f32 0.0, %v3954
        %v3956 = vpop.f32.mrb[0].mxu0
        %v3957 = vadd.f32 0.0, %v3956
        %v3958 = vpop.f32.mrb[0].mxu0
        %v3959 = vadd.f32 0.0, %v3958
        %v3960 = vpop.f32.mrb[0].mxu0
        %v3961 = vadd.f32 0.0, %v3960
        %3962 = vmatprep.mubr.bf16.mxu0 0
        %3963 = vmatmul.mubr.bf16.gmra.mrb[0].mxu0 %v3720
        %v3964 = vpop.f32.mrb[0].mxu0
        %v3965 = vadd.f32 0.0, %v3964
        %v3966 = vpop.f32.mrb[0].mxu0
        %v3967 = vadd.f32 0.0, %v3966
        %v3968 = vpop.f32.mrb[0].mxu0
        %v3969 = vadd.f32 0.0, %v3968
        %v3970 = vpop.f32.mrb[0].mxu0
        %v3971 = vadd.f32 0.0, %v3970
        %3972 = vmatprep.mubr.bf16.mxu0 0
        %3973 = vmatmul.mubr.bf16.gmra.mrb[0].mxu0 %v3723
        %v3974 = vpop.f32.mrb[0].mxu0
        %v3975 = vadd.f32 0.0, %v3974
        %v3976 = vpop.f32.mrb[0].mxu0
        %v3977 = vadd.f32 0.0, %v3976
        %v3978 = vpop.f32.mrb[0].mxu0
        %v3979 = vadd.f32 0.0, %v3978
        %v3980 = vpop.f32.mrb[0].mxu0
        %v3981 = vadd.f32 0.0, %v3980
        %3982 = vmatprep.mubr.bf16.mxu0 0
        %3983 = vmatmul.mubr.bf16.gmra.mrb[0].mxu0 %v3726
        %v3984 = vpop.f32.mrb[0].mxu0
        %v3985 = vadd.f32 0.0, %v3984
        %v3986 = vpop.f32.mrb[0].mxu0
        %v3987 = vadd.f32 0.0, %v3986
        %v3988 = vpop.f32.mrb[0].mxu0
        %v3989 = vadd.f32 0.0, %v3988
        %v3990 = vpop.f32.mrb[0].mxu0
        %v3991 = vadd.f32 0.0, %v3990
        %3992 = vmatprep.mubr.bf16.mxu0 0
        %3993 = vmatmul.mubr.bf16.gmra.mrb[0].mxu0 %v3729
        %v3994 = vpop.f32.mrb[0].mxu0
        %v3995 = vadd.f32 0.0, %v3994
        %v3996 = vpop.f32.mrb[0].mxu0
        %v3997 = vadd.f32 0.0, %v3996
        %v3998 = vpop.f32.mrb[0].mxu0
        %v3999 = vadd.f32 0.0, %v3998
        %v4000 = vpop.f32.mrb[0].mxu0
        %v4001 = vadd.f32 0.0, %v4000
        %4002 = vmatprep.mubr.bf16.mxu0 0
        %4003 = vmatmul.mubr.bf16.gmra.mrb[0].mxu0 %v3732
        %v4004 = vpop.f32.mrb[0].mxu0
        %v4005 = vadd.f32 0.0, %v4004
        %v4006 = vpop.f32.mrb[0].mxu0
        %v4007 = vadd.f32 0.0, %v4006
        %v4008 = vpop.f32.mrb[0].mxu0
        %v4009 = vadd.f32 0.0, %v4008
        %v4010 = vpop.f32.mrb[0].mxu0
        %v4011 = vadd.f32 0.0, %v4010
        %4012 = vmatprep.mubr.bf16.mxu0 0
        %4013 = vmatmul.mubr.bf16.gmra.mrb[0].mxu0 %v3735
        %v4014 = vpop.f32.mrb[0].mxu0
        %v4015 = vadd.f32 0.0, %v4014
        %v4016 = vpop.f32.mrb[0].mxu0
        %v4017 = vadd.f32 0.0, %v4016
        %v4018 = vpop.f32.mrb[0].mxu0
        %v4019 = vadd.f32 0.0, %v4018
        %v4020 = vpop.f32.mrb[0].mxu0
        %v4021 = vadd.f32 0.0, %v4020
        %4022 = vmatprep.mubr.bf16.mxu0 0
        %4023 = vmatmul.mubr.bf16.gmra.mrb[0].mxu0 %v3738
        %v4024 = vpop.f32.mrb[0].mxu0
        %v4025 = vpop.f32.mrb[0].mxu0
        %v4026 = vadd.f32 0.0, %v4025
        %v4027 = vpop.f32.mrb[0].mxu0
        %v4028 = vpop.f32.mrb[0].mxu0
        %v4029 = vadd.f32 0.0, %v4028
        %4030 = vmatprep.mubr.bf16.mxu0 0
        %4031 = vmatmul.mubr.bf16.gmra.mrb[0].mxu0 %v3741
        %v4032 = vpop.f32.mrb[0].mxu0
        %v4033 = vpop.f32.mrb[0].mxu0
        %v4034 = vadd.f32 0.0, %v4033
        %v4035 = vpop.f32.mrb[0].mxu0
        %v4036 = vpop.f32.mrb[0].mxu0
        %v4037 = vadd.f32 0.0, %v4036
        %4038 = vdwg.mxu0
        %4039 = vmatprep.subr.bf16.mxu0 0
        %4040 = vmatpush1.bf16.msra.mxu0 %v3640
        %4041 = vmatprep.subr.bf16.mxu0 0
        %4042 = vmatpush1.bf16.msra.mxu0 %v3643
        %4043 = vmatprep.subr.bf16.mxu0 0
        %4044 = vmatpush1.bf16.msra.mxu0 %v3646
        %4045 = vmatprep.subr.bf16.mxu0 0
        %4046 = vmatpush1.bf16.msra.mxu0 %v3649
        %4047 = vmatprep.subr.bf16.mxu0 0
        %4048 = vmatpush1.bf16.msra.mxu0 0
        %4049 = vmatprep.subr.bf16.mxu0 0
        %4050 = vmatpush1.bf16.msra.mxu0 0
        %4051 = vmatprep.subr.bf16.mxu0 0
        %4052 = vmatpush1.bf16.msra.mxu0 0
        %4053 = vmatprep.subr.bf16.mxu0 0
        %4054 = vmatpush1.bf16.msra.mxu0 0
        %4055 = vmatprep.subr.bf16.mxu0 0
        %4056 = vmatpush1.bf16.msra.mxu0 0
        %4057 = vmatprep.subr.bf16.mxu0 0
        %4058 = vmatpush1.bf16.msra.mxu0 0
        %4059 = vmatprep.subr.bf16.mxu0 0
        %4060 = vmatpush1.bf16.msra.mxu0 0
        %4061 = vmatprep.subr.bf16.mxu0 0
        %4062 = vmatpush1.bf16.msra.mxu0 0
        %4063 = vmatprep.subr.bf16.mxu0 0
        %4064 = vmatpush1.bf16.msra.mxu0 0
        %4065 = vmatprep.subr.bf16.mxu0 0
        %4066 = vmatpush1.bf16.msra.mxu0 0
        %4067 = vmatprep.subr.bf16.mxu0 0
        %4068 = vmatpush1.bf16.msra.mxu0 0
        %4069 = vmatprep.subr.bf16.mxu0 0
        %4070 = vmatpush1.bf16.msra.mxu0 0
        %4071 = vmatprep.mubr.bf16.mxu0 0
        %4072 = vmatmul.mubr.bf16.gmra.mrb[0].mxu0 %v3663
        %v4073 = vpop.f32.mrb[0].mxu0
        %v4074 = vpop.f32.mrb[0].mxu0
        %v4075 = vpop.f32.mrb[0].mxu0
        %v4076 = vpop.f32.mrb[0].mxu0
        %4077 = vmatprep.mubr.bf16.mxu0 0
        %4078 = vmatmul.mubr.bf16.gmra.mrb[0].mxu0 %v3666
        %v4079 = vpop.f32.mrb[0].mxu0
        %v4080 = vpop.f32.mrb[0].mxu0
        %v4081 = vpop.f32.mrb[0].mxu0
        %v4082 = vpop.f32.mrb[0].mxu0
        %4083 = vmatprep.mubr.bf16.mxu0 0
        %4084 = vmatmul.mubr.bf16.gmra.mrb[0].mxu0 %v3669
        %v4085 = vpop.f32.mrb[0].mxu0
        %v4086 = vpop.f32.mrb[0].mxu0
        %v4087 = vpop.f32.mrb[0].mxu0
        %v4088 = vpop.f32.mrb[0].mxu0
        %4089 = vmatprep.mubr.bf16.mxu0 0
        %4090 = vmatmul.mubr.bf16.gmra.mrb[0].mxu0 %v3672
        %v4091 = vpop.f32.mrb[0].mxu0
        %v4092 = vadd.f32 0.0, %v4091
        %v4093 = vpop.f32.mrb[0].mxu0
        %v4094 = vpop.f32.mrb[0].mxu0
        %v4095 = vadd.f32 0.0, %v4094
        %v4096 = vpop.f32.mrb[0].mxu0
        %4097 = vmatprep.mubr.bf16.mxu0 0
        %4098 = vmatmul.mubr.bf16.gmra.mrb[0].mxu0 %v3675
        %v4099 = vpop.f32.mrb[0].mxu0
        %v4100 = vadd.f32 0.0, %v4099
        %v4101 = vpop.f32.mrb[0].mxu0
        %v4102 = vpop.f32.mrb[0].mxu0
        %v4103 = vadd.f32 0.0, %v4102
        %v4104 = vpop.f32.mrb[0].mxu0
        %4105 = vmatprep.mubr.bf16.mxu0 0
        %4106 = vmatmul.mubr.bf16.gmra.mrb[0].mxu0 %v3678
        %v4107 = vpop.f32.mrb[0].mxu0
        %v4108 = vadd.f32 0.0, %v4107
        %v4109 = vpop.f32.mrb[0].mxu0
        %v4110 = vpop.f32.mrb[0].mxu0
        %v4111 = vadd.f32 0.0, %v4110
        %v4112 = vpop.f32.mrb[0].mxu0
        %4113 = vmatprep.mubr.bf16.mxu0 0
        %4114 = vmatmul.mubr.bf16.gmra.mrb[0].mxu0 %v3681
        %v4115 = vpop.f32.mrb[0].mxu0
        %v4116 = vadd.f32 0.0, %v4115
        %v4117 = vpop.f32.mrb[0].mxu0
        %v4118 = vpop.f32.mrb[0].mxu0
        %v4119 = vadd.f32 0.0, %v4118
        %v4120 = vpop.f32.mrb[0].mxu0
        %4121 = vmatprep.mubr.bf16.mxu0 0
        %4122 = vmatmul.mubr.bf16.gmra.mrb[0].mxu0 %v3684
        %v4123 = vpop.f32.mrb[0].mxu0
        %v4124 = vadd.f32 0.0, %v4123
        %v4125 = vpop.f32.mrb[0].mxu0
        %v4126 = vpop.f32.mrb[0].mxu0
        %v4127 = vadd.f32 0.0, %v4126
        %v4128 = vpop.f32.mrb[0].mxu0
        %4129 = vmatprep.mubr.bf16.mxu0 0
        %4130 = vmatmul.mubr.bf16.gmra.mrb[0].mxu0 %v3687
        %v4131 = vpop.f32.mrb[0].mxu0
        %v4132 = vadd.f32 0.0, %v4131
        %v4133 = vpop.f32.mrb[0].mxu0
        %v4134 = vpop.f32.mrb[0].mxu0
        %v4135 = vadd.f32 0.0, %v4134
        %v4136 = vpop.f32.mrb[0].mxu0
        %4137 = vmatprep.mubr.bf16.mxu0 0
        %4138 = vmatmul.mubr.bf16.gmra.mrb[0].mxu0 %v3690
        %v4139 = vpop.f32.mrb[0].mxu0
        %v4140 = vadd.f32 0.0, %v4139
        %v4141 = vpop.f32.mrb[0].mxu0
        %v4142 = vpop.f32.mrb[0].mxu0
        %v4143 = vadd.f32 0.0, %v4142
        %v4144 = vpop.f32.mrb[0].mxu0
        %4145 = vmatprep.mubr.bf16.mxu0 0
        %4146 = vmatmul.mubr.bf16.gmra.mrb[0].mxu0 %v3693
        %v4147 = vpop.f32.mrb[0].mxu0
        %v4148 = vadd.f32 0.0, %v4147
        %v4149 = vpop.f32.mrb[0].mxu0
        %v4150 = vpop.f32.mrb[0].mxu0
        %v4151 = vadd.f32 0.0, %v4150
        %v4152 = vpop.f32.mrb[0].mxu0
        %4153 = vmatprep.mubr.bf16.mxu0 0
        %4154 = vmatmul.mubr.bf16.gmra.mrb[0].mxu0 %v3696
        %v4155 = vpop.f32.mrb[0].mxu0
        %v4156 = vadd.f32 0.0, %v4155
        %v4157 = vpop.f32.mrb[0].mxu0
        %v4158 = vpop.f32.mrb[0].mxu0
        %v4159 = vadd.f32 0.0, %v4158
        %v4160 = vpop.f32.mrb[0].mxu0
        %4161 = vmatprep.mubr.bf16.mxu0 0
        %4162 = vmatmul.mubr.bf16.gmra.mrb[0].mxu0 %v3699
        %v4163 = vpop.f32.mrb[0].mxu0
        %v4164 = vadd.f32 0.0, %v4163
        %v4165 = vpop.f32.mrb[0].mxu0
        %v4166 = vpop.f32.mrb[0].mxu0
        %v4167 = vadd.f32 0.0, %v4166
        %v4168 = vpop.f32.mrb[0].mxu0
        %4169 = vmatprep.mubr.bf16.mxu0 0
        %4170 = vmatmul.mubr.bf16.gmra.mrb[0].mxu0 %v3702
        %v4171 = vpop.f32.mrb[0].mxu0
        %v4172 = vadd.f32 0.0, %v4171
        %v4173 = vpop.f32.mrb[0].mxu0
        %v4174 = vpop.f32.mrb[0].mxu0
        %v4175 = vadd.f32 0.0, %v4174
        %v4176 = vpop.f32.mrb[0].mxu0
        %4177 = vmatprep.mubr.bf16.mxu0 0
        %4178 = vmatmul.mubr.bf16.gmra.mrb[0].mxu0 %v3705
        %v4179 = vpop.f32.mrb[0].mxu0
        %v4180 = vadd.f32 0.0, %v4179
        %v4181 = vpop.f32.mrb[0].mxu0
        %v4182 = vpop.f32.mrb[0].mxu0
        %v4183 = vadd.f32 0.0, %v4182
        %v4184 = vpop.f32.mrb[0].mxu0
        %4185 = vmatprep.mubr.bf16.mxu0 0
        %4186 = vmatmul.mubr.bf16.gmra.mrb[0].mxu0 %v3708
        %v4187 = vpop.f32.mrb[0].mxu0
        %v4188 = vadd.f32 0.0, %v4187
        %v4189 = vpop.f32.mrb[0].mxu0
        %v4190 = vpop.f32.mrb[0].mxu0
        %v4191 = vadd.f32 0.0, %v4190
        %v4192 = vpop.f32.mrb[0].mxu0
        %4193 = vmatprep.mubr.bf16.mxu0 0
        %4194 = vmatmul.mubr.bf16.gmra.mrb[0].mxu0 %v3711
        %v4195 = vpop.f32.mrb[0].mxu0
        %v4196 = vadd.f32 0.0, %v4195
        %v4197 = vpop.f32.mrb[0].mxu0
        %v4198 = vpop.f32.mrb[0].mxu0
        %v4199 = vadd.f32 0.0, %v4198
        %v4200 = vpop.f32.mrb[0].mxu0
        %4201 = vmatprep.mubr.bf16.mxu0 0
        %4202 = vmatmul.mubr.bf16.gmra.mrb[0].mxu0 %v3714
        %v4203 = vpop.f32.mrb[0].mxu0
        %v4204 = vadd.f32 0.0, %v4203
        %v4205 = vpop.f32.mrb[0].mxu0
        %v4206 = vpop.f32.mrb[0].mxu0
        %v4207 = vadd.f32 0.0, %v4206
        %v4208 = vpop.f32.mrb[0].mxu0
        %4209 = vmatprep.mubr.bf16.mxu0 0
        %4210 = vmatmul.mubr.bf16.gmra.mrb[0].mxu0 %v3717
        %v4211 = vpop.f32.mrb[0].mxu0
        %v4212 = vadd.f32 0.0, %v4211
        %v4213 = vpop.f32.mrb[0].mxu0
        %v4214 = vpop.f32.mrb[0].mxu0
        %v4215 = vadd.f32 0.0, %v4214
        %v4216 = vpop.f32.mrb[0].mxu0
        %4217 = vmatprep.mubr.bf16.mxu0 0
        %4218 = vmatmul.mubr.bf16.gmra.mrb[0].mxu0 %v3720
        %v4219 = vpop.f32.mrb[0].mxu0
        %v4220 = vadd.f32 0.0, %v4219
        %v4221 = vpop.f32.mrb[0].mxu0
        %v4222 = vpop.f32.mrb[0].mxu0
        %v4223 = vadd.f32 0.0, %v4222
        %v4224 = vpop.f32.mrb[0].mxu0
        %4225 = vmatprep.mubr.bf16.mxu0 0
        %4226 = vmatmul.mubr.bf16.gmra.mrb[0].mxu0 %v3723
        %v4227 = vpop.f32.mrb[0].mxu0
        %v4228 = vadd.f32 0.0, %v4227
        %v4229 = vpop.f32.mrb[0].mxu0
        %v4230 = vpop.f32.mrb[0].mxu0
        %v4231 = vadd.f32 0.0, %v4230
        %v4232 = vpop.f32.mrb[0].mxu0
        %4233 = vmatprep.mubr.bf16.mxu0 0
        %4234 = vmatmul.mubr.bf16.gmra.mrb[0].mxu0 %v3726
        %v4235 = vpop.f32.mrb[0].mxu0
        %v4236 = vadd.f32 0.0, %v4235
        %v4237 = vpop.f32.mrb[0].mxu0
        %v4238 = vpop.f32.mrb[0].mxu0
        %v4239 = vadd.f32 0.0, %v4238
        %v4240 = vpop.f32.mrb[0].mxu0
        %4241 = vmatprep.mubr.bf16.mxu0 0
        %4242 = vmatmul.mubr.bf16.gmra.mrb[0].mxu0 %v3729
        %v4243 = vpop.f32.mrb[0].mxu0
        %v4244 = vadd.f32 0.0, %v4243
        %v4245 = vpop.f32.mrb[0].mxu0
        %v4246 = vpop.f32.mrb[0].mxu0
        %v4247 = vadd.f32 0.0, %v4246
        %v4248 = vpop.f32.mrb[0].mxu0
        %4249 = vmatprep.mubr.bf16.mxu0 0
        %4250 = vmatmul.mubr.bf16.gmra.mrb[0].mxu0 %v3732
        %v4251 = vpop.f32.mrb[0].mxu0
        %v4252 = vadd.f32 0.0, %v4251
        %v4253 = vpop.f32.mrb[0].mxu0
        %v4254 = vpop.f32.mrb[0].mxu0
        %v4255 = vadd.f32 0.0, %v4254
        %v4256 = vpop.f32.mrb[0].mxu0
        %4257 = vmatprep.mubr.bf16.mxu0 0
        %4258 = vmatmul.mubr.bf16.gmra.mrb[0].mxu0 %v3735
        %v4259 = vpop.f32.mrb[0].mxu0
        %v4260 = vadd.f32 0.0, %v4259
        %v4261 = vpop.f32.mrb[0].mxu0
        %v4262 = vpop.f32.mrb[0].mxu0
        %v4263 = vadd.f32 0.0, %v4262
        %v4264 = vpop.f32.mrb[0].mxu0
        %4265 = vmatprep.mubr.bf16.mxu0 0
        %4266 = vmatmul.mubr.bf16.gmra.mrb[0].mxu0 %v3738
        %v4267 = vpop.f32.mrb[0].mxu0
        %v4268 = vadd.f32 0.0, %v4267
        %v4269 = vpop.f32.mrb[0].mxu0
        %v4270 = vpop.f32.mrb[0].mxu0
        %v4271 = vadd.f32 0.0, %v4270
        %v4272 = vpop.f32.mrb[0].mxu0
        %4273 = vmatprep.mubr.bf16.mxu0 0
        %4274 = vmatmul.mubr.bf16.gmra.mrb[0].mxu0 %v3741
        %v4275 = vpop.f32.mrb[0].mxu0
        %v4276 = vadd.f32 0.0, %v4275
        %v4277 = vpop.f32.mrb[0].mxu0
        %v4278 = vpop.f32.mrb[0].mxu0
        %v4279 = vadd.f32 0.0, %v4278
        %v4280 = vpop.f32.mrb[0].mxu0
        %4281 = vdwg.mxu0
        %v4282 = vld [vmem:[%s15] sm:$0x1]
        %v4284 = vlaneseq
        %v4285 = vshrl.u32 %v4284, 7
        %v4286 = vsub.s32 0, %v4285
        %v4287 = vrot.slane %v4282, %v4286
        %v4289 = vadd.f32 %v4287, %v3778
        %v4290 = vadd.f32 %v4287, %v3781
        %v4291 = vadd.f32 %v4287, %v3789
        %v4292 = vadd.f32 %v4287, %v3795
        %v4293 = vadd.f32 %v4287, %v3805
        %v4294 = vadd.f32 %v4287, %v3809
        %v4295 = vadd.f32 %v4287, %v3819
        %v4296 = vadd.f32 %v4287, %v3825
        %v4297 = vadd.f32 %v4287, %v3835
        %v4298 = vadd.f32 %v4287, %v3839
        %v4299 = vadd.f32 %v4287, %v3849
        %v4300 = vadd.f32 %v4287, %v3855
        %v4301 = vadd.f32 %v4287, %v3865
        %v4302 = vadd.f32 %v4287, %v3869
        %v4303 = vadd.f32 %v4287, %v3879
        %v4304 = vadd.f32 %v4287, %v3885
        %v4305 = vadd.f32 %v4287, %v3895
        %v4306 = vadd.f32 %v4287, %v3899
        %v4307 = vadd.f32 %v4287, %v3909
        %v4308 = vadd.f32 %v4287, %v3915
        %v4309 = vadd.f32 %v4287, %v3925
        %v4310 = vadd.f32 %v4287, %v3929
        %v4311 = vadd.f32 %v4287, %v3939
        %v4312 = vadd.f32 %v4287, %v3945
        %v4313 = vadd.f32 %v4287, %v3955
        %v4314 = vadd.f32 %v4287, %v3959
        %v4315 = vadd.f32 %v4287, %v3969
        %v4316 = vadd.f32 %v4287, %v3975
        %v4317 = vadd.f32 %v4287, %v3985
        %v4318 = vadd.f32 %v4287, %v3989
        %v4319 = vadd.f32 %v4287, %v3999
        %v4320 = vadd.f32 %v4287, %v4005
        %vm4369 = vcmask 1046528
        %v4370 = vrot.slane %v3778, 1
        %v4371 = vrot.slane %v3781, 1
        %v4372 = vsel %vm4369, %v4370, %v4371
        %v4373 = vrot.slane %v3786, 1
        %v4374 = vsel %vm4369, %v4371, %v4373
        %v4375 = vrot.slane %v3789, 1
        %v4376 = vrot.slane %v3795, 1
        %v4377 = vsel %vm4369, %v4375, %v4376
        %v4378 = vrot.slane %v3799, 1
        %v4379 = vsel %vm4369, %v4376, %v4378
        %v4380 = vrot.slane %v3805, 1
        %v4381 = vrot.slane %v3809, 1
        %v4382 = vsel %vm4369, %v4380, %v4381
        %v4383 = vrot.slane %v3815, 1
        %v4384 = vsel %vm4369, %v4381, %v4383
        %v4385 = vrot.slane %v3819, 1
        %v4386 = vrot.slane %v3825, 1
        %v4387 = vsel %vm4369, %v4385, %v4386
        %v4388 = vrot.slane %v3829, 1
        %v4389 = vsel %vm4369, %v4386, %v4388
        %v4390 = vrot.slane %v3835, 1
        %v4391 = vrot.slane %v3839, 1
        %v4392 = vsel %vm4369, %v4390, %v4391
        %v4393 = vrot.slane %v3845, 1
        %v4394 = vsel %vm4369, %v4391, %v4393
        %v4395 = vrot.slane %v3849, 1
        %v4396 = vrot.slane %v3855, 1
        %v4397 = vsel %vm4369, %v4395, %v4396
        %v4398 = vrot.slane %v3859, 1
        %v4399 = vsel %vm4369, %v4396, %v4398
        %v4400 = vrot.slane %v3865, 1
        %v4401 = vrot.slane %v3869, 1
        %v4402 = vsel %vm4369, %v4400, %v4401
        %v4403 = vrot.slane %v3875, 1
        %v4404 = vsel %vm4369, %v4401, %v4403
        %v4405 = vrot.slane %v3879, 1
        %v4406 = vrot.slane %v3885, 1
        %v4407 = vsel %vm4369, %v4405, %v4406
        %v4408 = vrot.slane %v3889, 1
        %v4409 = vsel %vm4369, %v4406, %v4408
        %v4410 = vrot.slane %v3895, 1
        %v4411 = vrot.slane %v3899, 1
        %v4412 = vsel %vm4369, %v4410, %v4411
        %v4413 = vrot.slane %v3905, 1
        %v4414 = vsel %vm4369, %v4411, %v4413
        %v4415 = vrot.slane %v3909, 1
        %v4416 = vrot.slane %v3915, 1
        %v4417 = vsel %vm4369, %v4415, %v4416
        %v4418 = vrot.slane %v3919, 1
        %v4419 = vsel %vm4369, %v4416, %v4418
        %v4420 = vrot.slane %v3925, 1
        %v4421 = vrot.slane %v3929, 1
        %v4422 = vsel %vm4369, %v4420, %v4421
        %v4423 = vrot.slane %v3935, 1
        %v4424 = vsel %vm4369, %v4421, %v4423
        %v4425 = vrot.slane %v3939, 1
        %v4426 = vrot.slane %v3945, 1
        %v4427 = vsel %vm4369, %v4425, %v4426
        %v4428 = vrot.slane %v3949, 1
        %v4429 = vsel %vm4369, %v4426, %v4428
        %v4430 = vrot.slane %v3955, 1
        %v4431 = vrot.slane %v3959, 1
        %v4432 = vsel %vm4369, %v4430, %v4431
        %v4433 = vrot.slane %v3965, 1
        %v4434 = vsel %vm4369, %v4431, %v4433
        %v4435 = vrot.slane %v3969, 1
        %v4436 = vrot.slane %v3975, 1
        %v4437 = vsel %vm4369, %v4435, %v4436
        %v4438 = vrot.slane %v3979, 1
        %v4439 = vsel %vm4369, %v4436, %v4438
        %v4440 = vrot.slane %v3985, 1
        %v4441 = vrot.slane %v3989, 1
        %v4442 = vsel %vm4369, %v4440, %v4441
        %v4443 = vrot.slane %v3995, 1
        %v4444 = vsel %vm4369, %v4441, %v4443
        %v4445 = vrot.slane %v3999, 1
        %v4446 = vrot.slane %v4005, 1
        %v4447 = vsel %vm4369, %v4445, %v4446
        %v4448 = vrot.slane %v4009, 1
        %v4449 = vsel %vm4369, %v4446, %v4448
        %4450 = vrot.lane.b32.xlu0 %v4372, 96
        %v4451 = vpop.permute.xlu0 %4450
        %4452 = vrot.lane.b32.xlu0 %v4374, 96
        %v4453 = vpop.permute.xlu0 %4452
        %4454 = vrot.lane.b32.xlu0 %v4377, 96
        %v4455 = vpop.permute.xlu0 %4454
        %4456 = vrot.lane.b32.xlu0 %v4379, 96
        %v4457 = vpop.permute.xlu0 %4456
        %4458 = vrot.lane.b32.xlu0 %v4382, 96
        %v4459 = vpop.permute.xlu0 %4458
        %4460 = vrot.lane.b32.xlu0 %v4384, 96
        %v4461 = vpop.permute.xlu0 %4460
        %4462 = vrot.lane.b32.xlu0 %v4387, 96
        %v4463 = vpop.permute.xlu0 %4462
        %4464 = vrot.lane.b32.xlu0 %v4389, 96
        %v4465 = vpop.permute.xlu0 %4464
        %4466 = vrot.lane.b32.xlu0 %v4392, 96
        %v4467 = vpop.permute.xlu0 %4466
        %4468 = vrot.lane.b32.xlu0 %v4394, 96
        %v4469 = vpop.permute.xlu0 %4468
        %4470 = vrot.lane.b32.xlu0 %v4397, 96
        %v4471 = vpop.permute.xlu0 %4470
        %4472 = vrot.lane.b32.xlu0 %v4399, 96
        %v4473 = vpop.permute.xlu0 %4472
        %4474 = vrot.lane.b32.xlu0 %v4402, 96
        %v4475 = vpop.permute.xlu0 %4474
        %4476 = vrot.lane.b32.xlu0 %v4404, 96
        %v4477 = vpop.permute.xlu0 %4476
        %4478 = vrot.lane.b32.xlu0 %v4407, 96
        %v4479 = vpop.permute.xlu0 %4478
        %4480 = vrot.lane.b32.xlu0 %v4409, 96
        %v4481 = vpop.permute.xlu0 %4480
        %4482 = vrot.lane.b32.xlu0 %v4412, 96
        %v4483 = vpop.permute.xlu0 %4482
        %4484 = vrot.lane.b32.xlu0 %v4414, 96
        %v4485 = vpop.permute.xlu0 %4484
        %4486 = vrot.lane.b32.xlu0 %v4417, 96
        %v4487 = vpop.permute.xlu0 %4486
        %4488 = vrot.lane.b32.xlu0 %v4419, 96
        %v4489 = vpop.permute.xlu0 %4488
        %4490 = vrot.lane.b32.xlu0 %v4422, 96
        %v4491 = vpop.permute.xlu0 %4490
        %4492 = vrot.lane.b32.xlu0 %v4424, 96
        %v4493 = vpop.permute.xlu0 %4492
        %4494 = vrot.lane.b32.xlu0 %v4427, 96
        %v4495 = vpop.permute.xlu0 %4494
        %4496 = vrot.lane.b32.xlu0 %v4429, 96
        %v4497 = vpop.permute.xlu0 %4496
        %4498 = vrot.lane.b32.xlu0 %v4432, 96
        %v4499 = vpop.permute.xlu0 %4498
        %4500 = vrot.lane.b32.xlu0 %v4434, 96
        %v4501 = vpop.permute.xlu0 %4500
        %4502 = vrot.lane.b32.xlu0 %v4437, 96
        %v4503 = vpop.permute.xlu0 %4502
        %4504 = vrot.lane.b32.xlu0 %v4439, 96
        %v4505 = vpop.permute.xlu0 %4504
        %4506 = vrot.lane.b32.xlu0 %v4442, 96
        %v4507 = vpop.permute.xlu0 %4506
        %4508 = vrot.lane.b32.xlu0 %v4444, 96
        %v4509 = vpop.permute.xlu0 %4508
        %4510 = vrot.lane.b32.xlu0 %v4447, 96
        %v4511 = vpop.permute.xlu0 %4510
        %4512 = vrot.lane.b32.xlu0 %v4449, 96
        %v4513 = vpop.permute.xlu0 %4512
        %v4546 = vadd.f32 %v4289, %v4451
        %v4547 = vadd.f32 %v4290, %v4453
        %v4548 = vadd.f32 %v4291, %v4455
        %v4549 = vadd.f32 %v4292, %v4457
        %v4550 = vadd.f32 %v4293, %v4459
        %v4551 = vadd.f32 %v4294, %v4461
        %v4552 = vadd.f32 %v4295, %v4463
        %v4553 = vadd.f32 %v4296, %v4465
        %v4554 = vadd.f32 %v4297, %v4467
        %v4555 = vadd.f32 %v4298, %v4469
        %v4556 = vadd.f32 %v4299, %v4471
        %v4557 = vadd.f32 %v4300, %v4473
        %v4558 = vadd.f32 %v4301, %v4475
        %v4559 = vadd.f32 %v4302, %v4477
        %v4560 = vadd.f32 %v4303, %v4479
        %v4561 = vadd.f32 %v4304, %v4481
        %v4562 = vadd.f32 %v4305, %v4483
        %v4563 = vadd.f32 %v4306, %v4485
        %v4564 = vadd.f32 %v4307, %v4487
        %v4565 = vadd.f32 %v4308, %v4489
        %v4566 = vadd.f32 %v4309, %v4491
        %v4567 = vadd.f32 %v4310, %v4493
        %v4568 = vadd.f32 %v4311, %v4495
        %v4569 = vadd.f32 %v4312, %v4497
        %v4570 = vadd.f32 %v4313, %v4499
        %v4571 = vadd.f32 %v4314, %v4501
        %v4572 = vadd.f32 %v4315, %v4503
        %v4573 = vadd.f32 %v4316, %v4505
        %v4574 = vadd.f32 %v4317, %v4507
        %v4575 = vadd.f32 %v4318, %v4509
        %v4576 = vadd.f32 %v4319, %v4511
        %v4577 = vadd.f32 %v4320, %v4513
        %vm4578 = vcmask 1045504
        %v4579 = vrot.slane %v3778, 2
        %v4580 = vrot.slane %v3781, 2
        %v4581 = vsel %vm4578, %v4579, %v4580
        %v4582 = vrot.slane %v3786, 2
        %v4583 = vsel %vm4578, %v4580, %v4582
        %v4584 = vrot.slane %v3789, 2
        %v4585 = vrot.slane %v3795, 2
        %v4586 = vsel %vm4578, %v4584, %v4585
        %v4587 = vrot.slane %v3799, 2
        %v4588 = vsel %vm4578, %v4585, %v4587
        %v4589 = vrot.slane %v3805, 2
        %v4590 = vrot.slane %v3809, 2
        %v4591 = vsel %vm4578, %v4589, %v4590
        %v4592 = vrot.slane %v3815, 2
        %v4593 = vsel %vm4578, %v4590, %v4592
        %v4594 = vrot.slane %v3819, 2
        %v4595 = vrot.slane %v3825, 2
        %v4596 = vsel %vm4578, %v4594, %v4595
        %v4597 = vrot.slane %v3829, 2
        %v4598 = vsel %vm4578, %v4595, %v4597
        %v4599 = vrot.slane %v3835, 2
        %v4600 = vrot.slane %v3839, 2
        %v4601 = vsel %vm4578, %v4599, %v4600
        %v4602 = vrot.slane %v3845, 2
        %v4603 = vsel %vm4578, %v4600, %v4602
        %v4604 = vrot.slane %v3849, 2
        %v4605 = vrot.slane %v3855, 2
        %v4606 = vsel %vm4578, %v4604, %v4605
        %v4607 = vrot.slane %v3859, 2
        %v4608 = vsel %vm4578, %v4605, %v4607
        %v4609 = vrot.slane %v3865, 2
        %v4610 = vrot.slane %v3869, 2
        %v4611 = vsel %vm4578, %v4609, %v4610
        %v4612 = vrot.slane %v3875, 2
        %v4613 = vsel %vm4578, %v4610, %v4612
        %v4614 = vrot.slane %v3879, 2
        %v4615 = vrot.slane %v3885, 2
        %v4616 = vsel %vm4578, %v4614, %v4615
        %v4617 = vrot.slane %v3889, 2
        %v4618 = vsel %vm4578, %v4615, %v4617
        %v4619 = vrot.slane %v3895, 2
        %v4620 = vrot.slane %v3899, 2
        %v4621 = vsel %vm4578, %v4619, %v4620
        %v4622 = vrot.slane %v3905, 2
        %v4623 = vsel %vm4578, %v4620, %v4622
        %v4624 = vrot.slane %v3909, 2
        %v4625 = vrot.slane %v3915, 2
        %v4626 = vsel %vm4578, %v4624, %v4625
        %v4627 = vrot.slane %v3919, 2
        %v4628 = vsel %vm4578, %v4625, %v4627
        %v4629 = vrot.slane %v3925, 2
        %v4630 = vrot.slane %v3929, 2
        %v4631 = vsel %vm4578, %v4629, %v4630
        %v4632 = vrot.slane %v3935, 2
        %v4633 = vsel %vm4578, %v4630, %v4632
        %v4634 = vrot.slane %v3939, 2
        %v4635 = vrot.slane %v3945, 2
        %v4636 = vsel %vm4578, %v4634, %v4635
        %v4637 = vrot.slane %v3949, 2
        %v4638 = vsel %vm4578, %v4635, %v4637
        %v4639 = vrot.slane %v3955, 2
        %v4640 = vrot.slane %v3959, 2
        %v4641 = vsel %vm4578, %v4639, %v4640
        %v4642 = vrot.slane %v3965, 2
        %v4643 = vsel %vm4578, %v4640, %v4642
        %v4644 = vrot.slane %v3969, 2
        %v4645 = vrot.slane %v3975, 2
        %v4646 = vsel %vm4578, %v4644, %v4645
        %v4647 = vrot.slane %v3979, 2
        %v4648 = vsel %vm4578, %v4645, %v4647
        %v4649 = vrot.slane %v3985, 2
        %v4650 = vrot.slane %v3989, 2
        %v4651 = vsel %vm4578, %v4649, %v4650
        %v4652 = vrot.slane %v3995, 2
        %v4653 = vsel %vm4578, %v4650, %v4652
        %v4654 = vrot.slane %v3999, 2
        %v4655 = vrot.slane %v4005, 2
        %v4656 = vsel %vm4578, %v4654, %v4655
        %v4657 = vrot.slane %v4009, 2
        %v4658 = vsel %vm4578, %v4655, %v4657
        %4659 = vrot.lane.b32.xlu0 %v4581, 64
        %v4660 = vpop.permute.xlu0 %4659
        %4661 = vrot.lane.b32.xlu0 %v4583, 64
        %v4662 = vpop.permute.xlu0 %4661
        %4663 = vrot.lane.b32.xlu0 %v4586, 64
        %v4664 = vpop.permute.xlu0 %4663
        %4665 = vrot.lane.b32.xlu0 %v4588, 64
        %v4666 = vpop.permute.xlu0 %4665
        %4667 = vrot.lane.b32.xlu0 %v4591, 64
        %v4668 = vpop.permute.xlu0 %4667
        %4669 = vrot.lane.b32.xlu0 %v4593, 64
        %v4670 = vpop.permute.xlu0 %4669
        %4671 = vrot.lane.b32.xlu0 %v4596, 64
        %v4672 = vpop.permute.xlu0 %4671
        %4673 = vrot.lane.b32.xlu0 %v4598, 64
        %v4674 = vpop.permute.xlu0 %4673
        %4675 = vrot.lane.b32.xlu0 %v4601, 64
        %v4676 = vpop.permute.xlu0 %4675
        %4677 = vrot.lane.b32.xlu0 %v4603, 64
        %v4678 = vpop.permute.xlu0 %4677
        %4679 = vrot.lane.b32.xlu0 %v4606, 64
        %v4680 = vpop.permute.xlu0 %4679
        %4681 = vrot.lane.b32.xlu0 %v4608, 64
        %v4682 = vpop.permute.xlu0 %4681
        %4683 = vrot.lane.b32.xlu0 %v4611, 64
        %v4684 = vpop.permute.xlu0 %4683
        %4685 = vrot.lane.b32.xlu0 %v4613, 64
        %v4686 = vpop.permute.xlu0 %4685
        %4687 = vrot.lane.b32.xlu0 %v4616, 64
        %v4688 = vpop.permute.xlu0 %4687
        %4689 = vrot.lane.b32.xlu0 %v4618, 64
        %v4690 = vpop.permute.xlu0 %4689
        %4691 = vrot.lane.b32.xlu0 %v4621, 64
        %v4692 = vpop.permute.xlu0 %4691
        %4693 = vrot.lane.b32.xlu0 %v4623, 64
        %v4694 = vpop.permute.xlu0 %4693
        %4695 = vrot.lane.b32.xlu0 %v4626, 64
        %v4696 = vpop.permute.xlu0 %4695
        %4697 = vrot.lane.b32.xlu0 %v4628, 64
        %v4698 = vpop.permute.xlu0 %4697
        %4699 = vrot.lane.b32.xlu0 %v4631, 64
        %v4700 = vpop.permute.xlu0 %4699
        %4701 = vrot.lane.b32.xlu0 %v4633, 64
        %v4702 = vpop.permute.xlu0 %4701
        %4703 = vrot.lane.b32.xlu0 %v4636, 64
        %v4704 = vpop.permute.xlu0 %4703
        %4705 = vrot.lane.b32.xlu0 %v4638, 64
        %v4706 = vpop.permute.xlu0 %4705
        %4707 = vrot.lane.b32.xlu0 %v4641, 64
        %v4708 = vpop.permute.xlu0 %4707
        %4709 = vrot.lane.b32.xlu0 %v4643, 64
        %v4710 = vpop.permute.xlu0 %4709
        %4711 = vrot.lane.b32.xlu0 %v4646, 64
        %v4712 = vpop.permute.xlu0 %4711
        %4713 = vrot.lane.b32.xlu0 %v4648, 64
        %v4714 = vpop.permute.xlu0 %4713
        %4715 = vrot.lane.b32.xlu0 %v4651, 64
        %v4716 = vpop.permute.xlu0 %4715
        %4717 = vrot.lane.b32.xlu0 %v4653, 64
        %v4718 = vpop.permute.xlu0 %4717
        %4719 = vrot.lane.b32.xlu0 %v4656, 64
        %v4720 = vpop.permute.xlu0 %4719
        %4721 = vrot.lane.b32.xlu0 %v4658, 64
        %v4722 = vpop.permute.xlu0 %4721
        %v4755 = vadd.f32 %v4546, %v4660
        %v4756 = vadd.f32 %v4547, %v4662
        %v4757 = vadd.f32 %v4548, %v4664
        %v4758 = vadd.f32 %v4549, %v4666
        %v4759 = vadd.f32 %v4550, %v4668
        %v4760 = vadd.f32 %v4551, %v4670
        %v4761 = vadd.f32 %v4552, %v4672
        %v4762 = vadd.f32 %v4553, %v4674
        %v4763 = vadd.f32 %v4554, %v4676
        %v4764 = vadd.f32 %v4555, %v4678
        %v4765 = vadd.f32 %v4556, %v4680
        %v4766 = vadd.f32 %v4557, %v4682
        %v4767 = vadd.f32 %v4558, %v4684
        %v4768 = vadd.f32 %v4559, %v4686
        %v4769 = vadd.f32 %v4560, %v4688
        %v4770 = vadd.f32 %v4561, %v4690
        %v4771 = vadd.f32 %v4562, %v4692
        %v4772 = vadd.f32 %v4563, %v4694
        %v4773 = vadd.f32 %v4564, %v4696
        %v4774 = vadd.f32 %v4565, %v4698
        %v4775 = vadd.f32 %v4566, %v4700
        %v4776 = vadd.f32 %v4567, %v4702
        %v4777 = vadd.f32 %v4568, %v4704
        %v4778 = vadd.f32 %v4569, %v4706
        %v4779 = vadd.f32 %v4570, %v4708
        %v4780 = vadd.f32 %v4571, %v4710
        %v4781 = vadd.f32 %v4572, %v4712
        %v4782 = vadd.f32 %v4573, %v4714
        %v4783 = vadd.f32 %v4574, %v4716
        %v4784 = vadd.f32 %v4575, %v4718
        %v4785 = vadd.f32 %v4576, %v4720
        %v4786 = vadd.f32 %v4577, %v4722
        %4789 = vrot.lane.b32.xlu0 %v3789, 32
        %v4790 = vpop.permute.xlu0 %4789
        %4791 = vrot.lane.b32.xlu0 %v3795, 32
        %v4792 = vpop.permute.xlu0 %4791
        %4793 = vrot.lane.b32.xlu0 %v3805, 32
        %v4794 = vpop.permute.xlu0 %4793
        %4795 = vrot.lane.b32.xlu0 %v3809, 32
        %v4796 = vpop.permute.xlu0 %4795
        %4797 = vrot.lane.b32.xlu0 %v3819, 32
        %v4798 = vpop.permute.xlu0 %4797
        %4799 = vrot.lane.b32.xlu0 %v3825, 32
        %v4800 = vpop.permute.xlu0 %4799
        %4801 = vrot.lane.b32.xlu0 %v3835, 32
        %v4802 = vpop.permute.xlu0 %4801
        %4803 = vrot.lane.b32.xlu0 %v3839, 32
        %v4804 = vpop.permute.xlu0 %4803
        %4805 = vrot.lane.b32.xlu0 %v3849, 32
        %v4806 = vpop.permute.xlu0 %4805
        %4807 = vrot.lane.b32.xlu0 %v3855, 32
        %v4808 = vpop.permute.xlu0 %4807
        %4809 = vrot.lane.b32.xlu0 %v3865, 32
        %v4810 = vpop.permute.xlu0 %4809
        %4811 = vrot.lane.b32.xlu0 %v3869, 32
        %v4812 = vpop.permute.xlu0 %4811
        %4813 = vrot.lane.b32.xlu0 %v3879, 32
        %v4814 = vpop.permute.xlu0 %4813
        %4815 = vrot.lane.b32.xlu0 %v3885, 32
        %v4816 = vpop.permute.xlu0 %4815
        %4817 = vrot.lane.b32.xlu0 %v3895, 32
        %v4818 = vpop.permute.xlu0 %4817
        %4819 = vrot.lane.b32.xlu0 %v3899, 32
        %v4820 = vpop.permute.xlu0 %4819
        %4821 = vrot.lane.b32.xlu0 %v3909, 32
        %v4822 = vpop.permute.xlu0 %4821
        %4823 = vrot.lane.b32.xlu0 %v3915, 32
        %v4824 = vpop.permute.xlu0 %4823
        %4825 = vrot.lane.b32.xlu0 %v3925, 32
        %v4826 = vpop.permute.xlu0 %4825
        %4827 = vrot.lane.b32.xlu0 %v3929, 32
        %v4828 = vpop.permute.xlu0 %4827
        %4829 = vrot.lane.b32.xlu0 %v3939, 32
        %v4830 = vpop.permute.xlu0 %4829
        %4831 = vrot.lane.b32.xlu0 %v3945, 32
        %v4832 = vpop.permute.xlu0 %4831
        %4833 = vrot.lane.b32.xlu0 %v3955, 32
        %v4834 = vpop.permute.xlu0 %4833
        %4835 = vrot.lane.b32.xlu0 %v3959, 32
        %v4836 = vpop.permute.xlu0 %4835
        %4837 = vrot.lane.b32.xlu0 %v3969, 32
        %v4838 = vpop.permute.xlu0 %4837
        %4839 = vrot.lane.b32.xlu0 %v3975, 32
        %v4840 = vpop.permute.xlu0 %4839
        %4841 = vrot.lane.b32.xlu0 %v3985, 32
        %v4842 = vpop.permute.xlu0 %4841
        %4843 = vrot.lane.b32.xlu0 %v3989, 32
        %v4844 = vpop.permute.xlu0 %4843
        %4845 = vrot.lane.b32.xlu0 %v3999, 32
        %v4846 = vpop.permute.xlu0 %4845
        %4847 = vrot.lane.b32.xlu0 %v4005, 32
        %v4848 = vpop.permute.xlu0 %4847
        %4849 = vrot.lane.b32.xlu0 %v4015, 32
        %v4850 = vpop.permute.xlu0 %4849
        %4851 = vrot.lane.b32.xlu0 %v4019, 32
        %v4852 = vpop.permute.xlu0 %4851
        %v4885 = vadd.f32 %v4755, %v4790
        %v4886 = vadd.f32 %v4756, %v4792
        %v4887 = vadd.f32 %v4757, %v4794
        %v4888 = vadd.f32 %v4758, %v4796
        %v4889 = vadd.f32 %v4759, %v4798
        %v4890 = vadd.f32 %v4760, %v4800
        %v4891 = vadd.f32 %v4761, %v4802
        %v4892 = vadd.f32 %v4762, %v4804
        %v4893 = vadd.f32 %v4763, %v4806
        %v4894 = vadd.f32 %v4764, %v4808
        %v4895 = vadd.f32 %v4765, %v4810
        %v4896 = vadd.f32 %v4766, %v4812
        %v4897 = vadd.f32 %v4767, %v4814
        %v4898 = vadd.f32 %v4768, %v4816
        %v4899 = vadd.f32 %v4769, %v4818
        %v4900 = vadd.f32 %v4770, %v4820
        %v4901 = vadd.f32 %v4771, %v4822
        %v4902 = vadd.f32 %v4772, %v4824
        %v4903 = vadd.f32 %v4773, %v4826
        %v4904 = vadd.f32 %v4774, %v4828
        %v4905 = vadd.f32 %v4775, %v4830
        %v4906 = vadd.f32 %v4776, %v4832
        %v4907 = vadd.f32 %v4777, %v4834
        %v4908 = vadd.f32 %v4778, %v4836
        %v4909 = vadd.f32 %v4779, %v4838
        %v4910 = vadd.f32 %v4780, %v4840
        %v4911 = vadd.f32 %v4781, %v4842
        %v4912 = vadd.f32 %v4782, %v4844
        %v4913 = vadd.f32 %v4783, %v4846
        %v4914 = vadd.f32 %v4784, %v4848
        %v4915 = vadd.f32 %v4785, %v4850
        %v4916 = vadd.f32 %v4786, %v4852
        %v4965 = vrot.slane %v3791, 1
        %v4966 = vrot.slane %v3797, 1
        %v4967 = vsel %vm4369, %v4965, %v4966
        %v4968 = vrot.slane %v3801, 1
        %v4969 = vsel %vm4369, %v4966, %v4968
        %v4970 = vrot.slane %v3807, 1
        %v4971 = vrot.slane %v3811, 1
        %v4972 = vsel %vm4369, %v4970, %v4971
        %v4973 = vrot.slane %v3817, 1
        %v4974 = vsel %vm4369, %v4971, %v4973
        %v4975 = vrot.slane %v3821, 1
        %v4976 = vrot.slane %v3827, 1
        %v4977 = vsel %vm4369, %v4975, %v4976
        %v4978 = vrot.slane %v3831, 1
        %v4979 = vsel %vm4369, %v4976, %v4978
        %v4980 = vrot.slane %v3837, 1
        %v4981 = vrot.slane %v3841, 1
        %v4982 = vsel %vm4369, %v4980, %v4981
        %v4983 = vrot.slane %v3847, 1
        %v4984 = vsel %vm4369, %v4981, %v4983
        %v4985 = vrot.slane %v3851, 1
        %v4986 = vrot.slane %v3857, 1
        %v4987 = vsel %vm4369, %v4985, %v4986
        %v4988 = vrot.slane %v3861, 1
        %v4989 = vsel %vm4369, %v4986, %v4988
        %v4990 = vrot.slane %v3867, 1
        %v4991 = vrot.slane %v3871, 1
        %v4992 = vsel %vm4369, %v4990, %v4991
        %v4993 = vrot.slane %v3877, 1
        %v4994 = vsel %vm4369, %v4991, %v4993
        %v4995 = vrot.slane %v3881, 1
        %v4996 = vrot.slane %v3887, 1
        %v4997 = vsel %vm4369, %v4995, %v4996
        %v4998 = vrot.slane %v3891, 1
        %v4999 = vsel %vm4369, %v4996, %v4998
        %v5000 = vrot.slane %v3897, 1
        %v5001 = vrot.slane %v3901, 1
        %v5002 = vsel %vm4369, %v5000, %v5001
        %v5003 = vrot.slane %v3907, 1
        %v5004 = vsel %vm4369, %v5001, %v5003
        %v5005 = vrot.slane %v3911, 1
        %v5006 = vrot.slane %v3917, 1
        %v5007 = vsel %vm4369, %v5005, %v5006
        %v5008 = vrot.slane %v3921, 1
        %v5009 = vsel %vm4369, %v5006, %v5008
        %v5010 = vrot.slane %v3927, 1
        %v5011 = vrot.slane %v3931, 1
        %v5012 = vsel %vm4369, %v5010, %v5011
        %v5013 = vrot.slane %v3937, 1
        %v5014 = vsel %vm4369, %v5011, %v5013
        %v5015 = vrot.slane %v3941, 1
        %v5016 = vrot.slane %v3947, 1
        %v5017 = vsel %vm4369, %v5015, %v5016
        %v5018 = vrot.slane %v3951, 1
        %v5019 = vsel %vm4369, %v5016, %v5018
        %v5020 = vrot.slane %v3957, 1
        %v5021 = vrot.slane %v3961, 1
        %v5022 = vsel %vm4369, %v5020, %v5021
        %v5023 = vrot.slane %v3967, 1
        %v5024 = vsel %vm4369, %v5021, %v5023
        %v5025 = vrot.slane %v3971, 1
        %v5026 = vrot.slane %v3977, 1
        %v5027 = vsel %vm4369, %v5025, %v5026
        %v5028 = vrot.slane %v3981, 1
        %v5029 = vsel %vm4369, %v5026, %v5028
        %v5030 = vrot.slane %v3987, 1
        %v5031 = vrot.slane %v3991, 1
        %v5032 = vsel %vm4369, %v5030, %v5031
        %v5033 = vrot.slane %v3997, 1
        %v5034 = vsel %vm4369, %v5031, %v5033
        %v5035 = vrot.slane %v4001, 1
        %v5036 = vrot.slane %v4007, 1
        %v5037 = vsel %vm4369, %v5035, %v5036
        %v5038 = vrot.slane %v4011, 1
        %v5039 = vsel %vm4369, %v5036, %v5038
        %v5040 = vrot.slane %v4017, 1
        %v5041 = vrot.slane %v4021, 1
        %v5042 = vsel %vm4369, %v5040, %v5041
        %v5043 = vrot.slane %v4026, 1
        %v5044 = vsel %vm4369, %v5041, %v5043
        %v5077 = vadd.f32 %v4885, %v4967
        %v5078 = vadd.f32 %v4886, %v4969
        %v5079 = vadd.f32 %v4887, %v4972
        %v5080 = vadd.f32 %v4888, %v4974
        %v5081 = vadd.f32 %v4889, %v4977
        %v5082 = vadd.f32 %v4890, %v4979
        %v5083 = vadd.f32 %v4891, %v4982
        %v5084 = vadd.f32 %v4892, %v4984
        %v5085 = vadd.f32 %v4893, %v4987
        %v5086 = vadd.f32 %v4894, %v4989
        %v5087 = vadd.f32 %v4895, %v4992
        %v5088 = vadd.f32 %v4896, %v4994
        %v5089 = vadd.f32 %v4897, %v4997
        %v5090 = vadd.f32 %v4898, %v4999
        %v5091 = vadd.f32 %v4899, %v5002
        %v5092 = vadd.f32 %v4900, %v5004
        %v5093 = vadd.f32 %v4901, %v5007
        %v5094 = vadd.f32 %v4902, %v5009
        %v5095 = vadd.f32 %v4903, %v5012
        %v5096 = vadd.f32 %v4904, %v5014
        %v5097 = vadd.f32 %v4905, %v5017
        %v5098 = vadd.f32 %v4906, %v5019
        %v5099 = vadd.f32 %v4907, %v5022
        %v5100 = vadd.f32 %v4908, %v5024
        %v5101 = vadd.f32 %v4909, %v5027
        %v5102 = vadd.f32 %v4910, %v5029
        %v5103 = vadd.f32 %v4911, %v5032
        %v5104 = vadd.f32 %v4912, %v5034
        %v5105 = vadd.f32 %v4913, %v5037
        %v5106 = vadd.f32 %v4914, %v5039
        %v5107 = vadd.f32 %v4915, %v5042
        %v5108 = vadd.f32 %v4916, %v5044
        %v5109 = vrot.slane %v3791, 2
        %v5110 = vrot.slane %v3797, 2
        %v5111 = vsel %vm4578, %v5109, %v5110
        %v5112 = vrot.slane %v3801, 2
        %v5113 = vsel %vm4578, %v5110, %v5112
        %v5114 = vrot.slane %v3807, 2
        %v5115 = vrot.slane %v3811, 2
        %v5116 = vsel %vm4578, %v5114, %v5115
        %v5117 = vrot.slane %v3817, 2
        %v5118 = vsel %vm4578, %v5115, %v5117
        %v5119 = vrot.slane %v3821, 2
        %v5120 = vrot.slane %v3827, 2
        %v5121 = vsel %vm4578, %v5119, %v5120
        %v5122 = vrot.slane %v3831, 2
        %v5123 = vsel %vm4578, %v5120, %v5122
        %v5124 = vrot.slane %v3837, 2
        %v5125 = vrot.slane %v3841, 2
        %v5126 = vsel %vm4578, %v5124, %v5125
        %v5127 = vrot.slane %v3847, 2
        %v5128 = vsel %vm4578, %v5125, %v5127
        %v5129 = vrot.slane %v3851, 2
        %v5130 = vrot.slane %v3857, 2
        %v5131 = vsel %vm4578, %v5129, %v5130
        %v5132 = vrot.slane %v3861, 2
        %v5133 = vsel %vm4578, %v5130, %v5132
        %v5134 = vrot.slane %v3867, 2
        %v5135 = vrot.slane %v3871, 2
        %v5136 = vsel %vm4578, %v5134, %v5135
        %v5137 = vrot.slane %v3877, 2
        %v5138 = vsel %vm4578, %v5135, %v5137
        %v5139 = vrot.slane %v3881, 2
        %v5140 = vrot.slane %v3887, 2
        %v5141 = vsel %vm4578, %v5139, %v5140
        %v5142 = vrot.slane %v3891, 2
        %v5143 = vsel %vm4578, %v5140, %v5142
        %v5144 = vrot.slane %v3897, 2
        %v5145 = vrot.slane %v3901, 2
        %v5146 = vsel %vm4578, %v5144, %v5145
        %v5147 = vrot.slane %v3907, 2
        %v5148 = vsel %vm4578, %v5145, %v5147
        %v5149 = vrot.slane %v3911, 2
        %v5150 = vrot.slane %v3917, 2
        %v5151 = vsel %vm4578, %v5149, %v5150
        %v5152 = vrot.slane %v3921, 2
        %v5153 = vsel %vm4578, %v5150, %v5152
        %v5154 = vrot.slane %v3927, 2
        %v5155 = vrot.slane %v3931, 2
        %v5156 = vsel %vm4578, %v5154, %v5155
        %v5157 = vrot.slane %v3937, 2
        %v5158 = vsel %vm4578, %v5155, %v5157
        %v5159 = vrot.slane %v3941, 2
        %v5160 = vrot.slane %v3947, 2
        %v5161 = vsel %vm4578, %v5159, %v5160
        %v5162 = vrot.slane %v3951, 2
        %v5163 = vsel %vm4578, %v5160, %v5162
        %v5164 = vrot.slane %v3957, 2
        %v5165 = vrot.slane %v3961, 2
        %v5166 = vsel %vm4578, %v5164, %v5165
        %v5167 = vrot.slane %v3967, 2
        %v5168 = vsel %vm4578, %v5165, %v5167
        %v5169 = vrot.slane %v3971, 2
        %v5170 = vrot.slane %v3977, 2
        %v5171 = vsel %vm4578, %v5169, %v5170
        %v5172 = vrot.slane %v3981, 2
        %v5173 = vsel %vm4578, %v5170, %v5172
        %v5174 = vrot.slane %v3987, 2
        %v5175 = vrot.slane %v3991, 2
        %v5176 = vsel %vm4578, %v5174, %v5175
        %v5177 = vrot.slane %v3997, 2
        %v5178 = vsel %vm4578, %v5175, %v5177
        %v5179 = vrot.slane %v4001, 2
        %v5180 = vrot.slane %v4007, 2
        %v5181 = vsel %vm4578, %v5179, %v5180
        %v5182 = vrot.slane %v4011, 2
        %v5183 = vsel %vm4578, %v5180, %v5182
        %v5184 = vrot.slane %v4017, 2
        %v5185 = vrot.slane %v4021, 2
        %v5186 = vsel %vm4578, %v5184, %v5185
        %v5187 = vrot.slane %v4026, 2
        %v5188 = vsel %vm4578, %v5185, %v5187
        %5189 = vrot.lane.b32.xlu0 %v5111, 96
        %v5190 = vpop.permute.xlu0 %5189
        %5191 = vrot.lane.b32.xlu0 %v5113, 96
        %v5192 = vpop.permute.xlu0 %5191
        %5193 = vrot.lane.b32.xlu0 %v5116, 96
        %v5194 = vpop.permute.xlu0 %5193
        %5195 = vrot.lane.b32.xlu0 %v5118, 96
        %v5196 = vpop.permute.xlu0 %5195
        %5197 = vrot.lane.b32.xlu0 %v5121, 96
        %v5198 = vpop.permute.xlu0 %5197
        %5199 = vrot.lane.b32.xlu0 %v5123, 96
        %v5200 = vpop.permute.xlu0 %5199
        %5201 = vrot.lane.b32.xlu0 %v5126, 96
        %v5202 = vpop.permute.xlu0 %5201
        %5203 = vrot.lane.b32.xlu0 %v5128, 96
        %v5204 = vpop.permute.xlu0 %5203
        %5205 = vrot.lane.b32.xlu0 %v5131, 96
        %v5206 = vpop.permute.xlu0 %5205
        %5207 = vrot.lane.b32.xlu0 %v5133, 96
        %v5208 = vpop.permute.xlu0 %5207
        %5209 = vrot.lane.b32.xlu0 %v5136, 96
        %v5210 = vpop.permute.xlu0 %5209
        %5211 = vrot.lane.b32.xlu0 %v5138, 96
        %v5212 = vpop.permute.xlu0 %5211
        %5213 = vrot.lane.b32.xlu0 %v5141, 96
        %v5214 = vpop.permute.xlu0 %5213
        %5215 = vrot.lane.b32.xlu0 %v5143, 96
        %v5216 = vpop.permute.xlu0 %5215
        %5217 = vrot.lane.b32.xlu0 %v5146, 96
        %v5218 = vpop.permute.xlu0 %5217
        %5219 = vrot.lane.b32.xlu0 %v5148, 96
        %v5220 = vpop.permute.xlu0 %5219
        %5221 = vrot.lane.b32.xlu0 %v5151, 96
        %v5222 = vpop.permute.xlu0 %5221
        %5223 = vrot.lane.b32.xlu0 %v5153, 96
        %v5224 = vpop.permute.xlu0 %5223
        %5225 = vrot.lane.b32.xlu0 %v5156, 96
        %v5226 = vpop.permute.xlu0 %5225
        %5227 = vrot.lane.b32.xlu0 %v5158, 96
        %v5228 = vpop.permute.xlu0 %5227
        %5229 = vrot.lane.b32.xlu0 %v5161, 96
        %v5230 = vpop.permute.xlu0 %5229
        %5231 = vrot.lane.b32.xlu0 %v5163, 96
        %v5232 = vpop.permute.xlu0 %5231
        %5233 = vrot.lane.b32.xlu0 %v5166, 96
        %v5234 = vpop.permute.xlu0 %5233
        %5235 = vrot.lane.b32.xlu0 %v5168, 96
        %v5236 = vpop.permute.xlu0 %5235
        %5237 = vrot.lane.b32.xlu0 %v5171, 96
        %v5238 = vpop.permute.xlu0 %5237
        %5239 = vrot.lane.b32.xlu0 %v5173, 96
        %v5240 = vpop.permute.xlu0 %5239
        %5241 = vrot.lane.b32.xlu0 %v5176, 96
        %v5242 = vpop.permute.xlu0 %5241
        %5243 = vrot.lane.b32.xlu0 %v5178, 96
        %v5244 = vpop.permute.xlu0 %5243
        %5245 = vrot.lane.b32.xlu0 %v5181, 96
        %v5246 = vpop.permute.xlu0 %5245
        %5247 = vrot.lane.b32.xlu0 %v5183, 96
        %v5248 = vpop.permute.xlu0 %5247
        %5249 = vrot.lane.b32.xlu0 %v5186, 96
        %v5250 = vpop.permute.xlu0 %5249
        %5251 = vrot.lane.b32.xlu0 %v5188, 96
        %v5252 = vpop.permute.xlu0 %5251
        %v5285 = vadd.f32 %v5077, %v5190
        %v5286 = vadd.f32 %v5078, %v5192
        %v5287 = vadd.f32 %v5079, %v5194
        %v5288 = vadd.f32 %v5080, %v5196
        %v5289 = vadd.f32 %v5081, %v5198
        %v5290 = vadd.f32 %v5082, %v5200
        %v5291 = vadd.f32 %v5083, %v5202
        %v5292 = vadd.f32 %v5084, %v5204
        %v5293 = vadd.f32 %v5085, %v5206
        %v5294 = vadd.f32 %v5086, %v5208
        %v5295 = vadd.f32 %v5087, %v5210
        %v5296 = vadd.f32 %v5088, %v5212
        %v5297 = vadd.f32 %v5089, %v5214
        %v5298 = vadd.f32 %v5090, %v5216
        %v5299 = vadd.f32 %v5091, %v5218
        %v5300 = vadd.f32 %v5092, %v5220
        %v5301 = vadd.f32 %v5093, %v5222
        %v5302 = vadd.f32 %v5094, %v5224
        %v5303 = vadd.f32 %v5095, %v5226
        %v5304 = vadd.f32 %v5096, %v5228
        %v5305 = vadd.f32 %v5097, %v5230
        %v5306 = vadd.f32 %v5098, %v5232
        %v5307 = vadd.f32 %v5099, %v5234
        %v5308 = vadd.f32 %v5100, %v5236
        %v5309 = vadd.f32 %v5101, %v5238
        %v5310 = vadd.f32 %v5102, %v5240
        %v5311 = vadd.f32 %v5103, %v5242
        %v5312 = vadd.f32 %v5104, %v5244
        %v5313 = vadd.f32 %v5105, %v5246
        %v5314 = vadd.f32 %v5106, %v5248
        %v5315 = vadd.f32 %v5107, %v5250
        %v5316 = vadd.f32 %v5108, %v5252
        %5319 = vrot.lane.b32.xlu0 %v3807, 64
        %v5320 = vpop.permute.xlu0 %5319
        %5321 = vrot.lane.b32.xlu0 %v3811, 64
        %v5322 = vpop.permute.xlu0 %5321
        %5323 = vrot.lane.b32.xlu0 %v3821, 64
        %v5324 = vpop.permute.xlu0 %5323
        %5325 = vrot.lane.b32.xlu0 %v3827, 64
        %v5326 = vpop.permute.xlu0 %5325
        %5327 = vrot.lane.b32.xlu0 %v3837, 64
        %v5328 = vpop.permute.xlu0 %5327
        %5329 = vrot.lane.b32.xlu0 %v3841, 64
        %v5330 = vpop.permute.xlu0 %5329
        %5331 = vrot.lane.b32.xlu0 %v3851, 64
        %v5332 = vpop.permute.xlu0 %5331
        %5333 = vrot.lane.b32.xlu0 %v3857, 64
        %v5334 = vpop.permute.xlu0 %5333
        %5335 = vrot.lane.b32.xlu0 %v3867, 64
        %v5336 = vpop.permute.xlu0 %5335
        %5337 = vrot.lane.b32.xlu0 %v3871, 64
        %v5338 = vpop.permute.xlu0 %5337
        %5339 = vrot.lane.b32.xlu0 %v3881, 64
        %v5340 = vpop.permute.xlu0 %5339
        %5341 = vrot.lane.b32.xlu0 %v3887, 64
        %v5342 = vpop.permute.xlu0 %5341
        %5343 = vrot.lane.b32.xlu0 %v3897, 64
        %v5344 = vpop.permute.xlu0 %5343
        %5345 = vrot.lane.b32.xlu0 %v3901, 64
        %v5346 = vpop.permute.xlu0 %5345
        %5347 = vrot.lane.b32.xlu0 %v3911, 64
        %v5348 = vpop.permute.xlu0 %5347
        %5349 = vrot.lane.b32.xlu0 %v3917, 64
        %v5350 = vpop.permute.xlu0 %5349
        %5351 = vrot.lane.b32.xlu0 %v3927, 64
        %v5352 = vpop.permute.xlu0 %5351
        %5353 = vrot.lane.b32.xlu0 %v3931, 64
        %v5354 = vpop.permute.xlu0 %5353
        %5355 = vrot.lane.b32.xlu0 %v3941, 64
        %v5356 = vpop.permute.xlu0 %5355
        %5357 = vrot.lane.b32.xlu0 %v3947, 64
        %v5358 = vpop.permute.xlu0 %5357
        %5359 = vrot.lane.b32.xlu0 %v3957, 64
        %v5360 = vpop.permute.xlu0 %5359
        %5361 = vrot.lane.b32.xlu0 %v3961, 64
        %v5362 = vpop.permute.xlu0 %5361
        %5363 = vrot.lane.b32.xlu0 %v3971, 64
        %v5364 = vpop.permute.xlu0 %5363
        %5365 = vrot.lane.b32.xlu0 %v3977, 64
        %v5366 = vpop.permute.xlu0 %5365
        %5367 = vrot.lane.b32.xlu0 %v3987, 64
        %v5368 = vpop.permute.xlu0 %5367
        %5369 = vrot.lane.b32.xlu0 %v3991, 64
        %v5370 = vpop.permute.xlu0 %5369
        %5371 = vrot.lane.b32.xlu0 %v4001, 64
        %v5372 = vpop.permute.xlu0 %5371
        %5373 = vrot.lane.b32.xlu0 %v4007, 64
        %v5374 = vpop.permute.xlu0 %5373
        %5375 = vrot.lane.b32.xlu0 %v4017, 64
        %v5376 = vpop.permute.xlu0 %5375
        %5377 = vrot.lane.b32.xlu0 %v4021, 64
        %v5378 = vpop.permute.xlu0 %5377
        %5379 = vrot.lane.b32.xlu0 %v4029, 64
        %v5380 = vpop.permute.xlu0 %5379
        %5381 = vrot.lane.b32.xlu0 %v4034, 64
        %v5382 = vpop.permute.xlu0 %5381
        %v5415 = vadd.f32 %v5285, %v5320
        %v5416 = vadd.f32 %v5286, %v5322
        %v5417 = vadd.f32 %v5287, %v5324
        %v5418 = vadd.f32 %v5288, %v5326
        %v5419 = vadd.f32 %v5289, %v5328
        %v5420 = vadd.f32 %v5290, %v5330
        %v5421 = vadd.f32 %v5291, %v5332
        %v5422 = vadd.f32 %v5292, %v5334
        %v5423 = vadd.f32 %v5293, %v5336
        %v5424 = vadd.f32 %v5294, %v5338
        %v5425 = vadd.f32 %v5295, %v5340
        %v5426 = vadd.f32 %v5296, %v5342
        %v5427 = vadd.f32 %v5297, %v5344
        %v5428 = vadd.f32 %v5298, %v5346
        %v5429 = vadd.f32 %v5299, %v5348
        %v5430 = vadd.f32 %v5300, %v5350
        %v5431 = vadd.f32 %v5301, %v5352
        %v5432 = vadd.f32 %v5302, %v5354
        %v5433 = vadd.f32 %v5303, %v5356
        %v5434 = vadd.f32 %v5304, %v5358
        %v5435 = vadd.f32 %v5305, %v5360
        %v5436 = vadd.f32 %v5306, %v5362
        %v5437 = vadd.f32 %v5307, %v5364
        %v5438 = vadd.f32 %v5308, %v5366
        %v5439 = vadd.f32 %v5309, %v5368
        %v5440 = vadd.f32 %v5310, %v5370
        %v5441 = vadd.f32 %v5311, %v5372
        %v5442 = vadd.f32 %v5312, %v5374
        %v5443 = vadd.f32 %v5313, %v5376
        %v5444 = vadd.f32 %v5314, %v5378
        %v5445 = vadd.f32 %v5315, %v5380
        %v5446 = vadd.f32 %v5316, %v5382
        %v5448 = vrot.slane %v4029, 1
        %v5449 = vrot.slane %v4034, 1
        %v5450 = vsel %vm4369, %v5448, %v5449
        %v5451 = vrot.slane %v4037, 1
        %v5452 = vsel %vm4369, %v5449, %v5451
        %5453 = vrot.lane.b32.xlu0 %v4972, 32
        %v5454 = vpop.permute.xlu0 %5453
        %5455 = vrot.lane.b32.xlu0 %v4974, 32
        %v5456 = vpop.permute.xlu0 %5455
        %5457 = vrot.lane.b32.xlu0 %v4977, 32
        %v5458 = vpop.permute.xlu0 %5457
        %5459 = vrot.lane.b32.xlu0 %v4979, 32
        %v5460 = vpop.permute.xlu0 %5459
        %5461 = vrot.lane.b32.xlu0 %v4982, 32
        %v5462 = vpop.permute.xlu0 %5461
        %5463 = vrot.lane.b32.xlu0 %v4984, 32
        %v5464 = vpop.permute.xlu0 %5463
        %5465 = vrot.lane.b32.xlu0 %v4987, 32
        %v5466 = vpop.permute.xlu0 %5465
        %5467 = vrot.lane.b32.xlu0 %v4989, 32
        %v5468 = vpop.permute.xlu0 %5467
        %5469 = vrot.lane.b32.xlu0 %v4992, 32
        %v5470 = vpop.permute.xlu0 %5469
        %5471 = vrot.lane.b32.xlu0 %v4994, 32
        %v5472 = vpop.permute.xlu0 %5471
        %5473 = vrot.lane.b32.xlu0 %v4997, 32
        %v5474 = vpop.permute.xlu0 %5473
        %5475 = vrot.lane.b32.xlu0 %v4999, 32
        %v5476 = vpop.permute.xlu0 %5475
        %5477 = vrot.lane.b32.xlu0 %v5002, 32
        %v5478 = vpop.permute.xlu0 %5477
        %5479 = vrot.lane.b32.xlu0 %v5004, 32
        %v5480 = vpop.permute.xlu0 %5479
        %5481 = vrot.lane.b32.xlu0 %v5007, 32
        %v5482 = vpop.permute.xlu0 %5481
        %5483 = vrot.lane.b32.xlu0 %v5009, 32
        %v5484 = vpop.permute.xlu0 %5483
        %5485 = vrot.lane.b32.xlu0 %v5012, 32
        %v5486 = vpop.permute.xlu0 %5485
        %5487 = vrot.lane.b32.xlu0 %v5014, 32
        %v5488 = vpop.permute.xlu0 %5487
        %5489 = vrot.lane.b32.xlu0 %v5017, 32
        %v5490 = vpop.permute.xlu0 %5489
        %5491 = vrot.lane.b32.xlu0 %v5019, 32
        %v5492 = vpop.permute.xlu0 %5491
        %5493 = vrot.lane.b32.xlu0 %v5022, 32
        %v5494 = vpop.permute.xlu0 %5493
        %5495 = vrot.lane.b32.xlu0 %v5024, 32
        %v5496 = vpop.permute.xlu0 %5495
        %5497 = vrot.lane.b32.xlu0 %v5027, 32
        %v5498 = vpop.permute.xlu0 %5497
        %5499 = vrot.lane.b32.xlu0 %v5029, 32
        %v5500 = vpop.permute.xlu0 %5499
        %5501 = vrot.lane.b32.xlu0 %v5032, 32
        %v5502 = vpop.permute.xlu0 %5501
        %5503 = vrot.lane.b32.xlu0 %v5034, 32
        %v5504 = vpop.permute.xlu0 %5503
        %5505 = vrot.lane.b32.xlu0 %v5037, 32
        %v5506 = vpop.permute.xlu0 %5505
        %5507 = vrot.lane.b32.xlu0 %v5039, 32
        %v5508 = vpop.permute.xlu0 %5507
        %5509 = vrot.lane.b32.xlu0 %v5042, 32
        %v5510 = vpop.permute.xlu0 %5509
        %5511 = vrot.lane.b32.xlu0 %v5044, 32
        %v5512 = vpop.permute.xlu0 %5511
        %5513 = vrot.lane.b32.xlu0 %v5450, 32
        %v5514 = vpop.permute.xlu0 %5513
        %5515 = vrot.lane.b32.xlu0 %v5452, 32
        %v5516 = vpop.permute.xlu0 %5515
        %v5549 = vadd.f32 %v5415, %v5454
        %v5550 = vadd.f32 %v5416, %v5456
        %v5551 = vadd.f32 %v5417, %v5458
        %v5552 = vadd.f32 %v5418, %v5460
        %v5553 = vadd.f32 %v5419, %v5462
        %v5554 = vadd.f32 %v5420, %v5464
        %v5555 = vadd.f32 %v5421, %v5466
        %v5556 = vadd.f32 %v5422, %v5468
        %v5557 = vadd.f32 %v5423, %v5470
        %v5558 = vadd.f32 %v5424, %v5472
        %v5559 = vadd.f32 %v5425, %v5474
        %v5560 = vadd.f32 %v5426, %v5476
        %v5561 = vadd.f32 %v5427, %v5478
        %v5562 = vadd.f32 %v5428, %v5480
        %v5563 = vadd.f32 %v5429, %v5482
        %v5564 = vadd.f32 %v5430, %v5484
        %v5565 = vadd.f32 %v5431, %v5486
        %v5566 = vadd.f32 %v5432, %v5488
        %v5567 = vadd.f32 %v5433, %v5490
        %v5568 = vadd.f32 %v5434, %v5492
        %v5569 = vadd.f32 %v5435, %v5494
        %v5570 = vadd.f32 %v5436, %v5496
        %v5571 = vadd.f32 %v5437, %v5498
        %v5572 = vadd.f32 %v5438, %v5500
        %v5573 = vadd.f32 %v5439, %v5502
        %v5574 = vadd.f32 %v5440, %v5504
        %v5575 = vadd.f32 %v5441, %v5506
        %v5576 = vadd.f32 %v5442, %v5508
        %v5577 = vadd.f32 %v5443, %v5510
        %v5578 = vadd.f32 %v5444, %v5512
        %v5579 = vadd.f32 %v5445, %v5514
        %v5580 = vadd.f32 %v5446, %v5516
        %v5629 = vrot.slane %v4092, 2
        %v5630 = vrot.slane %v4095, 2
        %v5631 = vsel %vm4578, %v5629, %v5630
        %v5632 = vrot.slane %v4100, 2
        %v5633 = vsel %vm4578, %v5630, %v5632
        %v5634 = vrot.slane %v4103, 2
        %v5635 = vrot.slane %v4108, 2
        %v5636 = vsel %vm4578, %v5634, %v5635
        %v5637 = vrot.slane %v4111, 2
        %v5638 = vsel %vm4578, %v5635, %v5637
        %v5639 = vrot.slane %v4116, 2
        %v5640 = vrot.slane %v4119, 2
        %v5641 = vsel %vm4578, %v5639, %v5640
        %v5642 = vrot.slane %v4124, 2
        %v5643 = vsel %vm4578, %v5640, %v5642
        %v5644 = vrot.slane %v4127, 2
        %v5645 = vrot.slane %v4132, 2
        %v5646 = vsel %vm4578, %v5644, %v5645
        %v5647 = vrot.slane %v4135, 2
        %v5648 = vsel %vm4578, %v5645, %v5647
        %v5649 = vrot.slane %v4140, 2
        %v5650 = vrot.slane %v4143, 2
        %v5651 = vsel %vm4578, %v5649, %v5650
        %v5652 = vrot.slane %v4148, 2
        %v5653 = vsel %vm4578, %v5650, %v5652
        %v5654 = vrot.slane %v4151, 2
        %v5655 = vrot.slane %v4156, 2
        %v5656 = vsel %vm4578, %v5654, %v5655
        %v5657 = vrot.slane %v4159, 2
        %v5658 = vsel %vm4578, %v5655, %v5657
        %v5659 = vrot.slane %v4164, 2
        %v5660 = vrot.slane %v4167, 2
        %v5661 = vsel %vm4578, %v5659, %v5660
        %v5662 = vrot.slane %v4172, 2
        %v5663 = vsel %vm4578, %v5660, %v5662
        %v5664 = vrot.slane %v4175, 2
        %v5665 = vrot.slane %v4180, 2
        %v5666 = vsel %vm4578, %v5664, %v5665
        %v5667 = vrot.slane %v4183, 2
        %v5668 = vsel %vm4578, %v5665, %v5667
        %v5669 = vrot.slane %v4188, 2
        %v5670 = vrot.slane %v4191, 2
        %v5671 = vsel %vm4578, %v5669, %v5670
        %v5672 = vrot.slane %v4196, 2
        %v5673 = vsel %vm4578, %v5670, %v5672
        %v5674 = vrot.slane %v4199, 2
        %v5675 = vrot.slane %v4204, 2
        %v5676 = vsel %vm4578, %v5674, %v5675
        %v5677 = vrot.slane %v4207, 2
        %v5678 = vsel %vm4578, %v5675, %v5677
        %v5679 = vrot.slane %v4212, 2
        %v5680 = vrot.slane %v4215, 2
        %v5681 = vsel %vm4578, %v5679, %v5680
        %v5682 = vrot.slane %v4220, 2
        %v5683 = vsel %vm4578, %v5680, %v5682
        %v5684 = vrot.slane %v4223, 2
        %v5685 = vrot.slane %v4228, 2
        %v5686 = vsel %vm4578, %v5684, %v5685
        %v5687 = vrot.slane %v4231, 2
        %v5688 = vsel %vm4578, %v5685, %v5687
        %v5689 = vrot.slane %v4236, 2
        %v5690 = vrot.slane %v4239, 2
        %v5691 = vsel %vm4578, %v5689, %v5690
        %v5692 = vrot.slane %v4244, 2
        %v5693 = vsel %vm4578, %v5690, %v5692
        %v5694 = vrot.slane %v4247, 2
        %v5695 = vrot.slane %v4252, 2
        %v5696 = vsel %vm4578, %v5694, %v5695
        %v5697 = vrot.slane %v4255, 2
        %v5698 = vsel %vm4578, %v5695, %v5697
        %v5699 = vrot.slane %v4260, 2
        %v5700 = vrot.slane %v4263, 2
        %v5701 = vsel %vm4578, %v5699, %v5700
        %v5702 = vrot.slane %v4268, 2
        %v5703 = vsel %vm4578, %v5700, %v5702
        %v5704 = vrot.slane %v4271, 2
        %v5705 = vrot.slane %v4276, 2
        %v5706 = vsel %vm4578, %v5704, %v5705
        %v5707 = vrot.slane %v4279, 2
        %v5708 = vsel %vm4578, %v5705, %v5707
        %v5741 = vadd.f32 %v5549, %v5631
        %v5742 = vadd.f32 %v5550, %v5633
        %v5743 = vadd.f32 %v5551, %v5636
        %v5744 = vadd.f32 %v5552, %v5638
        %v5745 = vadd.f32 %v5553, %v5641
        %v5746 = vadd.f32 %v5554, %v5643
        %v5747 = vadd.f32 %v5555, %v5646
        %v5748 = vadd.f32 %v5556, %v5648
        %v5749 = vadd.f32 %v5557, %v5651
        %v5750 = vadd.f32 %v5558, %v5653
        %v5751 = vadd.f32 %v5559, %v5656
        %v5752 = vadd.f32 %v5560, %v5658
        %v5753 = vadd.f32 %v5561, %v5661
        %v5754 = vadd.f32 %v5562, %v5663
        %v5755 = vadd.f32 %v5563, %v5666
        %v5756 = vadd.f32 %v5564, %v5668
        %v5757 = vadd.f32 %v5565, %v5671
        %v5758 = vadd.f32 %v5566, %v5673
        %v5759 = vadd.f32 %v5567, %v5676
        %v5760 = vadd.f32 %v5568, %v5678
        %v5761 = vadd.f32 %v5569, %v5681
        %v5762 = vadd.f32 %v5570, %v5683
        %v5763 = vadd.f32 %v5571, %v5686
        %v5764 = vadd.f32 %v5572, %v5688
        %v5765 = vadd.f32 %v5573, %v5691
        %v5766 = vadd.f32 %v5574, %v5693
        %v5767 = vadd.f32 %v5575, %v5696
        %v5768 = vadd.f32 %v5576, %v5698
        %v5769 = vadd.f32 %v5577, %v5701
        %v5770 = vadd.f32 %v5578, %v5703
        %v5771 = vadd.f32 %v5579, %v5706
        %v5772 = vadd.f32 %v5580, %v5708
        %v5773 = vmax.f32 %v5741, 0.0
        %v5774 = vmax.f32 %v5742, 0.0
        %v5775 = vmax.f32 %v5743, 0.0
        %v5776 = vmax.f32 %v5744, 0.0
        %v5777 = vmax.f32 %v5745, 0.0
        %v5778 = vmax.f32 %v5746, 0.0
        %v5779 = vmax.f32 %v5747, 0.0
        %v5780 = vmax.f32 %v5748, 0.0
        %v5781 = vmax.f32 %v5749, 0.0
        %v5782 = vmax.f32 %v5750, 0.0
        %v5783 = vmax.f32 %v5751, 0.0
        %v5784 = vmax.f32 %v5752, 0.0
        %v5785 = vmax.f32 %v5753, 0.0
        %v5786 = vmax.f32 %v5754, 0.0
        %v5787 = vmax.f32 %v5755, 0.0
        %v5788 = vmax.f32 %v5756, 0.0
        %v5789 = vmax.f32 %v5757, 0.0
        %v5790 = vmax.f32 %v5758, 0.0
        %v5791 = vmax.f32 %v5759, 0.0
        %v5792 = vmax.f32 %v5760, 0.0
        %v5793 = vmax.f32 %v5761, 0.0
        %v5794 = vmax.f32 %v5762, 0.0
        %v5795 = vmax.f32 %v5763, 0.0
        %v5796 = vmax.f32 %v5764, 0.0
        %v5797 = vmax.f32 %v5765, 0.0
        %v5798 = vmax.f32 %v5766, 0.0
        %v5799 = vmax.f32 %v5767, 0.0
        %v5800 = vmax.f32 %v5768, 0.0
        %v5801 = vmax.f32 %v5769, 0.0
        %v5802 = vmax.f32 %v5770, 0.0
        %v5803 = vmax.f32 %v5771, 0.0
        %v5804 = vmax.f32 %v5772, 0.0
        %5805 = vst.msk [vmem:[#allocation3] sm:$0xff] %vm745, 0.0
        %5806 = vst.msk [vmem:[#allocation3 + $0x8] sm:$0xff] %vm745, 0.0
        %5807 = vst.msk [vmem:[#allocation3 + $0x10] sm:$0xff] %vm745, 0.0
        %5808 = vst.msk [vmem:[#allocation3 + $0x18] sm:$0xff] %vm745, 0.0
        %5809 = vst.msk [vmem:[#allocation3 + $0x20] sm:$0xff] %vm745, 0.0
        %5810 = vst.msk [vmem:[#allocation3 + $0x28] sm:$0xff] %vm745, 0.0
        %5811 = vst.msk [vmem:[#allocation3 + $0x30] sm:$0xff] %vm745, 0.0
        %5812 = vst.msk [vmem:[#allocation3 + $0x38] sm:$0xff] %vm745, 0.0
        %5813 = vst.msk [vmem:[#allocation3 + $0x40] sm:$0xff] %vm745, 0.0
        %5814 = vst.msk [vmem:[#allocation3 + $0x48] sm:$0xff] %vm745, 0.0
        %5815 = vst.msk [vmem:[#allocation3 + $0x50] sm:$0xff] %vm745, 0.0
        %5816 = vst.msk [vmem:[#allocation3 + $0x58] sm:$0xff] %vm745, 0.0
        %5817 = vst.msk [vmem:[#allocation3 + $0x60] sm:$0xff] %vm745, 0.0
        %5818 = vst.msk [vmem:[#allocation3 + $0x68] sm:$0xff] %vm745, 0.0
        %5819 = vst.msk [vmem:[#allocation3 + $0x70] sm:$0xff] %vm745, 0.0
        %5820 = vst.msk [vmem:[#allocation3 + $0x78] sm:$0xff] %vm745, 0.0
        %5821 = vst.msk [vmem:[#allocation3 + $0x80] sm:$0xff] %vm745, 0.0
        %5822 = vst.msk [vmem:[#allocation3 + $0x88] sm:$0xff] %vm745, 0.0
        %5823 = vst.msk [vmem:[#allocation3 + $0x90] sm:$0xff] %vm745, 0.0
        %5824 = vst.msk [vmem:[#allocation3 + $0x98] sm:$0xff] %vm745, 0.0
        %5825 = vst.msk [vmem:[#allocation3 + $0xa0] sm:$0xff] %vm745, 0.0
        %5826 = vst.msk [vmem:[#allocation3 + $0xa8] sm:$0xff] %vm745, 0.0
        %5827 = vst.msk [vmem:[#allocation3 + $0xb0] sm:$0xff] %vm745, 0.0
        %5828 = vst.msk [vmem:[#allocation3 + $0xb8] sm:$0xff] %vm745, 0.0
        %5829 = vst.msk [vmem:[#allocation3 + $0xc0] sm:$0xff] %vm745, 0.0
        %5830 = vst.msk [vmem:[#allocation3 + $0xc8] sm:$0xff] %vm745, 0.0
        %5831 = vst.msk [vmem:[#allocation3 + $0xd0] sm:$0xff] %vm745, 0.0
        %5832 = vst.msk [vmem:[#allocation3 + $0xd8] sm:$0xff] %vm745, 0.0
        %5833 = vst.msk [vmem:[#allocation3 + $0xe0] sm:$0xff] %vm745, 0.0
        %5834 = vst.msk [vmem:[#allocation3 + $0xe8] sm:$0xff] %vm745, 0.0
        %5835 = vst.msk [vmem:[#allocation3 + $0xf0] sm:$0xff] %vm745, 0.0
        %5836 = vst.msk [vmem:[#allocation3 + $0xf8] sm:$0xff] %vm745, 0.0
        %5837 = vst.msk [vmem:[#allocation3 + $0x100] sm:$0xff] %vm745, 0.0
        %5838 = vst.msk [vmem:[#allocation3 + $0x108] sm:$0xff] %vm745, 0.0
        %5839 = vst.msk [vmem:[#allocation3 + $0x110] sm:$0xff] %vm745, 0.0
        %5840 = vst.msk [vmem:[#allocation3 + $0x118] sm:$0xff] %vm745, 0.0
        %5841 = vst.msk [vmem:[#allocation3 + $0x120] sm:$0xff] %vm745, 0.0
        %5842 = vst.msk [vmem:[#allocation3 + $0x128] sm:$0xff] %vm745, 0.0
        %5843 = vst.msk [vmem:[#allocation3 + $0x130] sm:$0xff] %vm745, 0.0
        %5844 = vst.msk [vmem:[#allocation3 + $0x138] sm:$0xff] %vm745, 0.0
        %5845 = vst.msk [vmem:[#allocation3 + $0x140] sm:$0xff] %vm745, 0.0
        %5846 = vst.msk [vmem:[#allocation3 + $0x148] sm:$0xff] %vm745, 0.0
        %5847 = vst.msk [vmem:[#allocation3 + $0x150] sm:$0xff] %vm745, 0.0
        %5848 = vst.msk [vmem:[#allocation3 + $0x158] sm:$0xff] %vm745, 0.0
        %5849 = vst.msk [vmem:[#allocation3 + $0x160] sm:$0xff] %vm745, 0.0
        %5850 = vst.msk [vmem:[#allocation3 + $0x168] sm:$0xff] %vm745, 0.0
        %5851 = vst.msk [vmem:[#allocation3 + $0x170] sm:$0xff] %vm745, 0.0
        %5852 = vst.msk [vmem:[#allocation3 + $0x178] sm:$0xff] %vm745, 0.0
        %5853 = vst.msk [vmem:[#allocation3 + $0x180] sm:$0xff] %vm745, 0.0
        %5854 = vst.msk [vmem:[#allocation3 + $0x188] sm:$0xff] %vm745, 0.0
        %5855 = vst.msk [vmem:[#allocation3 + $0x190] sm:$0xff] %vm745, 0.0
        %5856 = vst.msk [vmem:[#allocation3 + $0x198] sm:$0xff] %vm745, 0.0
        %5857 = vst.msk [vmem:[#allocation3 + $0x1a0] sm:$0xff] %vm745, 0.0
        %5858 = vst.msk [vmem:[#allocation3 + $0x1a8] sm:$0xff] %vm745, 0.0
        %s5859 = scalar_lea.vmem [#allocation3], 24
        %5860 = vst.msk [vmem:[%s5859 + $0x1] sm:$0xff] %vm745, %v5773
        %5861 = vst.msk [vmem:[%s5859 + $0x9] sm:$0xff] %vm745, %v5774
        %5862 = vst.msk [vmem:[%s5859 + $0x19] sm:$0xff] %vm745, %v5775
        %5863 = vst.msk [vmem:[%s5859 + $0x21] sm:$0xff] %vm745, %v5776
        %5864 = vst.msk [vmem:[%s5859 + $0x31] sm:$0xff] %vm745, %v5777
        %5865 = vst.msk [vmem:[%s5859 + $0x39] sm:$0xff] %vm745, %v5778
        %5866 = vst.msk [vmem:[%s5859 + $0x49] sm:$0xff] %vm745, %v5779
        %5867 = vst.msk [vmem:[%s5859 + $0x51] sm:$0xff] %vm745, %v5780
        %5868 = vst.msk [vmem:[%s5859 + $0x61] sm:$0xff] %vm745, %v5781
        %5869 = vst.msk [vmem:[%s5859 + $0x69] sm:$0xff] %vm745, %v5782
        %5870 = vst.msk [vmem:[%s5859 + $0x79] sm:$0xff] %vm745, %v5783
        %5871 = vst.msk [vmem:[%s5859 + $0x81] sm:$0xff] %vm745, %v5784
        %5872 = vst.msk [vmem:[%s5859 + $0x91] sm:$0xff] %vm745, %v5785
        %5873 = vst.msk [vmem:[%s5859 + $0x99] sm:$0xff] %vm745, %v5786
        %5874 = vst.msk [vmem:[%s5859 + $0xa9] sm:$0xff] %vm745, %v5787
        %5875 = vst.msk [vmem:[%s5859 + $0xb1] sm:$0xff] %vm745, %v5788
        %5876 = vst.msk [vmem:[%s5859 + $0xc1] sm:$0xff] %vm745, %v5789
        %5877 = vst.msk [vmem:[%s5859 + $0xc9] sm:$0xff] %vm745, %v5790
        %5878 = vst.msk [vmem:[%s5859 + $0xd9] sm:$0xff] %vm745, %v5791
        %5879 = vst.msk [vmem:[%s5859 + $0xe1] sm:$0xff] %vm745, %v5792
        %5880 = vst.msk [vmem:[%s5859 + $0xf1] sm:$0xff] %vm745, %v5793
        %5881 = vst.msk [vmem:[%s5859 + $0xf9] sm:$0xff] %vm745, %v5794
        %5882 = vst.msk [vmem:[%s5859 + $0x109] sm:$0xff] %vm745, %v5795
        %5883 = vst.msk [vmem:[%s5859 + $0x111] sm:$0xff] %vm745, %v5796
        %5884 = vst.msk [vmem:[%s5859 + $0x121] sm:$0xff] %vm745, %v5797
        %5885 = vst.msk [vmem:[%s5859 + $0x129] sm:$0xff] %vm745, %v5798
        %5886 = vst.msk [vmem:[%s5859 + $0x139] sm:$0xff] %vm745, %v5799
        %5887 = vst.msk [vmem:[%s5859 + $0x141] sm:$0xff] %vm745, %v5800
        %5888 = vst.msk [vmem:[%s5859 + $0x151] sm:$0xff] %vm745, %v5801
        %5889 = vst.msk [vmem:[%s5859 + $0x159] sm:$0xff] %vm745, %v5802
        %5890 = vst.msk [vmem:[%s5859 + $0x169] sm:$0xff] %vm745, %v5803
        %5891 = vst.msk [vmem:[%s5859 + $0x171] sm:$0xff] %vm745, %v5804
        %v5892 = vld [vmem:[#allocation3] sm:$0xff]
        %v5893 = vld [vmem:[#allocation3 + $0x8] sm:$0xff]
        %v5894 = vld [vmem:[#allocation3 + $0x10] sm:$0xff]
        %v5895 = vld [vmem:[#allocation3 + $0x18] sm:$0xff]
        %v5896 = vld [vmem:[#allocation3 + $0x20] sm:$0xff]
        %v5897 = vld [vmem:[#allocation3 + $0x28] sm:$0xff]
        %v5898 = vld [vmem:[#allocation3 + $0x30] sm:$0xff]
        %v5899 = vld [vmem:[#allocation3 + $0x38] sm:$0xff]
        %v5900 = vld [vmem:[#allocation3 + $0x40] sm:$0xff]
        %v5901 = vld [vmem:[#allocation3 + $0x48] sm:$0xff]
        %v5902 = vld [vmem:[#allocation3 + $0x50] sm:$0xff]
        %v5903 = vld [vmem:[#allocation3 + $0x58] sm:$0xff]
        %v5904 = vld [vmem:[#allocation3 + $0x60] sm:$0xff]
        %v5905 = vld [vmem:[#allocation3 + $0x68] sm:$0xff]
        %v5906 = vld [vmem:[#allocation3 + $0x70] sm:$0xff]
        %v5907 = vld [vmem:[#allocation3 + $0x78] sm:$0xff]
        %v5908 = vld [vmem:[#allocation3 + $0x80] sm:$0xff]
        %v5909 = vld [vmem:[#allocation3 + $0x88] sm:$0xff]
        %v5910 = vld [vmem:[#allocation3 + $0x90] sm:$0xff]
        %v5911 = vld [vmem:[#allocation3 + $0x98] sm:$0xff]
        %v5912 = vld [vmem:[#allocation3 + $0xa0] sm:$0xff]
        %v5913 = vld [vmem:[#allocation3 + $0xa8] sm:$0xff]
        %v5914 = vld [vmem:[#allocation3 + $0xb0] sm:$0xff]
        %v5915 = vld [vmem:[#allocation3 + $0xb8] sm:$0xff]
        %v5916 = vld [vmem:[#allocation3 + $0xc0] sm:$0xff]
        %v5917 = vld [vmem:[#allocation3 + $0xc8] sm:$0xff]
        %v5918 = vld [vmem:[#allocation3 + $0xd0] sm:$0xff]
        %v5919 = vld [vmem:[#allocation3 + $0xd8] sm:$0xff]
        %v5920 = vld [vmem:[#allocation3 + $0xe0] sm:$0xff]
        %v5921 = vld [vmem:[#allocation3 + $0xe8] sm:$0xff]
        %v5922 = vld [vmem:[#allocation3 + $0xf0] sm:$0xff]
        %v5923 = vld [vmem:[#allocation3 + $0xf8] sm:$0xff]
        %v5924 = vld [vmem:[#allocation3 + $0x100] sm:$0xff]
        %v5925 = vld [vmem:[#allocation3 + $0x108] sm:$0xff]
        %v5926 = vld [vmem:[#allocation3 + $0x110] sm:$0xff]
        %v5927 = vld [vmem:[#allocation3 + $0x118] sm:$0xff]
        %v5928 = vld [vmem:[#allocation3 + $0x120] sm:$0xff]
        %v5929 = vld [vmem:[#allocation3 + $0x128] sm:$0xff]
        %v5930 = vld [vmem:[#allocation3 + $0x130] sm:$0xff]
        %v5931 = vld [vmem:[#allocation3 + $0x138] sm:$0xff]
        %v5932 = vld [vmem:[#allocation3 + $0x140] sm:$0xff]
        %v5933 = vld [vmem:[#allocation3 + $0x148] sm:$0xff]
        %v5934 = vld [vmem:[#allocation3 + $0x150] sm:$0xff]
        %v5935 = vld [vmem:[#allocation3 + $0x158] sm:$0xff]
        %v5936 = vld [vmem:[#allocation3 + $0x160] sm:$0xff]
        %v5937 = vld [vmem:[#allocation3 + $0x168] sm:$0xff]
        %v5938 = vld [vmem:[#allocation3 + $0x170] sm:$0xff]
        %v5939 = vld [vmem:[#allocation3 + $0x178] sm:$0xff]
        %v5940 = vld [vmem:[#allocation3 + $0x180] sm:$0xff]
        %v5941 = vld [vmem:[#allocation3 + $0x188] sm:$0xff]
        %v5942 = vld [vmem:[#allocation3 + $0x190] sm:$0xff]
        %v5943 = vld [vmem:[#allocation3 + $0x198] sm:$0xff]
        %v5944 = vld [vmem:[#allocation3 + $0x1a0] sm:$0xff]
        %v5945 = vld [vmem:[#allocation3 + $0x1a8] sm:$0xff]
        %v5946 = vpack.c.bf16 %v5893, %v5892
        %v5947 = vpack.c.bf16 %v5895, %v5894
        %v5948 = vpack.c.bf16 %v5897, %v5896
        %v5949 = vpack.c.bf16 %v5899, %v5898
        %v5950 = vpack.c.bf16 %v5901, %v5900
        %v5951 = vpack.c.bf16 %v5903, %v5902
        %v5952 = vpack.c.bf16 %v5905, %v5904
        %v5953 = vpack.c.bf16 %v5907, %v5906
        %v5954 = vpack.c.bf16 %v5909, %v5908
        %v5955 = vpack.c.bf16 %v5911, %v5910
        %v5956 = vpack.c.bf16 %v5913, %v5912
        %v5957 = vpack.c.bf16 %v5915, %v5914
        %v5958 = vpack.c.bf16 %v5917, %v5916
        %v5959 = vpack.c.bf16 %v5919, %v5918
        %v5960 = vpack.c.bf16 %v5921, %v5920
        %v5961 = vpack.c.bf16 %v5923, %v5922
        %v5962 = vpack.c.bf16 %v5925, %v5924
        %v5963 = vpack.c.bf16 %v5927, %v5926
        %v5964 = vpack.c.bf16 %v5929, %v5928
        %v5965 = vpack.c.bf16 %v5931, %v5930
        %v5966 = vpack.c.bf16 %v5933, %v5932
        %v5967 = vpack.c.bf16 %v5935, %v5934
        %v5968 = vpack.c.bf16 %v5937, %v5936
        %v5969 = vpack.c.bf16 %v5939, %v5938
        %v5970 = vpack.c.bf16 %v5941, %v5940
        %v5971 = vpack.c.bf16 %v5943, %v5942
        %v5972 = vpack.c.bf16 %v5945, %v5944
        %v5973 = vld [vmem:[%s16] sm:$0xff]
        %v5974 = vld [vmem:[%s16 + $0x8] sm:$0xf]
        %v5975 = vld [vmem:[%s16 + $0xc] sm:$0xff]
        %v5976 = vld [vmem:[%s16 + $0x14] sm:$0xf]
        %v5977 = vld [vmem:[%s16 + $0x18] sm:$0xff]
        %v5978 = vld [vmem:[%s16 + $0x20] sm:$0xf]
        %v5979 = vld [vmem:[%s16 + $0x24] sm:$0xff]
        %v5980 = vld [vmem:[%s16 + $0x2c] sm:$0xf]
        %v5989 = vunpack.c.l.b16 %v5973
        %v5990 = vunpack.c.h.b16 %v5973
        %v5991 = vunpack.c.l.b16 %v5974
        %v5992 = vunpack.c.l.b16 %v5975
        %v5993 = vunpack.c.h.b16 %v5975
        %v5994 = vunpack.c.l.b16 %v5976
        %v5995 = vunpack.c.l.b16 %v5977
        %v5996 = vunpack.c.h.b16 %v5977
        %v5997 = vunpack.c.l.b16 %v5978
        %v5998 = vunpack.c.l.b16 %v5979
        %v5999 = vunpack.c.h.b16 %v5979
        %v6000 = vunpack.c.l.b16 %v5980
        %v6001 = vpack.c.b16 %v5992, %v5989
        %v6002 = vpack.c.b16 %v5993, %v5990
        %v6003 = vpack.c.b16 %v5994, %v5991
        %v6004 = vpack.c.b16 %v5998, %v5995
        %v6005 = vpack.c.b16 %v5999, %v5996
        %v6006 = vpack.c.b16 %v6000, %v5997
        %v6014 = vsel %vm745, %v5946, 0
        %v6017 = vsel %vm745, %v5947, 0
        %v6020 = vsel %vm745, %v5948, 0
        %v6023 = vsel %vm745, %v5949, 0
        %v6026 = vsel %vm745, %v5950, 0
        %v6029 = vsel %vm745, %v5951, 0
        %v6032 = vsel %vm745, %v5952, 0
        %v6035 = vsel %vm745, %v5953, 0
        %v6038 = vsel %vm745, %v5954, 0
        %v6041 = vsel %vm745, %v5955, 0
        %v6044 = vsel %vm745, %v5956, 0
        %v6047 = vsel %vm745, %v5957, 0
        %v6050 = vsel %vm745, %v5958, 0
        %v6053 = vsel %vm745, %v5959, 0
        %v6056 = vsel %vm745, %v5960, 0
        %v6059 = vsel %vm745, %v5961, 0
        %v6062 = vsel %vm745, %v5962, 0
        %v6065 = vsel %vm745, %v5963, 0
        %v6068 = vsel %vm745, %v5964, 0
        %v6071 = vsel %vm745, %v5965, 0
        %v6074 = vsel %vm745, %v5966, 0
        %v6077 = vsel %vm745, %v5967, 0
        %v6080 = vsel %vm745, %v5968, 0
        %v6083 = vsel %vm745, %v5969, 0
        %v6086 = vsel %vm745, %v5970, 0
        %v6089 = vsel %vm745, %v5971, 0
        %v6092 = vsel %vm745, %v5972, 0
        %6094 = vmatprep.subr.bf16.mxu0 %v6002
        %6095 = vmatpush1.bf16.msra.mxu0 %v6001
        %6096 = vmatprep.subr.bf16.mxu0 %v6005
        %6097 = vmatpush1.bf16.msra.mxu0 %v6004
        %6098 = vmatprep.subr.bf16.mxu0 0
        %6099 = vmatpush1.bf16.msra.mxu0 0
        %6100 = vmatprep.subr.bf16.mxu0 0
        %6101 = vmatpush1.bf16.msra.mxu0 0
        %6102 = vmatprep.subr.bf16.mxu0 0
        %6103 = vmatpush1.bf16.msra.mxu0 0
        %6104 = vmatprep.subr.bf16.mxu0 0
        %6105 = vmatpush1.bf16.msra.mxu0 0
        %6106 = vmatprep.subr.bf16.mxu0 0
        %6107 = vmatpush1.bf16.msra.mxu0 0
        %6108 = vmatprep.subr.bf16.mxu0 0
        %6109 = vmatpush1.bf16.msra.mxu0 0
        %6110 = vmatprep.subr.bf16.mxu0 0
        %6111 = vmatpush1.bf16.msra.mxu0 0
        %6112 = vmatprep.subr.bf16.mxu0 0
        %6113 = vmatpush1.bf16.msra.mxu0 0
        %6114 = vmatprep.subr.bf16.mxu0 0
        %6115 = vmatpush1.bf16.msra.mxu0 0
        %6116 = vmatprep.subr.bf16.mxu0 0
        %6117 = vmatpush1.bf16.msra.mxu0 0
        %6118 = vmatprep.subr.bf16.mxu0 0
        %6119 = vmatpush1.bf16.msra.mxu0 0
        %6120 = vmatprep.subr.bf16.mxu0 0
        %6121 = vmatpush1.bf16.msra.mxu0 0
        %6122 = vmatprep.subr.bf16.mxu0 0
        %6123 = vmatpush1.bf16.msra.mxu0 0
        %6124 = vmatprep.subr.bf16.mxu0 0
        %6125 = vmatpush1.bf16.msra.mxu0 0
        %6126 = vmatprep.mubr.bf16.mxu0 0
        %6127 = vmatmul.mubr.bf16.gmra.mrb[0].mxu0 %v6014
        %v6128 = vpop.f32.mrb[0].mxu0
        %v6129 = vadd.f32 0.0, %v6128
        %v6130 = vpop.f32.mrb[0].mxu0
        %v6131 = vpop.f32.mrb[0].mxu0
        %v6132 = vadd.f32 0.0, %v6131
        %v6133 = vpop.f32.mrb[0].mxu0
        %6134 = vmatprep.mubr.bf16.mxu0 0
        %6135 = vmatmul.mubr.bf16.gmra.mrb[0].mxu0 %v6017
        %v6136 = vpop.f32.mrb[0].mxu0
        %v6137 = vadd.f32 0.0, %v6136
        %v6138 = vpop.f32.mrb[0].mxu0
        %v6139 = vpop.f32.mrb[0].mxu0
        %v6140 = vadd.f32 0.0, %v6139
        %v6141 = vpop.f32.mrb[0].mxu0
        %v6142 = vadd.f32 0.0, %v6141
        %6143 = vmatprep.mubr.bf16.mxu0 0
        %6144 = vmatmul.mubr.bf16.gmra.mrb[0].mxu0 %v6020
        %v6145 = vpop.f32.mrb[0].mxu0
        %v6146 = vadd.f32 0.0, %v6145
        %v6147 = vpop.f32.mrb[0].mxu0
        %v6148 = vadd.f32 0.0, %v6147
        %v6149 = vpop.f32.mrb[0].mxu0
        %v6150 = vadd.f32 0.0, %v6149
        %v6151 = vpop.f32.mrb[0].mxu0
        %v6152 = vadd.f32 0.0, %v6151
        %6153 = vmatprep.mubr.bf16.mxu0 0
        %6154 = vmatmul.mubr.bf16.gmra.mrb[0].mxu0 %v6023
        %v6155 = vpop.f32.mrb[0].mxu0
        %v6156 = vadd.f32 0.0, %v6155
        %v6157 = vpop.f32.mrb[0].mxu0
        %v6158 = vadd.f32 0.0, %v6157
        %v6159 = vpop.f32.mrb[0].mxu0
        %v6160 = vadd.f32 0.0, %v6159
        %v6161 = vpop.f32.mrb[0].mxu0
        %v6162 = vadd.f32 0.0, %v6161
        %6163 = vmatprep.mubr.bf16.mxu0 0
        %6164 = vmatmul.mubr.bf16.gmra.mrb[0].mxu0 %v6026
        %v6165 = vpop.f32.mrb[0].mxu0
        %v6166 = vadd.f32 0.0, %v6165
        %v6167 = vpop.f32.mrb[0].mxu0
        %v6168 = vadd.f32 0.0, %v6167
        %v6169 = vpop.f32.mrb[0].mxu0
        %v6170 = vadd.f32 0.0, %v6169
        %v6171 = vpop.f32.mrb[0].mxu0
        %v6172 = vadd.f32 0.0, %v6171
        %6173 = vmatprep.mubr.bf16.mxu0 0
        %6174 = vmatmul.mubr.bf16.gmra.mrb[0].mxu0 %v6029
        %v6175 = vpop.f32.mrb[0].mxu0
        %v6176 = vadd.f32 0.0, %v6175
        %v6177 = vpop.f32.mrb[0].mxu0
        %v6178 = vadd.f32 0.0, %v6177
        %v6179 = vpop.f32.mrb[0].mxu0
        %v6180 = vadd.f32 0.0, %v6179
        %v6181 = vpop.f32.mrb[0].mxu0
        %v6182 = vadd.f32 0.0, %v6181
        %6183 = vmatprep.mubr.bf16.mxu0 0
        %6184 = vmatmul.mubr.bf16.gmra.mrb[0].mxu0 %v6032
        %v6185 = vpop.f32.mrb[0].mxu0
        %v6186 = vadd.f32 0.0, %v6185
        %v6187 = vpop.f32.mrb[0].mxu0
        %v6188 = vadd.f32 0.0, %v6187
        %v6189 = vpop.f32.mrb[0].mxu0
        %v6190 = vadd.f32 0.0, %v6189
        %v6191 = vpop.f32.mrb[0].mxu0
        %v6192 = vadd.f32 0.0, %v6191
        %6193 = vmatprep.mubr.bf16.mxu0 0
        %6194 = vmatmul.mubr.bf16.gmra.mrb[0].mxu0 %v6035
        %v6195 = vpop.f32.mrb[0].mxu0
        %v6196 = vadd.f32 0.0, %v6195
        %v6197 = vpop.f32.mrb[0].mxu0
        %v6198 = vadd.f32 0.0, %v6197
        %v6199 = vpop.f32.mrb[0].mxu0
        %v6200 = vadd.f32 0.0, %v6199
        %v6201 = vpop.f32.mrb[0].mxu0
        %v6202 = vadd.f32 0.0, %v6201
        %6203 = vmatprep.mubr.bf16.mxu0 0
        %6204 = vmatmul.mubr.bf16.gmra.mrb[0].mxu0 %v6038
        %v6205 = vpop.f32.mrb[0].mxu0
        %v6206 = vadd.f32 0.0, %v6205
        %v6207 = vpop.f32.mrb[0].mxu0
        %v6208 = vadd.f32 0.0, %v6207
        %v6209 = vpop.f32.mrb[0].mxu0
        %v6210 = vadd.f32 0.0, %v6209
        %v6211 = vpop.f32.mrb[0].mxu0
        %v6212 = vadd.f32 0.0, %v6211
        %6213 = vmatprep.mubr.bf16.mxu0 0
        %6214 = vmatmul.mubr.bf16.gmra.mrb[0].mxu0 %v6041
        %v6215 = vpop.f32.mrb[0].mxu0
        %v6216 = vadd.f32 0.0, %v6215
        %v6217 = vpop.f32.mrb[0].mxu0
        %v6218 = vadd.f32 0.0, %v6217
        %v6219 = vpop.f32.mrb[0].mxu0
        %v6220 = vadd.f32 0.0, %v6219
        %v6221 = vpop.f32.mrb[0].mxu0
        %v6222 = vadd.f32 0.0, %v6221
        %6223 = vmatprep.mubr.bf16.mxu0 0
        %6224 = vmatmul.mubr.bf16.gmra.mrb[0].mxu0 %v6044
        %v6225 = vpop.f32.mrb[0].mxu0
        %v6226 = vadd.f32 0.0, %v6225
        %v6227 = vpop.f32.mrb[0].mxu0
        %v6228 = vadd.f32 0.0, %v6227
        %v6229 = vpop.f32.mrb[0].mxu0
        %v6230 = vadd.f32 0.0, %v6229
        %v6231 = vpop.f32.mrb[0].mxu0
        %v6232 = vadd.f32 0.0, %v6231
        %6233 = vmatprep.mubr.bf16.mxu0 0
        %6234 = vmatmul.mubr.bf16.gmra.mrb[0].mxu0 %v6047
        %v6235 = vpop.f32.mrb[0].mxu0
        %v6236 = vadd.f32 0.0, %v6235
        %v6237 = vpop.f32.mrb[0].mxu0
        %v6238 = vadd.f32 0.0, %v6237
        %v6239 = vpop.f32.mrb[0].mxu0
        %v6240 = vadd.f32 0.0, %v6239
        %v6241 = vpop.f32.mrb[0].mxu0
        %v6242 = vadd.f32 0.0, %v6241
        %6243 = vmatprep.mubr.bf16.mxu0 0
        %6244 = vmatmul.mubr.bf16.gmra.mrb[0].mxu0 %v6050
        %v6245 = vpop.f32.mrb[0].mxu0
        %v6246 = vadd.f32 0.0, %v6245
        %v6247 = vpop.f32.mrb[0].mxu0
        %v6248 = vadd.f32 0.0, %v6247
        %v6249 = vpop.f32.mrb[0].mxu0
        %v6250 = vadd.f32 0.0, %v6249
        %v6251 = vpop.f32.mrb[0].mxu0
        %v6252 = vadd.f32 0.0, %v6251
        %6253 = vmatprep.mubr.bf16.mxu0 0
        %6254 = vmatmul.mubr.bf16.gmra.mrb[0].mxu0 %v6053
        %v6255 = vpop.f32.mrb[0].mxu0
        %v6256 = vadd.f32 0.0, %v6255
        %v6257 = vpop.f32.mrb[0].mxu0
        %v6258 = vadd.f32 0.0, %v6257
        %v6259 = vpop.f32.mrb[0].mxu0
        %v6260 = vadd.f32 0.0, %v6259
        %v6261 = vpop.f32.mrb[0].mxu0
        %v6262 = vadd.f32 0.0, %v6261
        %6263 = vmatprep.mubr.bf16.mxu0 0
        %6264 = vmatmul.mubr.bf16.gmra.mrb[0].mxu0 %v6056
        %v6265 = vpop.f32.mrb[0].mxu0
        %v6266 = vadd.f32 0.0, %v6265
        %v6267 = vpop.f32.mrb[0].mxu0
        %v6268 = vadd.f32 0.0, %v6267
        %v6269 = vpop.f32.mrb[0].mxu0
        %v6270 = vadd.f32 0.0, %v6269
        %v6271 = vpop.f32.mrb[0].mxu0
        %v6272 = vadd.f32 0.0, %v6271
        %6273 = vmatprep.mubr.bf16.mxu0 0
        %6274 = vmatmul.mubr.bf16.gmra.mrb[0].mxu0 %v6059
        %v6275 = vpop.f32.mrb[0].mxu0
        %v6276 = vadd.f32 0.0, %v6275
        %v6277 = vpop.f32.mrb[0].mxu0
        %v6278 = vadd.f32 0.0, %v6277
        %v6279 = vpop.f32.mrb[0].mxu0
        %v6280 = vadd.f32 0.0, %v6279
        %v6281 = vpop.f32.mrb[0].mxu0
        %v6282 = vadd.f32 0.0, %v6281
        %6283 = vmatprep.mubr.bf16.mxu0 0
        %6284 = vmatmul.mubr.bf16.gmra.mrb[0].mxu0 %v6062
        %v6285 = vpop.f32.mrb[0].mxu0
        %v6286 = vadd.f32 0.0, %v6285
        %v6287 = vpop.f32.mrb[0].mxu0
        %v6288 = vadd.f32 0.0, %v6287
        %v6289 = vpop.f32.mrb[0].mxu0
        %v6290 = vadd.f32 0.0, %v6289
        %v6291 = vpop.f32.mrb[0].mxu0
        %v6292 = vadd.f32 0.0, %v6291
        %6293 = vmatprep.mubr.bf16.mxu0 0
        %6294 = vmatmul.mubr.bf16.gmra.mrb[0].mxu0 %v6065
        %v6295 = vpop.f32.mrb[0].mxu0
        %v6296 = vadd.f32 0.0, %v6295
        %v6297 = vpop.f32.mrb[0].mxu0
        %v6298 = vadd.f32 0.0, %v6297
        %v6299 = vpop.f32.mrb[0].mxu0
        %v6300 = vadd.f32 0.0, %v6299
        %v6301 = vpop.f32.mrb[0].mxu0
        %v6302 = vadd.f32 0.0, %v6301
        %6303 = vmatprep.mubr.bf16.mxu0 0
        %6304 = vmatmul.mubr.bf16.gmra.mrb[0].mxu0 %v6068
        %v6305 = vpop.f32.mrb[0].mxu0
        %v6306 = vadd.f32 0.0, %v6305
        %v6307 = vpop.f32.mrb[0].mxu0
        %v6308 = vadd.f32 0.0, %v6307
        %v6309 = vpop.f32.mrb[0].mxu0
        %v6310 = vadd.f32 0.0, %v6309
        %v6311 = vpop.f32.mrb[0].mxu0
        %v6312 = vadd.f32 0.0, %v6311
        %6313 = vmatprep.mubr.bf16.mxu0 0
        %6314 = vmatmul.mubr.bf16.gmra.mrb[0].mxu0 %v6071
        %v6315 = vpop.f32.mrb[0].mxu0
        %v6316 = vadd.f32 0.0, %v6315
        %v6317 = vpop.f32.mrb[0].mxu0
        %v6318 = vadd.f32 0.0, %v6317
        %v6319 = vpop.f32.mrb[0].mxu0
        %v6320 = vadd.f32 0.0, %v6319
        %v6321 = vpop.f32.mrb[0].mxu0
        %v6322 = vadd.f32 0.0, %v6321
        %6323 = vmatprep.mubr.bf16.mxu0 0
        %6324 = vmatmul.mubr.bf16.gmra.mrb[0].mxu0 %v6074
        %v6325 = vpop.f32.mrb[0].mxu0
        %v6326 = vadd.f32 0.0, %v6325
        %v6327 = vpop.f32.mrb[0].mxu0
        %v6328 = vadd.f32 0.0, %v6327
        %v6329 = vpop.f32.mrb[0].mxu0
        %v6330 = vadd.f32 0.0, %v6329
        %v6331 = vpop.f32.mrb[0].mxu0
        %v6332 = vadd.f32 0.0, %v6331
        %6333 = vmatprep.mubr.bf16.mxu0 0
        %6334 = vmatmul.mubr.bf16.gmra.mrb[0].mxu0 %v6077
        %v6335 = vpop.f32.mrb[0].mxu0
        %v6336 = vadd.f32 0.0, %v6335
        %v6337 = vpop.f32.mrb[0].mxu0
        %v6338 = vadd.f32 0.0, %v6337
        %v6339 = vpop.f32.mrb[0].mxu0
        %v6340 = vadd.f32 0.0, %v6339
        %v6341 = vpop.f32.mrb[0].mxu0
        %v6342 = vadd.f32 0.0, %v6341
        %6343 = vmatprep.mubr.bf16.mxu0 0
        %6344 = vmatmul.mubr.bf16.gmra.mrb[0].mxu0 %v6080
        %v6345 = vpop.f32.mrb[0].mxu0
        %v6346 = vadd.f32 0.0, %v6345
        %v6347 = vpop.f32.mrb[0].mxu0
        %v6348 = vadd.f32 0.0, %v6347
        %v6349 = vpop.f32.mrb[0].mxu0
        %v6350 = vadd.f32 0.0, %v6349
        %v6351 = vpop.f32.mrb[0].mxu0
        %v6352 = vadd.f32 0.0, %v6351
        %6353 = vmatprep.mubr.bf16.mxu0 0
        %6354 = vmatmul.mubr.bf16.gmra.mrb[0].mxu0 %v6083
        %v6355 = vpop.f32.mrb[0].mxu0
        %v6356 = vadd.f32 0.0, %v6355
        %v6357 = vpop.f32.mrb[0].mxu0
        %v6358 = vadd.f32 0.0, %v6357
        %v6359 = vpop.f32.mrb[0].mxu0
        %v6360 = vadd.f32 0.0, %v6359
        %v6361 = vpop.f32.mrb[0].mxu0
        %v6362 = vadd.f32 0.0, %v6361
        %6363 = vmatprep.mubr.bf16.mxu0 0
        %6364 = vmatmul.mubr.bf16.gmra.mrb[0].mxu0 %v6086
        %v6365 = vpop.f32.mrb[0].mxu0
        %v6366 = vadd.f32 0.0, %v6365
        %v6367 = vpop.f32.mrb[0].mxu0
        %v6368 = vadd.f32 0.0, %v6367
        %v6369 = vpop.f32.mrb[0].mxu0
        %v6370 = vadd.f32 0.0, %v6369
        %v6371 = vpop.f32.mrb[0].mxu0
        %v6372 = vadd.f32 0.0, %v6371
        %6373 = vmatprep.mubr.bf16.mxu0 0
        %6374 = vmatmul.mubr.bf16.gmra.mrb[0].mxu0 %v6089
        %v6375 = vpop.f32.mrb[0].mxu0
        %v6376 = vpop.f32.mrb[0].mxu0
        %v6377 = vadd.f32 0.0, %v6376
        %v6378 = vpop.f32.mrb[0].mxu0
        %v6379 = vpop.f32.mrb[0].mxu0
        %v6380 = vadd.f32 0.0, %v6379
        %6381 = vmatprep.mubr.bf16.mxu0 0
        %6382 = vmatmul.mubr.bf16.gmra.mrb[0].mxu0 %v6092
        %v6383 = vpop.f32.mrb[0].mxu0
        %v6384 = vpop.f32.mrb[0].mxu0
        %v6385 = vadd.f32 0.0, %v6384
        %v6386 = vpop.f32.mrb[0].mxu0
        %v6387 = vpop.f32.mrb[0].mxu0
        %v6388 = vadd.f32 0.0, %v6387
        %6389 = vdwg.mxu0
        %6390 = vmatprep.subr.bf16.mxu0 0
        %6391 = vmatpush1.bf16.msra.mxu0 %v6003
        %6392 = vmatprep.subr.bf16.mxu0 0
        %6393 = vmatpush1.bf16.msra.mxu0 %v6006
        %6394 = vmatprep.subr.bf16.mxu0 0
        %6395 = vmatpush1.bf16.msra.mxu0 0
        %6396 = vmatprep.subr.bf16.mxu0 0
        %6397 = vmatpush1.bf16.msra.mxu0 0
        %6398 = vmatprep.subr.bf16.mxu0 0
        %6399 = vmatpush1.bf16.msra.mxu0 0
        %6400 = vmatprep.subr.bf16.mxu0 0
        %6401 = vmatpush1.bf16.msra.mxu0 0
        %6402 = vmatprep.subr.bf16.mxu0 0
        %6403 = vmatpush1.bf16.msra.mxu0 0
        %6404 = vmatprep.subr.bf16.mxu0 0
        %6405 = vmatpush1.bf16.msra.mxu0 0
        %6406 = vmatprep.subr.bf16.mxu0 0
        %6407 = vmatpush1.bf16.msra.mxu0 0
        %6408 = vmatprep.subr.bf16.mxu0 0
        %6409 = vmatpush1.bf16.msra.mxu0 0
        %6410 = vmatprep.subr.bf16.mxu0 0
        %6411 = vmatpush1.bf16.msra.mxu0 0
        %6412 = vmatprep.subr.bf16.mxu0 0
        %6413 = vmatpush1.bf16.msra.mxu0 0
        %6414 = vmatprep.subr.bf16.mxu0 0
        %6415 = vmatpush1.bf16.msra.mxu0 0
        %6416 = vmatprep.subr.bf16.mxu0 0
        %6417 = vmatpush1.bf16.msra.mxu0 0
        %6418 = vmatprep.subr.bf16.mxu0 0
        %6419 = vmatpush1.bf16.msra.mxu0 0
        %6420 = vmatprep.subr.bf16.mxu0 0
        %6421 = vmatpush1.bf16.msra.mxu0 0
        %6422 = vmatprep.mubr.bf16.mxu0 0
        %6423 = vmatmul.mubr.bf16.gmra.mrb[0].mxu0 %v6014
        %v6424 = vpop.f32.mrb[0].mxu0
        %v6425 = vpop.f32.mrb[0].mxu0
        %v6426 = vpop.f32.mrb[0].mxu0
        %v6427 = vpop.f32.mrb[0].mxu0
        %6428 = vmatprep.mubr.bf16.mxu0 0
        %6429 = vmatmul.mubr.bf16.gmra.mrb[0].mxu0 %v6017
        %v6430 = vpop.f32.mrb[0].mxu0
        %v6431 = vpop.f32.mrb[0].mxu0
        %v6432 = vpop.f32.mrb[0].mxu0
        %v6433 = vpop.f32.mrb[0].mxu0
        %6434 = vmatprep.mubr.bf16.mxu0 0
        %6435 = vmatmul.mubr.bf16.gmra.mrb[0].mxu0 %v6020
        %v6436 = vpop.f32.mrb[0].mxu0
        %v6437 = vpop.f32.mrb[0].mxu0
        %v6438 = vpop.f32.mrb[0].mxu0
        %v6439 = vpop.f32.mrb[0].mxu0
        %6440 = vmatprep.mubr.bf16.mxu0 0
        %6441 = vmatmul.mubr.bf16.gmra.mrb[0].mxu0 %v6023
        %v6442 = vpop.f32.mrb[0].mxu0
        %v6443 = vadd.f32 0.0, %v6442
        %v6444 = vpop.f32.mrb[0].mxu0
        %v6445 = vpop.f32.mrb[0].mxu0
        %v6446 = vadd.f32 0.0, %v6445
        %v6447 = vpop.f32.mrb[0].mxu0
        %6448 = vmatprep.mubr.bf16.mxu0 0
        %6449 = vmatmul.mubr.bf16.gmra.mrb[0].mxu0 %v6026
        %v6450 = vpop.f32.mrb[0].mxu0
        %v6451 = vadd.f32 0.0, %v6450
        %v6452 = vpop.f32.mrb[0].mxu0
        %v6453 = vpop.f32.mrb[0].mxu0
        %v6454 = vadd.f32 0.0, %v6453
        %v6455 = vpop.f32.mrb[0].mxu0
        %6456 = vmatprep.mubr.bf16.mxu0 0
        %6457 = vmatmul.mubr.bf16.gmra.mrb[0].mxu0 %v6029
        %v6458 = vpop.f32.mrb[0].mxu0
        %v6459 = vadd.f32 0.0, %v6458
        %v6460 = vpop.f32.mrb[0].mxu0
        %v6461 = vpop.f32.mrb[0].mxu0
        %v6462 = vadd.f32 0.0, %v6461
        %v6463 = vpop.f32.mrb[0].mxu0
        %6464 = vmatprep.mubr.bf16.mxu0 0
        %6465 = vmatmul.mubr.bf16.gmra.mrb[0].mxu0 %v6032
        %v6466 = vpop.f32.mrb[0].mxu0
        %v6467 = vadd.f32 0.0, %v6466
        %v6468 = vpop.f32.mrb[0].mxu0
        %v6469 = vpop.f32.mrb[0].mxu0
        %v6470 = vadd.f32 0.0, %v6469
        %v6471 = vpop.f32.mrb[0].mxu0
        %6472 = vmatprep.mubr.bf16.mxu0 0
        %6473 = vmatmul.mubr.bf16.gmra.mrb[0].mxu0 %v6035
        %v6474 = vpop.f32.mrb[0].mxu0
        %v6475 = vadd.f32 0.0, %v6474
        %v6476 = vpop.f32.mrb[0].mxu0
        %v6477 = vpop.f32.mrb[0].mxu0
        %v6478 = vadd.f32 0.0, %v6477
        %v6479 = vpop.f32.mrb[0].mxu0
        %6480 = vmatprep.mubr.bf16.mxu0 0
        %6481 = vmatmul.mubr.bf16.gmra.mrb[0].mxu0 %v6038
        %v6482 = vpop.f32.mrb[0].mxu0
        %v6483 = vadd.f32 0.0, %v6482
        %v6484 = vpop.f32.mrb[0].mxu0
        %v6485 = vpop.f32.mrb[0].mxu0
        %v6486 = vadd.f32 0.0, %v6485
        %v6487 = vpop.f32.mrb[0].mxu0
        %6488 = vmatprep.mubr.bf16.mxu0 0
        %6489 = vmatmul.mubr.bf16.gmra.mrb[0].mxu0 %v6041
        %v6490 = vpop.f32.mrb[0].mxu0
        %v6491 = vadd.f32 0.0, %v6490
        %v6492 = vpop.f32.mrb[0].mxu0
        %v6493 = vpop.f32.mrb[0].mxu0
        %v6494 = vadd.f32 0.0, %v6493
        %v6495 = vpop.f32.mrb[0].mxu0
        %6496 = vmatprep.mubr.bf16.mxu0 0
        %6497 = vmatmul.mubr.bf16.gmra.mrb[0].mxu0 %v6044
        %v6498 = vpop.f32.mrb[0].mxu0
        %v6499 = vadd.f32 0.0, %v6498
        %v6500 = vpop.f32.mrb[0].mxu0
        %v6501 = vpop.f32.mrb[0].mxu0
        %v6502 = vadd.f32 0.0, %v6501
        %v6503 = vpop.f32.mrb[0].mxu0
        %6504 = vmatprep.mubr.bf16.mxu0 0
        %6505 = vmatmul.mubr.bf16.gmra.mrb[0].mxu0 %v6047
        %v6506 = vpop.f32.mrb[0].mxu0
        %v6507 = vadd.f32 0.0, %v6506
        %v6508 = vpop.f32.mrb[0].mxu0
        %v6509 = vpop.f32.mrb[0].mxu0
        %v6510 = vadd.f32 0.0, %v6509
        %v6511 = vpop.f32.mrb[0].mxu0
        %6512 = vmatprep.mubr.bf16.mxu0 0
        %6513 = vmatmul.mubr.bf16.gmra.mrb[0].mxu0 %v6050
        %v6514 = vpop.f32.mrb[0].mxu0
        %v6515 = vadd.f32 0.0, %v6514
        %v6516 = vpop.f32.mrb[0].mxu0
        %v6517 = vpop.f32.mrb[0].mxu0
        %v6518 = vadd.f32 0.0, %v6517
        %v6519 = vpop.f32.mrb[0].mxu0
        %6520 = vmatprep.mubr.bf16.mxu0 0
        %6521 = vmatmul.mubr.bf16.gmra.mrb[0].mxu0 %v6053
        %v6522 = vpop.f32.mrb[0].mxu0
        %v6523 = vadd.f32 0.0, %v6522
        %v6524 = vpop.f32.mrb[0].mxu0
        %v6525 = vpop.f32.mrb[0].mxu0
        %v6526 = vadd.f32 0.0, %v6525
        %v6527 = vpop.f32.mrb[0].mxu0
        %6528 = vmatprep.mubr.bf16.mxu0 0
        %6529 = vmatmul.mubr.bf16.gmra.mrb[0].mxu0 %v6056
        %v6530 = vpop.f32.mrb[0].mxu0
        %v6531 = vadd.f32 0.0, %v6530
        %v6532 = vpop.f32.mrb[0].mxu0
        %v6533 = vpop.f32.mrb[0].mxu0
        %v6534 = vadd.f32 0.0, %v6533
        %v6535 = vpop.f32.mrb[0].mxu0
        %6536 = vmatprep.mubr.bf16.mxu0 0
        %6537 = vmatmul.mubr.bf16.gmra.mrb[0].mxu0 %v6059
        %v6538 = vpop.f32.mrb[0].mxu0
        %v6539 = vadd.f32 0.0, %v6538
        %v6540 = vpop.f32.mrb[0].mxu0
        %v6541 = vpop.f32.mrb[0].mxu0
        %v6542 = vadd.f32 0.0, %v6541
        %v6543 = vpop.f32.mrb[0].mxu0
        %6544 = vmatprep.mubr.bf16.mxu0 0
        %6545 = vmatmul.mubr.bf16.gmra.mrb[0].mxu0 %v6062
        %v6546 = vpop.f32.mrb[0].mxu0
        %v6547 = vadd.f32 0.0, %v6546
        %v6548 = vpop.f32.mrb[0].mxu0
        %v6549 = vpop.f32.mrb[0].mxu0
        %v6550 = vadd.f32 0.0, %v6549
        %v6551 = vpop.f32.mrb[0].mxu0
        %6552 = vmatprep.mubr.bf16.mxu0 0
        %6553 = vmatmul.mubr.bf16.gmra.mrb[0].mxu0 %v6065
        %v6554 = vpop.f32.mrb[0].mxu0
        %v6555 = vadd.f32 0.0, %v6554
        %v6556 = vpop.f32.mrb[0].mxu0
        %v6557 = vpop.f32.mrb[0].mxu0
        %v6558 = vadd.f32 0.0, %v6557
        %v6559 = vpop.f32.mrb[0].mxu0
        %6560 = vmatprep.mubr.bf16.mxu0 0
        %6561 = vmatmul.mubr.bf16.gmra.mrb[0].mxu0 %v6068
        %v6562 = vpop.f32.mrb[0].mxu0
        %v6563 = vadd.f32 0.0, %v6562
        %v6564 = vpop.f32.mrb[0].mxu0
        %v6565 = vpop.f32.mrb[0].mxu0
        %v6566 = vadd.f32 0.0, %v6565
        %v6567 = vpop.f32.mrb[0].mxu0
        %6568 = vmatprep.mubr.bf16.mxu0 0
        %6569 = vmatmul.mubr.bf16.gmra.mrb[0].mxu0 %v6071
        %v6570 = vpop.f32.mrb[0].mxu0
        %v6571 = vadd.f32 0.0, %v6570
        %v6572 = vpop.f32.mrb[0].mxu0
        %v6573 = vpop.f32.mrb[0].mxu0
        %v6574 = vadd.f32 0.0, %v6573
        %v6575 = vpop.f32.mrb[0].mxu0
        %6576 = vmatprep.mubr.bf16.mxu0 0
        %6577 = vmatmul.mubr.bf16.gmra.mrb[0].mxu0 %v6074
        %v6578 = vpop.f32.mrb[0].mxu0
        %v6579 = vadd.f32 0.0, %v6578
        %v6580 = vpop.f32.mrb[0].mxu0
        %v6581 = vpop.f32.mrb[0].mxu0
        %v6582 = vadd.f32 0.0, %v6581
        %v6583 = vpop.f32.mrb[0].mxu0
        %6584 = vmatprep.mubr.bf16.mxu0 0
        %6585 = vmatmul.mubr.bf16.gmra.mrb[0].mxu0 %v6077
        %v6586 = vpop.f32.mrb[0].mxu0
        %v6587 = vadd.f32 0.0, %v6586
        %v6588 = vpop.f32.mrb[0].mxu0
        %v6589 = vpop.f32.mrb[0].mxu0
        %v6590 = vadd.f32 0.0, %v6589
        %v6591 = vpop.f32.mrb[0].mxu0
        %6592 = vmatprep.mubr.bf16.mxu0 0
        %6593 = vmatmul.mubr.bf16.gmra.mrb[0].mxu0 %v6080
        %v6594 = vpop.f32.mrb[0].mxu0
        %v6595 = vadd.f32 0.0, %v6594
        %v6596 = vpop.f32.mrb[0].mxu0
        %v6597 = vpop.f32.mrb[0].mxu0
        %v6598 = vadd.f32 0.0, %v6597
        %v6599 = vpop.f32.mrb[0].mxu0
        %6600 = vmatprep.mubr.bf16.mxu0 0
        %6601 = vmatmul.mubr.bf16.gmra.mrb[0].mxu0 %v6083
        %v6602 = vpop.f32.mrb[0].mxu0
        %v6603 = vadd.f32 0.0, %v6602
        %v6604 = vpop.f32.mrb[0].mxu0
        %v6605 = vpop.f32.mrb[0].mxu0
        %v6606 = vadd.f32 0.0, %v6605
        %v6607 = vpop.f32.mrb[0].mxu0
        %6608 = vmatprep.mubr.bf16.mxu0 0
        %6609 = vmatmul.mubr.bf16.gmra.mrb[0].mxu0 %v6086
        %v6610 = vpop.f32.mrb[0].mxu0
        %v6611 = vadd.f32 0.0, %v6610
        %v6612 = vpop.f32.mrb[0].mxu0
        %v6613 = vpop.f32.mrb[0].mxu0
        %v6614 = vadd.f32 0.0, %v6613
        %v6615 = vpop.f32.mrb[0].mxu0
        %6616 = vmatprep.mubr.bf16.mxu0 0
        %6617 = vmatmul.mubr.bf16.gmra.mrb[0].mxu0 %v6089
        %v6618 = vpop.f32.mrb[0].mxu0
        %v6619 = vadd.f32 0.0, %v6618
        %v6620 = vpop.f32.mrb[0].mxu0
        %v6621 = vpop.f32.mrb[0].mxu0
        %v6622 = vadd.f32 0.0, %v6621
        %v6623 = vpop.f32.mrb[0].mxu0
        %6624 = vmatprep.mubr.bf16.mxu0 0
        %6625 = vmatmul.mubr.bf16.gmra.mrb[0].mxu0 %v6092
        %v6626 = vpop.f32.mrb[0].mxu0
        %v6627 = vadd.f32 0.0, %v6626
        %v6628 = vpop.f32.mrb[0].mxu0
        %v6629 = vpop.f32.mrb[0].mxu0
        %v6630 = vadd.f32 0.0, %v6629
        %v6631 = vpop.f32.mrb[0].mxu0
        %6632 = vdwg.mxu0
        %v6633 = vld [vmem:[%s17] sm:$0x1]
        %v6635 = vlaneseq
        %v6636 = vshrl.u32 %v6635, 7
        %v6637 = vsub.s32 0, %v6636
        %v6638 = vrot.slane %v6633, %v6637
        %v6640 = vadd.f32 %v6638, %v6129
        %v6641 = vadd.f32 %v6638, %v6132
        %v6642 = vadd.f32 %v6638, %v6140
        %v6643 = vadd.f32 %v6638, %v6146
        %v6644 = vadd.f32 %v6638, %v6156
        %v6645 = vadd.f32 %v6638, %v6160
        %v6646 = vadd.f32 %v6638, %v6170
        %v6647 = vadd.f32 %v6638, %v6176
        %v6648 = vadd.f32 %v6638, %v6186
        %v6649 = vadd.f32 %v6638, %v6190
        %v6650 = vadd.f32 %v6638, %v6200
        %v6651 = vadd.f32 %v6638, %v6206
        %v6652 = vadd.f32 %v6638, %v6216
        %v6653 = vadd.f32 %v6638, %v6220
        %v6654 = vadd.f32 %v6638, %v6230
        %v6655 = vadd.f32 %v6638, %v6236
        %v6656 = vadd.f32 %v6638, %v6246
        %v6657 = vadd.f32 %v6638, %v6250
        %v6658 = vadd.f32 %v6638, %v6260
        %v6659 = vadd.f32 %v6638, %v6266
        %v6660 = vadd.f32 %v6638, %v6276
        %v6661 = vadd.f32 %v6638, %v6280
        %v6662 = vadd.f32 %v6638, %v6290
        %v6663 = vadd.f32 %v6638, %v6296
        %v6664 = vadd.f32 %v6638, %v6306
        %v6665 = vadd.f32 %v6638, %v6310
        %v6666 = vadd.f32 %v6638, %v6320
        %v6667 = vadd.f32 %v6638, %v6326
        %v6668 = vadd.f32 %v6638, %v6336
        %v6669 = vadd.f32 %v6638, %v6340
        %v6670 = vadd.f32 %v6638, %v6350
        %v6671 = vadd.f32 %v6638, %v6356
        %v6720 = vrot.slane %v6129, 1
        %v6721 = vrot.slane %v6132, 1
        %v6722 = vsel %vm4369, %v6720, %v6721
        %v6723 = vrot.slane %v6137, 1
        %v6724 = vsel %vm4369, %v6721, %v6723
        %v6725 = vrot.slane %v6140, 1
        %v6726 = vrot.slane %v6146, 1
        %v6727 = vsel %vm4369, %v6725, %v6726
        %v6728 = vrot.slane %v6150, 1
        %v6729 = vsel %vm4369, %v6726, %v6728
        %v6730 = vrot.slane %v6156, 1
        %v6731 = vrot.slane %v6160, 1
        %v6732 = vsel %vm4369, %v6730, %v6731
        %v6733 = vrot.slane %v6166, 1
        %v6734 = vsel %vm4369, %v6731, %v6733
        %v6735 = vrot.slane %v6170, 1
        %v6736 = vrot.slane %v6176, 1
        %v6737 = vsel %vm4369, %v6735, %v6736
        %v6738 = vrot.slane %v6180, 1
        %v6739 = vsel %vm4369, %v6736, %v6738
        %v6740 = vrot.slane %v6186, 1
        %v6741 = vrot.slane %v6190, 1
        %v6742 = vsel %vm4369, %v6740, %v6741
        %v6743 = vrot.slane %v6196, 1
        %v6744 = vsel %vm4369, %v6741, %v6743
        %v6745 = vrot.slane %v6200, 1
        %v6746 = vrot.slane %v6206, 1
        %v6747 = vsel %vm4369, %v6745, %v6746
        %v6748 = vrot.slane %v6210, 1
        %v6749 = vsel %vm4369, %v6746, %v6748
        %v6750 = vrot.slane %v6216, 1
        %v6751 = vrot.slane %v6220, 1
        %v6752 = vsel %vm4369, %v6750, %v6751
        %v6753 = vrot.slane %v6226, 1
        %v6754 = vsel %vm4369, %v6751, %v6753
        %v6755 = vrot.slane %v6230, 1
        %v6756 = vrot.slane %v6236, 1
        %v6757 = vsel %vm4369, %v6755, %v6756
        %v6758 = vrot.slane %v6240, 1
        %v6759 = vsel %vm4369, %v6756, %v6758
        %v6760 = vrot.slane %v6246, 1
        %v6761 = vrot.slane %v6250, 1
        %v6762 = vsel %vm4369, %v6760, %v6761
        %v6763 = vrot.slane %v6256, 1
        %v6764 = vsel %vm4369, %v6761, %v6763
        %v6765 = vrot.slane %v6260, 1
        %v6766 = vrot.slane %v6266, 1
        %v6767 = vsel %vm4369, %v6765, %v6766
        %v6768 = vrot.slane %v6270, 1
        %v6769 = vsel %vm4369, %v6766, %v6768
        %v6770 = vrot.slane %v6276, 1
        %v6771 = vrot.slane %v6280, 1
        %v6772 = vsel %vm4369, %v6770, %v6771
        %v6773 = vrot.slane %v6286, 1
        %v6774 = vsel %vm4369, %v6771, %v6773
        %v6775 = vrot.slane %v6290, 1
        %v6776 = vrot.slane %v6296, 1
        %v6777 = vsel %vm4369, %v6775, %v6776
        %v6778 = vrot.slane %v6300, 1
        %v6779 = vsel %vm4369, %v6776, %v6778
        %v6780 = vrot.slane %v6306, 1
        %v6781 = vrot.slane %v6310, 1
        %v6782 = vsel %vm4369, %v6780, %v6781
        %v6783 = vrot.slane %v6316, 1
        %v6784 = vsel %vm4369, %v6781, %v6783
        %v6785 = vrot.slane %v6320, 1
        %v6786 = vrot.slane %v6326, 1
        %v6787 = vsel %vm4369, %v6785, %v6786
        %v6788 = vrot.slane %v6330, 1
        %v6789 = vsel %vm4369, %v6786, %v6788
        %v6790 = vrot.slane %v6336, 1
        %v6791 = vrot.slane %v6340, 1
        %v6792 = vsel %vm4369, %v6790, %v6791
        %v6793 = vrot.slane %v6346, 1
        %v6794 = vsel %vm4369, %v6791, %v6793
        %v6795 = vrot.slane %v6350, 1
        %v6796 = vrot.slane %v6356, 1
        %v6797 = vsel %vm4369, %v6795, %v6796
        %v6798 = vrot.slane %v6360, 1
        %v6799 = vsel %vm4369, %v6796, %v6798
        %6800 = vrot.lane.b32.xlu0 %v6722, 96
        %v6801 = vpop.permute.xlu0 %6800
        %6802 = vrot.lane.b32.xlu0 %v6724, 96
        %v6803 = vpop.permute.xlu0 %6802
        %6804 = vrot.lane.b32.xlu0 %v6727, 96
        %v6805 = vpop.permute.xlu0 %6804
        %6806 = vrot.lane.b32.xlu0 %v6729, 96
        %v6807 = vpop.permute.xlu0 %6806
        %6808 = vrot.lane.b32.xlu0 %v6732, 96
        %v6809 = vpop.permute.xlu0 %6808
        %6810 = vrot.lane.b32.xlu0 %v6734, 96
        %v6811 = vpop.permute.xlu0 %6810
        %6812 = vrot.lane.b32.xlu0 %v6737, 96
        %v6813 = vpop.permute.xlu0 %6812
        %6814 = vrot.lane.b32.xlu0 %v6739, 96
        %v6815 = vpop.permute.xlu0 %6814
        %6816 = vrot.lane.b32.xlu0 %v6742, 96
        %v6817 = vpop.permute.xlu0 %6816
        %6818 = vrot.lane.b32.xlu0 %v6744, 96
        %v6819 = vpop.permute.xlu0 %6818
        %6820 = vrot.lane.b32.xlu0 %v6747, 96
        %v6821 = vpop.permute.xlu0 %6820
        %6822 = vrot.lane.b32.xlu0 %v6749, 96
        %v6823 = vpop.permute.xlu0 %6822
        %6824 = vrot.lane.b32.xlu0 %v6752, 96
        %v6825 = vpop.permute.xlu0 %6824
        %6826 = vrot.lane.b32.xlu0 %v6754, 96
        %v6827 = vpop.permute.xlu0 %6826
        %6828 = vrot.lane.b32.xlu0 %v6757, 96
        %v6829 = vpop.permute.xlu0 %6828
        %6830 = vrot.lane.b32.xlu0 %v6759, 96
        %v6831 = vpop.permute.xlu0 %6830
        %6832 = vrot.lane.b32.xlu0 %v6762, 96
        %v6833 = vpop.permute.xlu0 %6832
        %6834 = vrot.lane.b32.xlu0 %v6764, 96
        %v6835 = vpop.permute.xlu0 %6834
        %6836 = vrot.lane.b32.xlu0 %v6767, 96
        %v6837 = vpop.permute.xlu0 %6836
        %6838 = vrot.lane.b32.xlu0 %v6769, 96
        %v6839 = vpop.permute.xlu0 %6838
        %6840 = vrot.lane.b32.xlu0 %v6772, 96
        %v6841 = vpop.permute.xlu0 %6840
        %6842 = vrot.lane.b32.xlu0 %v6774, 96
        %v6843 = vpop.permute.xlu0 %6842
        %6844 = vrot.lane.b32.xlu0 %v6777, 96
        %v6845 = vpop.permute.xlu0 %6844
        %6846 = vrot.lane.b32.xlu0 %v6779, 96
        %v6847 = vpop.permute.xlu0 %6846
        %6848 = vrot.lane.b32.xlu0 %v6782, 96
        %v6849 = vpop.permute.xlu0 %6848
        %6850 = vrot.lane.b32.xlu0 %v6784, 96
        %v6851 = vpop.permute.xlu0 %6850
        %6852 = vrot.lane.b32.xlu0 %v6787, 96
        %v6853 = vpop.permute.xlu0 %6852
        %6854 = vrot.lane.b32.xlu0 %v6789, 96
        %v6855 = vpop.permute.xlu0 %6854
        %6856 = vrot.lane.b32.xlu0 %v6792, 96
        %v6857 = vpop.permute.xlu0 %6856
        %6858 = vrot.lane.b32.xlu0 %v6794, 96
        %v6859 = vpop.permute.xlu0 %6858
        %6860 = vrot.lane.b32.xlu0 %v6797, 96
        %v6861 = vpop.permute.xlu0 %6860
        %6862 = vrot.lane.b32.xlu0 %v6799, 96
        %v6863 = vpop.permute.xlu0 %6862
        %v6896 = vadd.f32 %v6640, %v6801
        %v6897 = vadd.f32 %v6641, %v6803
        %v6898 = vadd.f32 %v6642, %v6805
        %v6899 = vadd.f32 %v6643, %v6807
        %v6900 = vadd.f32 %v6644, %v6809
        %v6901 = vadd.f32 %v6645, %v6811
        %v6902 = vadd.f32 %v6646, %v6813
        %v6903 = vadd.f32 %v6647, %v6815
        %v6904 = vadd.f32 %v6648, %v6817
        %v6905 = vadd.f32 %v6649, %v6819
        %v6906 = vadd.f32 %v6650, %v6821
        %v6907 = vadd.f32 %v6651, %v6823
        %v6908 = vadd.f32 %v6652, %v6825
        %v6909 = vadd.f32 %v6653, %v6827
        %v6910 = vadd.f32 %v6654, %v6829
        %v6911 = vadd.f32 %v6655, %v6831
        %v6912 = vadd.f32 %v6656, %v6833
        %v6913 = vadd.f32 %v6657, %v6835
        %v6914 = vadd.f32 %v6658, %v6837
        %v6915 = vadd.f32 %v6659, %v6839
        %v6916 = vadd.f32 %v6660, %v6841
        %v6917 = vadd.f32 %v6661, %v6843
        %v6918 = vadd.f32 %v6662, %v6845
        %v6919 = vadd.f32 %v6663, %v6847
        %v6920 = vadd.f32 %v6664, %v6849
        %v6921 = vadd.f32 %v6665, %v6851
        %v6922 = vadd.f32 %v6666, %v6853
        %v6923 = vadd.f32 %v6667, %v6855
        %v6924 = vadd.f32 %v6668, %v6857
        %v6925 = vadd.f32 %v6669, %v6859
        %v6926 = vadd.f32 %v6670, %v6861
        %v6927 = vadd.f32 %v6671, %v6863
        %v6928 = vrot.slane %v6129, 2
        %v6929 = vrot.slane %v6132, 2
        %v6930 = vsel %vm4578, %v6928, %v6929
        %v6931 = vrot.slane %v6137, 2
        %v6932 = vsel %vm4578, %v6929, %v6931
        %v6933 = vrot.slane %v6140, 2
        %v6934 = vrot.slane %v6146, 2
        %v6935 = vsel %vm4578, %v6933, %v6934
        %v6936 = vrot.slane %v6150, 2
        %v6937 = vsel %vm4578, %v6934, %v6936
        %v6938 = vrot.slane %v6156, 2
        %v6939 = vrot.slane %v6160, 2
        %v6940 = vsel %vm4578, %v6938, %v6939
        %v6941 = vrot.slane %v6166, 2
        %v6942 = vsel %vm4578, %v6939, %v6941
        %v6943 = vrot.slane %v6170, 2
        %v6944 = vrot.slane %v6176, 2
        %v6945 = vsel %vm4578, %v6943, %v6944
        %v6946 = vrot.slane %v6180, 2
        %v6947 = vsel %vm4578, %v6944, %v6946
        %v6948 = vrot.slane %v6186, 2
        %v6949 = vrot.slane %v6190, 2
        %v6950 = vsel %vm4578, %v6948, %v6949
        %v6951 = vrot.slane %v6196, 2
        %v6952 = vsel %vm4578, %v6949, %v6951
        %v6953 = vrot.slane %v6200, 2
        %v6954 = vrot.slane %v6206, 2
        %v6955 = vsel %vm4578, %v6953, %v6954
        %v6956 = vrot.slane %v6210, 2
        %v6957 = vsel %vm4578, %v6954, %v6956
        %v6958 = vrot.slane %v6216, 2
        %v6959 = vrot.slane %v6220, 2
        %v6960 = vsel %vm4578, %v6958, %v6959
        %v6961 = vrot.slane %v6226, 2
        %v6962 = vsel %vm4578, %v6959, %v6961
        %v6963 = vrot.slane %v6230, 2
        %v6964 = vrot.slane %v6236, 2
        %v6965 = vsel %vm4578, %v6963, %v6964
        %v6966 = vrot.slane %v6240, 2
        %v6967 = vsel %vm4578, %v6964, %v6966
        %v6968 = vrot.slane %v6246, 2
        %v6969 = vrot.slane %v6250, 2
        %v6970 = vsel %vm4578, %v6968, %v6969
        %v6971 = vrot.slane %v6256, 2
        %v6972 = vsel %vm4578, %v6969, %v6971
        %v6973 = vrot.slane %v6260, 2
        %v6974 = vrot.slane %v6266, 2
        %v6975 = vsel %vm4578, %v6973, %v6974
        %v6976 = vrot.slane %v6270, 2
        %v6977 = vsel %vm4578, %v6974, %v6976
        %v6978 = vrot.slane %v6276, 2
        %v6979 = vrot.slane %v6280, 2
        %v6980 = vsel %vm4578, %v6978, %v6979
        %v6981 = vrot.slane %v6286, 2
        %v6982 = vsel %vm4578, %v6979, %v6981
        %v6983 = vrot.slane %v6290, 2
        %v6984 = vrot.slane %v6296, 2
        %v6985 = vsel %vm4578, %v6983, %v6984
        %v6986 = vrot.slane %v6300, 2
        %v6987 = vsel %vm4578, %v6984, %v6986
        %v6988 = vrot.slane %v6306, 2
        %v6989 = vrot.slane %v6310, 2
        %v6990 = vsel %vm4578, %v6988, %v6989
        %v6991 = vrot.slane %v6316, 2
        %v6992 = vsel %vm4578, %v6989, %v6991
        %v6993 = vrot.slane %v6320, 2
        %v6994 = vrot.slane %v6326, 2
        %v6995 = vsel %vm4578, %v6993, %v6994
        %v6996 = vrot.slane %v6330, 2
        %v6997 = vsel %vm4578, %v6994, %v6996
        %v6998 = vrot.slane %v6336, 2
        %v6999 = vrot.slane %v6340, 2
        %v7000 = vsel %vm4578, %v6998, %v6999
        %v7001 = vrot.slane %v6346, 2
        %v7002 = vsel %vm4578, %v6999, %v7001
        %v7003 = vrot.slane %v6350, 2
        %v7004 = vrot.slane %v6356, 2
        %v7005 = vsel %vm4578, %v7003, %v7004
        %v7006 = vrot.slane %v6360, 2
        %v7007 = vsel %vm4578, %v7004, %v7006
        %7008 = vrot.lane.b32.xlu0 %v6930, 64
        %v7009 = vpop.permute.xlu0 %7008
        %7010 = vrot.lane.b32.xlu0 %v6932, 64
        %v7011 = vpop.permute.xlu0 %7010
        %7012 = vrot.lane.b32.xlu0 %v6935, 64
        %v7013 = vpop.permute.xlu0 %7012
        %7014 = vrot.lane.b32.xlu0 %v6937, 64
        %v7015 = vpop.permute.xlu0 %7014
        %7016 = vrot.lane.b32.xlu0 %v6940, 64
        %v7017 = vpop.permute.xlu0 %7016
        %7018 = vrot.lane.b32.xlu0 %v6942, 64
        %v7019 = vpop.permute.xlu0 %7018
        %7020 = vrot.lane.b32.xlu0 %v6945, 64
        %v7021 = vpop.permute.xlu0 %7020
        %7022 = vrot.lane.b32.xlu0 %v6947, 64
        %v7023 = vpop.permute.xlu0 %7022
        %7024 = vrot.lane.b32.xlu0 %v6950, 64
        %v7025 = vpop.permute.xlu0 %7024
        %7026 = vrot.lane.b32.xlu0 %v6952, 64
        %v7027 = vpop.permute.xlu0 %7026
        %7028 = vrot.lane.b32.xlu0 %v6955, 64
        %v7029 = vpop.permute.xlu0 %7028
        %7030 = vrot.lane.b32.xlu0 %v6957, 64
        %v7031 = vpop.permute.xlu0 %7030
        %7032 = vrot.lane.b32.xlu0 %v6960, 64
        %v7033 = vpop.permute.xlu0 %7032
        %7034 = vrot.lane.b32.xlu0 %v6962, 64
        %v7035 = vpop.permute.xlu0 %7034
        %7036 = vrot.lane.b32.xlu0 %v6965, 64
        %v7037 = vpop.permute.xlu0 %7036
        %7038 = vrot.lane.b32.xlu0 %v6967, 64
        %v7039 = vpop.permute.xlu0 %7038
        %7040 = vrot.lane.b32.xlu0 %v6970, 64
        %v7041 = vpop.permute.xlu0 %7040
        %7042 = vrot.lane.b32.xlu0 %v6972, 64
        %v7043 = vpop.permute.xlu0 %7042
        %7044 = vrot.lane.b32.xlu0 %v6975, 64
        %v7045 = vpop.permute.xlu0 %7044
        %7046 = vrot.lane.b32.xlu0 %v6977, 64
        %v7047 = vpop.permute.xlu0 %7046
        %7048 = vrot.lane.b32.xlu0 %v6980, 64
        %v7049 = vpop.permute.xlu0 %7048
        %7050 = vrot.lane.b32.xlu0 %v6982, 64
        %v7051 = vpop.permute.xlu0 %7050
        %7052 = vrot.lane.b32.xlu0 %v6985, 64
        %v7053 = vpop.permute.xlu0 %7052
        %7054 = vrot.lane.b32.xlu0 %v6987, 64
        %v7055 = vpop.permute.xlu0 %7054
        %7056 = vrot.lane.b32.xlu0 %v6990, 64
        %v7057 = vpop.permute.xlu0 %7056
        %7058 = vrot.lane.b32.xlu0 %v6992, 64
        %v7059 = vpop.permute.xlu0 %7058
        %7060 = vrot.lane.b32.xlu0 %v6995, 64
        %v7061 = vpop.permute.xlu0 %7060
        %7062 = vrot.lane.b32.xlu0 %v6997, 64
        %v7063 = vpop.permute.xlu0 %7062
        %7064 = vrot.lane.b32.xlu0 %v7000, 64
        %v7065 = vpop.permute.xlu0 %7064
        %7066 = vrot.lane.b32.xlu0 %v7002, 64
        %v7067 = vpop.permute.xlu0 %7066
        %7068 = vrot.lane.b32.xlu0 %v7005, 64
        %v7069 = vpop.permute.xlu0 %7068
        %7070 = vrot.lane.b32.xlu0 %v7007, 64
        %v7071 = vpop.permute.xlu0 %7070
        %v7104 = vadd.f32 %v6896, %v7009
        %v7105 = vadd.f32 %v6897, %v7011
        %v7106 = vadd.f32 %v6898, %v7013
        %v7107 = vadd.f32 %v6899, %v7015
        %v7108 = vadd.f32 %v6900, %v7017
        %v7109 = vadd.f32 %v6901, %v7019
        %v7110 = vadd.f32 %v6902, %v7021
        %v7111 = vadd.f32 %v6903, %v7023
        %v7112 = vadd.f32 %v6904, %v7025
        %v7113 = vadd.f32 %v6905, %v7027
        %v7114 = vadd.f32 %v6906, %v7029
        %v7115 = vadd.f32 %v6907, %v7031
        %v7116 = vadd.f32 %v6908, %v7033
        %v7117 = vadd.f32 %v6909, %v7035
        %v7118 = vadd.f32 %v6910, %v7037
        %v7119 = vadd.f32 %v6911, %v7039
        %v7120 = vadd.f32 %v6912, %v7041
        %v7121 = vadd.f32 %v6913, %v7043
        %v7122 = vadd.f32 %v6914, %v7045
        %v7123 = vadd.f32 %v6915, %v7047
        %v7124 = vadd.f32 %v6916, %v7049
        %v7125 = vadd.f32 %v6917, %v7051
        %v7126 = vadd.f32 %v6918, %v7053
        %v7127 = vadd.f32 %v6919, %v7055
        %v7128 = vadd.f32 %v6920, %v7057
        %v7129 = vadd.f32 %v6921, %v7059
        %v7130 = vadd.f32 %v6922, %v7061
        %v7131 = vadd.f32 %v6923, %v7063
        %v7132 = vadd.f32 %v6924, %v7065
        %v7133 = vadd.f32 %v6925, %v7067
        %v7134 = vadd.f32 %v6926, %v7069
        %v7135 = vadd.f32 %v6927, %v7071
        %7138 = vrot.lane.b32.xlu0 %v6140, 32
        %v7139 = vpop.permute.xlu0 %7138
        %7140 = vrot.lane.b32.xlu0 %v6146, 32
        %v7141 = vpop.permute.xlu0 %7140
        %7142 = vrot.lane.b32.xlu0 %v6156, 32
        %v7143 = vpop.permute.xlu0 %7142
        %7144 = vrot.lane.b32.xlu0 %v6160, 32
        %v7145 = vpop.permute.xlu0 %7144
        %7146 = vrot.lane.b32.xlu0 %v6170, 32
        %v7147 = vpop.permute.xlu0 %7146
        %7148 = vrot.lane.b32.xlu0 %v6176, 32
        %v7149 = vpop.permute.xlu0 %7148
        %7150 = vrot.lane.b32.xlu0 %v6186, 32
        %v7151 = vpop.permute.xlu0 %7150
        %7152 = vrot.lane.b32.xlu0 %v6190, 32
        %v7153 = vpop.permute.xlu0 %7152
        %7154 = vrot.lane.b32.xlu0 %v6200, 32
        %v7155 = vpop.permute.xlu0 %7154
        %7156 = vrot.lane.b32.xlu0 %v6206, 32
        %v7157 = vpop.permute.xlu0 %7156
        %7158 = vrot.lane.b32.xlu0 %v6216, 32
        %v7159 = vpop.permute.xlu0 %7158
        %7160 = vrot.lane.b32.xlu0 %v6220, 32
        %v7161 = vpop.permute.xlu0 %7160
        %7162 = vrot.lane.b32.xlu0 %v6230, 32
        %v7163 = vpop.permute.xlu0 %7162
        %7164 = vrot.lane.b32.xlu0 %v6236, 32
        %v7165 = vpop.permute.xlu0 %7164
        %7166 = vrot.lane.b32.xlu0 %v6246, 32
        %v7167 = vpop.permute.xlu0 %7166
        %7168 = vrot.lane.b32.xlu0 %v6250, 32
        %v7169 = vpop.permute.xlu0 %7168
        %7170 = vrot.lane.b32.xlu0 %v6260, 32
        %v7171 = vpop.permute.xlu0 %7170
        %7172 = vrot.lane.b32.xlu0 %v6266, 32
        %v7173 = vpop.permute.xlu0 %7172
        %7174 = vrot.lane.b32.xlu0 %v6276, 32
        %v7175 = vpop.permute.xlu0 %7174
        %7176 = vrot.lane.b32.xlu0 %v6280, 32
        %v7177 = vpop.permute.xlu0 %7176
        %7178 = vrot.lane.b32.xlu0 %v6290, 32
        %v7179 = vpop.permute.xlu0 %7178
        %7180 = vrot.lane.b32.xlu0 %v6296, 32
        %v7181 = vpop.permute.xlu0 %7180
        %7182 = vrot.lane.b32.xlu0 %v6306, 32
        %v7183 = vpop.permute.xlu0 %7182
        %7184 = vrot.lane.b32.xlu0 %v6310, 32
        %v7185 = vpop.permute.xlu0 %7184
        %7186 = vrot.lane.b32.xlu0 %v6320, 32
        %v7187 = vpop.permute.xlu0 %7186
        %7188 = vrot.lane.b32.xlu0 %v6326, 32
        %v7189 = vpop.permute.xlu0 %7188
        %7190 = vrot.lane.b32.xlu0 %v6336, 32
        %v7191 = vpop.permute.xlu0 %7190
        %7192 = vrot.lane.b32.xlu0 %v6340, 32
        %v7193 = vpop.permute.xlu0 %7192
        %7194 = vrot.lane.b32.xlu0 %v6350, 32
        %v7195 = vpop.permute.xlu0 %7194
        %7196 = vrot.lane.b32.xlu0 %v6356, 32
        %v7197 = vpop.permute.xlu0 %7196
        %7198 = vrot.lane.b32.xlu0 %v6366, 32
        %v7199 = vpop.permute.xlu0 %7198
        %7200 = vrot.lane.b32.xlu0 %v6370, 32
        %v7201 = vpop.permute.xlu0 %7200
        %v7234 = vadd.f32 %v7104, %v7139
        %v7235 = vadd.f32 %v7105, %v7141
        %v7236 = vadd.f32 %v7106, %v7143
        %v7237 = vadd.f32 %v7107, %v7145
        %v7238 = vadd.f32 %v7108, %v7147
        %v7239 = vadd.f32 %v7109, %v7149
        %v7240 = vadd.f32 %v7110, %v7151
        %v7241 = vadd.f32 %v7111, %v7153
        %v7242 = vadd.f32 %v7112, %v7155
        %v7243 = vadd.f32 %v7113, %v7157
        %v7244 = vadd.f32 %v7114, %v7159
        %v7245 = vadd.f32 %v7115, %v7161
        %v7246 = vadd.f32 %v7116, %v7163
        %v7247 = vadd.f32 %v7117, %v7165
        %v7248 = vadd.f32 %v7118, %v7167
        %v7249 = vadd.f32 %v7119, %v7169
        %v7250 = vadd.f32 %v7120, %v7171
        %v7251 = vadd.f32 %v7121, %v7173
        %v7252 = vadd.f32 %v7122, %v7175
        %v7253 = vadd.f32 %v7123, %v7177
        %v7254 = vadd.f32 %v7124, %v7179
        %v7255 = vadd.f32 %v7125, %v7181
        %v7256 = vadd.f32 %v7126, %v7183
        %v7257 = vadd.f32 %v7127, %v7185
        %v7258 = vadd.f32 %v7128, %v7187
        %v7259 = vadd.f32 %v7129, %v7189
        %v7260 = vadd.f32 %v7130, %v7191
        %v7261 = vadd.f32 %v7131, %v7193
        %v7262 = vadd.f32 %v7132, %v7195
        %v7263 = vadd.f32 %v7133, %v7197
        %v7264 = vadd.f32 %v7134, %v7199
        %v7265 = vadd.f32 %v7135, %v7201
        %v7314 = vrot.slane %v6142, 1
        %v7315 = vrot.slane %v6148, 1
        %v7316 = vsel %vm4369, %v7314, %v7315
        %v7317 = vrot.slane %v6152, 1
        %v7318 = vsel %vm4369, %v7315, %v7317
        %v7319 = vrot.slane %v6158, 1
        %v7320 = vrot.slane %v6162, 1
        %v7321 = vsel %vm4369, %v7319, %v7320
        %v7322 = vrot.slane %v6168, 1
        %v7323 = vsel %vm4369, %v7320, %v7322
        %v7324 = vrot.slane %v6172, 1
        %v7325 = vrot.slane %v6178, 1
        %v7326 = vsel %vm4369, %v7324, %v7325
        %v7327 = vrot.slane %v6182, 1
        %v7328 = vsel %vm4369, %v7325, %v7327
        %v7329 = vrot.slane %v6188, 1
        %v7330 = vrot.slane %v6192, 1
        %v7331 = vsel %vm4369, %v7329, %v7330
        %v7332 = vrot.slane %v6198, 1
        %v7333 = vsel %vm4369, %v7330, %v7332
        %v7334 = vrot.slane %v6202, 1
        %v7335 = vrot.slane %v6208, 1
        %v7336 = vsel %vm4369, %v7334, %v7335
        %v7337 = vrot.slane %v6212, 1
        %v7338 = vsel %vm4369, %v7335, %v7337
        %v7339 = vrot.slane %v6218, 1
        %v7340 = vrot.slane %v6222, 1
        %v7341 = vsel %vm4369, %v7339, %v7340
        %v7342 = vrot.slane %v6228, 1
        %v7343 = vsel %vm4369, %v7340, %v7342
        %v7344 = vrot.slane %v6232, 1
        %v7345 = vrot.slane %v6238, 1
        %v7346 = vsel %vm4369, %v7344, %v7345
        %v7347 = vrot.slane %v6242, 1
        %v7348 = vsel %vm4369, %v7345, %v7347
        %v7349 = vrot.slane %v6248, 1
        %v7350 = vrot.slane %v6252, 1
        %v7351 = vsel %vm4369, %v7349, %v7350
        %v7352 = vrot.slane %v6258, 1
        %v7353 = vsel %vm4369, %v7350, %v7352
        %v7354 = vrot.slane %v6262, 1
        %v7355 = vrot.slane %v6268, 1
        %v7356 = vsel %vm4369, %v7354, %v7355
        %v7357 = vrot.slane %v6272, 1
        %v7358 = vsel %vm4369, %v7355, %v7357
        %v7359 = vrot.slane %v6278, 1
        %v7360 = vrot.slane %v6282, 1
        %v7361 = vsel %vm4369, %v7359, %v7360
        %v7362 = vrot.slane %v6288, 1
        %v7363 = vsel %vm4369, %v7360, %v7362
        %v7364 = vrot.slane %v6292, 1
        %v7365 = vrot.slane %v6298, 1
        %v7366 = vsel %vm4369, %v7364, %v7365
        %v7367 = vrot.slane %v6302, 1
        %v7368 = vsel %vm4369, %v7365, %v7367
        %v7369 = vrot.slane %v6308, 1
        %v7370 = vrot.slane %v6312, 1
        %v7371 = vsel %vm4369, %v7369, %v7370
        %v7372 = vrot.slane %v6318, 1
        %v7373 = vsel %vm4369, %v7370, %v7372
        %v7374 = vrot.slane %v6322, 1
        %v7375 = vrot.slane %v6328, 1
        %v7376 = vsel %vm4369, %v7374, %v7375
        %v7377 = vrot.slane %v6332, 1
        %v7378 = vsel %vm4369, %v7375, %v7377
        %v7379 = vrot.slane %v6338, 1
        %v7380 = vrot.slane %v6342, 1
        %v7381 = vsel %vm4369, %v7379, %v7380
        %v7382 = vrot.slane %v6348, 1
        %v7383 = vsel %vm4369, %v7380, %v7382
        %v7384 = vrot.slane %v6352, 1
        %v7385 = vrot.slane %v6358, 1
        %v7386 = vsel %vm4369, %v7384, %v7385
        %v7387 = vrot.slane %v6362, 1
        %v7388 = vsel %vm4369, %v7385, %v7387
        %v7389 = vrot.slane %v6368, 1
        %v7390 = vrot.slane %v6372, 1
        %v7391 = vsel %vm4369, %v7389, %v7390
        %v7392 = vrot.slane %v6377, 1
        %v7393 = vsel %vm4369, %v7390, %v7392
        %v7426 = vadd.f32 %v7234, %v7316
        %v7427 = vadd.f32 %v7235, %v7318
        %v7428 = vadd.f32 %v7236, %v7321
        %v7429 = vadd.f32 %v7237, %v7323
        %v7430 = vadd.f32 %v7238, %v7326
        %v7431 = vadd.f32 %v7239, %v7328
        %v7432 = vadd.f32 %v7240, %v7331
        %v7433 = vadd.f32 %v7241, %v7333
        %v7434 = vadd.f32 %v7242, %v7336
        %v7435 = vadd.f32 %v7243, %v7338
        %v7436 = vadd.f32 %v7244, %v7341
        %v7437 = vadd.f32 %v7245, %v7343
        %v7438 = vadd.f32 %v7246, %v7346
        %v7439 = vadd.f32 %v7247, %v7348
        %v7440 = vadd.f32 %v7248, %v7351
        %v7441 = vadd.f32 %v7249, %v7353
        %v7442 = vadd.f32 %v7250, %v7356
        %v7443 = vadd.f32 %v7251, %v7358
        %v7444 = vadd.f32 %v7252, %v7361
        %v7445 = vadd.f32 %v7253, %v7363
        %v7446 = vadd.f32 %v7254, %v7366
        %v7447 = vadd.f32 %v7255, %v7368
        %v7448 = vadd.f32 %v7256, %v7371
        %v7449 = vadd.f32 %v7257, %v7373
        %v7450 = vadd.f32 %v7258, %v7376
        %v7451 = vadd.f32 %v7259, %v7378
        %v7452 = vadd.f32 %v7260, %v7381
        %v7453 = vadd.f32 %v7261, %v7383
        %v7454 = vadd.f32 %v7262, %v7386
        %v7455 = vadd.f32 %v7263, %v7388
        %v7456 = vadd.f32 %v7264, %v7391
        %v7457 = vadd.f32 %v7265, %v7393
        %v7458 = vrot.slane %v6142, 2
        %v7459 = vrot.slane %v6148, 2
        %v7460 = vsel %vm4578, %v7458, %v7459
        %v7461 = vrot.slane %v6152, 2
        %v7462 = vsel %vm4578, %v7459, %v7461
        %v7463 = vrot.slane %v6158, 2
        %v7464 = vrot.slane %v6162, 2
        %v7465 = vsel %vm4578, %v7463, %v7464
        %v7466 = vrot.slane %v6168, 2
        %v7467 = vsel %vm4578, %v7464, %v7466
        %v7468 = vrot.slane %v6172, 2
        %v7469 = vrot.slane %v6178, 2
        %v7470 = vsel %vm4578, %v7468, %v7469
        %v7471 = vrot.slane %v6182, 2
        %v7472 = vsel %vm4578, %v7469, %v7471
        %v7473 = vrot.slane %v6188, 2
        %v7474 = vrot.slane %v6192, 2
        %v7475 = vsel %vm4578, %v7473, %v7474
        %v7476 = vrot.slane %v6198, 2
        %v7477 = vsel %vm4578, %v7474, %v7476
        %v7478 = vrot.slane %v6202, 2
        %v7479 = vrot.slane %v6208, 2
        %v7480 = vsel %vm4578, %v7478, %v7479
        %v7481 = vrot.slane %v6212, 2
        %v7482 = vsel %vm4578, %v7479, %v7481
        %v7483 = vrot.slane %v6218, 2
        %v7484 = vrot.slane %v6222, 2
        %v7485 = vsel %vm4578, %v7483, %v7484
        %v7486 = vrot.slane %v6228, 2
        %v7487 = vsel %vm4578, %v7484, %v7486
        %v7488 = vrot.slane %v6232, 2
        %v7489 = vrot.slane %v6238, 2
        %v7490 = vsel %vm4578, %v7488, %v7489
        %v7491 = vrot.slane %v6242, 2
        %v7492 = vsel %vm4578, %v7489, %v7491
        %v7493 = vrot.slane %v6248, 2
        %v7494 = vrot.slane %v6252, 2
        %v7495 = vsel %vm4578, %v7493, %v7494
        %v7496 = vrot.slane %v6258, 2
        %v7497 = vsel %vm4578, %v7494, %v7496
        %v7498 = vrot.slane %v6262, 2
        %v7499 = vrot.slane %v6268, 2
        %v7500 = vsel %vm4578, %v7498, %v7499
        %v7501 = vrot.slane %v6272, 2
        %v7502 = vsel %vm4578, %v7499, %v7501
        %v7503 = vrot.slane %v6278, 2
        %v7504 = vrot.slane %v6282, 2
        %v7505 = vsel %vm4578, %v7503, %v7504
        %v7506 = vrot.slane %v6288, 2
        %v7507 = vsel %vm4578, %v7504, %v7506
        %v7508 = vrot.slane %v6292, 2
        %v7509 = vrot.slane %v6298, 2
        %v7510 = vsel %vm4578, %v7508, %v7509
        %v7511 = vrot.slane %v6302, 2
        %v7512 = vsel %vm4578, %v7509, %v7511
        %v7513 = vrot.slane %v6308, 2
        %v7514 = vrot.slane %v6312, 2
        %v7515 = vsel %vm4578, %v7513, %v7514
        %v7516 = vrot.slane %v6318, 2
        %v7517 = vsel %vm4578, %v7514, %v7516
        %v7518 = vrot.slane %v6322, 2
        %v7519 = vrot.slane %v6328, 2
        %v7520 = vsel %vm4578, %v7518, %v7519
        %v7521 = vrot.slane %v6332, 2
        %v7522 = vsel %vm4578, %v7519, %v7521
        %v7523 = vrot.slane %v6338, 2
        %v7524 = vrot.slane %v6342, 2
        %v7525 = vsel %vm4578, %v7523, %v7524
        %v7526 = vrot.slane %v6348, 2
        %v7527 = vsel %vm4578, %v7524, %v7526
        %v7528 = vrot.slane %v6352, 2
        %v7529 = vrot.slane %v6358, 2
        %v7530 = vsel %vm4578, %v7528, %v7529
        %v7531 = vrot.slane %v6362, 2
        %v7532 = vsel %vm4578, %v7529, %v7531
        %v7533 = vrot.slane %v6368, 2
        %v7534 = vrot.slane %v6372, 2
        %v7535 = vsel %vm4578, %v7533, %v7534
        %v7536 = vrot.slane %v6377, 2
        %v7537 = vsel %vm4578, %v7534, %v7536
        %7538 = vrot.lane.b32.xlu0 %v7460, 96
        %v7539 = vpop.permute.xlu0 %7538
        %7540 = vrot.lane.b32.xlu0 %v7462, 96
        %v7541 = vpop.permute.xlu0 %7540
        %7542 = vrot.lane.b32.xlu0 %v7465, 96
        %v7543 = vpop.permute.xlu0 %7542
        %7544 = vrot.lane.b32.xlu0 %v7467, 96
        %v7545 = vpop.permute.xlu0 %7544
        %7546 = vrot.lane.b32.xlu0 %v7470, 96
        %v7547 = vpop.permute.xlu0 %7546
        %7548 = vrot.lane.b32.xlu0 %v7472, 96
        %v7549 = vpop.permute.xlu0 %7548
        %7550 = vrot.lane.b32.xlu0 %v7475, 96
        %v7551 = vpop.permute.xlu0 %7550
        %7552 = vrot.lane.b32.xlu0 %v7477, 96
        %v7553 = vpop.permute.xlu0 %7552
        %7554 = vrot.lane.b32.xlu0 %v7480, 96
        %v7555 = vpop.permute.xlu0 %7554
        %7556 = vrot.lane.b32.xlu0 %v7482, 96
        %v7557 = vpop.permute.xlu0 %7556
        %7558 = vrot.lane.b32.xlu0 %v7485, 96
        %v7559 = vpop.permute.xlu0 %7558
        %7560 = vrot.lane.b32.xlu0 %v7487, 96
        %v7561 = vpop.permute.xlu0 %7560
        %7562 = vrot.lane.b32.xlu0 %v7490, 96
        %v7563 = vpop.permute.xlu0 %7562
        %7564 = vrot.lane.b32.xlu0 %v7492, 96
        %v7565 = vpop.permute.xlu0 %7564
        %7566 = vrot.lane.b32.xlu0 %v7495, 96
        %v7567 = vpop.permute.xlu0 %7566
        %7568 = vrot.lane.b32.xlu0 %v7497, 96
        %v7569 = vpop.permute.xlu0 %7568
        %7570 = vrot.lane.b32.xlu0 %v7500, 96
        %v7571 = vpop.permute.xlu0 %7570
        %7572 = vrot.lane.b32.xlu0 %v7502, 96
        %v7573 = vpop.permute.xlu0 %7572
        %7574 = vrot.lane.b32.xlu0 %v7505, 96
        %v7575 = vpop.permute.xlu0 %7574
        %7576 = vrot.lane.b32.xlu0 %v7507, 96
        %v7577 = vpop.permute.xlu0 %7576
        %7578 = vrot.lane.b32.xlu0 %v7510, 96
        %v7579 = vpop.permute.xlu0 %7578
        %7580 = vrot.lane.b32.xlu0 %v7512, 96
        %v7581 = vpop.permute.xlu0 %7580
        %7582 = vrot.lane.b32.xlu0 %v7515, 96
        %v7583 = vpop.permute.xlu0 %7582
        %7584 = vrot.lane.b32.xlu0 %v7517, 96
        %v7585 = vpop.permute.xlu0 %7584
        %7586 = vrot.lane.b32.xlu0 %v7520, 96
        %v7587 = vpop.permute.xlu0 %7586
        %7588 = vrot.lane.b32.xlu0 %v7522, 96
        %v7589 = vpop.permute.xlu0 %7588
        %7590 = vrot.lane.b32.xlu0 %v7525, 96
        %v7591 = vpop.permute.xlu0 %7590
        %7592 = vrot.lane.b32.xlu0 %v7527, 96
        %v7593 = vpop.permute.xlu0 %7592
        %7594 = vrot.lane.b32.xlu0 %v7530, 96
        %v7595 = vpop.permute.xlu0 %7594
        %7596 = vrot.lane.b32.xlu0 %v7532, 96
        %v7597 = vpop.permute.xlu0 %7596
        %7598 = vrot.lane.b32.xlu0 %v7535, 96
        %v7599 = vpop.permute.xlu0 %7598
        %7600 = vrot.lane.b32.xlu0 %v7537, 96
        %v7601 = vpop.permute.xlu0 %7600
        %v7634 = vadd.f32 %v7426, %v7539
        %v7635 = vadd.f32 %v7427, %v7541
        %v7636 = vadd.f32 %v7428, %v7543
        %v7637 = vadd.f32 %v7429, %v7545
        %v7638 = vadd.f32 %v7430, %v7547
        %v7639 = vadd.f32 %v7431, %v7549
        %v7640 = vadd.f32 %v7432, %v7551
        %v7641 = vadd.f32 %v7433, %v7553
        %v7642 = vadd.f32 %v7434, %v7555
        %v7643 = vadd.f32 %v7435, %v7557
        %v7644 = vadd.f32 %v7436, %v7559
        %v7645 = vadd.f32 %v7437, %v7561
        %v7646 = vadd.f32 %v7438, %v7563
        %v7647 = vadd.f32 %v7439, %v7565
        %v7648 = vadd.f32 %v7440, %v7567
        %v7649 = vadd.f32 %v7441, %v7569
        %v7650 = vadd.f32 %v7442, %v7571
        %v7651 = vadd.f32 %v7443, %v7573
        %v7652 = vadd.f32 %v7444, %v7575
        %v7653 = vadd.f32 %v7445, %v7577
        %v7654 = vadd.f32 %v7446, %v7579
        %v7655 = vadd.f32 %v7447, %v7581
        %v7656 = vadd.f32 %v7448, %v7583
        %v7657 = vadd.f32 %v7449, %v7585
        %v7658 = vadd.f32 %v7450, %v7587
        %v7659 = vadd.f32 %v7451, %v7589
        %v7660 = vadd.f32 %v7452, %v7591
        %v7661 = vadd.f32 %v7453, %v7593
        %v7662 = vadd.f32 %v7454, %v7595
        %v7663 = vadd.f32 %v7455, %v7597
        %v7664 = vadd.f32 %v7456, %v7599
        %v7665 = vadd.f32 %v7457, %v7601
        %7668 = vrot.lane.b32.xlu0 %v6158, 64
        %v7669 = vpop.permute.xlu0 %7668
        %7670 = vrot.lane.b32.xlu0 %v6162, 64
        %v7671 = vpop.permute.xlu0 %7670
        %7672 = vrot.lane.b32.xlu0 %v6172, 64
        %v7673 = vpop.permute.xlu0 %7672
        %7674 = vrot.lane.b32.xlu0 %v6178, 64
        %v7675 = vpop.permute.xlu0 %7674
        %7676 = vrot.lane.b32.xlu0 %v6188, 64
        %v7677 = vpop.permute.xlu0 %7676
        %7678 = vrot.lane.b32.xlu0 %v6192, 64
        %v7679 = vpop.permute.xlu0 %7678
        %7680 = vrot.lane.b32.xlu0 %v6202, 64
        %v7681 = vpop.permute.xlu0 %7680
        %7682 = vrot.lane.b32.xlu0 %v6208, 64
        %v7683 = vpop.permute.xlu0 %7682
        %7684 = vrot.lane.b32.xlu0 %v6218, 64
        %v7685 = vpop.permute.xlu0 %7684
        %7686 = vrot.lane.b32.xlu0 %v6222, 64
        %v7687 = vpop.permute.xlu0 %7686
        %7688 = vrot.lane.b32.xlu0 %v6232, 64
        %v7689 = vpop.permute.xlu0 %7688
        %7690 = vrot.lane.b32.xlu0 %v6238, 64
        %v7691 = vpop.permute.xlu0 %7690
        %7692 = vrot.lane.b32.xlu0 %v6248, 64
        %v7693 = vpop.permute.xlu0 %7692
        %7694 = vrot.lane.b32.xlu0 %v6252, 64
        %v7695 = vpop.permute.xlu0 %7694
        %7696 = vrot.lane.b32.xlu0 %v6262, 64
        %v7697 = vpop.permute.xlu0 %7696
        %7698 = vrot.lane.b32.xlu0 %v6268, 64
        %v7699 = vpop.permute.xlu0 %7698
        %7700 = vrot.lane.b32.xlu0 %v6278, 64
        %v7701 = vpop.permute.xlu0 %7700
        %7702 = vrot.lane.b32.xlu0 %v6282, 64
        %v7703 = vpop.permute.xlu0 %7702
        %7704 = vrot.lane.b32.xlu0 %v6292, 64
        %v7705 = vpop.permute.xlu0 %7704
        %7706 = vrot.lane.b32.xlu0 %v6298, 64
        %v7707 = vpop.permute.xlu0 %7706
        %7708 = vrot.lane.b32.xlu0 %v6308, 64
        %v7709 = vpop.permute.xlu0 %7708
        %7710 = vrot.lane.b32.xlu0 %v6312, 64
        %v7711 = vpop.permute.xlu0 %7710
        %7712 = vrot.lane.b32.xlu0 %v6322, 64
        %v7713 = vpop.permute.xlu0 %7712
        %7714 = vrot.lane.b32.xlu0 %v6328, 64
        %v7715 = vpop.permute.xlu0 %7714
        %7716 = vrot.lane.b32.xlu0 %v6338, 64
        %v7717 = vpop.permute.xlu0 %7716
        %7718 = vrot.lane.b32.xlu0 %v6342, 64
        %v7719 = vpop.permute.xlu0 %7718
        %7720 = vrot.lane.b32.xlu0 %v6352, 64
        %v7721 = vpop.permute.xlu0 %7720
        %7722 = vrot.lane.b32.xlu0 %v6358, 64
        %v7723 = vpop.permute.xlu0 %7722
        %7724 = vrot.lane.b32.xlu0 %v6368, 64
        %v7725 = vpop.permute.xlu0 %7724
        %7726 = vrot.lane.b32.xlu0 %v6372, 64
        %v7727 = vpop.permute.xlu0 %7726
        %7728 = vrot.lane.b32.xlu0 %v6380, 64
        %v7729 = vpop.permute.xlu0 %7728
        %7730 = vrot.lane.b32.xlu0 %v6385, 64
        %v7731 = vpop.permute.xlu0 %7730
        %v7764 = vadd.f32 %v7634, %v7669
        %v7765 = vadd.f32 %v7635, %v7671
        %v7766 = vadd.f32 %v7636, %v7673
        %v7767 = vadd.f32 %v7637, %v7675
        %v7768 = vadd.f32 %v7638, %v7677
        %v7769 = vadd.f32 %v7639, %v7679
        %v7770 = vadd.f32 %v7640, %v7681
        %v7771 = vadd.f32 %v7641, %v7683
        %v7772 = vadd.f32 %v7642, %v7685
        %v7773 = vadd.f32 %v7643, %v7687
        %v7774 = vadd.f32 %v7644, %v7689
        %v7775 = vadd.f32 %v7645, %v7691
        %v7776 = vadd.f32 %v7646, %v7693
        %v7777 = vadd.f32 %v7647, %v7695
        %v7778 = vadd.f32 %v7648, %v7697
        %v7779 = vadd.f32 %v7649, %v7699
        %v7780 = vadd.f32 %v7650, %v7701
        %v7781 = vadd.f32 %v7651, %v7703
        %v7782 = vadd.f32 %v7652, %v7705
        %v7783 = vadd.f32 %v7653, %v7707
        %v7784 = vadd.f32 %v7654, %v7709
        %v7785 = vadd.f32 %v7655, %v7711
        %v7786 = vadd.f32 %v7656, %v7713
        %v7787 = vadd.f32 %v7657, %v7715
        %v7788 = vadd.f32 %v7658, %v7717
        %v7789 = vadd.f32 %v7659, %v7719
        %v7790 = vadd.f32 %v7660, %v7721
        %v7791 = vadd.f32 %v7661, %v7723
        %v7792 = vadd.f32 %v7662, %v7725
        %v7793 = vadd.f32 %v7663, %v7727
        %v7794 = vadd.f32 %v7664, %v7729
        %v7795 = vadd.f32 %v7665, %v7731
        %v7797 = vrot.slane %v6380, 1
        %v7798 = vrot.slane %v6385, 1
        %v7799 = vsel %vm4369, %v7797, %v7798
        %v7800 = vrot.slane %v6388, 1
        %v7801 = vsel %vm4369, %v7798, %v7800
        %7802 = vrot.lane.b32.xlu0 %v7321, 32
        %v7803 = vpop.permute.xlu0 %7802
        %7804 = vrot.lane.b32.xlu0 %v7323, 32
        %v7805 = vpop.permute.xlu0 %7804
        %7806 = vrot.lane.b32.xlu0 %v7326, 32
        %v7807 = vpop.permute.xlu0 %7806
        %7808 = vrot.lane.b32.xlu0 %v7328, 32
        %v7809 = vpop.permute.xlu0 %7808
        %7810 = vrot.lane.b32.xlu0 %v7331, 32
        %v7811 = vpop.permute.xlu0 %7810
        %7812 = vrot.lane.b32.xlu0 %v7333, 32
        %v7813 = vpop.permute.xlu0 %7812
        %7814 = vrot.lane.b32.xlu0 %v7336, 32
        %v7815 = vpop.permute.xlu0 %7814
        %7816 = vrot.lane.b32.xlu0 %v7338, 32
        %v7817 = vpop.permute.xlu0 %7816
        %7818 = vrot.lane.b32.xlu0 %v7341, 32
        %v7819 = vpop.permute.xlu0 %7818
        %7820 = vrot.lane.b32.xlu0 %v7343, 32
        %v7821 = vpop.permute.xlu0 %7820
        %7822 = vrot.lane.b32.xlu0 %v7346, 32
        %v7823 = vpop.permute.xlu0 %7822
        %7824 = vrot.lane.b32.xlu0 %v7348, 32
        %v7825 = vpop.permute.xlu0 %7824
        %7826 = vrot.lane.b32.xlu0 %v7351, 32
        %v7827 = vpop.permute.xlu0 %7826
        %7828 = vrot.lane.b32.xlu0 %v7353, 32
        %v7829 = vpop.permute.xlu0 %7828
        %7830 = vrot.lane.b32.xlu0 %v7356, 32
        %v7831 = vpop.permute.xlu0 %7830
        %7832 = vrot.lane.b32.xlu0 %v7358, 32
        %v7833 = vpop.permute.xlu0 %7832
        %7834 = vrot.lane.b32.xlu0 %v7361, 32
        %v7835 = vpop.permute.xlu0 %7834
        %7836 = vrot.lane.b32.xlu0 %v7363, 32
        %v7837 = vpop.permute.xlu0 %7836
        %7838 = vrot.lane.b32.xlu0 %v7366, 32
        %v7839 = vpop.permute.xlu0 %7838
        %7840 = vrot.lane.b32.xlu0 %v7368, 32
        %v7841 = vpop.permute.xlu0 %7840
        %7842 = vrot.lane.b32.xlu0 %v7371, 32
        %v7843 = vpop.permute.xlu0 %7842
        %7844 = vrot.lane.b32.xlu0 %v7373, 32
        %v7845 = vpop.permute.xlu0 %7844
        %7846 = vrot.lane.b32.xlu0 %v7376, 32
        %v7847 = vpop.permute.xlu0 %7846
        %7848 = vrot.lane.b32.xlu0 %v7378, 32
        %v7849 = vpop.permute.xlu0 %7848
        %7850 = vrot.lane.b32.xlu0 %v7381, 32
        %v7851 = vpop.permute.xlu0 %7850
        %7852 = vrot.lane.b32.xlu0 %v7383, 32
        %v7853 = vpop.permute.xlu0 %7852
        %7854 = vrot.lane.b32.xlu0 %v7386, 32
        %v7855 = vpop.permute.xlu0 %7854
        %7856 = vrot.lane.b32.xlu0 %v7388, 32
        %v7857 = vpop.permute.xlu0 %7856
        %7858 = vrot.lane.b32.xlu0 %v7391, 32
        %v7859 = vpop.permute.xlu0 %7858
        %7860 = vrot.lane.b32.xlu0 %v7393, 32
        %v7861 = vpop.permute.xlu0 %7860
        %7862 = vrot.lane.b32.xlu0 %v7799, 32
        %v7863 = vpop.permute.xlu0 %7862
        %7864 = vrot.lane.b32.xlu0 %v7801, 32
        %v7865 = vpop.permute.xlu0 %7864
        %v7898 = vadd.f32 %v7764, %v7803
        %v7899 = vadd.f32 %v7765, %v7805
        %v7900 = vadd.f32 %v7766, %v7807
        %v7901 = vadd.f32 %v7767, %v7809
        %v7902 = vadd.f32 %v7768, %v7811
        %v7903 = vadd.f32 %v7769, %v7813
        %v7904 = vadd.f32 %v7770, %v7815
        %v7905 = vadd.f32 %v7771, %v7817
        %v7906 = vadd.f32 %v7772, %v7819
        %v7907 = vadd.f32 %v7773, %v7821
        %v7908 = vadd.f32 %v7774, %v7823
        %v7909 = vadd.f32 %v7775, %v7825
        %v7910 = vadd.f32 %v7776, %v7827
        %v7911 = vadd.f32 %v7777, %v7829
        %v7912 = vadd.f32 %v7778, %v7831
        %v7913 = vadd.f32 %v7779, %v7833
        %v7914 = vadd.f32 %v7780, %v7835
        %v7915 = vadd.f32 %v7781, %v7837
        %v7916 = vadd.f32 %v7782, %v7839
        %v7917 = vadd.f32 %v7783, %v7841
        %v7918 = vadd.f32 %v7784, %v7843
        %v7919 = vadd.f32 %v7785, %v7845
        %v7920 = vadd.f32 %v7786, %v7847
        %v7921 = vadd.f32 %v7787, %v7849
        %v7922 = vadd.f32 %v7788, %v7851
        %v7923 = vadd.f32 %v7789, %v7853
        %v7924 = vadd.f32 %v7790, %v7855
        %v7925 = vadd.f32 %v7791, %v7857
        %v7926 = vadd.f32 %v7792, %v7859
        %v7927 = vadd.f32 %v7793, %v7861
        %v7928 = vadd.f32 %v7794, %v7863
        %v7929 = vadd.f32 %v7795, %v7865
        %v7978 = vrot.slane %v6443, 2
        %v7979 = vrot.slane %v6446, 2
        %v7980 = vsel %vm4578, %v7978, %v7979
        %v7981 = vrot.slane %v6451, 2
        %v7982 = vsel %vm4578, %v7979, %v7981
        %v7983 = vrot.slane %v6454, 2
        %v7984 = vrot.slane %v6459, 2
        %v7985 = vsel %vm4578, %v7983, %v7984
        %v7986 = vrot.slane %v6462, 2
        %v7987 = vsel %vm4578, %v7984, %v7986
        %v7988 = vrot.slane %v6467, 2
        %v7989 = vrot.slane %v6470, 2
        %v7990 = vsel %vm4578, %v7988, %v7989
        %v7991 = vrot.slane %v6475, 2
        %v7992 = vsel %vm4578, %v7989, %v7991
        %v7993 = vrot.slane %v6478, 2
        %v7994 = vrot.slane %v6483, 2
        %v7995 = vsel %vm4578, %v7993, %v7994
        %v7996 = vrot.slane %v6486, 2
        %v7997 = vsel %vm4578, %v7994, %v7996
        %v7998 = vrot.slane %v6491, 2
        %v7999 = vrot.slane %v6494, 2
        %v8000 = vsel %vm4578, %v7998, %v7999
        %v8001 = vrot.slane %v6499, 2
        %v8002 = vsel %vm4578, %v7999, %v8001
        %v8003 = vrot.slane %v6502, 2
        %v8004 = vrot.slane %v6507, 2
        %v8005 = vsel %vm4578, %v8003, %v8004
        %v8006 = vrot.slane %v6510, 2
        %v8007 = vsel %vm4578, %v8004, %v8006
        %v8008 = vrot.slane %v6515, 2
        %v8009 = vrot.slane %v6518, 2
        %v8010 = vsel %vm4578, %v8008, %v8009
        %v8011 = vrot.slane %v6523, 2
        %v8012 = vsel %vm4578, %v8009, %v8011
        %v8013 = vrot.slane %v6526, 2
        %v8014 = vrot.slane %v6531, 2
        %v8015 = vsel %vm4578, %v8013, %v8014
        %v8016 = vrot.slane %v6534, 2
        %v8017 = vsel %vm4578, %v8014, %v8016
        %v8018 = vrot.slane %v6539, 2
        %v8019 = vrot.slane %v6542, 2
        %v8020 = vsel %vm4578, %v8018, %v8019
        %v8021 = vrot.slane %v6547, 2
        %v8022 = vsel %vm4578, %v8019, %v8021
        %v8023 = vrot.slane %v6550, 2
        %v8024 = vrot.slane %v6555, 2
        %v8025 = vsel %vm4578, %v8023, %v8024
        %v8026 = vrot.slane %v6558, 2
        %v8027 = vsel %vm4578, %v8024, %v8026
        %v8028 = vrot.slane %v6563, 2
        %v8029 = vrot.slane %v6566, 2
        %v8030 = vsel %vm4578, %v8028, %v8029
        %v8031 = vrot.slane %v6571, 2
        %v8032 = vsel %vm4578, %v8029, %v8031
        %v8033 = vrot.slane %v6574, 2
        %v8034 = vrot.slane %v6579, 2
        %v8035 = vsel %vm4578, %v8033, %v8034
        %v8036 = vrot.slane %v6582, 2
        %v8037 = vsel %vm4578, %v8034, %v8036
        %v8038 = vrot.slane %v6587, 2
        %v8039 = vrot.slane %v6590, 2
        %v8040 = vsel %vm4578, %v8038, %v8039
        %v8041 = vrot.slane %v6595, 2
        %v8042 = vsel %vm4578, %v8039, %v8041
        %v8043 = vrot.slane %v6598, 2
        %v8044 = vrot.slane %v6603, 2
        %v8045 = vsel %vm4578, %v8043, %v8044
        %v8046 = vrot.slane %v6606, 2
        %v8047 = vsel %vm4578, %v8044, %v8046
        %v8048 = vrot.slane %v6611, 2
        %v8049 = vrot.slane %v6614, 2
        %v8050 = vsel %vm4578, %v8048, %v8049
        %v8051 = vrot.slane %v6619, 2
        %v8052 = vsel %vm4578, %v8049, %v8051
        %v8053 = vrot.slane %v6622, 2
        %v8054 = vrot.slane %v6627, 2
        %v8055 = vsel %vm4578, %v8053, %v8054
        %v8056 = vrot.slane %v6630, 2
        %v8057 = vsel %vm4578, %v8054, %v8056
        %v8090 = vadd.f32 %v7898, %v7980
        %v8091 = vadd.f32 %v7899, %v7982
        %v8092 = vadd.f32 %v7900, %v7985
        %v8093 = vadd.f32 %v7901, %v7987
        %v8094 = vadd.f32 %v7902, %v7990
        %v8095 = vadd.f32 %v7903, %v7992
        %v8096 = vadd.f32 %v7904, %v7995
        %v8097 = vadd.f32 %v7905, %v7997
        %v8098 = vadd.f32 %v7906, %v8000
        %v8099 = vadd.f32 %v7907, %v8002
        %v8100 = vadd.f32 %v7908, %v8005
        %v8101 = vadd.f32 %v7909, %v8007
        %v8102 = vadd.f32 %v7910, %v8010
        %v8103 = vadd.f32 %v7911, %v8012
        %v8104 = vadd.f32 %v7912, %v8015
        %v8105 = vadd.f32 %v7913, %v8017
        %v8106 = vadd.f32 %v7914, %v8020
        %v8107 = vadd.f32 %v7915, %v8022
        %v8108 = vadd.f32 %v7916, %v8025
        %v8109 = vadd.f32 %v7917, %v8027
        %v8110 = vadd.f32 %v7918, %v8030
        %v8111 = vadd.f32 %v7919, %v8032
        %v8112 = vadd.f32 %v7920, %v8035
        %v8113 = vadd.f32 %v7921, %v8037
        %v8114 = vadd.f32 %v7922, %v8040
        %v8115 = vadd.f32 %v7923, %v8042
        %v8116 = vadd.f32 %v7924, %v8045
        %v8117 = vadd.f32 %v7925, %v8047
        %v8118 = vadd.f32 %v7926, %v8050
        %v8119 = vadd.f32 %v7927, %v8052
        %v8120 = vadd.f32 %v7928, %v8055
        %v8121 = vadd.f32 %v7929, %v8057
        %v8122 = vpack.c.bf16 %v3222, %v3221
        %v8123 = vpack.c.bf16 %v3224, %v3223
        %v8124 = vpack.c.bf16 %v3226, %v3225
        %v8125 = vpack.c.bf16 %v3228, %v3227
        %v8126 = vpack.c.bf16 %v3230, %v3229
        %v8127 = vpack.c.bf16 %v3232, %v3231
        %v8128 = vpack.c.bf16 %v3234, %v3233
        %v8129 = vpack.c.bf16 %v3236, %v3235
        %v8130 = vpack.c.bf16 %v3238, %v3237
        %v8131 = vpack.c.bf16 %v3240, %v3239
        %v8132 = vpack.c.bf16 %v3242, %v3241
        %v8133 = vpack.c.bf16 %v3244, %v3243
        %v8134 = vpack.c.bf16 %v3246, %v3245
        %v8135 = vpack.c.bf16 %v3248, %v3247
        %v8136 = vpack.c.bf16 %v3250, %v3249
        %v8137 = vpack.c.bf16 %v3252, %v3251
        %v8138 = vld [vmem:[%s18] sm:$0xf]
        %v8139 = vld [vmem:[%s18 + $0x4] sm:$0xf]
        %v8140 = vld [vmem:[%s18 + $0x8] sm:$0xf]
        %v8141 = vld [vmem:[%s18 + $0xc] sm:$0xf]
        %v8142 = vpack.c.bf16 %v1325, %v1324
        %v8143 = vpack.c.bf16 %v1327, %v1326
        %v8144 = vpack.c.bf16 %v1329, %v1328
        %v8145 = vpack.c.bf16 %v1331, %v1330
        %v8146 = vpack.c.bf16 %v1333, %v1332
        %v8147 = vpack.c.bf16 %v1335, %v1334
        %v8148 = vpack.c.bf16 %v1337, %v1336
        %v8149 = vpack.c.bf16 %v1339, %v1338
        %v8150 = vpack.c.bf16 %v1341, %v1340
        %v8151 = vpack.c.bf16 %v1343, %v1342
        %v8152 = vpack.c.bf16 %v1345, %v1344
        %v8153 = vpack.c.bf16 %v1347, %v1346
        %v8154 = vpack.c.bf16 %v1349, %v1348
        %v8155 = vpack.c.bf16 %v1351, %v1350
        %v8156 = vpack.c.bf16 %v1353, %v1352
        %v8157 = vpack.c.bf16 %v1355, %v1354
        %v8158 = vld [vmem:[%s18 + $0x10] sm:$0xf]
        %v8159 = vld [vmem:[%s18 + $0x14] sm:$0xf]
        %v8160 = vld [vmem:[%s18 + $0x18] sm:$0xf]
        %v8161 = vld [vmem:[%s18 + $0x1c] sm:$0xf]
        %v8166 = vunpack.c.l.b16 %v8158
        %v8167 = vunpack.c.l.b16 %v8159
        %v8168 = vunpack.c.l.b16 %v8160
        %v8169 = vunpack.c.l.b16 %v8161
        %v8170 = vpack.c.b16 %v8167, %v8166
        %v8171 = vpack.c.b16 %v8169, %v8168
        %v8175 = vsel %vm745, %v8142, 0
        %v8178 = vsel %vm745, %v8143, 0
        %v8181 = vsel %vm745, %v8144, 0
        %v8184 = vsel %vm745, %v8145, 0
        %v8187 = vsel %vm745, %v8146, 0
        %v8190 = vsel %vm745, %v8147, 0
        %v8193 = vsel %vm745, %v8148, 0
        %v8196 = vsel %vm745, %v8149, 0
        %v8199 = vsel %vm745, %v8150, 0
        %v8202 = vsel %vm745, %v8151, 0
        %v8205 = vsel %vm745, %v8152, 0
        %v8208 = vsel %vm745, %v8153, 0
        %v8211 = vsel %vm745, %v8154, 0
        %v8214 = vsel %vm745, %v8155, 0
        %v8217 = vsel %vm745, %v8156, 0
        %v8220 = vsel %vm745, %v8157, 0
        %8222 = vmatprep.subr.bf16.mxu0 0
        %8223 = vmatpush1.bf16.msra.mxu0 %v8170
        %8224 = vmatprep.subr.bf16.mxu0 0
        %8225 = vmatpush1.bf16.msra.mxu0 %v8171
        %8226 = vmatprep.subr.bf16.mxu0 0
        %8227 = vmatpush1.bf16.msra.mxu0 0
        %8228 = vmatprep.subr.bf16.mxu0 0
        %8229 = vmatpush1.bf16.msra.mxu0 0
        %8230 = vmatprep.subr.bf16.mxu0 0
        %8231 = vmatpush1.bf16.msra.mxu0 0
        %8232 = vmatprep.subr.bf16.mxu0 0
        %8233 = vmatpush1.bf16.msra.mxu0 0
        %8234 = vmatprep.subr.bf16.mxu0 0
        %8235 = vmatpush1.bf16.msra.mxu0 0
        %8236 = vmatprep.subr.bf16.mxu0 0
        %8237 = vmatpush1.bf16.msra.mxu0 0
        %8238 = vmatprep.subr.bf16.mxu0 0
        %8239 = vmatpush1.bf16.msra.mxu0 0
        %8240 = vmatprep.subr.bf16.mxu0 0
        %8241 = vmatpush1.bf16.msra.mxu0 0
        %8242 = vmatprep.subr.bf16.mxu0 0
        %8243 = vmatpush1.bf16.msra.mxu0 0
        %8244 = vmatprep.subr.bf16.mxu0 0
        %8245 = vmatpush1.bf16.msra.mxu0 0
        %8246 = vmatprep.subr.bf16.mxu0 0
        %8247 = vmatpush1.bf16.msra.mxu0 0
        %8248 = vmatprep.subr.bf16.mxu0 0
        %8249 = vmatpush1.bf16.msra.mxu0 0
        %8250 = vmatprep.subr.bf16.mxu0 0
        %8251 = vmatpush1.bf16.msra.mxu0 0
        %8252 = vmatprep.subr.bf16.mxu0 0
        %8253 = vmatpush1.bf16.msra.mxu0 0
        %8254 = vmatprep.mubr.bf16.mxu0 0
        %8255 = vmatmul.mubr.bf16.gmra.mrb[0].mxu0 %v8175
        %v8256 = vpop.f32.mrb[0].mxu0
        %v8257 = vadd.f32 0.0, %v8256
        %v8258 = vpop.f32.mrb[0].mxu0
        %v8259 = vpop.f32.mrb[0].mxu0
        %v8260 = vadd.f32 0.0, %v8259
        %v8261 = vpop.f32.mrb[0].mxu0
        %8262 = vmatprep.mubr.bf16.mxu0 0
        %8263 = vmatmul.mubr.bf16.gmra.mrb[0].mxu0 %v8178
        %v8264 = vpop.f32.mrb[0].mxu0
        %v8265 = vadd.f32 0.0, %v8264
        %v8266 = vpop.f32.mrb[0].mxu0
        %v8267 = vpop.f32.mrb[0].mxu0
        %v8268 = vadd.f32 0.0, %v8267
        %v8269 = vpop.f32.mrb[0].mxu0
        %8270 = vmatprep.mubr.bf16.mxu0 0
        %8271 = vmatmul.mubr.bf16.gmra.mrb[0].mxu0 %v8181
        %v8272 = vpop.f32.mrb[0].mxu0
        %v8273 = vadd.f32 0.0, %v8272
        %v8274 = vpop.f32.mrb[0].mxu0
        %v8275 = vpop.f32.mrb[0].mxu0
        %v8276 = vadd.f32 0.0, %v8275
        %v8277 = vpop.f32.mrb[0].mxu0
        %8278 = vmatprep.mubr.bf16.mxu0 0
        %8279 = vmatmul.mubr.bf16.gmra.mrb[0].mxu0 %v8184
        %v8280 = vpop.f32.mrb[0].mxu0
        %v8281 = vadd.f32 0.0, %v8280
        %v8282 = vpop.f32.mrb[0].mxu0
        %v8283 = vpop.f32.mrb[0].mxu0
        %v8284 = vadd.f32 0.0, %v8283
        %v8285 = vpop.f32.mrb[0].mxu0
        %8286 = vmatprep.mubr.bf16.mxu0 0
        %8287 = vmatmul.mubr.bf16.gmra.mrb[0].mxu0 %v8187
        %v8288 = vpop.f32.mrb[0].mxu0
        %v8289 = vadd.f32 0.0, %v8288
        %v8290 = vpop.f32.mrb[0].mxu0
        %v8291 = vpop.f32.mrb[0].mxu0
        %v8292 = vadd.f32 0.0, %v8291
        %v8293 = vpop.f32.mrb[0].mxu0
        %8294 = vmatprep.mubr.bf16.mxu0 0
        %8295 = vmatmul.mubr.bf16.gmra.mrb[0].mxu0 %v8190
        %v8296 = vpop.f32.mrb[0].mxu0
        %v8297 = vadd.f32 0.0, %v8296
        %v8298 = vpop.f32.mrb[0].mxu0
        %v8299 = vpop.f32.mrb[0].mxu0
        %v8300 = vadd.f32 0.0, %v8299
        %v8301 = vpop.f32.mrb[0].mxu0
        %8302 = vmatprep.mubr.bf16.mxu0 0
        %8303 = vmatmul.mubr.bf16.gmra.mrb[0].mxu0 %v8193
        %v8304 = vpop.f32.mrb[0].mxu0
        %v8305 = vadd.f32 0.0, %v8304
        %v8306 = vpop.f32.mrb[0].mxu0
        %v8307 = vpop.f32.mrb[0].mxu0
        %v8308 = vadd.f32 0.0, %v8307
        %v8309 = vpop.f32.mrb[0].mxu0
        %8310 = vmatprep.mubr.bf16.mxu0 0
        %8311 = vmatmul.mubr.bf16.gmra.mrb[0].mxu0 %v8196
        %v8312 = vpop.f32.mrb[0].mxu0
        %v8313 = vadd.f32 0.0, %v8312
        %v8314 = vpop.f32.mrb[0].mxu0
        %v8315 = vpop.f32.mrb[0].mxu0
        %v8316 = vadd.f32 0.0, %v8315
        %v8317 = vpop.f32.mrb[0].mxu0
        %8318 = vmatprep.mubr.bf16.mxu0 0
        %8319 = vmatmul.mubr.bf16.gmra.mrb[0].mxu0 %v8199
        %v8320 = vpop.f32.mrb[0].mxu0
        %v8321 = vadd.f32 0.0, %v8320
        %v8322 = vpop.f32.mrb[0].mxu0
        %v8323 = vpop.f32.mrb[0].mxu0
        %v8324 = vadd.f32 0.0, %v8323
        %v8325 = vpop.f32.mrb[0].mxu0
        %8326 = vmatprep.mubr.bf16.mxu0 0
        %8327 = vmatmul.mubr.bf16.gmra.mrb[0].mxu0 %v8202
        %v8328 = vpop.f32.mrb[0].mxu0
        %v8329 = vadd.f32 0.0, %v8328
        %v8330 = vpop.f32.mrb[0].mxu0
        %v8331 = vpop.f32.mrb[0].mxu0
        %v8332 = vadd.f32 0.0, %v8331
        %v8333 = vpop.f32.mrb[0].mxu0
        %8334 = vmatprep.mubr.bf16.mxu0 0
        %8335 = vmatmul.mubr.bf16.gmra.mrb[0].mxu0 %v8205
        %v8336 = vpop.f32.mrb[0].mxu0
        %v8337 = vadd.f32 0.0, %v8336
        %v8338 = vpop.f32.mrb[0].mxu0
        %v8339 = vpop.f32.mrb[0].mxu0
        %v8340 = vadd.f32 0.0, %v8339
        %v8341 = vpop.f32.mrb[0].mxu0
        %8342 = vmatprep.mubr.bf16.mxu0 0
        %8343 = vmatmul.mubr.bf16.gmra.mrb[0].mxu0 %v8208
        %v8344 = vpop.f32.mrb[0].mxu0
        %v8345 = vadd.f32 0.0, %v8344
        %v8346 = vpop.f32.mrb[0].mxu0
        %v8347 = vpop.f32.mrb[0].mxu0
        %v8348 = vadd.f32 0.0, %v8347
        %v8349 = vpop.f32.mrb[0].mxu0
        %8350 = vmatprep.mubr.bf16.mxu0 0
        %8351 = vmatmul.mubr.bf16.gmra.mrb[0].mxu0 %v8211
        %v8352 = vpop.f32.mrb[0].mxu0
        %v8353 = vadd.f32 0.0, %v8352
        %v8354 = vpop.f32.mrb[0].mxu0
        %v8355 = vpop.f32.mrb[0].mxu0
        %v8356 = vadd.f32 0.0, %v8355
        %v8357 = vpop.f32.mrb[0].mxu0
        %8358 = vmatprep.mubr.bf16.mxu0 0
        %8359 = vmatmul.mubr.bf16.gmra.mrb[0].mxu0 %v8214
        %v8360 = vpop.f32.mrb[0].mxu0
        %v8361 = vadd.f32 0.0, %v8360
        %v8362 = vpop.f32.mrb[0].mxu0
        %v8363 = vpop.f32.mrb[0].mxu0
        %v8364 = vadd.f32 0.0, %v8363
        %v8365 = vpop.f32.mrb[0].mxu0
        %8366 = vmatprep.mubr.bf16.mxu0 0
        %8367 = vmatmul.mubr.bf16.gmra.mrb[0].mxu0 %v8217
        %v8368 = vpop.f32.mrb[0].mxu0
        %v8369 = vadd.f32 0.0, %v8368
        %v8370 = vpop.f32.mrb[0].mxu0
        %v8371 = vpop.f32.mrb[0].mxu0
        %v8372 = vadd.f32 0.0, %v8371
        %v8373 = vpop.f32.mrb[0].mxu0
        %8374 = vmatprep.mubr.bf16.mxu0 0
        %8375 = vmatmul.mubr.bf16.gmra.mrb[0].mxu0 %v8220
        %v8376 = vpop.f32.mrb[0].mxu0
        %v8377 = vadd.f32 0.0, %v8376
        %v8378 = vpop.f32.mrb[0].mxu0
        %v8379 = vpop.f32.mrb[0].mxu0
        %v8380 = vadd.f32 0.0, %v8379
        %v8381 = vpop.f32.mrb[0].mxu0
        %8382 = vdwg.mxu0
        %v8387 = vunpack.c.l.b16 %v8138
        %v8388 = vunpack.c.l.b16 %v8139
        %v8389 = vunpack.c.l.b16 %v8140
        %v8390 = vunpack.c.l.b16 %v8141
        %v8391 = vpack.c.b16 %v8388, %v8387
        %v8392 = vpack.c.b16 %v8390, %v8389
        %v8396 = vsel %vm745, %v8122, 0
        %v8399 = vsel %vm745, %v8123, 0
        %v8402 = vsel %vm745, %v8124, 0
        %v8405 = vsel %vm745, %v8125, 0
        %v8408 = vsel %vm745, %v8126, 0
        %v8411 = vsel %vm745, %v8127, 0
        %v8414 = vsel %vm745, %v8128, 0
        %v8417 = vsel %vm745, %v8129, 0
        %v8420 = vsel %vm745, %v8130, 0
        %v8423 = vsel %vm745, %v8131, 0
        %v8426 = vsel %vm745, %v8132, 0
        %v8429 = vsel %vm745, %v8133, 0
        %v8432 = vsel %vm745, %v8134, 0
        %v8435 = vsel %vm745, %v8135, 0
        %v8438 = vsel %vm745, %v8136, 0
        %v8441 = vsel %vm745, %v8137, 0
        %8443 = vmatprep.subr.bf16.mxu0 0
        %8444 = vmatpush1.bf16.msra.mxu0 %v8391
        %8445 = vmatprep.subr.bf16.mxu0 0
        %8446 = vmatpush1.bf16.msra.mxu0 %v8392
        %8447 = vmatprep.subr.bf16.mxu0 0
        %8448 = vmatpush1.bf16.msra.mxu0 0
        %8449 = vmatprep.subr.bf16.mxu0 0
        %8450 = vmatpush1.bf16.msra.mxu0 0
        %8451 = vmatprep.subr.bf16.mxu0 0
        %8452 = vmatpush1.bf16.msra.mxu0 0
        %8453 = vmatprep.subr.bf16.mxu0 0
        %8454 = vmatpush1.bf16.msra.mxu0 0
        %8455 = vmatprep.subr.bf16.mxu0 0
        %8456 = vmatpush1.bf16.msra.mxu0 0
        %8457 = vmatprep.subr.bf16.mxu0 0
        %8458 = vmatpush1.bf16.msra.mxu0 0
        %8459 = vmatprep.subr.bf16.mxu0 0
        %8460 = vmatpush1.bf16.msra.mxu0 0
        %8461 = vmatprep.subr.bf16.mxu0 0
        %8462 = vmatpush1.bf16.msra.mxu0 0
        %8463 = vmatprep.subr.bf16.mxu0 0
        %8464 = vmatpush1.bf16.msra.mxu0 0
        %8465 = vmatprep.subr.bf16.mxu0 0
        %8466 = vmatpush1.bf16.msra.mxu0 0
        %8467 = vmatprep.subr.bf16.mxu0 0
        %8468 = vmatpush1.bf16.msra.mxu0 0
        %8469 = vmatprep.subr.bf16.mxu0 0
        %8470 = vmatpush1.bf16.msra.mxu0 0
        %8471 = vmatprep.subr.bf16.mxu0 0
        %8472 = vmatpush1.bf16.msra.mxu0 0
        %8473 = vmatprep.subr.bf16.mxu0 0
        %8474 = vmatpush1.bf16.msra.mxu0 0
        %8475 = vmatprep.mubr.bf16.mxu0 0
        %8476 = vmatmul.mubr.bf16.gmra.mrb[0].mxu0 %v8396
        %v8477 = vpop.f32.mrb[0].mxu0
        %v8478 = vadd.f32 %v8257, %v8477
        %v8479 = vpop.f32.mrb[0].mxu0
        %v8480 = vpop.f32.mrb[0].mxu0
        %v8481 = vadd.f32 %v8260, %v8480
        %v8482 = vpop.f32.mrb[0].mxu0
        %8483 = vmatprep.mubr.bf16.mxu0 0
        %8484 = vmatmul.mubr.bf16.gmra.mrb[0].mxu0 %v8399
        %v8485 = vpop.f32.mrb[0].mxu0
        %v8486 = vadd.f32 %v8265, %v8485
        %v8487 = vpop.f32.mrb[0].mxu0
        %v8488 = vpop.f32.mrb[0].mxu0
        %v8489 = vadd.f32 %v8268, %v8488
        %v8490 = vpop.f32.mrb[0].mxu0
        %8491 = vmatprep.mubr.bf16.mxu0 0
        %8492 = vmatmul.mubr.bf16.gmra.mrb[0].mxu0 %v8402
        %v8493 = vpop.f32.mrb[0].mxu0
        %v8494 = vadd.f32 %v8273, %v8493
        %v8495 = vpop.f32.mrb[0].mxu0
        %v8496 = vpop.f32.mrb[0].mxu0
        %v8497 = vadd.f32 %v8276, %v8496
        %v8498 = vpop.f32.mrb[0].mxu0
        %8499 = vmatprep.mubr.bf16.mxu0 0
        %8500 = vmatmul.mubr.bf16.gmra.mrb[0].mxu0 %v8405
        %v8501 = vpop.f32.mrb[0].mxu0
        %v8502 = vadd.f32 %v8281, %v8501
        %v8503 = vpop.f32.mrb[0].mxu0
        %v8504 = vpop.f32.mrb[0].mxu0
        %v8505 = vadd.f32 %v8284, %v8504
        %v8506 = vpop.f32.mrb[0].mxu0
        %8507 = vmatprep.mubr.bf16.mxu0 0
        %8508 = vmatmul.mubr.bf16.gmra.mrb[0].mxu0 %v8408
        %v8509 = vpop.f32.mrb[0].mxu0
        %v8510 = vadd.f32 %v8289, %v8509
        %v8511 = vpop.f32.mrb[0].mxu0
        %v8512 = vpop.f32.mrb[0].mxu0
        %v8513 = vadd.f32 %v8292, %v8512
        %v8514 = vpop.f32.mrb[0].mxu0
        %8515 = vmatprep.mubr.bf16.mxu0 0
        %8516 = vmatmul.mubr.bf16.gmra.mrb[0].mxu0 %v8411
        %v8517 = vpop.f32.mrb[0].mxu0
        %v8518 = vadd.f32 %v8297, %v8517
        %v8519 = vpop.f32.mrb[0].mxu0
        %v8520 = vpop.f32.mrb[0].mxu0
        %v8521 = vadd.f32 %v8300, %v8520
        %v8522 = vpop.f32.mrb[0].mxu0
        %8523 = vmatprep.mubr.bf16.mxu0 0
        %8524 = vmatmul.mubr.bf16.gmra.mrb[0].mxu0 %v8414
        %v8525 = vpop.f32.mrb[0].mxu0
        %v8526 = vadd.f32 %v8305, %v8525
        %v8527 = vpop.f32.mrb[0].mxu0
        %v8528 = vpop.f32.mrb[0].mxu0
        %v8529 = vadd.f32 %v8308, %v8528
        %v8530 = vpop.f32.mrb[0].mxu0
        %8531 = vmatprep.mubr.bf16.mxu0 0
        %8532 = vmatmul.mubr.bf16.gmra.mrb[0].mxu0 %v8417
        %v8533 = vpop.f32.mrb[0].mxu0
        %v8534 = vadd.f32 %v8313, %v8533
        %v8535 = vpop.f32.mrb[0].mxu0
        %v8536 = vpop.f32.mrb[0].mxu0
        %v8537 = vadd.f32 %v8316, %v8536
        %v8538 = vpop.f32.mrb[0].mxu0
        %8539 = vmatprep.mubr.bf16.mxu0 0
        %8540 = vmatmul.mubr.bf16.gmra.mrb[0].mxu0 %v8420
        %v8541 = vpop.f32.mrb[0].mxu0
        %v8542 = vadd.f32 %v8321, %v8541
        %v8543 = vpop.f32.mrb[0].mxu0
        %v8544 = vpop.f32.mrb[0].mxu0
        %v8545 = vadd.f32 %v8324, %v8544
        %v8546 = vpop.f32.mrb[0].mxu0
        %8547 = vmatprep.mubr.bf16.mxu0 0
        %8548 = vmatmul.mubr.bf16.gmra.mrb[0].mxu0 %v8423
        %v8549 = vpop.f32.mrb[0].mxu0
        %v8550 = vadd.f32 %v8329, %v8549
        %v8551 = vpop.f32.mrb[0].mxu0
        %v8552 = vpop.f32.mrb[0].mxu0
        %v8553 = vadd.f32 %v8332, %v8552
        %v8554 = vpop.f32.mrb[0].mxu0
        %8555 = vmatprep.mubr.bf16.mxu0 0
        %8556 = vmatmul.mubr.bf16.gmra.mrb[0].mxu0 %v8426
        %v8557 = vpop.f32.mrb[0].mxu0
        %v8558 = vadd.f32 %v8337, %v8557
        %v8559 = vpop.f32.mrb[0].mxu0
        %v8560 = vpop.f32.mrb[0].mxu0
        %v8561 = vadd.f32 %v8340, %v8560
        %v8562 = vpop.f32.mrb[0].mxu0
        %8563 = vmatprep.mubr.bf16.mxu0 0
        %8564 = vmatmul.mubr.bf16.gmra.mrb[0].mxu0 %v8429
        %v8565 = vpop.f32.mrb[0].mxu0
        %v8566 = vadd.f32 %v8345, %v8565
        %v8567 = vpop.f32.mrb[0].mxu0
        %v8568 = vpop.f32.mrb[0].mxu0
        %v8569 = vadd.f32 %v8348, %v8568
        %v8570 = vpop.f32.mrb[0].mxu0
        %8571 = vmatprep.mubr.bf16.mxu0 0
        %8572 = vmatmul.mubr.bf16.gmra.mrb[0].mxu0 %v8432
        %v8573 = vpop.f32.mrb[0].mxu0
        %v8574 = vadd.f32 %v8353, %v8573
        %v8575 = vpop.f32.mrb[0].mxu0
        %v8576 = vpop.f32.mrb[0].mxu0
        %v8577 = vadd.f32 %v8356, %v8576
        %v8578 = vpop.f32.mrb[0].mxu0
        %8579 = vmatprep.mubr.bf16.mxu0 0
        %8580 = vmatmul.mubr.bf16.gmra.mrb[0].mxu0 %v8435
        %v8581 = vpop.f32.mrb[0].mxu0
        %v8582 = vadd.f32 %v8361, %v8581
        %v8583 = vpop.f32.mrb[0].mxu0
        %v8584 = vpop.f32.mrb[0].mxu0
        %v8585 = vadd.f32 %v8364, %v8584
        %v8586 = vpop.f32.mrb[0].mxu0
        %8587 = vmatprep.mubr.bf16.mxu0 0
        %8588 = vmatmul.mubr.bf16.gmra.mrb[0].mxu0 %v8438
        %v8589 = vpop.f32.mrb[0].mxu0
        %v8590 = vadd.f32 %v8369, %v8589
        %v8591 = vpop.f32.mrb[0].mxu0
        %v8592 = vpop.f32.mrb[0].mxu0
        %v8593 = vadd.f32 %v8372, %v8592
        %v8594 = vpop.f32.mrb[0].mxu0
        %8595 = vmatprep.mubr.bf16.mxu0 0
        %8596 = vmatmul.mubr.bf16.gmra.mrb[0].mxu0 %v8441
        %v8597 = vpop.f32.mrb[0].mxu0
        %v8598 = vadd.f32 %v8377, %v8597
        %v8599 = vpop.f32.mrb[0].mxu0
        %v8600 = vpop.f32.mrb[0].mxu0
        %v8601 = vadd.f32 %v8380, %v8600
        %v8602 = vpop.f32.mrb[0].mxu0
        %8603 = vdwg.mxu0
        %v8604 = vld [vmem:[%s19] sm:$0x1]
        %v8606 = vlaneseq
        %v8607 = vshrl.u32 %v8606, 7
        %v8608 = vsub.s32 0, %v8607
        %v8609 = vrot.slane %v8604, %v8608
        %v8611 = vadd.f32 %v8478, %v8609
        %v8612 = vadd.f32 %v8481, %v8609
        %v8613 = vadd.f32 %v8486, %v8609
        %v8614 = vadd.f32 %v8489, %v8609
        %v8615 = vadd.f32 %v8494, %v8609
        %v8616 = vadd.f32 %v8497, %v8609
        %v8617 = vadd.f32 %v8502, %v8609
        %v8618 = vadd.f32 %v8505, %v8609
        %v8619 = vadd.f32 %v8510, %v8609
        %v8620 = vadd.f32 %v8513, %v8609
        %v8621 = vadd.f32 %v8518, %v8609
        %v8622 = vadd.f32 %v8521, %v8609
        %v8623 = vadd.f32 %v8526, %v8609
        %v8624 = vadd.f32 %v8529, %v8609
        %v8625 = vadd.f32 %v8534, %v8609
        %v8626 = vadd.f32 %v8537, %v8609
        %v8627 = vadd.f32 %v8542, %v8609
        %v8628 = vadd.f32 %v8545, %v8609
        %v8629 = vadd.f32 %v8550, %v8609
        %v8630 = vadd.f32 %v8553, %v8609
        %v8631 = vadd.f32 %v8558, %v8609
        %v8632 = vadd.f32 %v8561, %v8609
        %v8633 = vadd.f32 %v8566, %v8609
        %v8634 = vadd.f32 %v8569, %v8609
        %v8635 = vadd.f32 %v8574, %v8609
        %v8636 = vadd.f32 %v8577, %v8609
        %v8637 = vadd.f32 %v8582, %v8609
        %v8638 = vadd.f32 %v8585, %v8609
        %v8639 = vadd.f32 %v8590, %v8609
        %v8640 = vadd.f32 %v8593, %v8609
        %v8641 = vadd.f32 %v8598, %v8609
        %v8642 = vadd.f32 %v8601, %v8609
        %v8643 = vadd.f32 %v8090, %v8611
        %v8644 = vadd.f32 %v8091, %v8612
        %v8645 = vadd.f32 %v8092, %v8613
        %v8646 = vadd.f32 %v8093, %v8614
        %v8647 = vadd.f32 %v8094, %v8615
        %v8648 = vadd.f32 %v8095, %v8616
        %v8649 = vadd.f32 %v8096, %v8617
        %v8650 = vadd.f32 %v8097, %v8618
        %v8651 = vadd.f32 %v8098, %v8619
        %v8652 = vadd.f32 %v8099, %v8620
        %v8653 = vadd.f32 %v8100, %v8621
        %v8654 = vadd.f32 %v8101, %v8622
        %v8655 = vadd.f32 %v8102, %v8623
        %v8656 = vadd.f32 %v8103, %v8624
        %v8657 = vadd.f32 %v8104, %v8625
        %v8658 = vadd.f32 %v8105, %v8626
        %v8659 = vadd.f32 %v8106, %v8627
        %v8660 = vadd.f32 %v8107, %v8628
        %v8661 = vadd.f32 %v8108, %v8629
        %v8662 = vadd.f32 %v8109, %v8630
        %v8663 = vadd.f32 %v8110, %v8631
        %v8664 = vadd.f32 %v8111, %v8632
        %v8665 = vadd.f32 %v8112, %v8633
        %v8666 = vadd.f32 %v8113, %v8634
        %v8667 = vadd.f32 %v8114, %v8635
        %v8668 = vadd.f32 %v8115, %v8636
        %v8669 = vadd.f32 %v8116, %v8637
        %v8670 = vadd.f32 %v8117, %v8638
        %v8671 = vadd.f32 %v8118, %v8639
        %v8672 = vadd.f32 %v8119, %v8640
        %v8673 = vadd.f32 %v8120, %v8641
        %v8674 = vadd.f32 %v8121, %v8642
        %8675 = vst.msk [vmem:[%s657] sm:$0xff] %vm745, %v8643
        %8676 = vst.msk [vmem:[%s657 + $0x8] sm:$0xff] %vm745, %v8644
        %8677 = vst.msk [vmem:[%s657 + $0x10] sm:$0xff] %vm745, %v8645
        %8678 = vst.msk [vmem:[%s657 + $0x18] sm:$0xff] %vm745, %v8646
        %8679 = vst.msk [vmem:[%s657 + $0x20] sm:$0xff] %vm745, %v8647
        %8680 = vst.msk [vmem:[%s657 + $0x28] sm:$0xff] %vm745, %v8648
        %8681 = vst.msk [vmem:[%s657 + $0x30] sm:$0xff] %vm745, %v8649
        %8682 = vst.msk [vmem:[%s657 + $0x38] sm:$0xff] %vm745, %v8650
        %8683 = vst.msk [vmem:[%s657 + $0x40] sm:$0xff] %vm745, %v8651
        %8684 = vst.msk [vmem:[%s657 + $0x48] sm:$0xff] %vm745, %v8652
        %8685 = vst.msk [vmem:[%s657 + $0x50] sm:$0xff] %vm745, %v8653
        %8686 = vst.msk [vmem:[%s657 + $0x58] sm:$0xff] %vm745, %v8654
        %8687 = vst.msk [vmem:[%s657 + $0x60] sm:$0xff] %vm745, %v8655
        %8688 = vst.msk [vmem:[%s657 + $0x68] sm:$0xff] %vm745, %v8656
        %8689 = vst.msk [vmem:[%s657 + $0x70] sm:$0xff] %vm745, %v8657
        %8690 = vst.msk [vmem:[%s657 + $0x78] sm:$0xff] %vm745, %v8658
        %8691 = vst.msk [vmem:[%s657 + $0x80] sm:$0xff] %vm745, %v8659
        %8692 = vst.msk [vmem:[%s657 + $0x88] sm:$0xff] %vm745, %v8660
        %8693 = vst.msk [vmem:[%s657 + $0x90] sm:$0xff] %vm745, %v8661
        %8694 = vst.msk [vmem:[%s657 + $0x98] sm:$0xff] %vm745, %v8662
        %8695 = vst.msk [vmem:[%s657 + $0xa0] sm:$0xff] %vm745, %v8663
        %8696 = vst.msk [vmem:[%s657 + $0xa8] sm:$0xff] %vm745, %v8664
        %8697 = vst.msk [vmem:[%s657 + $0xb0] sm:$0xff] %vm745, %v8665
        %8698 = vst.msk [vmem:[%s657 + $0xb8] sm:$0xff] %vm745, %v8666
        %8699 = vst.msk [vmem:[%s657 + $0xc0] sm:$0xff] %vm745, %v8667
        %8700 = vst.msk [vmem:[%s657 + $0xc8] sm:$0xff] %vm745, %v8668
        %8701 = vst.msk [vmem:[%s657 + $0xd0] sm:$0xff] %vm745, %v8669
        %8702 = vst.msk [vmem:[%s657 + $0xd8] sm:$0xff] %vm745, %v8670
        %8703 = vst.msk [vmem:[%s657 + $0xe0] sm:$0xff] %vm745, %v8671
        %8704 = vst.msk [vmem:[%s657 + $0xe8] sm:$0xff] %vm745, %v8672
        %8705 = vst.msk [vmem:[%s657 + $0xf0] sm:$0xff] %vm745, %v8673
        %8706 = vst.msk [vmem:[%s657 + $0xf8] sm:$0xff] %vm745, %v8674
        %s8707 = sand.u32 %s479, 1
        %s8708 = scalar_lea.sflag [#allocation5], %s8707
        %s8709 = sand.u32 %s479, 1
        %s8710 = smul.addr %s8709, 256
        %s8711 = scalar_lea.vmem [#allocation4], %s8710
        // Predicated region
        $region101: #{scm_block_forward.1} parent=99 // pred_check
          %p8712 = pneg %p489
        $region102: #{scm_block_forward.1} parent=99 // pred_check_branch
          %8714 = sbr.rel (%p8712) target = $region104
        $region103: #{scm_block_forward.1} parent=99 // pred_region
          %s8716 = ssub.s32 4096, 4096
          %8717 = vsyncadd %s8708, %s8716
          %s8718 = smul.addr %s34, 32
          %s8719 = smul.addr %s8718, 128
          %s8720 = scalar_lea.hbm %s20, %s8719
          %s8721 = sshll.u32 %s8711, 4
          %s8722 = int_to_ptr.vmem [resolvable:$true] %s8721
          %8727 = dma.vmem_to_hbm [thread:$0]  %s8722, 4096, %s8720, %s8708, 128, 128, 8
        $region104: #{scm_block_forward.1} parent=99 // pred_fallthru
          _
      $region100: #{scm_block_forward.1} parent=5 // pred_fallthru
        _
      %p8728 = scmp.le.s32.totalorder 2, %s29
      // Predicated region
      $region105: #{scm_block_forward.1} parent=5 // pred_check
        %p8729 = pneg %p8728
      $region106: #{scm_block_forward.1} parent=5 // pred_check_branch
        %8731 = sbr.rel (%p8729) target = $region108
      $region107: #{scm_block_forward.1} parent=5 // pred_region
        %s8732 = ssub.s32 %s29, 2
        // Predicated region
        $region109: #{scm_block_forward.1} parent=107 // pred_check
          %p8733 = pneg %p495
        $region110: #{scm_block_forward.1} parent=107 // pred_check_branch
          %8735 = sbr.rel (%p8733) target = $region112
        $region111: #{scm_block_forward.1} parent=107 // pred_region
          %s8736 = sand.u32 %s480, 1
          %s8737 = scalar_lea.sflag [#allocation5], %s8736
          %s8738 = sand.u32 %s480, 1
          %s8739 = smul.addr %s8738, 256
          %s8740 = scalar_lea.vmem [#allocation4], %s8739
          %8741 = dma.done %s8737, 4096
        $region112: #{scm_block_forward.1} parent=107 // pred_fallthru
          _
      $region108: #{scm_block_forward.1} parent=5 // pred_fallthru
        _
    $region6: #{scm_block_forward.1} parent=1 // loop_footer
      %s33 = sadd.s32 1, %s29
    $region7: #{scm_block_forward.1} parent=1 // loop_footer_branch
      %28 = sbr.rel target = $region3
    $region8: #{scm_block_forward.1} parent=1 // loop_exit
      _
    %8742 = vsyncpa [#allocation5], 1
    %s8743 = scalar_lea.sflag [#allocation5], 1
    %8744 = vsyncpa %s8743, 1

</llo_original>
